<compile_context>
chip_gen: v6e
topology: v6e:2x2x1
jax: 0.10.0
libtpu: 0.0.40
codegen_flags: <defaults>
</compile_context>

<pallas_src>
import functools

import jax
import jax.numpy as jnp
from jax.experimental import pallas as pl
from jax.experimental.pallas import tpu as pltpu

# Model dimensions (from the PyTorch module) and padded kernel layout.
H1 = 108          # lstm1 hidden
H2 = 56           # lstm2 hidden
E = 112           # attention embed dim (= 2 * H2)
HP = 128          # padded per-direction hidden width (lane aligned)
DP = 2 * HP       # both directions packed along lanes
G = 4 * HP        # padded gate width per direction


# ---------------------------------------------------------------------------
# Fused Pallas kernel
# ---------------------------------------------------------------------------
def fused_kernel(
    x1_ref, w1_ref, b1_ref, whh1_ref,                      # LSTM1
    w2_ref, b2_ref, whh2_ref,                              # LSTM2 (BN folded)
    wqkv_ref, bqkv_ref, pick_ref,                          # MHA in-proj + last-step query pick
    hsum_ref, hexp_ref, sel_ref,                           # 0/1 head-reduce / expand / batch-sum
    wo_ref, bo_ref,                                        # MHA out-proj
    wm1_ref, bm1_ref, wm2_ref, bm2_ref, wm3_ref, bm3_ref,  # MLP head
    out_ref, h1_ref, c1_ref, h2_ref, c2_ref,               # outputs (padded, P rows)
    gx_scr, x2_scr, out2_scr,                              # VMEM scratch
    *, T, B, P):
    f32 = jnp.float32
    bf16 = jnp.bfloat16
    dot = functools.partial(jnp.dot, preferred_element_type=f32)

    # Direction row masks over the P padded rows: rows [0,B) = fwd, [B,2B) = bwd, rest dead(=0).
    row = jax.lax.broadcasted_iota(jnp.int32, (P, 1), 0)
    mask_f = (row < B).astype(f32)
    mask_b = jnp.logical_and(row >= B, row < 2 * B).astype(f32)

    def lstm_cell(gates, c):
        i = jax.nn.sigmoid(gates[:, 0 * HP:1 * HP])
        f = jax.nn.sigmoid(gates[:, 1 * HP:2 * HP])
        g = jnp.tanh(gates[:, 2 * HP:3 * HP])
        o = jax.nn.sigmoid(gates[:, 3 * HP:4 * HP])
        c_new = f * c + i * g
        h_new = o * jnp.tanh(c_new)
        return h_new, c_new

    def run_layer(whh_ref, b_ref, store_fn):
        """Both directions fused per step: packed state (P, HP), extended (P, 2*HP) h feeds a
        block-stacked (2*HP, G) recurrent weight -> one matmul + one cell per step."""
        h_ext = jnp.zeros((P, 2 * HP), f32)
        c = jnp.zeros((P, HP), f32)
        h = jnp.zeros((P, HP), f32)
        for s in range(T):                                   # static unroll (T small & fixed)
            gx = gx_scr[s * P:(s + 1) * P, :] + b_ref[...]   # clean 8-row aligned load
            if s == 0:
                gates = gx                                   # h0 == 0 -> skip the first matmul
            else:
                gates = dot(h_ext.astype(bf16), whh_ref[...]) + gx
            h, c = lstm_cell(gates, c)
            if s + 1 < T:
                h_ext = jnp.concatenate([h * mask_f, h * mask_b], axis=1)
            store_fn(s, h)
        return h, c

    # -------- BiLSTM layer 1: one batched input-projection matmul --------
    x2_scr[...] = jnp.zeros(x2_scr.shape, f32)               # zero the layer-2 staging buffer
    gx_scr[...] = dot(x1_ref[...].astype(bf16), w1_ref[...])

    def store1(s, h):
        # Stage layer-1 outputs directly in the direction-extended, step-aligned layout
        # that layer-2's batched gate-input matmul consumes (fwd rows: [out1(s) | 0],
        # bwd rows: [0 | out1(T-1-s)]).  All stores are off the recurrent dependency chain.
        r = T - 1 - s
        hf = h[0:B, :]            # h1_fwd(s)
        hb = h[B:2 * B, :]        # h1_bwd(T-1-s)
        x2_scr[s * P:s * P + B, 0:HP] = hf
        x2_scr[r * P + B:r * P + 2 * B, 2 * HP:3 * HP] = hf
        x2_scr[r * P:r * P + B, HP:2 * HP] = hb
        x2_scr[s * P + B:s * P + 2 * B, 3 * HP:4 * HP] = hb

    h1, c1 = run_layer(whh1_ref, b1_ref, store1)
    h1_ref[...] = h1
    c1_ref[...] = c1

    # -------- BiLSTM layer 2 (eval BatchNorm + identity dropout folded into w2/b2) --------
    gx_scr[...] = dot(x2_scr[...].astype(bf16), w2_ref[...])

    def store2(s, h):
        # Time-major (T*B, 2*HP) layer-2 outputs for the attention stage.
        r = T - 1 - s
        out2_scr[s * B:(s + 1) * B, 0:HP] = h[0:B, :]
        out2_scr[r * B:(r + 1) * B, HP:2 * HP] = h[B:2 * B, :]

    h2, c2 = run_layer(whh2_ref, b2_ref, store2)
    h2_ref[...] = h2
    c2_ref[...] = c2

    # -------- Multi-head self-attention (only the t = T-1 query feeds the output) --------
    out2_all = out2_scr[...]                                            # (T*B, 2*HP)
    qkv = dot(out2_all.astype(bf16), wqkv_ref[...]) + bqkv_ref[...]     # (T*B, 3*HP)
    q_all = qkv[:, 0:HP]                                                # 1/sqrt(hd) folded in
    k_all = qkv[:, HP:2 * HP]
    v_all = qkv[:, 2 * HP:3 * HP]

    q_t = dot(pick_ref[...], q_all)                      # broadcast q(T-1) over all T*B rows
    scores = dot(k_all * q_t, hsum_ref[...])             # (T*B, HP): per-head scores in lanes 0:nh
    m = jnp.max(scores, axis=0, keepdims=True)           # per-head shift (uniform over t -> valid)
    s_exp = jnp.exp(scores - m)
    w_lane = dot(s_exp, hexp_ref[...])                   # expand per-head weights back to lanes
    packed = jnp.concatenate([s_exp, w_lane * v_all], axis=1)           # (T*B, 2*HP)
    red = dot(sel_ref[...], packed)                      # (P, 2*HP): [softmax denom | unnorm ctx]
    den = jnp.maximum(dot(red[:, 0:HP], hexp_ref[...]), 1e-20)
    ctx = red[:, HP:2 * HP] * pl.reciprocal(den, approx=True)           # (P, HP)
    attn = dot(ctx.astype(bf16), wo_ref[...]) + bo_ref[...]             # (P, 128)

    # -------- MLP head (last timestep only), all widths padded to 128 lanes --------
    z = jnp.maximum(dot(attn.astype(bf16), wm1_ref[...]) + bm1_ref[...], 0.0)
    z = jnp.maximum(dot(z.astype(bf16), wm2_ref[...]) + bm2_ref[...], 0.0)
    out_ref[...] = dot(z.astype(bf16), wm3_ref[...]) + bm3_ref[...]


def _fused_call(x1_ext, b1_rows, b2_rows, pick, hsum, hexp, sel, kp, *, T, B, P):
    f32 = jnp.float32
    vmem = pl.BlockSpec(memory_space=pltpu.MemorySpace.VMEM)
    kern = functools.partial(fused_kernel, T=T, B=B, P=P)
    args = (x1_ext, kp['w1_stack'], b1_rows, kp['whh1_stack'],
            kp['w2_stack'], b2_rows, kp['whh2_stack'],
            kp['wqkv'], kp['bqkv'], pick,
            hsum, hexp, sel,
            kp['wo'], kp['bo'],
            kp['wm1'], kp['bm1'], kp['wm2'], kp['bm2'], kp['wm3'], kp['bm3'])
    out_shape = tuple(jax.ShapeDtypeStruct((P, HP), f32) for _ in range(5))
    return pl.pallas_call(
        kern,
        out_shape=out_shape,
        in_specs=[vmem] * len(args),
        out_specs=(vmem,) * len(out_shape),
        scratch_shapes=[
            pltpu.VMEM((T * P, G), f32),        # gx_scr: current layer's gate inputs
            pltpu.VMEM((T * P, 2 * DP), f32),   # x2_scr: direction-extended layer-2 input staging
            pltpu.VMEM((T * B, DP), f32),       # out2_scr: layer-2 outputs, time-major
        ],
    )(*args)


# ---------------------------------------------------------------------------
# Forward wrapper (mirrors AttentionBiLSTM.forward, default zero initial states)
# ---------------------------------------------------------------------------
def attention_bilstm_forward(kp, x, *, num_heads):
    f32 = jnp.float32
    B, T, _ = x.shape
    P = ((2 * B + 7) // 8) * 8                 # padded rows per step (sublane aligned)
    Din = 5
    head_dim = E // num_heads

    idx = x[:, :, 4].astype(jnp.int32)                                  # emb = x[:,:,4].long()
    embed = jnp.take(kp['emb'], idx, axis=0)                            # (B, T, 1)
    inp = jnp.concatenate([embed, x[:, :, :4]], axis=2).astype(f32)     # (B, T, 5)

    # Direction-extended, step-aligned LSTM-1 input (fwd rows time s, bwd rows time T-1-s).
    inp_tm = jnp.transpose(inp, (1, 0, 2))                              # (T, B, 5)
    blk = jnp.zeros((T, P, HP), f32)
    blk = blk.at[:, 0:B, 0:Din].set(inp_tm)
    blk = blk.at[:, B:2 * B, Din:2 * Din].set(inp_tm[::-1])
    x1_ext = blk.reshape(T * P, HP)

    def rows_bias(pair):                                                # (2, G) -> (P, G)
        b = jnp.zeros((P, G), f32)
        b = b.at[0:B, :].set(pair[0])
        b = b.at[B:2 * B, :].set(pair[1])
        return b
    b1_rows = rows_bias(kp['b1_pair'])
    b2_rows = rows_bias(kp['b2_pair'])

    # 0/1 helper matrices for the vectorized attention epilogue.
    d = jnp.arange(HP)
    hsum = (((d[:, None] // head_dim) == d[None, :])
            & (d[:, None] < E) & (d[None, :] < num_heads)).astype(f32)  # (HP, HP)
    hexp = hsum.T
    rcol = jnp.arange(T * B)
    sel = (((rcol[None, :] % B) == jnp.arange(P)[:, None])
           & (jnp.arange(P)[:, None] < B)).astype(f32)                  # (P, T*B) sum-over-T
    pick = (rcol[None, :] == ((T - 1) * B + (rcol[:, None] % B))).astype(f32)   # (T*B, T*B)

    out_p, h1_p, c1_p, h2_p, c2_p = _fused_call(
        x1_ext, b1_rows, b2_rows, pick, hsum, hexp, sel, kp, T=T, B=B, P=P)

    out = out_p[:B, :56]
    h1 = jnp.stack([h1_p[0:B, :H1], h1_p[B:2 * B, :H1]], axis=0)
    c1 = jnp.stack([c1_p[0:B, :H1], c1_p[B:2 * B, :H1]], axis=0)
    h2 = jnp.stack([h2_p[0:B, :H2], h2_p[B:2 * B, :H2]], axis=0)
    c2 = jnp.stack([c2_p[0:B, :H2], c2_p[B:2 * B, :H2]], axis=0)
    return out, h1, c1, h2, c2


# ---------------------------------------------------------------------------
# Parameters: torch-shaped synthetic params + packing into the padded kernel layout
# ---------------------------------------------------------------------------
def make_params(key, inputdim=5, outputdim=64, layerdim=1):
    assert layerdim == 1, "fused kernel implements layerdim == 1"
    keys = iter(jax.random.split(key, 64))

    def u(shape, s):
        return jax.random.uniform(next(keys), shape, jnp.float32, -s, s)

    params = {'emb': jax.random.normal(next(keys), (25, 1), jnp.float32)}

    def lstm_dir(in_dim, hidden):
        k = 1.0 / (hidden ** 0.5)
        wih = u((in_dim, 4 * hidden), k)                       # weight_ih^T
        whh = u((hidden, 4 * hidden), k)                       # weight_hh^T
        b = u((1, 4 * hidden), k) + u((1, 4 * hidden), k)      # b_ih + b_hh
        return wih, whh, b

    params['lstm1'] = (lstm_dir(inputdim, H1), lstm_dir(inputdim, H1))
    params['lstm2'] = (lstm_dir(2 * H1, H2), lstm_dir(2 * H1, H2))

    # BatchNorm1d(216), eval mode with fresh running stats -> (almost) identity affine.
    C, eps = 2 * H1, 1e-5
    gamma = jnp.ones((C,), jnp.float32)
    beta = jnp.zeros((C,), jnp.float32)
    rmean = jnp.zeros((C,), jnp.float32)
    rvar = jnp.ones((C,), jnp.float32)
    scale = gamma / jnp.sqrt(rvar + eps)
    params['bn'] = (scale, beta - rmean * scale)

    k_in = 1.0 / (E ** 0.5)
    params['mha'] = dict(
        w_in=u((E, 3 * E), k_in), b_in=jnp.zeros((1, 3 * E), jnp.float32),
        w_out=u((E, E), k_in), b_out=jnp.zeros((1, E), jnp.float32))

    def lin(din, dout):
        k = 1.0 / (din ** 0.5)
        return u((din, dout), k), u((1, dout), k)

    w1, b1 = lin(E, 56)
    w2, b2 = lin(56, 32)
    w3, b3 = lin(32, outputdim)
    params['mlp'] = (w1, b1, w2, b2, w3, b3)
    return params


def _pad_gate_cols(w, hidden):
    """(rows, 4*hidden) gate-blocked [i,f,g,o] -> (rows, 4*HP), zero-padded per block."""
    blocks = [jnp.pad(w[:, g * hidden:(g + 1) * hidden], ((0, 0), (0, HP - hidden)))
              for g in range(4)]
    return jnp.concatenate(blocks, axis=1)


def _pad_in_rows(w, hidden):
    """(2*hidden, N) rows [fwd | bwd] -> (2*HP, N), zero rows in padding."""
    top = jnp.pad(w[:hidden], ((0, HP - hidden), (0, 0)))
    bot = jnp.pad(w[hidden:], ((0, HP - hidden), (0, 0)))
    return jnp.concatenate([top, bot], axis=0)


def pack_params(p, *, num_heads):
    bf16 = jnp.bfloat16
    (w1f, u1f, b1f), (w1b, u1b, b1b) = p['lstm1']
    (w2f, u2f, b2f), (w2b, u2b, b2b) = p['lstm2']
    bn_scale, bn_shift = p['bn']
    Din = w1f.shape[0]

    def pad_rows(w, n):
        return jnp.pad(w, ((0, n - w.shape[0]), (0, 0)))

    def pad_cols(w, n):
        return jnp.pad(w, ((0, 0), (0, n - w.shape[1])))

    # LSTM1: stacked input projection (fwd rows 0:Din, bwd rows Din:2*Din), stacked recurrent.
    w1_stack = jnp.zeros((HP, G), jnp.float32)
    w1_stack = w1_stack.at[0:Din, :].set(_pad_gate_cols(w1f, H1))
    w1_stack = w1_stack.at[Din:2 * Din, :].set(_pad_gate_cols(w1b, H1))
    b1_pair = jnp.concatenate([_pad_gate_cols(b1f, H1), _pad_gate_cols(b1b, H1)], axis=0)
    whh1_stack = jnp.concatenate([pad_rows(_pad_gate_cols(u1f, H1), HP),
                                  pad_rows(_pad_gate_cols(u1b, H1), HP)], axis=0)

    # LSTM2: fold eval-mode BatchNorm (affine) and identity dropout into the input side.
    w2f_e = bn_scale[:, None] * w2f
    w2b_e = bn_scale[:, None] * w2b
    b2f_e = b2f + bn_shift[None, :] @ w2f
    b2b_e = b2b + bn_shift[None, :] @ w2b
    w2_stack = jnp.concatenate([_pad_in_rows(_pad_gate_cols(w2f_e, H2), H1),
                                _pad_in_rows(_pad_gate_cols(w2b_e, H2), H1)], axis=0)  # (2*DP, G)
    b2_pair = jnp.concatenate([_pad_gate_cols(b2f_e, H2), _pad_gate_cols(b2b_e, H2)], axis=0)
    whh2_stack = jnp.concatenate([pad_rows(_pad_gate_cols(u2f, H2), HP),
                                  pad_rows(_pad_gate_cols(u2b, H2), HP)], axis=0)

    # MHA in-projection: rows remapped through the padded LSTM2 output layout, columns
    # lane-padded to HP; 1/sqrt(head_dim) folded into the Q block; Q|K|V packed into one matmul.
    head_dim = E // num_heads
    scale = 1.0 / (head_dim ** 0.5)
    w_in, b_in = p['mha']['w_in'], p['mha']['b_in']

    def in_w(w):
        return pad_cols(_pad_in_rows(w, H2), HP)

    def in_b(b):
        return pad_cols(b, HP)

    wqkv = jnp.concatenate([in_w(w_in[:, 0:E]) * scale,
                            in_w(w_in[:, E:2 * E]),
                            in_w(w_in[:, 2 * E:3 * E])], axis=1)          # (DP, 3*HP)
    bqkv = jnp.concatenate([in_b(b_in[:, 0:E]) * scale,
                            in_b(b_in[:, E:2 * E]),
                            in_b(b_in[:, 2 * E:3 * E])], axis=1)          # (1, 3*HP)
    wo = pad_cols(pad_rows(p['mha']['w_out'], HP), HP)                    # (HP, HP)
    bo = pad_cols(p['mha']['b_out'], HP)

    # MLP head, all widths padded to 128 lanes.
    wm1_, bm1_, wm2_, bm2_, wm3_, bm3_ = p['mlp']
    wm1 = pad_cols(pad_rows(wm1_, HP), HP); bm1 = pad_cols(bm1_, HP)
    wm2 = pad_cols(pad_rows(wm2_, HP), HP); bm2 = pad_cols(bm2_, HP)
    wm3 = pad_cols(pad_rows(wm3_, HP), HP); bm3 = pad_cols(bm3_, HP)

    return dict(
        emb=p['emb'],
        w1_stack=w1_stack.astype(bf16), b1_pair=b1_pair, whh1_stack=whh1_stack.astype(bf16),
        w2_stack=w2_stack.astype(bf16), b2_pair=b2_pair, whh2_stack=whh2_stack.astype(bf16),
        wqkv=wqkv.astype(bf16), bqkv=bqkv,
        wo=wo.astype(bf16), bo=bo,
        wm1=wm1.astype(bf16), bm1=bm1, wm2=wm2.astype(bf16), bm2=bm2,
        wm3=wm3.astype(bf16), bm3=bm3)


# ---------------------------------------------------------------------------
# Pure-JAX (XLA) reference of the same forward pass, for numerical cross-check
# ---------------------------------------------------------------------------
def reference_forward(params, x, *, num_heads):
    B, T, _ = x.shape
    idx = x[:, :, 4].astype(jnp.int32)
    embed = jnp.take(params['emb'], idx, axis=0)
    inp = jnp.concatenate([embed, x[:, :, :4]], axis=2).astype(jnp.float32)

    def lstm_dir(xseq, wih, whh, b, reverse):
        H = whh.shape[0]
        h = jnp.zeros((xseq.shape[0], H), jnp.float32)
        c = jnp.zeros((xseq.shape[0], H), jnp.float32)
        order = range(T - 1, -1, -1) if reverse else range(T)
        outs = [None] * T
        for t in order:
            gates = xseq[:, t, :] @ wih + h @ whh + b
            i = jax.nn.sigmoid(gates[:, 0 * H:1 * H])
            f = jax.nn.sigmoid(gates[:, 1 * H:2 * H])
            g = jnp.tanh(gates[:, 2 * H:3 * H])
            o = jax.nn.sigmoid(gates[:, 3 * H:4 * H])
            c = f * c + i * g
            h = o * jnp.tanh(c)
            outs[t] = h
        return jnp.stack(outs, axis=1), h, c

    def bilstm(xseq, layer):
        (wf, uf, bf), (wb, ub, bb) = layer
        of, hf, cf = lstm_dir(xseq, wf, uf, bf, False)
        ob, hb, cb = lstm_dir(xseq, wb, ub, bb, True)
        return jnp.concatenate([of, ob], axis=-1), (hf, cf, hb, cb)

    out1, (h1f, c1f, h1b, c1b) = bilstm(inp, params['lstm1'])
    scale, shift = params['bn']
    out1 = out1 * scale[None, None, :] + shift[None, None, :]
    out2, (h2f, c2f, h2b, c2b) = bilstm(out1, params['lstm2'])

    hd = E // num_heads
    w_in, b_in = params['mha']['w_in'], params['mha']['b_in']
    wo, bo = params['mha']['w_out'], params['mha']['b_out']
    qkv = out2 @ w_in + b_in
    q, k, v = qkv[..., :E], qkv[..., E:2 * E], qkv[..., 2 * E:]
    qh = q.reshape(B, T, num_heads, hd).transpose(0, 2, 1, 3)
    kh = k.reshape(B, T, num_heads, hd).transpose(0, 2, 1, 3)
    vh = v.reshape(B, T, num_heads, hd).transpose(0, 2, 1, 3)
    s = jnp.einsum('bhqd,bhkd->bhqk', qh, kh) / (hd ** 0.5)
    p = jax.nn.softmax(s, axis=-1)
    ctx = jnp.einsum('bhqk,bhkd->bhqd', p, vh).transpose(0, 2, 1, 3).reshape(B, T, E)
    attn = ctx @ wo + bo

    w1, b1, w2, b2, w3, b3 = params['mlp']
    z = jnp.maximum(attn @ w1 + b1, 0.0)
    z = jnp.maximum(z @ w2 + b2, 0.0)
    outm = z @ w3 + b3
    return (outm[:, -1, :56],
            jnp.stack([h1f, h1b]), jnp.stack([c1f, c1b]),
            jnp.stack([h2f, h2b]), jnp.stack([c2f, c2b]))


if __name__ == "__main__":
    key = jax.random.PRNGKey(0)
    pkey, fkey, ikey = jax.random.split(key, 3)

    B, T = 2, 8
    inputdim, outputdim, numheads, layerdim = 5, 64, 4, 1

    params = make_params(pkey, inputdim=inputdim, outputdim=outputdim, layerdim=layerdim)
    kparams = pack_params(params, num_heads=numheads)

    feats = jax.random.normal(fkey, (B, T, 4), jnp.float32)
    emb_ids = jax.random.randint(ikey, (B, T), 0, 25).astype(jnp.float32)
    x = jnp.concatenate([feats, emb_ids[..., None]], axis=2)            # (B, T, 5)

    fwd = jax.jit(functools.partial(attention_bilstm_forward, num_heads=numheads))
    out, h1, c1, h2, c2 = fwd(kparams, x)
    jax.block_until_ready((out, h1, c1, h2, c2))

    assert out.shape == (B, 56), out.shape
    assert h1.shape == (layerdim * 2, B, 108) and c1.shape == h1.shape
    assert h2.shape == (layerdim * 2, B, 56) and c2.shape == h2.shape
    assert bool(jnp.all(jnp.isfinite(out)))

    # Cross-check the fused kernel against a pure-JAX reference of the same module.
    # Tolerance accounts for bf16 MXU operands + approx reciprocal in the kernel.
    ref = reference_forward(params, x, num_heads=numheads)
    for got, want in zip((out, h1, c1, h2, c2), ref):
        assert got.shape == want.shape, (got.shape, want.shape)
        err = float(jnp.max(jnp.abs(got - want)))
        assert err < 3e-2, err

    print("KERNEL_OK")
</pallas_src>

<mosaic_0001>
module attributes {stable_mosaic.version = 11 : i64} {
  func.func @fused_kernel(%arg0: memref<64x128xf32, #tpu.memory_space<vmem>>, %arg1: memref<128x512xbf16, #tpu.memory_space<vmem>>, %arg2: memref<8x512xf32, #tpu.memory_space<vmem>>, %arg3: memref<256x512xbf16, #tpu.memory_space<vmem>>, %arg4: memref<512x512xbf16, #tpu.memory_space<vmem>>, %arg5: memref<8x512xf32, #tpu.memory_space<vmem>>, %arg6: memref<256x512xbf16, #tpu.memory_space<vmem>>, %arg7: memref<256x384xbf16, #tpu.memory_space<vmem>>, %arg8: memref<1x384xf32, #tpu.memory_space<vmem>>, %arg9: memref<16x16xf32, #tpu.memory_space<vmem>>, %arg10: memref<128x128xf32, #tpu.memory_space<vmem>>, %arg11: memref<128x128xf32, #tpu.memory_space<vmem>>, %arg12: memref<8x16xf32, #tpu.memory_space<vmem>>, %arg13: memref<128x128xbf16, #tpu.memory_space<vmem>>, %arg14: memref<1x128xf32, #tpu.memory_space<vmem>>, %arg15: memref<128x128xbf16, #tpu.memory_space<vmem>>, %arg16: memref<1x128xf32, #tpu.memory_space<vmem>>, %arg17: memref<128x128xbf16, #tpu.memory_space<vmem>>, %arg18: memref<1x128xf32, #tpu.memory_space<vmem>>, %arg19: memref<128x128xbf16, #tpu.memory_space<vmem>>, %arg20: memref<1x128xf32, #tpu.memory_space<vmem>>, %arg21: memref<8x128xf32, #tpu.memory_space<vmem>>, %arg22: memref<8x128xf32, #tpu.memory_space<vmem>>, %arg23: memref<8x128xf32, #tpu.memory_space<vmem>>, %arg24: memref<8x128xf32, #tpu.memory_space<vmem>>, %arg25: memref<8x128xf32, #tpu.memory_space<vmem>>, %arg26: memref<64x512xf32, #tpu.memory_space<vmem>>, %arg27: memref<64x512xf32, #tpu.memory_space<vmem>>, %arg28: memref<16x256xf32, #tpu.memory_space<vmem>>) attributes {dimension_semantics = [], scalar_prefetch = 0 : i64, scratch_operands = 3 : i64, tpu.core_type = #tpu.core_type<tc>} {
    %0 = tpu.iota {dimensions = array<i32: 0>} : vector<8x1xi32>
    %c2_i32 = arith.constant 2 : i32
    %1 = vector.broadcast %c2_i32 : i32 to vector<8x1xi32>
    %2 = arith.cmpi slt, %0, %1 : vector<8x1xi32>
    %3 = arith.extui %2 : vector<8x1xi1> to vector<8x1xi32>
    %4 = arith.sitofp %3 : vector<8x1xi32> to vector<8x1xf32>
    %c2_i32_0 = arith.constant 2 : i32
    %5 = vector.broadcast %c2_i32_0 : i32 to vector<8x1xi32>
    %6 = arith.cmpi sge, %0, %5 : vector<8x1xi32>
    %c4_i32 = arith.constant 4 : i32
    %7 = vector.broadcast %c4_i32 : i32 to vector<8x1xi32>
    %8 = arith.cmpi slt, %0, %7 : vector<8x1xi32>
    %9 = arith.andi %6, %8 : vector<8x1xi1>
    %10 = arith.extui %9 : vector<8x1xi1> to vector<8x1xi32>
    %11 = arith.sitofp %10 : vector<8x1xi32> to vector<8x1xf32>
    %cst = arith.constant 0.000000e+00 : f32
    %12 = vector.broadcast %cst : f32 to vector<64x512xf32>
    %c0 = arith.constant 0 : index
    %c0_1 = arith.constant 0 : index
    %13 = vector.load %arg27[%c0, %c0_1] : memref<64x512xf32, #tpu.memory_space<vmem>>, vector<64x512xf32>
    tpu.vector_store %arg27[%c0, %c0_1], %12 {strides = array<i32>} : memref<64x512xf32, #tpu.memory_space<vmem>>, vector<64x512xf32>,
    %c0_2 = arith.constant 0 : index
    %c0_3 = arith.constant 0 : index
    %14 = vector.load %arg0[%c0_2, %c0_3] : memref<64x128xf32, #tpu.memory_space<vmem>>, vector<64x128xf32>
    %15 = arith.truncf %14 : vector<64x128xf32> to vector<64x128xbf16>
    %c0_4 = arith.constant 0 : index
    %c0_5 = arith.constant 0 : index
    %16 = vector.load %arg1[%c0_4, %c0_5] : memref<128x512xbf16, #tpu.memory_space<vmem>>, vector<128x512xbf16>
    %cst_6 = arith.constant dense<0.000000e+00> : vector<64x512xf32>
    %17 = tpu.matmul %15, %16, %cst_6 {dimension_numbers = #tpu.dot_dimension_numbers<[1], [0], [0], [1], [0, 0, 1, 1], [], []>} : vector<64x128xbf16>, vector<128x512xbf16>, vector<64x512xf32> -> vector<64x512xf32>
    %c0_7 = arith.constant 0 : index
    %c0_8 = arith.constant 0 : index
    %18 = vector.load %arg26[%c0_7, %c0_8] : memref<64x512xf32, #tpu.memory_space<vmem>>, vector<64x512xf32>
    tpu.vector_store %arg26[%c0_7, %c0_8], %17 {strides = array<i32>} : memref<64x512xf32, #tpu.memory_space<vmem>>, vector<64x512xf32>,
    %cst_9 = arith.constant 0.000000e+00 : f32
    %19 = vector.broadcast %cst_9 : f32 to vector<8x128xf32>
    %c0_10 = arith.constant 0 : index
    %c0_11 = arith.constant 0 : index
    %20 = vector.load %arg26[%c0_10, %c0_11] : memref<64x512xf32, #tpu.memory_space<vmem>>, vector<8x512xf32>
    %c0_12 = arith.constant 0 : index
    %c0_13 = arith.constant 0 : index
    %21 = vector.load %arg2[%c0_12, %c0_13] : memref<8x512xf32, #tpu.memory_space<vmem>>, vector<8x512xf32>
    %22 = arith.addf %20, %21 : vector<8x512xf32>
    %23 = vector.extract_strided_slice %22 {offsets = [0, 0], sizes = [8, 128], strides = [1, 1]} : vector<8x512xf32> to vector<8x128xf32>
    %24 = arith.negf %23 : vector<8x128xf32>
    %25 = math.exp %24 : vector<8x128xf32>
    %cst_14 = arith.constant 1.000000e+00 : f32
    %26 = vector.broadcast %cst_14 : f32 to vector<8x128xf32>
    %27 = arith.addf %26, %25 : vector<8x128xf32>
    %28 = arith.divf %26, %27 : vector<8x128xf32>
    %29 = vector.extract_strided_slice %22 {offsets = [0, 128], sizes = [8, 128], strides = [1, 1]} : vector<8x512xf32> to vector<8x128xf32>
    %30 = arith.negf %29 : vector<8x128xf32>
    %31 = math.exp %30 : vector<8x128xf32>
    %cst_15 = arith.constant 1.000000e+00 : f32
    %32 = vector.broadcast %cst_15 : f32 to vector<8x128xf32>
    %33 = arith.addf %32, %31 : vector<8x128xf32>
    %34 = arith.divf %32, %33 : vector<8x128xf32>
    %35 = vector.extract_strided_slice %22 {offsets = [0, 256], sizes = [8, 128], strides = [1, 1]} : vector<8x512xf32> to vector<8x128xf32>
    %36 = math.tanh %35 : vector<8x128xf32>
    %37 = vector.extract_strided_slice %22 {offsets = [0, 384], sizes = [8, 128], strides = [1, 1]} : vector<8x512xf32> to vector<8x128xf32>
    %38 = arith.negf %37 : vector<8x128xf32>
    %39 = math.exp %38 : vector<8x128xf32>
    %cst_16 = arith.constant 1.000000e+00 : f32
    %40 = vector.broadcast %cst_16 : f32 to vector<8x128xf32>
    %41 = arith.addf %40, %39 : vector<8x128xf32>
    %42 = arith.divf %40, %41 : vector<8x128xf32>
    %43 = arith.mulf %34, %19 : vector<8x128xf32>
    %44 = arith.mulf %28, %36 : vector<8x128xf32>
    %45 = arith.addf %43, %44 : vector<8x128xf32>
    %46 = math.tanh %45 : vector<8x128xf32>
    %47 = arith.mulf %42, %46 : vector<8x128xf32>
    %48 = vector.broadcast %4 : vector<8x1xf32> to vector<8x128xf32>
    %49 = arith.mulf %47, %48 : vector<8x128xf32>
    %50 = vector.broadcast %11 : vector<8x1xf32> to vector<8x128xf32>
    %51 = arith.mulf %47, %50 : vector<8x128xf32>
    %52 = tpu.concatenate %49, %51 in 1 : vector<8x128xf32>, vector<8x128xf32> -> vector<8x256xf32>
    %53 = vector.extract_strided_slice %47 {offsets = [0, 0], sizes = [2, 128], strides = [1, 1]} : vector<8x128xf32> to vector<2x128xf32>
    %54 = vector.extract_strided_slice %47 {offsets = [2, 0], sizes = [2, 128], strides = [1, 1]} : vector<8x128xf32> to vector<2x128xf32>
    %c0_17 = arith.constant 0 : index
    %c0_18 = arith.constant 0 : index
    %55 = vector.load %arg27[%c0_17, %c0_18] : memref<64x512xf32, #tpu.memory_space<vmem>>, vector<2x128xf32>
    tpu.vector_store %arg27[%c0_17, %c0_18], %53 {strides = array<i32>} : memref<64x512xf32, #tpu.memory_space<vmem>>, vector<2x128xf32>,
    %c58 = arith.constant 58 : index
    %c256 = arith.constant 256 : index
    %56 = vector.load %arg27[%c58, %c256] : memref<64x512xf32, #tpu.memory_space<vmem>>, vector<2x128xf32>
    tpu.vector_store %arg27[%c58, %c256], %53 {strides = array<i32>} : memref<64x512xf32, #tpu.memory_space<vmem>>, vector<2x128xf32>,
    %c56 = arith.constant 56 : index
    %c128 = arith.constant 128 : index
    %57 = vector.load %arg27[%c56, %c128] : memref<64x512xf32, #tpu.memory_space<vmem>>, vector<2x128xf32>
    tpu.vector_store %arg27[%c56, %c128], %54 {strides = array<i32>} : memref<64x512xf32, #tpu.memory_space<vmem>>, vector<2x128xf32>,
    %c2 = arith.constant 2 : index
    %c384 = arith.constant 384 : index
    %58 = vector.load %arg27[%c2, %c384] : memref<64x512xf32, #tpu.memory_space<vmem>>, vector<2x128xf32>
    tpu.vector_store %arg27[%c2, %c384], %54 {strides = array<i32>} : memref<64x512xf32, #tpu.memory_space<vmem>>, vector<2x128xf32>,
    %c8 = arith.constant 8 : index
    %c0_19 = arith.constant 0 : index
    %59 = vector.load %arg26[%c8, %c0_19] : memref<64x512xf32, #tpu.memory_space<vmem>>, vector<8x512xf32>
    %c0_20 = arith.constant 0 : index
    %c0_21 = arith.constant 0 : index
    %60 = vector.load %arg2[%c0_20, %c0_21] : memref<8x512xf32, #tpu.memory_space<vmem>>, vector<8x512xf32>
    %61 = arith.addf %59, %60 : vector<8x512xf32>
    %62 = arith.truncf %52 : vector<8x256xf32> to vector<8x256xbf16>
    %c0_22 = arith.constant 0 : index
    %c0_23 = arith.constant 0 : index
    %63 = vector.load %arg3[%c0_22, %c0_23] : memref<256x512xbf16, #tpu.memory_space<vmem>>, vector<256x512xbf16>
    %cst_24 = arith.constant dense<0.000000e+00> : vector<8x512xf32>
    %64 = tpu.matmul %62, %63, %cst_24 {dimension_numbers = #tpu.dot_dimension_numbers<[1], [0], [0], [1], [0, 0, 1, 1], [], []>} : vector<8x256xbf16>, vector<256x512xbf16>, vector<8x512xf32> -> vector<8x512xf32>
    %65 = arith.addf %64, %61 : vector<8x512xf32>
    %66 = vector.extract_strided_slice %65 {offsets = [0, 0], sizes = [8, 128], strides = [1, 1]} : vector<8x512xf32> to vector<8x128xf32>
    %67 = arith.negf %66 : vector<8x128xf32>
    %68 = math.exp %67 : vector<8x128xf32>
    %cst_25 = arith.constant 1.000000e+00 : f32
    %69 = vector.broadcast %cst_25 : f32 to vector<8x128xf32>
    %70 = arith.addf %69, %68 : vector<8x128xf32>
    %71 = arith.divf %69, %70 : vector<8x128xf32>
    %72 = vector.extract_strided_slice %65 {offsets = [0, 128], sizes = [8, 128], strides = [1, 1]} : vector<8x512xf32> to vector<8x128xf32>
    %73 = arith.negf %72 : vector<8x128xf32>
    %74 = math.exp %73 : vector<8x128xf32>
    %cst_26 = arith.constant 1.000000e+00 : f32
    %75 = vector.broadcast %cst_26 : f32 to vector<8x128xf32>
    %76 = arith.addf %75, %74 : vector<8x128xf32>
    %77 = arith.divf %75, %76 : vector<8x128xf32>
    %78 = vector.extract_strided_slice %65 {offsets = [0, 256], sizes = [8, 128], strides = [1, 1]} : vector<8x512xf32> to vector<8x128xf32>
    %79 = math.tanh %78 : vector<8x128xf32>
    %80 = vector.extract_strided_slice %65 {offsets = [0, 384], sizes = [8, 128], strides = [1, 1]} : vector<8x512xf32> to vector<8x128xf32>
    %81 = arith.negf %80 : vector<8x128xf32>
    %82 = math.exp %81 : vector<8x128xf32>
    %cst_27 = arith.constant 1.000000e+00 : f32
    %83 = vector.broadcast %cst_27 : f32 to vector<8x128xf32>
    %84 = arith.addf %83, %82 : vector<8x128xf32>
    %85 = arith.divf %83, %84 : vector<8x128xf32>
    %86 = arith.mulf %77, %45 : vector<8x128xf32>
    %87 = arith.mulf %71, %79 : vector<8x128xf32>
    %88 = arith.addf %86, %87 : vector<8x128xf32>
    %89 = math.tanh %88 : vector<8x128xf32>
    %90 = arith.mulf %85, %89 : vector<8x128xf32>
    %91 = vector.broadcast %4 : vector<8x1xf32> to vector<8x128xf32>
    %92 = arith.mulf %90, %91 : vector<8x128xf32>
    %93 = vector.broadcast %11 : vector<8x1xf32> to vector<8x128xf32>
    %94 = arith.mulf %90, %93 : vector<8x128xf32>
    %95 = tpu.concatenate %92, %94 in 1 : vector<8x128xf32>, vector<8x128xf32> -> vector<8x256xf32>
    %96 = vector.extract_strided_slice %90 {offsets = [0, 0], sizes = [2, 128], strides = [1, 1]} : vector<8x128xf32> to vector<2x128xf32>
    %97 = vector.extract_strided_slice %90 {offsets = [2, 0], sizes = [2, 128], strides = [1, 1]} : vector<8x128xf32> to vector<2x128xf32>
    %c8_28 = arith.constant 8 : index
    %c0_29 = arith.constant 0 : index
    %98 = vector.load %arg27[%c8_28, %c0_29] : memref<64x512xf32, #tpu.memory_space<vmem>>, vector<2x128xf32>
    tpu.vector_store %arg27[%c8_28, %c0_29], %96 {strides = array<i32>} : memref<64x512xf32, #tpu.memory_space<vmem>>, vector<2x128xf32>,
    %c50 = arith.constant 50 : index
    %c256_30 = arith.constant 256 : index
    %99 = vector.load %arg27[%c50, %c256_30] : memref<64x512xf32, #tpu.memory_space<vmem>>, vector<2x128xf32>
    tpu.vector_store %arg27[%c50, %c256_30], %96 {strides = array<i32>} : memref<64x512xf32, #tpu.memory_space<vmem>>, vector<2x128xf32>,
    %c48 = arith.constant 48 : index
    %c128_31 = arith.constant 128 : index
    %100 = vector.load %arg27[%c48, %c128_31] : memref<64x512xf32, #tpu.memory_space<vmem>>, vector<2x128xf32>
    tpu.vector_store %arg27[%c48, %c128_31], %97 {strides = array<i32>} : memref<64x512xf32, #tpu.memory_space<vmem>>, vector<2x128xf32>,
    %c10 = arith.constant 10 : index
    %c384_32 = arith.constant 384 : index
    %101 = vector.load %arg27[%c10, %c384_32] : memref<64x512xf32, #tpu.memory_space<vmem>>, vector<2x128xf32>
    tpu.vector_store %arg27[%c10, %c384_32], %97 {strides = array<i32>} : memref<64x512xf32, #tpu.memory_space<vmem>>, vector<2x128xf32>,
    %c16 = arith.constant 16 : index
    %c0_33 = arith.constant 0 : index
    %102 = vector.load %arg26[%c16, %c0_33] : memref<64x512xf32, #tpu.memory_space<vmem>>, vector<8x512xf32>
    %c0_34 = arith.constant 0 : index
    %c0_35 = arith.constant 0 : index
    %103 = vector.load %arg2[%c0_34, %c0_35] : memref<8x512xf32, #tpu.memory_space<vmem>>, vector<8x512xf32>
    %104 = arith.addf %102, %103 : vector<8x512xf32>
    %105 = arith.truncf %95 : vector<8x256xf32> to vector<8x256xbf16>
    %c0_36 = arith.constant 0 : index
    %c0_37 = arith.constant 0 : index
    %106 = vector.load %arg3[%c0_36, %c0_37] : memref<256x512xbf16, #tpu.memory_space<vmem>>, vector<256x512xbf16>
    %cst_38 = arith.constant dense<0.000000e+00> : vector<8x512xf32>
    %107 = tpu.matmul %105, %106, %cst_38 {dimension_numbers = #tpu.dot_dimension_numbers<[1], [0], [0], [1], [0, 0, 1, 1], [], []>} : vector<8x256xbf16>, vector<256x512xbf16>, vector<8x512xf32> -> vector<8x512xf32>
    %108 = arith.addf %107, %104 : vector<8x512xf32>
    %109 = vector.extract_strided_slice %108 {offsets = [0, 0], sizes = [8, 128], strides = [1, 1]} : vector<8x512xf32> to vector<8x128xf32>
    %110 = arith.negf %109 : vector<8x128xf32>
    %111 = math.exp %110 : vector<8x128xf32>
    %cst_39 = arith.constant 1.000000e+00 : f32
    %112 = vector.broadcast %cst_39 : f32 to vector<8x128xf32>
    %113 = arith.addf %112, %111 : vector<8x128xf32>
    %114 = arith.divf %112, %113 : vector<8x128xf32>
    %115 = vector.extract_strided_slice %108 {offsets = [0, 128], sizes = [8, 128], strides = [1, 1]} : vector<8x512xf32> to vector<8x128xf32>
    %116 = arith.negf %115 : vector<8x128xf32>
    %117 = math.exp %116 : vector<8x128xf32>
    %cst_40 = arith.constant 1.000000e+00 : f32
    %118 = vector.broadcast %cst_40 : f32 to vector<8x128xf32>
    %119 = arith.addf %118, %117 : vector<8x128xf32>
    %120 = arith.divf %118, %119 : vector<8x128xf32>
    %121 = vector.extract_strided_slice %108 {offsets = [0, 256], sizes = [8, 128], strides = [1, 1]} : vector<8x512xf32> to vector<8x128xf32>
    %122 = math.tanh %121 : vector<8x128xf32>
    %123 = vector.extract_strided_slice %108 {offsets = [0, 384], sizes = [8, 128], strides = [1, 1]} : vector<8x512xf32> to vector<8x128xf32>
    %124 = arith.negf %123 : vector<8x128xf32>
    %125 = math.exp %124 : vector<8x128xf32>
    %cst_41 = arith.constant 1.000000e+00 : f32
    %126 = vector.broadcast %cst_41 : f32 to vector<8x128xf32>
    %127 = arith.addf %126, %125 : vector<8x128xf32>
    %128 = arith.divf %126, %127 : vector<8x128xf32>
    %129 = arith.mulf %120, %88 : vector<8x128xf32>
    %130 = arith.mulf %114, %122 : vector<8x128xf32>
    %131 = arith.addf %129, %130 : vector<8x128xf32>
    %132 = math.tanh %131 : vector<8x128xf32>
    %133 = arith.mulf %128, %132 : vector<8x128xf32>
    %134 = vector.broadcast %4 : vector<8x1xf32> to vector<8x128xf32>
    %135 = arith.mulf %133, %134 : vector<8x128xf32>
    %136 = vector.broadcast %11 : vector<8x1xf32> to vector<8x128xf32>
    %137 = arith.mulf %133, %136 : vector<8x128xf32>
    %138 = tpu.concatenate %135, %137 in 1 : vector<8x128xf32>, vector<8x128xf32> -> vector<8x256xf32>
    %139 = vector.extract_strided_slice %133 {offsets = [0, 0], sizes = [2, 128], strides = [1, 1]} : vector<8x128xf32> to vector<2x128xf32>
    %140 = vector.extract_strided_slice %133 {offsets = [2, 0], sizes = [2, 128], strides = [1, 1]} : vector<8x128xf32> to vector<2x128xf32>
    %c16_42 = arith.constant 16 : index
    %c0_43 = arith.constant 0 : index
    %141 = vector.load %arg27[%c16_42, %c0_43] : memref<64x512xf32, #tpu.memory_space<vmem>>, vector<2x128xf32>
    tpu.vector_store %arg27[%c16_42, %c0_43], %139 {strides = array<i32>} : memref<64x512xf32, #tpu.memory_space<vmem>>, vector<2x128xf32>,
    %c42 = arith.constant 42 : index
    %c256_44 = arith.constant 256 : index
    %142 = vector.load %arg27[%c42, %c256_44] : memref<64x512xf32, #tpu.memory_space<vmem>>, vector<2x128xf32>
    tpu.vector_store %arg27[%c42, %c256_44], %139 {strides = array<i32>} : memref<64x512xf32, #tpu.memory_space<vmem>>, vector<2x128xf32>,
    %c40 = arith.constant 40 : index
    %c128_45 = arith.constant 128 : index
    %143 = vector.load %arg27[%c40, %c128_45] : memref<64x512xf32, #tpu.memory_space<vmem>>, vector<2x128xf32>
    tpu.vector_store %arg27[%c40, %c128_45], %140 {strides = array<i32>} : memref<64x512xf32, #tpu.memory_space<vmem>>, vector<2x128xf32>,
    %c18 = arith.constant 18 : index
    %c384_46 = arith.constant 384 : index
    %144 = vector.load %arg27[%c18, %c384_46] : memref<64x512xf32, #tpu.memory_space<vmem>>, vector<2x128xf32>
    tpu.vector_store %arg27[%c18, %c384_46], %140 {strides = array<i32>} : memref<64x512xf32, #tpu.memory_space<vmem>>, vector<2x128xf32>,
    %c24 = arith.constant 24 : index
    %c0_47 = arith.constant 0 : index
    %145 = vector.load %arg26[%c24, %c0_47] : memref<64x512xf32, #tpu.memory_space<vmem>>, vector<8x512xf32>
    %c0_48 = arith.constant 0 : index
    %c0_49 = arith.constant 0 : index
    %146 = vector.load %arg2[%c0_48, %c0_49] : memref<8x512xf32, #tpu.memory_space<vmem>>, vector<8x512xf32>
    %147 = arith.addf %145, %146 : vector<8x512xf32>
    %148 = arith.truncf %138 : vector<8x256xf32> to vector<8x256xbf16>
    %c0_50 = arith.constant 0 : index
    %c0_51 = arith.constant 0 : index
    %149 = vector.load %arg3[%c0_50, %c0_51] : memref<256x512xbf16, #tpu.memory_space<vmem>>, vector<256x512xbf16>
    %cst_52 = arith.constant dense<0.000000e+00> : vector<8x512xf32>
    %150 = tpu.matmul %148, %149, %cst_52 {dimension_numbers = #tpu.dot_dimension_numbers<[1], [0], [0], [1], [0, 0, 1, 1], [], []>} : vector<8x256xbf16>, vector<256x512xbf16>, vector<8x512xf32> -> vector<8x512xf32>
    %151 = arith.addf %150, %147 : vector<8x512xf32>
    %152 = vector.extract_strided_slice %151 {offsets = [0, 0], sizes = [8, 128], strides = [1, 1]} : vector<8x512xf32> to vector<8x128xf32>
    %153 = arith.negf %152 : vector<8x128xf32>
    %154 = math.exp %153 : vector<8x128xf32>
    %cst_53 = arith.constant 1.000000e+00 : f32
    %155 = vector.broadcast %cst_53 : f32 to vector<8x128xf32>
    %156 = arith.addf %155, %154 : vector<8x128xf32>
    %157 = arith.divf %155, %156 : vector<8x128xf32>
    %158 = vector.extract_strided_slice %151 {offsets = [0, 128], sizes = [8, 128], strides = [1, 1]} : vector<8x512xf32> to vector<8x128xf32>
    %159 = arith.negf %158 : vector<8x128xf32>
    %160 = math.exp %159 : vector<8x128xf32>
    %cst_54 = arith.constant 1.000000e+00 : f32
    %161 = vector.broadcast %cst_54 : f32 to vector<8x128xf32>
    %162 = arith.addf %161, %160 : vector<8x128xf32>
    %163 = arith.divf %161, %162 : vector<8x128xf32>
    %164 = vector.extract_strided_slice %151 {offsets = [0, 256], sizes = [8, 128], strides = [1, 1]} : vector<8x512xf32> to vector<8x128xf32>
    %165 = math.tanh %164 : vector<8x128xf32>
    %166 = vector.extract_strided_slice %151 {offsets = [0, 384], sizes = [8, 128], strides = [1, 1]} : vector<8x512xf32> to vector<8x128xf32>
    %167 = arith.negf %166 : vector<8x128xf32>
    %168 = math.exp %167 : vector<8x128xf32>
    %cst_55 = arith.constant 1.000000e+00 : f32
    %169 = vector.broadcast %cst_55 : f32 to vector<8x128xf32>
    %170 = arith.addf %169, %168 : vector<8x128xf32>
    %171 = arith.divf %169, %170 : vector<8x128xf32>
    %172 = arith.mulf %163, %131 : vector<8x128xf32>
    %173 = arith.mulf %157, %165 : vector<8x128xf32>
    %174 = arith.addf %172, %173 : vector<8x128xf32>
    %175 = math.tanh %174 : vector<8x128xf32>
    %176 = arith.mulf %171, %175 : vector<8x128xf32>
    %177 = vector.broadcast %4 : vector<8x1xf32> to vector<8x128xf32>
    %178 = arith.mulf %176, %177 : vector<8x128xf32>
    %179 = vector.broadcast %11 : vector<8x1xf32> to vector<8x128xf32>
    %180 = arith.mulf %176, %179 : vector<8x128xf32>
    %181 = tpu.concatenate %178, %180 in 1 : vector<8x128xf32>, vector<8x128xf32> -> vector<8x256xf32>
    %182 = vector.extract_strided_slice %176 {offsets = [0, 0], sizes = [2, 128], strides = [1, 1]} : vector<8x128xf32> to vector<2x128xf32>
    %183 = vector.extract_strided_slice %176 {offsets = [2, 0], sizes = [2, 128], strides = [1, 1]} : vector<8x128xf32> to vector<2x128xf32>
    %c24_56 = arith.constant 24 : index
    %c0_57 = arith.constant 0 : index
    %184 = vector.load %arg27[%c24_56, %c0_57] : memref<64x512xf32, #tpu.memory_space<vmem>>, vector<2x128xf32>
    tpu.vector_store %arg27[%c24_56, %c0_57], %182 {strides = array<i32>} : memref<64x512xf32, #tpu.memory_space<vmem>>, vector<2x128xf32>,
    %c34 = arith.constant 34 : index
    %c256_58 = arith.constant 256 : index
    %185 = vector.load %arg27[%c34, %c256_58] : memref<64x512xf32, #tpu.memory_space<vmem>>, vector<2x128xf32>
    tpu.vector_store %arg27[%c34, %c256_58], %182 {strides = array<i32>} : memref<64x512xf32, #tpu.memory_space<vmem>>, vector<2x128xf32>,
    %c32 = arith.constant 32 : index
    %c128_59 = arith.constant 128 : index
    %186 = vector.load %arg27[%c32, %c128_59] : memref<64x512xf32, #tpu.memory_space<vmem>>, vector<2x128xf32>
    tpu.vector_store %arg27[%c32, %c128_59], %183 {strides = array<i32>} : memref<64x512xf32, #tpu.memory_space<vmem>>, vector<2x128xf32>,
    %c26 = arith.constant 26 : index
    %c384_60 = arith.constant 384 : index
    %187 = vector.load %arg27[%c26, %c384_60] : memref<64x512xf32, #tpu.memory_space<vmem>>, vector<2x128xf32>
    tpu.vector_store %arg27[%c26, %c384_60], %183 {strides = array<i32>} : memref<64x512xf32, #tpu.memory_space<vmem>>, vector<2x128xf32>,
    %c32_61 = arith.constant 32 : index
    %c0_62 = arith.constant 0 : index
    %188 = vector.load %arg26[%c32_61, %c0_62] : memref<64x512xf32, #tpu.memory_space<vmem>>, vector<8x512xf32>
    %c0_63 = arith.constant 0 : index
    %c0_64 = arith.constant 0 : index
    %189 = vector.load %arg2[%c0_63, %c0_64] : memref<8x512xf32, #tpu.memory_space<vmem>>, vector<8x512xf32>
    %190 = arith.addf %188, %189 : vector<8x512xf32>
    %191 = arith.truncf %181 : vector<8x256xf32> to vector<8x256xbf16>
    %c0_65 = arith.constant 0 : index
    %c0_66 = arith.constant 0 : index
    %192 = vector.load %arg3[%c0_65, %c0_66] : memref<256x512xbf16, #tpu.memory_space<vmem>>, vector<256x512xbf16>
    %cst_67 = arith.constant dense<0.000000e+00> : vector<8x512xf32>
    %193 = tpu.matmul %191, %192, %cst_67 {dimension_numbers = #tpu.dot_dimension_numbers<[1], [0], [0], [1], [0, 0, 1, 1], [], []>} : vector<8x256xbf16>, vector<256x512xbf16>, vector<8x512xf32> -> vector<8x512xf32>
    %194 = arith.addf %193, %190 : vector<8x512xf32>
    %195 = vector.extract_strided_slice %194 {offsets = [0, 0], sizes = [8, 128], strides = [1, 1]} : vector<8x512xf32> to vector<8x128xf32>
    %196 = arith.negf %195 : vector<8x128xf32>
    %197 = math.exp %196 : vector<8x128xf32>
    %cst_68 = arith.constant 1.000000e+00 : f32
    %198 = vector.broadcast %cst_68 : f32 to vector<8x128xf32>
    %199 = arith.addf %198, %197 : vector<8x128xf32>
    %200 = arith.divf %198, %199 : vector<8x128xf32>
    %201 = vector.extract_strided_slice %194 {offsets = [0, 128], sizes = [8, 128], strides = [1, 1]} : vector<8x512xf32> to vector<8x128xf32>
    %202 = arith.negf %201 : vector<8x128xf32>
    %203 = math.exp %202 : vector<8x128xf32>
    %cst_69 = arith.constant 1.000000e+00 : f32
    %204 = vector.broadcast %cst_69 : f32 to vector<8x128xf32>
    %205 = arith.addf %204, %203 : vector<8x128xf32>
    %206 = arith.divf %204, %205 : vector<8x128xf32>
    %207 = vector.extract_strided_slice %194 {offsets = [0, 256], sizes = [8, 128], strides = [1, 1]} : vector<8x512xf32> to vector<8x128xf32>
    %208 = math.tanh %207 : vector<8x128xf32>
    %209 = vector.extract_strided_slice %194 {offsets = [0, 384], sizes = [8, 128], strides = [1, 1]} : vector<8x512xf32> to vector<8x128xf32>
    %210 = arith.negf %209 : vector<8x128xf32>
    %211 = math.exp %210 : vector<8x128xf32>
    %cst_70 = arith.constant 1.000000e+00 : f32
    %212 = vector.broadcast %cst_70 : f32 to vector<8x128xf32>
    %213 = arith.addf %212, %211 : vector<8x128xf32>
    %214 = arith.divf %212, %213 : vector<8x128xf32>
    %215 = arith.mulf %206, %174 : vector<8x128xf32>
    %216 = arith.mulf %200, %208 : vector<8x128xf32>
    %217 = arith.addf %215, %216 : vector<8x128xf32>
    %218 = math.tanh %217 : vector<8x128xf32>
    %219 = arith.mulf %214, %218 : vector<8x128xf32>
    %220 = vector.broadcast %4 : vector<8x1xf32> to vector<8x128xf32>
    %221 = arith.mulf %219, %220 : vector<8x128xf32>
    %222 = vector.broadcast %11 : vector<8x1xf32> to vector<8x128xf32>
    %223 = arith.mulf %219, %222 : vector<8x128xf32>
    %224 = tpu.concatenate %221, %223 in 1 : vector<8x128xf32>, vector<8x128xf32> -> vector<8x256xf32>
    %225 = vector.extract_strided_slice %219 {offsets = [0, 0], sizes = [2, 128], strides = [1, 1]} : vector<8x128xf32> to vector<2x128xf32>
    %226 = vector.extract_strided_slice %219 {offsets = [2, 0], sizes = [2, 128], strides = [1, 1]} : vector<8x128xf32> to vector<2x128xf32>
    %c32_71 = arith.constant 32 : index
    %c0_72 = arith.constant 0 : index
    %227 = vector.load %arg27[%c32_71, %c0_72] : memref<64x512xf32, #tpu.memory_space<vmem>>, vector<2x128xf32>
    tpu.vector_store %arg27[%c32_71, %c0_72], %225 {strides = array<i32>} : memref<64x512xf32, #tpu.memory_space<vmem>>, vector<2x128xf32>,
    %c26_73 = arith.constant 26 : index
    %c256_74 = arith.constant 256 : index
    %228 = vector.load %arg27[%c26_73, %c256_74] : memref<64x512xf32, #tpu.memory_space<vmem>>, vector<2x128xf32>
    tpu.vector_store %arg27[%c26_73, %c256_74], %225 {strides = array<i32>} : memref<64x512xf32, #tpu.memory_space<vmem>>, vector<2x128xf32>,
    %c24_75 = arith.constant 24 : index
    %c128_76 = arith.constant 128 : index
    %229 = vector.load %arg27[%c24_75, %c128_76] : memref<64x512xf32, #tpu.memory_space<vmem>>, vector<2x128xf32>
    tpu.vector_store %arg27[%c24_75, %c128_76], %226 {strides = array<i32>} : memref<64x512xf32, #tpu.memory_space<vmem>>, vector<2x128xf32>,
    %c34_77 = arith.constant 34 : index
    %c384_78 = arith.constant 384 : index
    %230 = vector.load %arg27[%c34_77, %c384_78] : memref<64x512xf32, #tpu.memory_space<vmem>>, vector<2x128xf32>
    tpu.vector_store %arg27[%c34_77, %c384_78], %226 {strides = array<i32>} : memref<64x512xf32, #tpu.memory_space<vmem>>, vector<2x128xf32>,
    %c40_79 = arith.constant 40 : index
    %c0_80 = arith.constant 0 : index
    %231 = vector.load %arg26[%c40_79, %c0_80] : memref<64x512xf32, #tpu.memory_space<vmem>>, vector<8x512xf32>
    %c0_81 = arith.constant 0 : index
    %c0_82 = arith.constant 0 : index
    %232 = vector.load %arg2[%c0_81, %c0_82] : memref<8x512xf32, #tpu.memory_space<vmem>>, vector<8x512xf32>
    %233 = arith.addf %231, %232 : vector<8x512xf32>
    %234 = arith.truncf %224 : vector<8x256xf32> to vector<8x256xbf16>
    %c0_83 = arith.constant 0 : index
    %c0_84 = arith.constant 0 : index
    %235 = vector.load %arg3[%c0_83, %c0_84] : memref<256x512xbf16, #tpu.memory_space<vmem>>, vector<256x512xbf16>
    %cst_85 = arith.constant dense<0.000000e+00> : vector<8x512xf32>
    %236 = tpu.matmul %234, %235, %cst_85 {dimension_numbers = #tpu.dot_dimension_numbers<[1], [0], [0], [1], [0, 0, 1, 1], [], []>} : vector<8x256xbf16>, vector<256x512xbf16>, vector<8x512xf32> -> vector<8x512xf32>
    %237 = arith.addf %236, %233 : vector<8x512xf32>
    %238 = vector.extract_strided_slice %237 {offsets = [0, 0], sizes = [8, 128], strides = [1, 1]} : vector<8x512xf32> to vector<8x128xf32>
    %239 = arith.negf %238 : vector<8x128xf32>
    %240 = math.exp %239 : vector<8x128xf32>
    %cst_86 = arith.constant 1.000000e+00 : f32
    %241 = vector.broadcast %cst_86 : f32 to vector<8x128xf32>
    %242 = arith.addf %241, %240 : vector<8x128xf32>
    %243 = arith.divf %241, %242 : vector<8x128xf32>
    %244 = vector.extract_strided_slice %237 {offsets = [0, 128], sizes = [8, 128], strides = [1, 1]} : vector<8x512xf32> to vector<8x128xf32>
    %245 = arith.negf %244 : vector<8x128xf32>
    %246 = math.exp %245 : vector<8x128xf32>
    %cst_87 = arith.constant 1.000000e+00 : f32
    %247 = vector.broadcast %cst_87 : f32 to vector<8x128xf32>
    %248 = arith.addf %247, %246 : vector<8x128xf32>
    %249 = arith.divf %247, %248 : vector<8x128xf32>
    %250 = vector.extract_strided_slice %237 {offsets = [0, 256], sizes = [8, 128], strides = [1, 1]} : vector<8x512xf32> to vector<8x128xf32>
    %251 = math.tanh %250 : vector<8x128xf32>
    %252 = vector.extract_strided_slice %237 {offsets = [0, 384], sizes = [8, 128], strides = [1, 1]} : vector<8x512xf32> to vector<8x128xf32>
    %253 = arith.negf %252 : vector<8x128xf32>
    %254 = math.exp %253 : vector<8x128xf32>
    %cst_88 = arith.constant 1.000000e+00 : f32
    %255 = vector.broadcast %cst_88 : f32 to vector<8x128xf32>
    %256 = arith.addf %255, %254 : vector<8x128xf32>
    %257 = arith.divf %255, %256 : vector<8x128xf32>
    %258 = arith.mulf %249, %217 : vector<8x128xf32>
    %259 = arith.mulf %243, %251 : vector<8x128xf32>
    %260 = arith.addf %258, %259 : vector<8x128xf32>
    %261 = math.tanh %260 : vector<8x128xf32>
    %262 = arith.mulf %257, %261 : vector<8x128xf32>
    %263 = vector.broadcast %4 : vector<8x1xf32> to vector<8x128xf32>
    %264 = arith.mulf %262, %263 : vector<8x128xf32>
    %265 = vector.broadcast %11 : vector<8x1xf32> to vector<8x128xf32>
    %266 = arith.mulf %262, %265 : vector<8x128xf32>
    %267 = tpu.concatenate %264, %266 in 1 : vector<8x128xf32>, vector<8x128xf32> -> vector<8x256xf32>
    %268 = vector.extract_strided_slice %262 {offsets = [0, 0], sizes = [2, 128], strides = [1, 1]} : vector<8x128xf32> to vector<2x128xf32>
    %269 = vector.extract_strided_slice %262 {offsets = [2, 0], sizes = [2, 128], strides = [1, 1]} : vector<8x128xf32> to vector<2x128xf32>
    %c40_89 = arith.constant 40 : index
    %c0_90 = arith.constant 0 : index
    %270 = vector.load %arg27[%c40_89, %c0_90] : memref<64x512xf32, #tpu.memory_space<vmem>>, vector<2x128xf32>
    tpu.vector_store %arg27[%c40_89, %c0_90], %268 {strides = array<i32>} : memref<64x512xf32, #tpu.memory_space<vmem>>, vector<2x128xf32>,
    %c18_91 = arith.constant 18 : index
    %c256_92 = arith.constant 256 : index
    %271 = vector.load %arg27[%c18_91, %c256_92] : memref<64x512xf32, #tpu.memory_space<vmem>>, vector<2x128xf32>
    tpu.vector_store %arg27[%c18_91, %c256_92], %268 {strides = array<i32>} : memref<64x512xf32, #tpu.memory_space<vmem>>, vector<2x128xf32>,
    %c16_93 = arith.constant 16 : index
    %c128_94 = arith.constant 128 : index
    %272 = vector.load %arg27[%c16_93, %c128_94] : memref<64x512xf32, #tpu.memory_space<vmem>>, vector<2x128xf32>
    tpu.vector_store %arg27[%c16_93, %c128_94], %269 {strides = array<i32>} : memref<64x512xf32, #tpu.memory_space<vmem>>, vector<2x128xf32>,
    %c42_95 = arith.constant 42 : index
    %c384_96 = arith.constant 384 : index
    %273 = vector.load %arg27[%c42_95, %c384_96] : memref<64x512xf32, #tpu.memory_space<vmem>>, vector<2x128xf32>
    tpu.vector_store %arg27[%c42_95, %c384_96], %269 {strides = array<i32>} : memref<64x512xf32, #tpu.memory_space<vmem>>, vector<2x128xf32>,
    %c48_97 = arith.constant 48 : index
    %c0_98 = arith.constant 0 : index
    %274 = vector.load %arg26[%c48_97, %c0_98] : memref<64x512xf32, #tpu.memory_space<vmem>>, vector<8x512xf32>
    %c0_99 = arith.constant 0 : index
    %c0_100 = arith.constant 0 : index
    %275 = vector.load %arg2[%c0_99, %c0_100] : memref<8x512xf32, #tpu.memory_space<vmem>>, vector<8x512xf32>
    %276 = arith.addf %274, %275 : vector<8x512xf32>
    %277 = arith.truncf %267 : vector<8x256xf32> to vector<8x256xbf16>
    %c0_101 = arith.constant 0 : index
    %c0_102 = arith.constant 0 : index
    %278 = vector.load %arg3[%c0_101, %c0_102] : memref<256x512xbf16, #tpu.memory_space<vmem>>, vector<256x512xbf16>
    %cst_103 = arith.constant dense<0.000000e+00> : vector<8x512xf32>
    %279 = tpu.matmul %277, %278, %cst_103 {dimension_numbers = #tpu.dot_dimension_numbers<[1], [0], [0], [1], [0, 0, 1, 1], [], []>} : vector<8x256xbf16>, vector<256x512xbf16>, vector<8x512xf32> -> vector<8x512xf32>
    %280 = arith.addf %279, %276 : vector<8x512xf32>
    %281 = vector.extract_strided_slice %280 {offsets = [0, 0], sizes = [8, 128], strides = [1, 1]} : vector<8x512xf32> to vector<8x128xf32>
    %282 = arith.negf %281 : vector<8x128xf32>
    %283 = math.exp %282 : vector<8x128xf32>
    %cst_104 = arith.constant 1.000000e+00 : f32
    %284 = vector.broadcast %cst_104 : f32 to vector<8x128xf32>
    %285 = arith.addf %284, %283 : vector<8x128xf32>
    %286 = arith.divf %284, %285 : vector<8x128xf32>
    %287 = vector.extract_strided_slice %280 {offsets = [0, 128], sizes = [8, 128], strides = [1, 1]} : vector<8x512xf32> to vector<8x128xf32>
    %288 = arith.negf %287 : vector<8x128xf32>
    %289 = math.exp %288 : vector<8x128xf32>
    %cst_105 = arith.constant 1.000000e+00 : f32
    %290 = vector.broadcast %cst_105 : f32 to vector<8x128xf32>
    %291 = arith.addf %290, %289 : vector<8x128xf32>
    %292 = arith.divf %290, %291 : vector<8x128xf32>
    %293 = vector.extract_strided_slice %280 {offsets = [0, 256], sizes = [8, 128], strides = [1, 1]} : vector<8x512xf32> to vector<8x128xf32>
    %294 = math.tanh %293 : vector<8x128xf32>
    %295 = vector.extract_strided_slice %280 {offsets = [0, 384], sizes = [8, 128], strides = [1, 1]} : vector<8x512xf32> to vector<8x128xf32>
    %296 = arith.negf %295 : vector<8x128xf32>
    %297 = math.exp %296 : vector<8x128xf32>
    %cst_106 = arith.constant 1.000000e+00 : f32
    %298 = vector.broadcast %cst_106 : f32 to vector<8x128xf32>
    %299 = arith.addf %298, %297 : vector<8x128xf32>
    %300 = arith.divf %298, %299 : vector<8x128xf32>
    %301 = arith.mulf %292, %260 : vector<8x128xf32>
    %302 = arith.mulf %286, %294 : vector<8x128xf32>
    %303 = arith.addf %301, %302 : vector<8x128xf32>
    %304 = math.tanh %303 : vector<8x128xf32>
    %305 = arith.mulf %300, %304 : vector<8x128xf32>
    %306 = vector.broadcast %4 : vector<8x1xf32> to vector<8x128xf32>
    %307 = arith.mulf %305, %306 : vector<8x128xf32>
    %308 = vector.broadcast %11 : vector<8x1xf32> to vector<8x128xf32>
    %309 = arith.mulf %305, %308 : vector<8x128xf32>
    %310 = tpu.concatenate %307, %309 in 1 : vector<8x128xf32>, vector<8x128xf32> -> vector<8x256xf32>
    %311 = vector.extract_strided_slice %305 {offsets = [0, 0], sizes = [2, 128], strides = [1, 1]} : vector<8x128xf32> to vector<2x128xf32>
    %312 = vector.extract_strided_slice %305 {offsets = [2, 0], sizes = [2, 128], strides = [1, 1]} : vector<8x128xf32> to vector<2x128xf32>
    %c48_107 = arith.constant 48 : index
    %c0_108 = arith.constant 0 : index
    %313 = vector.load %arg27[%c48_107, %c0_108] : memref<64x512xf32, #tpu.memory_space<vmem>>, vector<2x128xf32>
    tpu.vector_store %arg27[%c48_107, %c0_108], %311 {strides = array<i32>} : memref<64x512xf32, #tpu.memory_space<vmem>>, vector<2x128xf32>,
    %c10_109 = arith.constant 10 : index
    %c256_110 = arith.constant 256 : index
    %314 = vector.load %arg27[%c10_109, %c256_110] : memref<64x512xf32, #tpu.memory_space<vmem>>, vector<2x128xf32>
    tpu.vector_store %arg27[%c10_109, %c256_110], %311 {strides = array<i32>} : memref<64x512xf32, #tpu.memory_space<vmem>>, vector<2x128xf32>,
    %c8_111 = arith.constant 8 : index
    %c128_112 = arith.constant 128 : index
    %315 = vector.load %arg27[%c8_111, %c128_112] : memref<64x512xf32, #tpu.memory_space<vmem>>, vector<2x128xf32>
    tpu.vector_store %arg27[%c8_111, %c128_112], %312 {strides = array<i32>} : memref<64x512xf32, #tpu.memory_space<vmem>>, vector<2x128xf32>,
    %c50_113 = arith.constant 50 : index
    %c384_114 = arith.constant 384 : index
    %316 = vector.load %arg27[%c50_113, %c384_114] : memref<64x512xf32, #tpu.memory_space<vmem>>, vector<2x128xf32>
    tpu.vector_store %arg27[%c50_113, %c384_114], %312 {strides = array<i32>} : memref<64x512xf32, #tpu.memory_space<vmem>>, vector<2x128xf32>,
    %c56_115 = arith.constant 56 : index
    %c0_116 = arith.constant 0 : index
    %317 = vector.load %arg26[%c56_115, %c0_116] : memref<64x512xf32, #tpu.memory_space<vmem>>, vector<8x512xf32>
    %c0_117 = arith.constant 0 : index
    %c0_118 = arith.constant 0 : index
    %318 = vector.load %arg2[%c0_117, %c0_118] : memref<8x512xf32, #tpu.memory_space<vmem>>, vector<8x512xf32>
    %319 = arith.addf %317, %318 : vector<8x512xf32>
    %320 = arith.truncf %310 : vector<8x256xf32> to vector<8x256xbf16>
    %c0_119 = arith.constant 0 : index
    %c0_120 = arith.constant 0 : index
    %321 = vector.load %arg3[%c0_119, %c0_120] : memref<256x512xbf16, #tpu.memory_space<vmem>>, vector<256x512xbf16>
    %cst_121 = arith.constant dense<0.000000e+00> : vector<8x512xf32>
    %322 = tpu.matmul %320, %321, %cst_121 {dimension_numbers = #tpu.dot_dimension_numbers<[1], [0], [0], [1], [0, 0, 1, 1], [], []>} : vector<8x256xbf16>, vector<256x512xbf16>, vector<8x512xf32> -> vector<8x512xf32>
    %323 = arith.addf %322, %319 : vector<8x512xf32>
    %324 = vector.extract_strided_slice %323 {offsets = [0, 0], sizes = [8, 128], strides = [1, 1]} : vector<8x512xf32> to vector<8x128xf32>
    %325 = arith.negf %324 : vector<8x128xf32>
    %326 = math.exp %325 : vector<8x128xf32>
    %cst_122 = arith.constant 1.000000e+00 : f32
    %327 = vector.broadcast %cst_122 : f32 to vector<8x128xf32>
    %328 = arith.addf %327, %326 : vector<8x128xf32>
    %329 = arith.divf %327, %328 : vector<8x128xf32>
    %330 = vector.extract_strided_slice %323 {offsets = [0, 128], sizes = [8, 128], strides = [1, 1]} : vector<8x512xf32> to vector<8x128xf32>
    %331 = arith.negf %330 : vector<8x128xf32>
    %332 = math.exp %331 : vector<8x128xf32>
    %cst_123 = arith.constant 1.000000e+00 : f32
    %333 = vector.broadcast %cst_123 : f32 to vector<8x128xf32>
    %334 = arith.addf %333, %332 : vector<8x128xf32>
    %335 = arith.divf %333, %334 : vector<8x128xf32>
    %336 = vector.extract_strided_slice %323 {offsets = [0, 256], sizes = [8, 128], strides = [1, 1]} : vector<8x512xf32> to vector<8x128xf32>
    %337 = math.tanh %336 : vector<8x128xf32>
    %338 = vector.extract_strided_slice %323 {offsets = [0, 384], sizes = [8, 128], strides = [1, 1]} : vector<8x512xf32> to vector<8x128xf32>
    %339 = arith.negf %338 : vector<8x128xf32>
    %340 = math.exp %339 : vector<8x128xf32>
    %cst_124 = arith.constant 1.000000e+00 : f32
    %341 = vector.broadcast %cst_124 : f32 to vector<8x128xf32>
    %342 = arith.addf %341, %340 : vector<8x128xf32>
    %343 = arith.divf %341, %342 : vector<8x128xf32>
    %344 = arith.mulf %335, %303 : vector<8x128xf32>
    %345 = arith.mulf %329, %337 : vector<8x128xf32>
    %346 = arith.addf %344, %345 : vector<8x128xf32>
    %347 = math.tanh %346 : vector<8x128xf32>
    %348 = arith.mulf %343, %347 : vector<8x128xf32>
    %349 = vector.extract_strided_slice %348 {offsets = [0, 0], sizes = [2, 128], strides = [1, 1]} : vector<8x128xf32> to vector<2x128xf32>
    %350 = vector.extract_strided_slice %348 {offsets = [2, 0], sizes = [2, 128], strides = [1, 1]} : vector<8x128xf32> to vector<2x128xf32>
    %c56_125 = arith.constant 56 : index
    %c0_126 = arith.constant 0 : index
    %351 = vector.load %arg27[%c56_125, %c0_126] : memref<64x512xf32, #tpu.memory_space<vmem>>, vector<2x128xf32>
    tpu.vector_store %arg27[%c56_125, %c0_126], %349 {strides = array<i32>} : memref<64x512xf32, #tpu.memory_space<vmem>>, vector<2x128xf32>,
    %c2_127 = arith.constant 2 : index
    %c256_128 = arith.constant 256 : index
    %352 = vector.load %arg27[%c2_127, %c256_128] : memref<64x512xf32, #tpu.memory_space<vmem>>, vector<2x128xf32>
    tpu.vector_store %arg27[%c2_127, %c256_128], %349 {strides = array<i32>} : memref<64x512xf32, #tpu.memory_space<vmem>>, vector<2x128xf32>,
    %c0_129 = arith.constant 0 : index
    %c128_130 = arith.constant 128 : index
    %353 = vector.load %arg27[%c0_129, %c128_130] : memref<64x512xf32, #tpu.memory_space<vmem>>, vector<2x128xf32>
    tpu.vector_store %arg27[%c0_129, %c128_130], %350 {strides = array<i32>} : memref<64x512xf32, #tpu.memory_space<vmem>>, vector<2x128xf32>,
    %c58_131 = arith.constant 58 : index
    %c384_132 = arith.constant 384 : index
    %354 = vector.load %arg27[%c58_131, %c384_132] : memref<64x512xf32, #tpu.memory_space<vmem>>, vector<2x128xf32>
    tpu.vector_store %arg27[%c58_131, %c384_132], %350 {strides = array<i32>} : memref<64x512xf32, #tpu.memory_space<vmem>>, vector<2x128xf32>,
    %c0_133 = arith.constant 0 : index
    %c0_134 = arith.constant 0 : index
    %355 = vector.load %arg22[%c0_133, %c0_134] : memref<8x128xf32, #tpu.memory_space<vmem>>, vector<8x128xf32>
    tpu.vector_store %arg22[%c0_133, %c0_134], %348 {strides = array<i32>} : memref<8x128xf32, #tpu.memory_space<vmem>>, vector<8x128xf32>,
    %c0_135 = arith.constant 0 : index
    %c0_136 = arith.constant 0 : index
    %356 = vector.load %arg23[%c0_135, %c0_136] : memref<8x128xf32, #tpu.memory_space<vmem>>, vector<8x128xf32>
    tpu.vector_store %arg23[%c0_135, %c0_136], %346 {strides = array<i32>} : memref<8x128xf32, #tpu.memory_space<vmem>>, vector<8x128xf32>,
    %c0_137 = arith.constant 0 : index
    %c0_138 = arith.constant 0 : index
    %357 = vector.load %arg27[%c0_137, %c0_138] : memref<64x512xf32, #tpu.memory_space<vmem>>, vector<64x512xf32>
    %358 = arith.truncf %357 : vector<64x512xf32> to vector<64x512xbf16>
    %c0_139 = arith.constant 0 : index
    %c0_140 = arith.constant 0 : index
    %359 = vector.load %arg4[%c0_139, %c0_140] : memref<512x512xbf16, #tpu.memory_space<vmem>>, vector<512x512xbf16>
    %cst_141 = arith.constant dense<0.000000e+00> : vector<64x512xf32>
    %360 = tpu.matmul %358, %359, %cst_141 {dimension_numbers = #tpu.dot_dimension_numbers<[1], [0], [0], [1], [0, 0, 1, 1], [], []>} : vector<64x512xbf16>, vector<512x512xbf16>, vector<64x512xf32> -> vector<64x512xf32>
    %c0_142 = arith.constant 0 : index
    %c0_143 = arith.constant 0 : index
    %361 = vector.load %arg26[%c0_142, %c0_143] : memref<64x512xf32, #tpu.memory_space<vmem>>, vector<64x512xf32>
    tpu.vector_store %arg26[%c0_142, %c0_143], %360 {strides = array<i32>} : memref<64x512xf32, #tpu.memory_space<vmem>>, vector<64x512xf32>,
    %cst_144 = arith.constant 0.000000e+00 : f32
    %362 = vector.broadcast %cst_144 : f32 to vector<8x128xf32>
    %c0_145 = arith.constant 0 : index
    %c0_146 = arith.constant 0 : index
    %363 = vector.load %arg26[%c0_145, %c0_146] : memref<64x512xf32, #tpu.memory_space<vmem>>, vector<8x512xf32>
    %c0_147 = arith.constant 0 : index
    %c0_148 = arith.constant 0 : index
    %364 = vector.load %arg5[%c0_147, %c0_148] : memref<8x512xf32, #tpu.memory_space<vmem>>, vector<8x512xf32>
    %365 = arith.addf %363, %364 : vector<8x512xf32>
    %366 = vector.extract_strided_slice %365 {offsets = [0, 0], sizes = [8, 128], strides = [1, 1]} : vector<8x512xf32> to vector<8x128xf32>
    %367 = arith.negf %366 : vector<8x128xf32>
    %368 = math.exp %367 : vector<8x128xf32>
    %cst_149 = arith.constant 1.000000e+00 : f32
    %369 = vector.broadcast %cst_149 : f32 to vector<8x128xf32>
    %370 = arith.addf %369, %368 : vector<8x128xf32>
    %371 = arith.divf %369, %370 : vector<8x128xf32>
    %372 = vector.extract_strided_slice %365 {offsets = [0, 128], sizes = [8, 128], strides = [1, 1]} : vector<8x512xf32> to vector<8x128xf32>
    %373 = arith.negf %372 : vector<8x128xf32>
    %374 = math.exp %373 : vector<8x128xf32>
    %cst_150 = arith.constant 1.000000e+00 : f32
    %375 = vector.broadcast %cst_150 : f32 to vector<8x128xf32>
    %376 = arith.addf %375, %374 : vector<8x128xf32>
    %377 = arith.divf %375, %376 : vector<8x128xf32>
    %378 = vector.extract_strided_slice %365 {offsets = [0, 256], sizes = [8, 128], strides = [1, 1]} : vector<8x512xf32> to vector<8x128xf32>
    %379 = math.tanh %378 : vector<8x128xf32>
    %380 = vector.extract_strided_slice %365 {offsets = [0, 384], sizes = [8, 128], strides = [1, 1]} : vector<8x512xf32> to vector<8x128xf32>
    %381 = arith.negf %380 : vector<8x128xf32>
    %382 = math.exp %381 : vector<8x128xf32>
    %cst_151 = arith.constant 1.000000e+00 : f32
    %383 = vector.broadcast %cst_151 : f32 to vector<8x128xf32>
    %384 = arith.addf %383, %382 : vector<8x128xf32>
    %385 = arith.divf %383, %384 : vector<8x128xf32>
    %386 = arith.mulf %377, %362 : vector<8x128xf32>
    %387 = arith.mulf %371, %379 : vector<8x128xf32>
    %388 = arith.addf %386, %387 : vector<8x128xf32>
    %389 = math.tanh %388 : vector<8x128xf32>
    %390 = arith.mulf %385, %389 : vector<8x128xf32>
    %391 = vector.broadcast %4 : vector<8x1xf32> to vector<8x128xf32>
    %392 = arith.mulf %390, %391 : vector<8x128xf32>
    %393 = vector.broadcast %11 : vector<8x1xf32> to vector<8x128xf32>
    %394 = arith.mulf %390, %393 : vector<8x128xf32>
    %395 = tpu.concatenate %392, %394 in 1 : vector<8x128xf32>, vector<8x128xf32> -> vector<8x256xf32>
    %396 = vector.extract_strided_slice %390 {offsets = [0, 0], sizes = [2, 128], strides = [1, 1]} : vector<8x128xf32> to vector<2x128xf32>
    %c0_152 = arith.constant 0 : index
    %c0_153 = arith.constant 0 : index
    %397 = vector.load %arg28[%c0_152, %c0_153] : memref<16x256xf32, #tpu.memory_space<vmem>>, vector<2x128xf32>
    tpu.vector_store %arg28[%c0_152, %c0_153], %396 {strides = array<i32>} : memref<16x256xf32, #tpu.memory_space<vmem>>, vector<2x128xf32>,
    %398 = vector.extract_strided_slice %390 {offsets = [2, 0], sizes = [2, 128], strides = [1, 1]} : vector<8x128xf32> to vector<2x128xf32>
    %c14 = arith.constant 14 : index
    %c128_154 = arith.constant 128 : index
    %399 = vector.load %arg28[%c14, %c128_154] : memref<16x256xf32, #tpu.memory_space<vmem>>, vector<2x128xf32>
    tpu.vector_store %arg28[%c14, %c128_154], %398 {strides = array<i32>} : memref<16x256xf32, #tpu.memory_space<vmem>>, vector<2x128xf32>,
    %c8_155 = arith.constant 8 : index
    %c0_156 = arith.constant 0 : index
    %400 = vector.load %arg26[%c8_155, %c0_156] : memref<64x512xf32, #tpu.memory_space<vmem>>, vector<8x512xf32>
    %c0_157 = arith.constant 0 : index
    %c0_158 = arith.constant 0 : index
    %401 = vector.load %arg5[%c0_157, %c0_158] : memref<8x512xf32, #tpu.memory_space<vmem>>, vector<8x512xf32>
    %402 = arith.addf %400, %401 : vector<8x512xf32>
    %403 = arith.truncf %395 : vector<8x256xf32> to vector<8x256xbf16>
    %c0_159 = arith.constant 0 : index
    %c0_160 = arith.constant 0 : index
    %404 = vector.load %arg6[%c0_159, %c0_160] : memref<256x512xbf16, #tpu.memory_space<vmem>>, vector<256x512xbf16>
    %cst_161 = arith.constant dense<0.000000e+00> : vector<8x512xf32>
    %405 = tpu.matmul %403, %404, %cst_161 {dimension_numbers = #tpu.dot_dimension_numbers<[1], [0], [0], [1], [0, 0, 1, 1], [], []>} : vector<8x256xbf16>, vector<256x512xbf16>, vector<8x512xf32> -> vector<8x512xf32>
    %406 = arith.addf %405, %402 : vector<8x512xf32>
    %407 = vector.extract_strided_slice %406 {offsets = [0, 0], sizes = [8, 128], strides = [1, 1]} : vector<8x512xf32> to vector<8x128xf32>
    %408 = arith.negf %407 : vector<8x128xf32>
    %409 = math.exp %408 : vector<8x128xf32>
    %cst_162 = arith.constant 1.000000e+00 : f32
    %410 = vector.broadcast %cst_162 : f32 to vector<8x128xf32>
    %411 = arith.addf %410, %409 : vector<8x128xf32>
    %412 = arith.divf %410, %411 : vector<8x128xf32>
    %413 = vector.extract_strided_slice %406 {offsets = [0, 128], sizes = [8, 128], strides = [1, 1]} : vector<8x512xf32> to vector<8x128xf32>
    %414 = arith.negf %413 : vector<8x128xf32>
    %415 = math.exp %414 : vector<8x128xf32>
    %cst_163 = arith.constant 1.000000e+00 : f32
    %416 = vector.broadcast %cst_163 : f32 to vector<8x128xf32>
    %417 = arith.addf %416, %415 : vector<8x128xf32>
    %418 = arith.divf %416, %417 : vector<8x128xf32>
    %419 = vector.extract_strided_slice %406 {offsets = [0, 256], sizes = [8, 128], strides = [1, 1]} : vector<8x512xf32> to vector<8x128xf32>
    %420 = math.tanh %419 : vector<8x128xf32>
    %421 = vector.extract_strided_slice %406 {offsets = [0, 384], sizes = [8, 128], strides = [1, 1]} : vector<8x512xf32> to vector<8x128xf32>
    %422 = arith.negf %421 : vector<8x128xf32>
    %423 = math.exp %422 : vector<8x128xf32>
    %cst_164 = arith.constant 1.000000e+00 : f32
    %424 = vector.broadcast %cst_164 : f32 to vector<8x128xf32>
    %425 = arith.addf %424, %423 : vector<8x128xf32>
    %426 = arith.divf %424, %425 : vector<8x128xf32>
    %427 = arith.mulf %418, %388 : vector<8x128xf32>
    %428 = arith.mulf %412, %420 : vector<8x128xf32>
    %429 = arith.addf %427, %428 : vector<8x128xf32>
    %430 = math.tanh %429 : vector<8x128xf32>
    %431 = arith.mulf %426, %430 : vector<8x128xf32>
    %432 = vector.broadcast %4 : vector<8x1xf32> to vector<8x128xf32>
    %433 = arith.mulf %431, %432 : vector<8x128xf32>
    %434 = vector.broadcast %11 : vector<8x1xf32> to vector<8x128xf32>
    %435 = arith.mulf %431, %434 : vector<8x128xf32>
    %436 = tpu.concatenate %433, %435 in 1 : vector<8x128xf32>, vector<8x128xf32> -> vector<8x256xf32>
    %437 = vector.extract_strided_slice %431 {offsets = [0, 0], sizes = [2, 128], strides = [1, 1]} : vector<8x128xf32> to vector<2x128xf32>
    %c2_165 = arith.constant 2 : index
    %c0_166 = arith.constant 0 : index
    %438 = vector.load %arg28[%c2_165, %c0_166] : memref<16x256xf32, #tpu.memory_space<vmem>>, vector<2x128xf32>
    tpu.vector_store %arg28[%c2_165, %c0_166], %437 {strides = array<i32>} : memref<16x256xf32, #tpu.memory_space<vmem>>, vector<2x128xf32>,
    %439 = vector.extract_strided_slice %431 {offsets = [2, 0], sizes = [2, 128], strides = [1, 1]} : vector<8x128xf32> to vector<2x128xf32>
    %c12 = arith.constant 12 : index
    %c128_167 = arith.constant 128 : index
    %440 = vector.load %arg28[%c12, %c128_167] : memref<16x256xf32, #tpu.memory_space<vmem>>, vector<2x128xf32>
    tpu.vector_store %arg28[%c12, %c128_167], %439 {strides = array<i32>} : memref<16x256xf32, #tpu.memory_space<vmem>>, vector<2x128xf32>,
    %c16_168 = arith.constant 16 : index
    %c0_169 = arith.constant 0 : index
    %441 = vector.load %arg26[%c16_168, %c0_169] : memref<64x512xf32, #tpu.memory_space<vmem>>, vector<8x512xf32>
    %c0_170 = arith.constant 0 : index
    %c0_171 = arith.constant 0 : index
    %442 = vector.load %arg5[%c0_170, %c0_171] : memref<8x512xf32, #tpu.memory_space<vmem>>, vector<8x512xf32>
    %443 = arith.addf %441, %442 : vector<8x512xf32>
    %444 = arith.truncf %436 : vector<8x256xf32> to vector<8x256xbf16>
    %c0_172 = arith.constant 0 : index
    %c0_173 = arith.constant 0 : index
    %445 = vector.load %arg6[%c0_172, %c0_173] : memref<256x512xbf16, #tpu.memory_space<vmem>>, vector<256x512xbf16>
    %cst_174 = arith.constant dense<0.000000e+00> : vector<8x512xf32>
    %446 = tpu.matmul %444, %445, %cst_174 {dimension_numbers = #tpu.dot_dimension_numbers<[1], [0], [0], [1], [0, 0, 1, 1], [], []>} : vector<8x256xbf16>, vector<256x512xbf16>, vector<8x512xf32> -> vector<8x512xf32>
    %447 = arith.addf %446, %443 : vector<8x512xf32>
    %448 = vector.extract_strided_slice %447 {offsets = [0, 0], sizes = [8, 128], strides = [1, 1]} : vector<8x512xf32> to vector<8x128xf32>
    %449 = arith.negf %448 : vector<8x128xf32>
    %450 = math.exp %449 : vector<8x128xf32>
    %cst_175 = arith.constant 1.000000e+00 : f32
    %451 = vector.broadcast %cst_175 : f32 to vector<8x128xf32>
    %452 = arith.addf %451, %450 : vector<8x128xf32>
    %453 = arith.divf %451, %452 : vector<8x128xf32>
    %454 = vector.extract_strided_slice %447 {offsets = [0, 128], sizes = [8, 128], strides = [1, 1]} : vector<8x512xf32> to vector<8x128xf32>
    %455 = arith.negf %454 : vector<8x128xf32>
    %456 = math.exp %455 : vector<8x128xf32>
    %cst_176 = arith.constant 1.000000e+00 : f32
    %457 = vector.broadcast %cst_176 : f32 to vector<8x128xf32>
    %458 = arith.addf %457, %456 : vector<8x128xf32>
    %459 = arith.divf %457, %458 : vector<8x128xf32>
    %460 = vector.extract_strided_slice %447 {offsets = [0, 256], sizes = [8, 128], strides = [1, 1]} : vector<8x512xf32> to vector<8x128xf32>
    %461 = math.tanh %460 : vector<8x128xf32>
    %462 = vector.extract_strided_slice %447 {offsets = [0, 384], sizes = [8, 128], strides = [1, 1]} : vector<8x512xf32> to vector<8x128xf32>
    %463 = arith.negf %462 : vector<8x128xf32>
    %464 = math.exp %463 : vector<8x128xf32>
    %cst_177 = arith.constant 1.000000e+00 : f32
    %465 = vector.broadcast %cst_177 : f32 to vector<8x128xf32>
    %466 = arith.addf %465, %464 : vector<8x128xf32>
    %467 = arith.divf %465, %466 : vector<8x128xf32>
    %468 = arith.mulf %459, %429 : vector<8x128xf32>
    %469 = arith.mulf %453, %461 : vector<8x128xf32>
    %470 = arith.addf %468, %469 : vector<8x128xf32>
    %471 = math.tanh %470 : vector<8x128xf32>
    %472 = arith.mulf %467, %471 : vector<8x128xf32>
    %473 = vector.broadcast %4 : vector<8x1xf32> to vector<8x128xf32>
    %474 = arith.mulf %472, %473 : vector<8x128xf32>
    %475 = vector.broadcast %11 : vector<8x1xf32> to vector<8x128xf32>
    %476 = arith.mulf %472, %475 : vector<8x128xf32>
    %477 = tpu.concatenate %474, %476 in 1 : vector<8x128xf32>, vector<8x128xf32> -> vector<8x256xf32>
    %478 = vector.extract_strided_slice %472 {offsets = [0, 0], sizes = [2, 128], strides = [1, 1]} : vector<8x128xf32> to vector<2x128xf32>
    %c4 = arith.constant 4 : index
    %c0_178 = arith.constant 0 : index
    %479 = vector.load %arg28[%c4, %c0_178] : memref<16x256xf32, #tpu.memory_space<vmem>>, vector<2x128xf32>
    tpu.vector_store %arg28[%c4, %c0_178], %478 {strides = array<i32>} : memref<16x256xf32, #tpu.memory_space<vmem>>, vector<2x128xf32>,
    %480 = vector.extract_strided_slice %472 {offsets = [2, 0], sizes = [2, 128], strides = [1, 1]} : vector<8x128xf32> to vector<2x128xf32>
    %c10_179 = arith.constant 10 : index
    %c128_180 = arith.constant 128 : index
    %481 = vector.load %arg28[%c10_179, %c128_180] : memref<16x256xf32, #tpu.memory_space<vmem>>, vector<2x128xf32>
    tpu.vector_store %arg28[%c10_179, %c128_180], %480 {strides = array<i32>} : memref<16x256xf32, #tpu.memory_space<vmem>>, vector<2x128xf32>,
    %c24_181 = arith.constant 24 : index
    %c0_182 = arith.constant 0 : index
    %482 = vector.load %arg26[%c24_181, %c0_182] : memref<64x512xf32, #tpu.memory_space<vmem>>, vector<8x512xf32>
    %c0_183 = arith.constant 0 : index
    %c0_184 = arith.constant 0 : index
    %483 = vector.load %arg5[%c0_183, %c0_184] : memref<8x512xf32, #tpu.memory_space<vmem>>, vector<8x512xf32>
    %484 = arith.addf %482, %483 : vector<8x512xf32>
    %485 = arith.truncf %477 : vector<8x256xf32> to vector<8x256xbf16>
    %c0_185 = arith.constant 0 : index
    %c0_186 = arith.constant 0 : index
    %486 = vector.load %arg6[%c0_185, %c0_186] : memref<256x512xbf16, #tpu.memory_space<vmem>>, vector<256x512xbf16>
    %cst_187 = arith.constant dense<0.000000e+00> : vector<8x512xf32>
    %487 = tpu.matmul %485, %486, %cst_187 {dimension_numbers = #tpu.dot_dimension_numbers<[1], [0], [0], [1], [0, 0, 1, 1], [], []>} : vector<8x256xbf16>, vector<256x512xbf16>, vector<8x512xf32> -> vector<8x512xf32>
    %488 = arith.addf %487, %484 : vector<8x512xf32>
    %489 = vector.extract_strided_slice %488 {offsets = [0, 0], sizes = [8, 128], strides = [1, 1]} : vector<8x512xf32> to vector<8x128xf32>
    %490 = arith.negf %489 : vector<8x128xf32>
    %491 = math.exp %490 : vector<8x128xf32>
    %cst_188 = arith.constant 1.000000e+00 : f32
    %492 = vector.broadcast %cst_188 : f32 to vector<8x128xf32>
    %493 = arith.addf %492, %491 : vector<8x128xf32>
    %494 = arith.divf %492, %493 : vector<8x128xf32>
    %495 = vector.extract_strided_slice %488 {offsets = [0, 128], sizes = [8, 128], strides = [1, 1]} : vector<8x512xf32> to vector<8x128xf32>
    %496 = arith.negf %495 : vector<8x128xf32>
    %497 = math.exp %496 : vector<8x128xf32>
    %cst_189 = arith.constant 1.000000e+00 : f32
    %498 = vector.broadcast %cst_189 : f32 to vector<8x128xf32>
    %499 = arith.addf %498, %497 : vector<8x128xf32>
    %500 = arith.divf %498, %499 : vector<8x128xf32>
    %501 = vector.extract_strided_slice %488 {offsets = [0, 256], sizes = [8, 128], strides = [1, 1]} : vector<8x512xf32> to vector<8x128xf32>
    %502 = math.tanh %501 : vector<8x128xf32>
    %503 = vector.extract_strided_slice %488 {offsets = [0, 384], sizes = [8, 128], strides = [1, 1]} : vector<8x512xf32> to vector<8x128xf32>
    %504 = arith.negf %503 : vector<8x128xf32>
    %505 = math.exp %504 : vector<8x128xf32>
    %cst_190 = arith.constant 1.000000e+00 : f32
    %506 = vector.broadcast %cst_190 : f32 to vector<8x128xf32>
    %507 = arith.addf %506, %505 : vector<8x128xf32>
    %508 = arith.divf %506, %507 : vector<8x128xf32>
    %509 = arith.mulf %500, %470 : vector<8x128xf32>
    %510 = arith.mulf %494, %502 : vector<8x128xf32>
    %511 = arith.addf %509, %510 : vector<8x128xf32>
    %512 = math.tanh %511 : vector<8x128xf32>
    %513 = arith.mulf %508, %512 : vector<8x128xf32>
    %514 = vector.broadcast %4 : vector<8x1xf32> to vector<8x128xf32>
    %515 = arith.mulf %513, %514 : vector<8x128xf32>
    %516 = vector.broadcast %11 : vector<8x1xf32> to vector<8x128xf32>
    %517 = arith.mulf %513, %516 : vector<8x128xf32>
    %518 = tpu.concatenate %515, %517 in 1 : vector<8x128xf32>, vector<8x128xf32> -> vector<8x256xf32>
    %519 = vector.extract_strided_slice %513 {offsets = [0, 0], sizes = [2, 128], strides = [1, 1]} : vector<8x128xf32> to vector<2x128xf32>
    %c6 = arith.constant 6 : index
    %c0_191 = arith.constant 0 : index
    %520 = vector.load %arg28[%c6, %c0_191] : memref<16x256xf32, #tpu.memory_space<vmem>>, vector<2x128xf32>
    tpu.vector_store %arg28[%c6, %c0_191], %519 {strides = array<i32>} : memref<16x256xf32, #tpu.memory_space<vmem>>, vector<2x128xf32>,
    %521 = vector.extract_strided_slice %513 {offsets = [2, 0], sizes = [2, 128], strides = [1, 1]} : vector<8x128xf32> to vector<2x128xf32>
    %c8_192 = arith.constant 8 : index
    %c128_193 = arith.constant 128 : index
    %522 = vector.load %arg28[%c8_192, %c128_193] : memref<16x256xf32, #tpu.memory_space<vmem>>, vector<2x128xf32>
    tpu.vector_store %arg28[%c8_192, %c128_193], %521 {strides = array<i32>} : memref<16x256xf32, #tpu.memory_space<vmem>>, vector<2x128xf32>,
    %c32_194 = arith.constant 32 : index
    %c0_195 = arith.constant 0 : index
    %523 = vector.load %arg26[%c32_194, %c0_195] : memref<64x512xf32, #tpu.memory_space<vmem>>, vector<8x512xf32>
    %c0_196 = arith.constant 0 : index
    %c0_197 = arith.constant 0 : index
    %524 = vector.load %arg5[%c0_196, %c0_197] : memref<8x512xf32, #tpu.memory_space<vmem>>, vector<8x512xf32>
    %525 = arith.addf %523, %524 : vector<8x512xf32>
    %526 = arith.truncf %518 : vector<8x256xf32> to vector<8x256xbf16>
    %c0_198 = arith.constant 0 : index
    %c0_199 = arith.constant 0 : index
    %527 = vector.load %arg6[%c0_198, %c0_199] : memref<256x512xbf16, #tpu.memory_space<vmem>>, vector<256x512xbf16>
    %cst_200 = arith.constant dense<0.000000e+00> : vector<8x512xf32>
    %528 = tpu.matmul %526, %527, %cst_200 {dimension_numbers = #tpu.dot_dimension_numbers<[1], [0], [0], [1], [0, 0, 1, 1], [], []>} : vector<8x256xbf16>, vector<256x512xbf16>, vector<8x512xf32> -> vector<8x512xf32>
    %529 = arith.addf %528, %525 : vector<8x512xf32>
    %530 = vector.extract_strided_slice %529 {offsets = [0, 0], sizes = [8, 128], strides = [1, 1]} : vector<8x512xf32> to vector<8x128xf32>
    %531 = arith.negf %530 : vector<8x128xf32>
    %532 = math.exp %531 : vector<8x128xf32>
    %cst_201 = arith.constant 1.000000e+00 : f32
    %533 = vector.broadcast %cst_201 : f32 to vector<8x128xf32>
    %534 = arith.addf %533, %532 : vector<8x128xf32>
    %535 = arith.divf %533, %534 : vector<8x128xf32>
    %536 = vector.extract_strided_slice %529 {offsets = [0, 128], sizes = [8, 128], strides = [1, 1]} : vector<8x512xf32> to vector<8x128xf32>
    %537 = arith.negf %536 : vector<8x128xf32>
    %538 = math.exp %537 : vector<8x128xf32>
    %cst_202 = arith.constant 1.000000e+00 : f32
    %539 = vector.broadcast %cst_202 : f32 to vector<8x128xf32>
    %540 = arith.addf %539, %538 : vector<8x128xf32>
    %541 = arith.divf %539, %540 : vector<8x128xf32>
    %542 = vector.extract_strided_slice %529 {offsets = [0, 256], sizes = [8, 128], strides = [1, 1]} : vector<8x512xf32> to vector<8x128xf32>
    %543 = math.tanh %542 : vector<8x128xf32>
    %544 = vector.extract_strided_slice %529 {offsets = [0, 384], sizes = [8, 128], strides = [1, 1]} : vector<8x512xf32> to vector<8x128xf32>
    %545 = arith.negf %544 : vector<8x128xf32>
    %546 = math.exp %545 : vector<8x128xf32>
    %cst_203 = arith.constant 1.000000e+00 : f32
    %547 = vector.broadcast %cst_203 : f32 to vector<8x128xf32>
    %548 = arith.addf %547, %546 : vector<8x128xf32>
    %549 = arith.divf %547, %548 : vector<8x128xf32>
    %550 = arith.mulf %541, %511 : vector<8x128xf32>
    %551 = arith.mulf %535, %543 : vector<8x128xf32>
    %552 = arith.addf %550, %551 : vector<8x128xf32>
    %553 = math.tanh %552 : vector<8x128xf32>
    %554 = arith.mulf %549, %553 : vector<8x128xf32>
    %555 = vector.broadcast %4 : vector<8x1xf32> to vector<8x128xf32>
    %556 = arith.mulf %554, %555 : vector<8x128xf32>
    %557 = vector.broadcast %11 : vector<8x1xf32> to vector<8x128xf32>
    %558 = arith.mulf %554, %557 : vector<8x128xf32>
    %559 = tpu.concatenate %556, %558 in 1 : vector<8x128xf32>, vector<8x128xf32> -> vector<8x256xf32>
    %560 = vector.extract_strided_slice %554 {offsets = [0, 0], sizes = [2, 128], strides = [1, 1]} : vector<8x128xf32> to vector<2x128xf32>
    %c8_204 = arith.constant 8 : index
    %c0_205 = arith.constant 0 : index
    %561 = vector.load %arg28[%c8_204, %c0_205] : memref<16x256xf32, #tpu.memory_space<vmem>>, vector<2x128xf32>
    tpu.vector_store %arg28[%c8_204, %c0_205], %560 {strides = array<i32>} : memref<16x256xf32, #tpu.memory_space<vmem>>, vector<2x128xf32>,
    %562 = vector.extract_strided_slice %554 {offsets = [2, 0], sizes = [2, 128], strides = [1, 1]} : vector<8x128xf32> to vector<2x128xf32>
    %c6_206 = arith.constant 6 : index
    %c128_207 = arith.constant 128 : index
    %563 = vector.load %arg28[%c6_206, %c128_207] : memref<16x256xf32, #tpu.memory_space<vmem>>, vector<2x128xf32>
    tpu.vector_store %arg28[%c6_206, %c128_207], %562 {strides = array<i32>} : memref<16x256xf32, #tpu.memory_space<vmem>>, vector<2x128xf32>,
    %c40_208 = arith.constant 40 : index
    %c0_209 = arith.constant 0 : index
    %564 = vector.load %arg26[%c40_208, %c0_209] : memref<64x512xf32, #tpu.memory_space<vmem>>, vector<8x512xf32>
    %c0_210 = arith.constant 0 : index
    %c0_211 = arith.constant 0 : index
    %565 = vector.load %arg5[%c0_210, %c0_211] : memref<8x512xf32, #tpu.memory_space<vmem>>, vector<8x512xf32>
    %566 = arith.addf %564, %565 : vector<8x512xf32>
    %567 = arith.truncf %559 : vector<8x256xf32> to vector<8x256xbf16>
    %c0_212 = arith.constant 0 : index
    %c0_213 = arith.constant 0 : index
    %568 = vector.load %arg6[%c0_212, %c0_213] : memref<256x512xbf16, #tpu.memory_space<vmem>>, vector<256x512xbf16>
    %cst_214 = arith.constant dense<0.000000e+00> : vector<8x512xf32>
    %569 = tpu.matmul %567, %568, %cst_214 {dimension_numbers = #tpu.dot_dimension_numbers<[1], [0], [0], [1], [0, 0, 1, 1], [], []>} : vector<8x256xbf16>, vector<256x512xbf16>, vector<8x512xf32> -> vector<8x512xf32>
    %570 = arith.addf %569, %566 : vector<8x512xf32>
    %571 = vector.extract_strided_slice %570 {offsets = [0, 0], sizes = [8, 128], strides = [1, 1]} : vector<8x512xf32> to vector<8x128xf32>
    %572 = arith.negf %571 : vector<8x128xf32>
    %573 = math.exp %572 : vector<8x128xf32>
    %cst_215 = arith.constant 1.000000e+00 : f32
    %574 = vector.broadcast %cst_215 : f32 to vector<8x128xf32>
    %575 = arith.addf %574, %573 : vector<8x128xf32>
    %576 = arith.divf %574, %575 : vector<8x128xf32>
    %577 = vector.extract_strided_slice %570 {offsets = [0, 128], sizes = [8, 128], strides = [1, 1]} : vector<8x512xf32> to vector<8x128xf32>
    %578 = arith.negf %577 : vector<8x128xf32>
    %579 = math.exp %578 : vector<8x128xf32>
    %cst_216 = arith.constant 1.000000e+00 : f32
    %580 = vector.broadcast %cst_216 : f32 to vector<8x128xf32>
    %581 = arith.addf %580, %579 : vector<8x128xf32>
    %582 = arith.divf %580, %581 : vector<8x128xf32>
    %583 = vector.extract_strided_slice %570 {offsets = [0, 256], sizes = [8, 128], strides = [1, 1]} : vector<8x512xf32> to vector<8x128xf32>
    %584 = math.tanh %583 : vector<8x128xf32>
    %585 = vector.extract_strided_slice %570 {offsets = [0, 384], sizes = [8, 128], strides = [1, 1]} : vector<8x512xf32> to vector<8x128xf32>
    %586 = arith.negf %585 : vector<8x128xf32>
    %587 = math.exp %586 : vector<8x128xf32>
    %cst_217 = arith.constant 1.000000e+00 : f32
    %588 = vector.broadcast %cst_217 : f32 to vector<8x128xf32>
    %589 = arith.addf %588, %587 : vector<8x128xf32>
    %590 = arith.divf %588, %589 : vector<8x128xf32>
    %591 = arith.mulf %582, %552 : vector<8x128xf32>
    %592 = arith.mulf %576, %584 : vector<8x128xf32>
    %593 = arith.addf %591, %592 : vector<8x128xf32>
    %594 = math.tanh %593 : vector<8x128xf32>
    %595 = arith.mulf %590, %594 : vector<8x128xf32>
    %596 = vector.broadcast %4 : vector<8x1xf32> to vector<8x128xf32>
    %597 = arith.mulf %595, %596 : vector<8x128xf32>
    %598 = vector.broadcast %11 : vector<8x1xf32> to vector<8x128xf32>
    %599 = arith.mulf %595, %598 : vector<8x128xf32>
    %600 = tpu.concatenate %597, %599 in 1 : vector<8x128xf32>, vector<8x128xf32> -> vector<8x256xf32>
    %601 = vector.extract_strided_slice %595 {offsets = [0, 0], sizes = [2, 128], strides = [1, 1]} : vector<8x128xf32> to vector<2x128xf32>
    %c10_218 = arith.constant 10 : index
    %c0_219 = arith.constant 0 : index
    %602 = vector.load %arg28[%c10_218, %c0_219] : memref<16x256xf32, #tpu.memory_space<vmem>>, vector<2x128xf32>
    tpu.vector_store %arg28[%c10_218, %c0_219], %601 {strides = array<i32>} : memref<16x256xf32, #tpu.memory_space<vmem>>, vector<2x128xf32>,
    %603 = vector.extract_strided_slice %595 {offsets = [2, 0], sizes = [2, 128], strides = [1, 1]} : vector<8x128xf32> to vector<2x128xf32>
    %c4_220 = arith.constant 4 : index
    %c128_221 = arith.constant 128 : index
    %604 = vector.load %arg28[%c4_220, %c128_221] : memref<16x256xf32, #tpu.memory_space<vmem>>, vector<2x128xf32>
    tpu.vector_store %arg28[%c4_220, %c128_221], %603 {strides = array<i32>} : memref<16x256xf32, #tpu.memory_space<vmem>>, vector<2x128xf32>,
    %c48_222 = arith.constant 48 : index
    %c0_223 = arith.constant 0 : index
    %605 = vector.load %arg26[%c48_222, %c0_223] : memref<64x512xf32, #tpu.memory_space<vmem>>, vector<8x512xf32>
    %c0_224 = arith.constant 0 : index
    %c0_225 = arith.constant 0 : index
    %606 = vector.load %arg5[%c0_224, %c0_225] : memref<8x512xf32, #tpu.memory_space<vmem>>, vector<8x512xf32>
    %607 = arith.addf %605, %606 : vector<8x512xf32>
    %608 = arith.truncf %600 : vector<8x256xf32> to vector<8x256xbf16>
    %c0_226 = arith.constant 0 : index
    %c0_227 = arith.constant 0 : index
    %609 = vector.load %arg6[%c0_226, %c0_227] : memref<256x512xbf16, #tpu.memory_space<vmem>>, vector<256x512xbf16>
    %cst_228 = arith.constant dense<0.000000e+00> : vector<8x512xf32>
    %610 = tpu.matmul %608, %609, %cst_228 {dimension_numbers = #tpu.dot_dimension_numbers<[1], [0], [0], [1], [0, 0, 1, 1], [], []>} : vector<8x256xbf16>, vector<256x512xbf16>, vector<8x512xf32> -> vector<8x512xf32>
    %611 = arith.addf %610, %607 : vector<8x512xf32>
    %612 = vector.extract_strided_slice %611 {offsets = [0, 0], sizes = [8, 128], strides = [1, 1]} : vector<8x512xf32> to vector<8x128xf32>
    %613 = arith.negf %612 : vector<8x128xf32>
    %614 = math.exp %613 : vector<8x128xf32>
    %cst_229 = arith.constant 1.000000e+00 : f32
    %615 = vector.broadcast %cst_229 : f32 to vector<8x128xf32>
    %616 = arith.addf %615, %614 : vector<8x128xf32>
    %617 = arith.divf %615, %616 : vector<8x128xf32>
    %618 = vector.extract_strided_slice %611 {offsets = [0, 128], sizes = [8, 128], strides = [1, 1]} : vector<8x512xf32> to vector<8x128xf32>
    %619 = arith.negf %618 : vector<8x128xf32>
    %620 = math.exp %619 : vector<8x128xf32>
    %cst_230 = arith.constant 1.000000e+00 : f32
    %621 = vector.broadcast %cst_230 : f32 to vector<8x128xf32>
    %622 = arith.addf %621, %620 : vector<8x128xf32>
    %623 = arith.divf %621, %622 : vector<8x128xf32>
    %624 = vector.extract_strided_slice %611 {offsets = [0, 256], sizes = [8, 128], strides = [1, 1]} : vector<8x512xf32> to vector<8x128xf32>
    %625 = math.tanh %624 : vector<8x128xf32>
    %626 = vector.extract_strided_slice %611 {offsets = [0, 384], sizes = [8, 128], strides = [1, 1]} : vector<8x512xf32> to vector<8x128xf32>
    %627 = arith.negf %626 : vector<8x128xf32>
    %628 = math.exp %627 : vector<8x128xf32>
    %cst_231 = arith.constant 1.000000e+00 : f32
    %629 = vector.broadcast %cst_231 : f32 to vector<8x128xf32>
    %630 = arith.addf %629, %628 : vector<8x128xf32>
    %631 = arith.divf %629, %630 : vector<8x128xf32>
    %632 = arith.mulf %623, %593 : vector<8x128xf32>
    %633 = arith.mulf %617, %625 : vector<8x128xf32>
    %634 = arith.addf %632, %633 : vector<8x128xf32>
    %635 = math.tanh %634 : vector<8x128xf32>
    %636 = arith.mulf %631, %635 : vector<8x128xf32>
    %637 = vector.broadcast %4 : vector<8x1xf32> to vector<8x128xf32>
    %638 = arith.mulf %636, %637 : vector<8x128xf32>
    %639 = vector.broadcast %11 : vector<8x1xf32> to vector<8x128xf32>
    %640 = arith.mulf %636, %639 : vector<8x128xf32>
    %641 = tpu.concatenate %638, %640 in 1 : vector<8x128xf32>, vector<8x128xf32> -> vector<8x256xf32>
    %642 = vector.extract_strided_slice %636 {offsets = [0, 0], sizes = [2, 128], strides = [1, 1]} : vector<8x128xf32> to vector<2x128xf32>
    %c12_232 = arith.constant 12 : index
    %c0_233 = arith.constant 0 : index
    %643 = vector.load %arg28[%c12_232, %c0_233] : memref<16x256xf32, #tpu.memory_space<vmem>>, vector<2x128xf32>
    tpu.vector_store %arg28[%c12_232, %c0_233], %642 {strides = array<i32>} : memref<16x256xf32, #tpu.memory_space<vmem>>, vector<2x128xf32>,
    %644 = vector.extract_strided_slice %636 {offsets = [2, 0], sizes = [2, 128], strides = [1, 1]} : vector<8x128xf32> to vector<2x128xf32>
    %c2_234 = arith.constant 2 : index
    %c128_235 = arith.constant 128 : index
    %645 = vector.load %arg28[%c2_234, %c128_235] : memref<16x256xf32, #tpu.memory_space<vmem>>, vector<2x128xf32>
    tpu.vector_store %arg28[%c2_234, %c128_235], %644 {strides = array<i32>} : memref<16x256xf32, #tpu.memory_space<vmem>>, vector<2x128xf32>,
    %c56_236 = arith.constant 56 : index
    %c0_237 = arith.constant 0 : index
    %646 = vector.load %arg26[%c56_236, %c0_237] : memref<64x512xf32, #tpu.memory_space<vmem>>, vector<8x512xf32>
    %c0_238 = arith.constant 0 : index
    %c0_239 = arith.constant 0 : index
    %647 = vector.load %arg5[%c0_238, %c0_239] : memref<8x512xf32, #tpu.memory_space<vmem>>, vector<8x512xf32>
    %648 = arith.addf %646, %647 : vector<8x512xf32>
    %649 = arith.truncf %641 : vector<8x256xf32> to vector<8x256xbf16>
    %c0_240 = arith.constant 0 : index
    %c0_241 = arith.constant 0 : index
    %650 = vector.load %arg6[%c0_240, %c0_241] : memref<256x512xbf16, #tpu.memory_space<vmem>>, vector<256x512xbf16>
    %cst_242 = arith.constant dense<0.000000e+00> : vector<8x512xf32>
    %651 = tpu.matmul %649, %650, %cst_242 {dimension_numbers = #tpu.dot_dimension_numbers<[1], [0], [0], [1], [0, 0, 1, 1], [], []>} : vector<8x256xbf16>, vector<256x512xbf16>, vector<8x512xf32> -> vector<8x512xf32>
    %652 = arith.addf %651, %648 : vector<8x512xf32>
    %653 = vector.extract_strided_slice %652 {offsets = [0, 0], sizes = [8, 128], strides = [1, 1]} : vector<8x512xf32> to vector<8x128xf32>
    %654 = arith.negf %653 : vector<8x128xf32>
    %655 = math.exp %654 : vector<8x128xf32>
    %cst_243 = arith.constant 1.000000e+00 : f32
    %656 = vector.broadcast %cst_243 : f32 to vector<8x128xf32>
    %657 = arith.addf %656, %655 : vector<8x128xf32>
    %658 = arith.divf %656, %657 : vector<8x128xf32>
    %659 = vector.extract_strided_slice %652 {offsets = [0, 128], sizes = [8, 128], strides = [1, 1]} : vector<8x512xf32> to vector<8x128xf32>
    %660 = arith.negf %659 : vector<8x128xf32>
    %661 = math.exp %660 : vector<8x128xf32>
    %cst_244 = arith.constant 1.000000e+00 : f32
    %662 = vector.broadcast %cst_244 : f32 to vector<8x128xf32>
    %663 = arith.addf %662, %661 : vector<8x128xf32>
    %664 = arith.divf %662, %663 : vector<8x128xf32>
    %665 = vector.extract_strided_slice %652 {offsets = [0, 256], sizes = [8, 128], strides = [1, 1]} : vector<8x512xf32> to vector<8x128xf32>
    %666 = math.tanh %665 : vector<8x128xf32>
    %667 = vector.extract_strided_slice %652 {offsets = [0, 384], sizes = [8, 128], strides = [1, 1]} : vector<8x512xf32> to vector<8x128xf32>
    %668 = arith.negf %667 : vector<8x128xf32>
    %669 = math.exp %668 : vector<8x128xf32>
    %cst_245 = arith.constant 1.000000e+00 : f32
    %670 = vector.broadcast %cst_245 : f32 to vector<8x128xf32>
    %671 = arith.addf %670, %669 : vector<8x128xf32>
    %672 = arith.divf %670, %671 : vector<8x128xf32>
    %673 = arith.mulf %664, %634 : vector<8x128xf32>
    %674 = arith.mulf %658, %666 : vector<8x128xf32>
    %675 = arith.addf %673, %674 : vector<8x128xf32>
    %676 = math.tanh %675 : vector<8x128xf32>
    %677 = arith.mulf %672, %676 : vector<8x128xf32>
    %678 = vector.extract_strided_slice %677 {offsets = [0, 0], sizes = [2, 128], strides = [1, 1]} : vector<8x128xf32> to vector<2x128xf32>
    %c14_246 = arith.constant 14 : index
    %c0_247 = arith.constant 0 : index
    %679 = vector.load %arg28[%c14_246, %c0_247] : memref<16x256xf32, #tpu.memory_space<vmem>>, vector<2x128xf32>
    tpu.vector_store %arg28[%c14_246, %c0_247], %678 {strides = array<i32>} : memref<16x256xf32, #tpu.memory_space<vmem>>, vector<2x128xf32>,
    %680 = vector.extract_strided_slice %677 {offsets = [2, 0], sizes = [2, 128], strides = [1, 1]} : vector<8x128xf32> to vector<2x128xf32>
    %c0_248 = arith.constant 0 : index
    %c128_249 = arith.constant 128 : index
    %681 = vector.load %arg28[%c0_248, %c128_249] : memref<16x256xf32, #tpu.memory_space<vmem>>, vector<2x128xf32>
    tpu.vector_store %arg28[%c0_248, %c128_249], %680 {strides = array<i32>} : memref<16x256xf32, #tpu.memory_space<vmem>>, vector<2x128xf32>,
    %c0_250 = arith.constant 0 : index
    %c0_251 = arith.constant 0 : index
    %682 = vector.load %arg24[%c0_250, %c0_251] : memref<8x128xf32, #tpu.memory_space<vmem>>, vector<8x128xf32>
    tpu.vector_store %arg24[%c0_250, %c0_251], %677 {strides = array<i32>} : memref<8x128xf32, #tpu.memory_space<vmem>>, vector<8x128xf32>,
    %c0_252 = arith.constant 0 : index
    %c0_253 = arith.constant 0 : index
    %683 = vector.load %arg25[%c0_252, %c0_253] : memref<8x128xf32, #tpu.memory_space<vmem>>, vector<8x128xf32>
    tpu.vector_store %arg25[%c0_252, %c0_253], %675 {strides = array<i32>} : memref<8x128xf32, #tpu.memory_space<vmem>>, vector<8x128xf32>,
    %c0_254 = arith.constant 0 : index
    %c0_255 = arith.constant 0 : index
    %684 = vector.load %arg28[%c0_254, %c0_255] : memref<16x256xf32, #tpu.memory_space<vmem>>, vector<16x256xf32>
    %685 = arith.truncf %684 : vector<16x256xf32> to vector<16x256xbf16>
    %c0_256 = arith.constant 0 : index
    %c0_257 = arith.constant 0 : index
    %686 = vector.load %arg7[%c0_256, %c0_257] : memref<256x384xbf16, #tpu.memory_space<vmem>>, vector<256x384xbf16>
    %cst_258 = arith.constant dense<0.000000e+00> : vector<16x384xf32>
    %687 = tpu.matmul %685, %686, %cst_258 {dimension_numbers = #tpu.dot_dimension_numbers<[1], [0], [0], [1], [0, 0, 1, 1], [], []>} : vector<16x256xbf16>, vector<256x384xbf16>, vector<16x384xf32> -> vector<16x384xf32>
    %c0_259 = arith.constant 0 : index
    %c0_260 = arith.constant 0 : index
    %688 = vector.load %arg8[%c0_259, %c0_260] : memref<1x384xf32, #tpu.memory_space<vmem>>, vector<1x384xf32>
    %689 = vector.broadcast %688 : vector<1x384xf32> to vector<16x384xf32>
    %690 = arith.addf %687, %689 : vector<16x384xf32>
    %691 = vector.extract_strided_slice %690 {offsets = [0, 0], sizes = [16, 128], strides = [1, 1]} : vector<16x384xf32> to vector<16x128xf32>
    %692 = vector.extract_strided_slice %690 {offsets = [0, 128], sizes = [16, 128], strides = [1, 1]} : vector<16x384xf32> to vector<16x128xf32>
    %693 = vector.extract_strided_slice %690 {offsets = [0, 256], sizes = [16, 128], strides = [1, 1]} : vector<16x384xf32> to vector<16x128xf32>
    %c0_261 = arith.constant 0 : index
    %c0_262 = arith.constant 0 : index
    %694 = vector.load %arg9[%c0_261, %c0_262] : memref<16x16xf32, #tpu.memory_space<vmem>>, vector<16x16xf32>
    %cst_263 = arith.constant dense<0.000000e+00> : vector<16x128xf32>
    %695 = tpu.matmul %694, %691, %cst_263 {dimension_numbers = #tpu.dot_dimension_numbers<[1], [0], [0], [1], [0, 0, 1, 1], [], []>} : vector<16x16xf32>, vector<16x128xf32>, vector<16x128xf32> -> vector<16x128xf32>
    %696 = arith.mulf %692, %695 : vector<16x128xf32>
    %c0_264 = arith.constant 0 : index
    %c0_265 = arith.constant 0 : index
    %697 = vector.load %arg10[%c0_264, %c0_265] : memref<128x128xf32, #tpu.memory_space<vmem>>, vector<128x128xf32>
    %cst_266 = arith.constant dense<0.000000e+00> : vector<16x128xf32>
    %698 = tpu.matmul %696, %697, %cst_266 {dimension_numbers = #tpu.dot_dimension_numbers<[1], [0], [0], [1], [0, 0, 1, 1], [], []>} : vector<16x128xf32>, vector<128x128xf32>, vector<16x128xf32> -> vector<16x128xf32>
    %cst_267 = arith.constant dense<0xFF800000> : vector<128xf32>
    %699 = vector.multi_reduction <maximumf>, %698, %cst_267 [0] : vector<16x128xf32> to vector<128xf32>
    %700 = vector.shape_cast %699 : vector<128xf32> to vector<1x128xf32>
    %701 = vector.broadcast %700 : vector<1x128xf32> to vector<16x128xf32>
    %702 = arith.subf %698, %701 : vector<16x128xf32>
    %703 = math.exp %702 : vector<16x128xf32>
    %c0_268 = arith.constant 0 : index
    %c0_269 = arith.constant 0 : index
    %704 = vector.load %arg11[%c0_268, %c0_269] : memref<128x128xf32, #tpu.memory_space<vmem>>, vector<128x128xf32>
    %cst_270 = arith.constant dense<0.000000e+00> : vector<16x128xf32>
    %705 = tpu.matmul %703, %704, %cst_270 {dimension_numbers = #tpu.dot_dimension_numbers<[1], [0], [0], [1], [0, 0, 1, 1], [], []>} : vector<16x128xf32>, vector<128x128xf32>, vector<16x128xf32> -> vector<16x128xf32>
    %706 = arith.mulf %705, %693 : vector<16x128xf32>
    %707 = tpu.concatenate %703, %706 in 1 : vector<16x128xf32>, vector<16x128xf32> -> vector<16x256xf32>
    %c0_271 = arith.constant 0 : index
    %c0_272 = arith.constant 0 : index
    %708 = vector.load %arg12[%c0_271, %c0_272] : memref<8x16xf32, #tpu.memory_space<vmem>>, vector<8x16xf32>
    %cst_273 = arith.constant dense<0.000000e+00> : vector<8x256xf32>
    %709 = tpu.matmul %708, %707, %cst_273 {dimension_numbers = #tpu.dot_dimension_numbers<[1], [0], [0], [1], [0, 0, 1, 1], [], []>} : vector<8x16xf32>, vector<16x256xf32>, vector<8x256xf32> -> vector<8x256xf32>
    %710 = vector.extract_strided_slice %709 {offsets = [0, 0], sizes = [8, 128], strides = [1, 1]} : vector<8x256xf32> to vector<8x128xf32>
    %c0_274 = arith.constant 0 : index
    %c0_275 = arith.constant 0 : index
    %711 = vector.load %arg11[%c0_274, %c0_275] : memref<128x128xf32, #tpu.memory_space<vmem>>, vector<128x128xf32>
    %cst_276 = arith.constant dense<0.000000e+00> : vector<8x128xf32>
    %712 = tpu.matmul %710, %711, %cst_276 {dimension_numbers = #tpu.dot_dimension_numbers<[1], [0], [0], [1], [0, 0, 1, 1], [], []>} : vector<8x128xf32>, vector<128x128xf32>, vector<8x128xf32> -> vector<8x128xf32>
    %cst_277 = arith.constant 9.99999968E-21 : f32
    %713 = vector.broadcast %cst_277 : f32 to vector<8x128xf32>
    %714 = arith.maximumf %712, %713 : vector<8x128xf32>
    %715 = vector.extract_strided_slice %709 {offsets = [0, 128], sizes = [8, 128], strides = [1, 1]} : vector<8x256xf32> to vector<8x128xf32>
    %716 = tpu.reciprocal %714 {approx = true} : vector<8x128xf32> -> vector<8x128xf32>
    %717 = arith.mulf %715, %716 : vector<8x128xf32>
    %718 = arith.truncf %717 : vector<8x128xf32> to vector<8x128xbf16>
    %c0_278 = arith.constant 0 : index
    %c0_279 = arith.constant 0 : index
    %719 = vector.load %arg13[%c0_278, %c0_279] : memref<128x128xbf16, #tpu.memory_space<vmem>>, vector<128x128xbf16>
    %cst_280 = arith.constant dense<0.000000e+00> : vector<8x128xf32>
    %720 = tpu.matmul %718, %719, %cst_280 {dimension_numbers = #tpu.dot_dimension_numbers<[1], [0], [0], [1], [0, 0, 1, 1], [], []>} : vector<8x128xbf16>, vector<128x128xbf16>, vector<8x128xf32> -> vector<8x128xf32>
    %c0_281 = arith.constant 0 : index
    %c0_282 = arith.constant 0 : index
    %721 = vector.load %arg14[%c0_281, %c0_282] : memref<1x128xf32, #tpu.memory_space<vmem>>, vector<1x128xf32>
    %722 = vector.broadcast %721 : vector<1x128xf32> to vector<8x128xf32>
    %723 = arith.addf %720, %722 : vector<8x128xf32>
    %724 = arith.truncf %723 : vector<8x128xf32> to vector<8x128xbf16>
    %c0_283 = arith.constant 0 : index
    %c0_284 = arith.constant 0 : index
    %725 = vector.load %arg15[%c0_283, %c0_284] : memref<128x128xbf16, #tpu.memory_space<vmem>>, vector<128x128xbf16>
    %cst_285 = arith.constant dense<0.000000e+00> : vector<8x128xf32>
    %726 = tpu.matmul %724, %725, %cst_285 {dimension_numbers = #tpu.dot_dimension_numbers<[1], [0], [0], [1], [0, 0, 1, 1], [], []>} : vector<8x128xbf16>, vector<128x128xbf16>, vector<8x128xf32> -> vector<8x128xf32>
    %c0_286 = arith.constant 0 : index
    %c0_287 = arith.constant 0 : index
    %727 = vector.load %arg16[%c0_286, %c0_287] : memref<1x128xf32, #tpu.memory_space<vmem>>, vector<1x128xf32>
    %728 = vector.broadcast %727 : vector<1x128xf32> to vector<8x128xf32>
    %729 = arith.addf %726, %728 : vector<8x128xf32>
    %cst_288 = arith.constant 0.000000e+00 : f32
    %730 = vector.broadcast %cst_288 : f32 to vector<8x128xf32>
    %731 = arith.maximumf %729, %730 : vector<8x128xf32>
    %732 = arith.truncf %731 : vector<8x128xf32> to vector<8x128xbf16>
    %c0_289 = arith.constant 0 : index
    %c0_290 = arith.constant 0 : index
    %733 = vector.load %arg17[%c0_289, %c0_290] : memref<128x128xbf16, #tpu.memory_space<vmem>>, vector<128x128xbf16>
    %cst_291 = arith.constant dense<0.000000e+00> : vector<8x128xf32>
    %734 = tpu.matmul %732, %733, %cst_291 {dimension_numbers = #tpu.dot_dimension_numbers<[1], [0], [0], [1], [0, 0, 1, 1], [], []>} : vector<8x128xbf16>, vector<128x128xbf16>, vector<8x128xf32> -> vector<8x128xf32>
    %c0_292 = arith.constant 0 : index
    %c0_293 = arith.constant 0 : index
    %735 = vector.load %arg18[%c0_292, %c0_293] : memref<1x128xf32, #tpu.memory_space<vmem>>, vector<1x128xf32>
    %736 = vector.broadcast %735 : vector<1x128xf32> to vector<8x128xf32>
    %737 = arith.addf %734, %736 : vector<8x128xf32>
    %cst_294 = arith.constant 0.000000e+00 : f32
    %738 = vector.broadcast %cst_294 : f32 to vector<8x128xf32>
    %739 = arith.maximumf %737, %738 : vector<8x128xf32>
    %740 = arith.truncf %739 : vector<8x128xf32> to vector<8x128xbf16>
    %c0_295 = arith.constant 0 : index
    %c0_296 = arith.constant 0 : index
    %741 = vector.load %arg19[%c0_295, %c0_296] : memref<128x128xbf16, #tpu.memory_space<vmem>>, vector<128x128xbf16>
    %cst_297 = arith.constant dense<0.000000e+00> : vector<8x128xf32>
    %742 = tpu.matmul %740, %741, %cst_297 {dimension_numbers = #tpu.dot_dimension_numbers<[1], [0], [0], [1], [0, 0, 1, 1], [], []>} : vector<8x128xbf16>, vector<128x128xbf16>, vector<8x128xf32> -> vector<8x128xf32>
    %c0_298 = arith.constant 0 : index
    %c0_299 = arith.constant 0 : index
    %743 = vector.load %arg20[%c0_298, %c0_299] : memref<1x128xf32, #tpu.memory_space<vmem>>, vector<1x128xf32>
    %744 = vector.broadcast %743 : vector<1x128xf32> to vector<8x128xf32>
    %745 = arith.addf %742, %744 : vector<8x128xf32>
    %c0_300 = arith.constant 0 : index
    %c0_301 = arith.constant 0 : index
    %746 = vector.load %arg21[%c0_300, %c0_301] : memref<8x128xf32, #tpu.memory_space<vmem>>, vector<8x128xf32>
    tpu.vector_store %arg21[%c0_300, %c0_301], %745 {strides = array<i32>} : memref<8x128xf32, #tpu.memory_space<vmem>>, vector<8x128xf32>,
    return
  }
}

</mosaic_0001>

<llo_original>
// kernel: attention_bilstm_forward.1
$region0: #{attention_bilstm_forward.1}
  #allocation0 [shape = 'u32[]', space=smem, size = 0x4, offset = 0x4, fixed_abs, tag = 'smem constant byte address 0x4 - core index']
  #allocation1 [shape = 'u32[144,128]{1,0:T(1,128)}', space=vmem, size = 0x12000, scoped, tag = 'internal scratch']
  #allocation2 [shape = 'f32[64,512]{1,0:T(8,128)}', space=vmem, size = 0x20000, scoped, tag = 'scratch operand']
  #allocation3 [shape = 'f32[64,512]{1,0:T(8,128)}', space=vmem, size = 0x20000, scoped, tag = 'scratch operand']
  #allocation4 [shape = 'f32[16,256]{1,0:T(8,128)}', space=vmem, size = 0x4000, scoped, tag = 'scratch operand']
  %s0 = inlined_call_operand.vmem [shape: f32[64,128], index: 0, kind: input, shape index: {}]
  %s1 = inlined_call_operand.vmem [shape: bf16[128,512], index: 1, kind: input, shape index: {}]
  %s2 = inlined_call_operand.vmem [shape: f32[8,512], index: 2, kind: input, shape index: {}]
  %s3 = inlined_call_operand.vmem [shape: bf16[256,512], index: 3, kind: input, shape index: {}]
  %s4 = inlined_call_operand.vmem [shape: bf16[512,512], index: 4, kind: input, shape index: {}]
  %s5 = inlined_call_operand.vmem [shape: f32[8,512], index: 5, kind: input, shape index: {}]
  %s6 = inlined_call_operand.vmem [shape: bf16[256,512], index: 6, kind: input, shape index: {}]
  %s7 = inlined_call_operand.vmem [shape: bf16[256,384], index: 7, kind: input, shape index: {}]
  %s8 = inlined_call_operand.vmem [shape: f32[1,384], index: 8, kind: input, shape index: {}]
  %s9 = inlined_call_operand.vmem [shape: f32[16,16], index: 9, kind: input, shape index: {}]
  %s10 = inlined_call_operand.vmem [shape: f32[128,128], index: 10, kind: input, shape index: {}]
  %s11 = inlined_call_operand.vmem [shape: f32[128,128], index: 11, kind: input, shape index: {}]
  %s12 = inlined_call_operand.vmem [shape: f32[8,16], index: 12, kind: input, shape index: {}]
  %s13 = inlined_call_operand.vmem [shape: bf16[128,128], index: 13, kind: input, shape index: {}]
  %s14 = inlined_call_operand.vmem [shape: f32[1,128], index: 14, kind: input, shape index: {}]
  %s15 = inlined_call_operand.vmem [shape: bf16[128,128], index: 15, kind: input, shape index: {}]
  %s16 = inlined_call_operand.vmem [shape: f32[1,128], index: 16, kind: input, shape index: {}]
  %s17 = inlined_call_operand.vmem [shape: bf16[128,128], index: 17, kind: input, shape index: {}]
  %s18 = inlined_call_operand.vmem [shape: f32[1,128], index: 18, kind: input, shape index: {}]
  %s19 = inlined_call_operand.vmem [shape: bf16[128,128], index: 19, kind: input, shape index: {}]
  %s20 = inlined_call_operand.vmem [shape: f32[1,128], index: 20, kind: input, shape index: {}]
  %s21 = inlined_call_operand.vmem [shape: f32[8,128], index: 21, kind: output, shape index: {0}]
  %s22 = inlined_call_operand.vmem [shape: f32[8,128], index: 22, kind: output, shape index: {1}]
  %s23 = inlined_call_operand.vmem [shape: f32[8,128], index: 23, kind: output, shape index: {2}]
  %s24 = inlined_call_operand.vmem [shape: f32[8,128], index: 24, kind: output, shape index: {3}]
  %s25 = inlined_call_operand.vmem [shape: f32[8,128], index: 25, kind: output, shape index: {4}]
  %26 = xla_tuple %s21, %s22, %s23, %s24, %s25
  %s27 = sld [smem:[#allocation0]]
  $region126: #{attention_bilstm_forward.1} parent=0
    _
  %s29 = ssub.s32 1, %s27
  %s30 = scalar_select 0, %s29, %s27
  // Predicated region
  $region2: #{attention_bilstm_forward.1} parent=0 // pred_check
    _
  $region3: #{attention_bilstm_forward.1} parent=0 // pred_check_branch
    %32 = sbr.rel (0) target = $region5
  $region4: #{attention_bilstm_forward.1} parent=0 // pred_region
    _
  $region5: #{attention_bilstm_forward.1} parent=0 // pred_fallthru
    _
  // Predicated region
  $region6: #{attention_bilstm_forward.1} parent=0 // pred_check
    _
  $region7: #{attention_bilstm_forward.1} parent=0 // pred_check_branch
    %34 = sbr.rel (0) target = $region9
  $region8: #{attention_bilstm_forward.1} parent=0 // pred_region
    _
  $region9: #{attention_bilstm_forward.1} parent=0 // pred_fallthru
    _
  // Predicated region
  $region10: #{attention_bilstm_forward.1} parent=0 // pred_check
    _
  $region11: #{attention_bilstm_forward.1} parent=0 // pred_check_branch
    %36 = sbr.rel (0) target = $region13
  $region12: #{attention_bilstm_forward.1} parent=0 // pred_region
    _
  $region13: #{attention_bilstm_forward.1} parent=0 // pred_fallthru
    _
  // Predicated region
  $region14: #{attention_bilstm_forward.1} parent=0 // pred_check
    _
  $region15: #{attention_bilstm_forward.1} parent=0 // pred_check_branch
    %38 = sbr.rel (0) target = $region17
  $region16: #{attention_bilstm_forward.1} parent=0 // pred_region
    _
  $region17: #{attention_bilstm_forward.1} parent=0 // pred_fallthru
    _
  // Predicated region
  $region18: #{attention_bilstm_forward.1} parent=0 // pred_check
    _
  $region19: #{attention_bilstm_forward.1} parent=0 // pred_check_branch
    %40 = sbr.rel (0) target = $region21
  $region20: #{attention_bilstm_forward.1} parent=0 // pred_region
    _
  $region21: #{attention_bilstm_forward.1} parent=0 // pred_fallthru
    _
  // Predicated region
  $region22: #{attention_bilstm_forward.1} parent=0 // pred_check
    _
  $region23: #{attention_bilstm_forward.1} parent=0 // pred_check_branch
    %42 = sbr.rel (0) target = $region25
  $region24: #{attention_bilstm_forward.1} parent=0 // pred_region
    _
  $region25: #{attention_bilstm_forward.1} parent=0 // pred_fallthru
    _
  // Predicated region
  $region26: #{attention_bilstm_forward.1} parent=0 // pred_check
    _
  $region27: #{attention_bilstm_forward.1} parent=0 // pred_check_branch
    %44 = sbr.rel (0) target = $region29
  $region28: #{attention_bilstm_forward.1} parent=0 // pred_region
    _
  $region29: #{attention_bilstm_forward.1} parent=0 // pred_fallthru
    _
  // Predicated region
  $region30: #{attention_bilstm_forward.1} parent=0 // pred_check
    _
  $region31: #{attention_bilstm_forward.1} parent=0 // pred_check_branch
    %46 = sbr.rel (0) target = $region33
  $region32: #{attention_bilstm_forward.1} parent=0 // pred_region
    _
  $region33: #{attention_bilstm_forward.1} parent=0 // pred_fallthru
    _
  // Predicated region
  $region34: #{attention_bilstm_forward.1} parent=0 // pred_check
    _
  $region35: #{attention_bilstm_forward.1} parent=0 // pred_check_branch
    %48 = sbr.rel (0) target = $region37
  $region36: #{attention_bilstm_forward.1} parent=0 // pred_region
    _
  $region37: #{attention_bilstm_forward.1} parent=0 // pred_fallthru
    _
  // Predicated region
  $region38: #{attention_bilstm_forward.1} parent=0 // pred_check
    _
  $region39: #{attention_bilstm_forward.1} parent=0 // pred_check_branch
    %50 = sbr.rel (0) target = $region41
  $region40: #{attention_bilstm_forward.1} parent=0 // pred_region
    _
  $region41: #{attention_bilstm_forward.1} parent=0 // pred_fallthru
    _
  // Predicated region
  $region42: #{attention_bilstm_forward.1} parent=0 // pred_check
    _
  $region43: #{attention_bilstm_forward.1} parent=0 // pred_check_branch
    %52 = sbr.rel (0) target = $region45
  $region44: #{attention_bilstm_forward.1} parent=0 // pred_region
    _
  $region45: #{attention_bilstm_forward.1} parent=0 // pred_fallthru
    _
  // Predicated region
  $region46: #{attention_bilstm_forward.1} parent=0 // pred_check
    _
  $region47: #{attention_bilstm_forward.1} parent=0 // pred_check_branch
    %54 = sbr.rel (0) target = $region49
  $region48: #{attention_bilstm_forward.1} parent=0 // pred_region
    _
  $region49: #{attention_bilstm_forward.1} parent=0 // pred_fallthru
    _
  // Predicated region
  $region50: #{attention_bilstm_forward.1} parent=0 // pred_check
    _
  $region51: #{attention_bilstm_forward.1} parent=0 // pred_check_branch
    %56 = sbr.rel (0) target = $region53
  $region52: #{attention_bilstm_forward.1} parent=0 // pred_region
    _
  $region53: #{attention_bilstm_forward.1} parent=0 // pred_fallthru
    _
  // Predicated region
  $region54: #{attention_bilstm_forward.1} parent=0 // pred_check
    _
  $region55: #{attention_bilstm_forward.1} parent=0 // pred_check_branch
    %58 = sbr.rel (0) target = $region57
  $region56: #{attention_bilstm_forward.1} parent=0 // pred_region
    _
  $region57: #{attention_bilstm_forward.1} parent=0 // pred_fallthru
    _
  // Predicated region
  $region58: #{attention_bilstm_forward.1} parent=0 // pred_check
    _
  $region59: #{attention_bilstm_forward.1} parent=0 // pred_check_branch
    %60 = sbr.rel (0) target = $region61
  $region60: #{attention_bilstm_forward.1} parent=0 // pred_region
    _
  $region61: #{attention_bilstm_forward.1} parent=0 // pred_fallthru
    _
  // Predicated region
  $region62: #{attention_bilstm_forward.1} parent=0 // pred_check
    _
  $region63: #{attention_bilstm_forward.1} parent=0 // pred_check_branch
    %62 = sbr.rel (0) target = $region65
  $region64: #{attention_bilstm_forward.1} parent=0 // pred_region
    _
  $region65: #{attention_bilstm_forward.1} parent=0 // pred_fallthru
    _
  // Predicated region
  $region66: #{attention_bilstm_forward.1} parent=0 // pred_check
    _
  $region67: #{attention_bilstm_forward.1} parent=0 // pred_check_branch
    %64 = sbr.rel (0) target = $region69
  $region68: #{attention_bilstm_forward.1} parent=0 // pred_region
    _
  $region69: #{attention_bilstm_forward.1} parent=0 // pred_fallthru
    _
  // Predicated region
  $region70: #{attention_bilstm_forward.1} parent=0 // pred_check
    _
  $region71: #{attention_bilstm_forward.1} parent=0 // pred_check_branch
    %66 = sbr.rel (0) target = $region73
  $region72: #{attention_bilstm_forward.1} parent=0 // pred_region
    _
  $region73: #{attention_bilstm_forward.1} parent=0 // pred_fallthru
    _
  // Predicated region
  $region74: #{attention_bilstm_forward.1} parent=0 // pred_check
    _
  $region75: #{attention_bilstm_forward.1} parent=0 // pred_check_branch
    %68 = sbr.rel (0) target = $region77
  $region76: #{attention_bilstm_forward.1} parent=0 // pred_region
    _
  $region77: #{attention_bilstm_forward.1} parent=0 // pred_fallthru
    _
  // Predicated region
  $region78: #{attention_bilstm_forward.1} parent=0 // pred_check
    _
  $region79: #{attention_bilstm_forward.1} parent=0 // pred_check_branch
    %70 = sbr.rel (0) target = $region81
  $region80: #{attention_bilstm_forward.1} parent=0 // pred_region
    _
  $region81: #{attention_bilstm_forward.1} parent=0 // pred_fallthru
    _
  // Predicated region
  $region82: #{attention_bilstm_forward.1} parent=0 // pred_check
    _
  $region83: #{attention_bilstm_forward.1} parent=0 // pred_check_branch
    %72 = sbr.rel (0) target = $region85
  $region84: #{attention_bilstm_forward.1} parent=0 // pred_region
    _
  $region85: #{attention_bilstm_forward.1} parent=0 // pred_fallthru
    _
  %v74 = vlaneseq
  %v75 = vshrl.u32 %v74, 7
  %vm76 = vcmp.lt.s32.totalorder %v75, 2
  %v77 = vsel %vm76, 1, 0
  %v78 = vcvt.s32.f32 %v77
  %vm79 = vcmp.ge.s32.totalorder %v75, 2
  %vm80 = vcmp.lt.s32.totalorder %v75, 4
  %vm81 = vmand %vm79, %vm80
  %v82 = vsel %vm81, 1, 0
  %v83 = vcvt.s32.f32 %v82
  %84 = vst [vmem:[#allocation3] sm:$0xff] 0.0
  %85 = vst [vmem:[#allocation3 + $0x8] sm:$0xff] 0.0
  %86 = vst [vmem:[#allocation3 + $0x10] sm:$0xff] 0.0
  %87 = vst [vmem:[#allocation3 + $0x18] sm:$0xff] 0.0
  %88 = vst [vmem:[#allocation3 + $0x20] sm:$0xff] 0.0
  %89 = vst [vmem:[#allocation3 + $0x28] sm:$0xff] 0.0
  %90 = vst [vmem:[#allocation3 + $0x30] sm:$0xff] 0.0
  %91 = vst [vmem:[#allocation3 + $0x38] sm:$0xff] 0.0
  %92 = vst [vmem:[#allocation3 + $0x40] sm:$0xff] 0.0
  %93 = vst [vmem:[#allocation3 + $0x48] sm:$0xff] 0.0
  %94 = vst [vmem:[#allocation3 + $0x50] sm:$0xff] 0.0
  %95 = vst [vmem:[#allocation3 + $0x58] sm:$0xff] 0.0
  %96 = vst [vmem:[#allocation3 + $0x60] sm:$0xff] 0.0
  %97 = vst [vmem:[#allocation3 + $0x68] sm:$0xff] 0.0
  %98 = vst [vmem:[#allocation3 + $0x70] sm:$0xff] 0.0
  %99 = vst [vmem:[#allocation3 + $0x78] sm:$0xff] 0.0
  %100 = vst [vmem:[#allocation3 + $0x80] sm:$0xff] 0.0
  %101 = vst [vmem:[#allocation3 + $0x88] sm:$0xff] 0.0
  %102 = vst [vmem:[#allocation3 + $0x90] sm:$0xff] 0.0
  %103 = vst [vmem:[#allocation3 + $0x98] sm:$0xff] 0.0
  %104 = vst [vmem:[#allocation3 + $0xa0] sm:$0xff] 0.0
  %105 = vst [vmem:[#allocation3 + $0xa8] sm:$0xff] 0.0
  %106 = vst [vmem:[#allocation3 + $0xb0] sm:$0xff] 0.0
  %107 = vst [vmem:[#allocation3 + $0xb8] sm:$0xff] 0.0
  %108 = vst [vmem:[#allocation3 + $0xc0] sm:$0xff] 0.0
  %109 = vst [vmem:[#allocation3 + $0xc8] sm:$0xff] 0.0
  %110 = vst [vmem:[#allocation3 + $0xd0] sm:$0xff] 0.0
  %111 = vst [vmem:[#allocation3 + $0xd8] sm:$0xff] 0.0
  %112 = vst [vmem:[#allocation3 + $0xe0] sm:$0xff] 0.0
  %113 = vst [vmem:[#allocation3 + $0xe8] sm:$0xff] 0.0
  %114 = vst [vmem:[#allocation3 + $0xf0] sm:$0xff] 0.0
  %115 = vst [vmem:[#allocation3 + $0xf8] sm:$0xff] 0.0
  %v116 = vld [vmem:[%s0] sm:$0xff]
  %v117 = vld [vmem:[%s0 + $0x8] sm:$0xff]
  %v118 = vld [vmem:[%s0 + $0x10] sm:$0xff]
  %v119 = vld [vmem:[%s0 + $0x18] sm:$0xff]
  %v120 = vld [vmem:[%s0 + $0x20] sm:$0xff]
  %v121 = vld [vmem:[%s0 + $0x28] sm:$0xff]
  %v122 = vld [vmem:[%s0 + $0x30] sm:$0xff]
  %v123 = vld [vmem:[%s0 + $0x38] sm:$0xff]
  %v124 = vpack.c.bf16 %v117, %v116
  %v125 = vpack.c.bf16 %v119, %v118
  %v126 = vpack.c.bf16 %v121, %v120
  %v127 = vpack.c.bf16 %v123, %v122
  %v128 = vld [vmem:[%s1] sm:$0xff]
  %v129 = vld [vmem:[%s1 + $0x8] sm:$0xff]
  %v130 = vld [vmem:[%s1 + $0x10] sm:$0xff]
  %v131 = vld [vmem:[%s1 + $0x18] sm:$0xff]
  %v132 = vld [vmem:[%s1 + $0x20] sm:$0xff]
  %v133 = vld [vmem:[%s1 + $0x28] sm:$0xff]
  %v134 = vld [vmem:[%s1 + $0x30] sm:$0xff]
  %v135 = vld [vmem:[%s1 + $0x38] sm:$0xff]
  %v136 = vld [vmem:[%s1 + $0x40] sm:$0xff]
  %v137 = vld [vmem:[%s1 + $0x48] sm:$0xff]
  %v138 = vld [vmem:[%s1 + $0x50] sm:$0xff]
  %v139 = vld [vmem:[%s1 + $0x58] sm:$0xff]
  %v140 = vld [vmem:[%s1 + $0x60] sm:$0xff]
  %v141 = vld [vmem:[%s1 + $0x68] sm:$0xff]
  %v142 = vld [vmem:[%s1 + $0x70] sm:$0xff]
  %v143 = vld [vmem:[%s1 + $0x78] sm:$0xff]
  %v144 = vld [vmem:[%s1 + $0x80] sm:$0xff]
  %v145 = vld [vmem:[%s1 + $0x88] sm:$0xff]
  %v146 = vld [vmem:[%s1 + $0x90] sm:$0xff]
  %v147 = vld [vmem:[%s1 + $0x98] sm:$0xff]
  %v148 = vld [vmem:[%s1 + $0xa0] sm:$0xff]
  %v149 = vld [vmem:[%s1 + $0xa8] sm:$0xff]
  %v150 = vld [vmem:[%s1 + $0xb0] sm:$0xff]
  %v151 = vld [vmem:[%s1 + $0xb8] sm:$0xff]
  %v152 = vld [vmem:[%s1 + $0xc0] sm:$0xff]
  %v153 = vld [vmem:[%s1 + $0xc8] sm:$0xff]
  %v154 = vld [vmem:[%s1 + $0xd0] sm:$0xff]
  %v155 = vld [vmem:[%s1 + $0xd8] sm:$0xff]
  %v156 = vld [vmem:[%s1 + $0xe0] sm:$0xff]
  %v157 = vld [vmem:[%s1 + $0xe8] sm:$0xff]
  %v158 = vld [vmem:[%s1 + $0xf0] sm:$0xff]
  %v159 = vld [vmem:[%s1 + $0xf8] sm:$0xff]
  %v192 = vunpack.c.l.b16 %v128
  %v193 = vunpack.c.h.b16 %v128
  %v194 = vunpack.c.l.b16 %v129
  %v195 = vunpack.c.h.b16 %v129
  %v196 = vunpack.c.l.b16 %v130
  %v197 = vunpack.c.h.b16 %v130
  %v198 = vunpack.c.l.b16 %v131
  %v199 = vunpack.c.h.b16 %v131
  %v200 = vunpack.c.l.b16 %v132
  %v201 = vunpack.c.h.b16 %v132
  %v202 = vunpack.c.l.b16 %v133
  %v203 = vunpack.c.h.b16 %v133
  %v204 = vunpack.c.l.b16 %v134
  %v205 = vunpack.c.h.b16 %v134
  %v206 = vunpack.c.l.b16 %v135
  %v207 = vunpack.c.h.b16 %v135
  %v208 = vunpack.c.l.b16 %v136
  %v209 = vunpack.c.h.b16 %v136
  %v210 = vunpack.c.l.b16 %v137
  %v211 = vunpack.c.h.b16 %v137
  %v212 = vunpack.c.l.b16 %v138
  %v213 = vunpack.c.h.b16 %v138
  %v214 = vunpack.c.l.b16 %v139
  %v215 = vunpack.c.h.b16 %v139
  %v216 = vunpack.c.l.b16 %v140
  %v217 = vunpack.c.h.b16 %v140
  %v218 = vunpack.c.l.b16 %v141
  %v219 = vunpack.c.h.b16 %v141
  %v220 = vunpack.c.l.b16 %v142
  %v221 = vunpack.c.h.b16 %v142
  %v222 = vunpack.c.l.b16 %v143
  %v223 = vunpack.c.h.b16 %v143
  %v224 = vunpack.c.l.b16 %v144
  %v225 = vunpack.c.h.b16 %v144
  %v226 = vunpack.c.l.b16 %v145
  %v227 = vunpack.c.h.b16 %v145
  %v228 = vunpack.c.l.b16 %v146
  %v229 = vunpack.c.h.b16 %v146
  %v230 = vunpack.c.l.b16 %v147
  %v231 = vunpack.c.h.b16 %v147
  %v232 = vunpack.c.l.b16 %v148
  %v233 = vunpack.c.h.b16 %v148
  %v234 = vunpack.c.l.b16 %v149
  %v235 = vunpack.c.h.b16 %v149
  %v236 = vunpack.c.l.b16 %v150
  %v237 = vunpack.c.h.b16 %v150
  %v238 = vunpack.c.l.b16 %v151
  %v239 = vunpack.c.h.b16 %v151
  %v240 = vunpack.c.l.b16 %v152
  %v241 = vunpack.c.h.b16 %v152
  %v242 = vunpack.c.l.b16 %v153
  %v243 = vunpack.c.h.b16 %v153
  %v244 = vunpack.c.l.b16 %v154
  %v245 = vunpack.c.h.b16 %v154
  %v246 = vunpack.c.l.b16 %v155
  %v247 = vunpack.c.h.b16 %v155
  %v248 = vunpack.c.l.b16 %v156
  %v249 = vunpack.c.h.b16 %v156
  %v250 = vunpack.c.l.b16 %v157
  %v251 = vunpack.c.h.b16 %v157
  %v252 = vunpack.c.l.b16 %v158
  %v253 = vunpack.c.h.b16 %v158
  %v254 = vunpack.c.l.b16 %v159
  %v255 = vunpack.c.h.b16 %v159
  %v256 = vpack.c.b16 %v196, %v192
  %v257 = vpack.c.b16 %v197, %v193
  %v258 = vpack.c.b16 %v198, %v194
  %v259 = vpack.c.b16 %v199, %v195
  %v260 = vpack.c.b16 %v204, %v200
  %v261 = vpack.c.b16 %v205, %v201
  %v262 = vpack.c.b16 %v206, %v202
  %v263 = vpack.c.b16 %v207, %v203
  %v264 = vpack.c.b16 %v212, %v208
  %v265 = vpack.c.b16 %v213, %v209
  %v266 = vpack.c.b16 %v214, %v210
  %v267 = vpack.c.b16 %v215, %v211
  %v268 = vpack.c.b16 %v220, %v216
  %v269 = vpack.c.b16 %v221, %v217
  %v270 = vpack.c.b16 %v222, %v218
  %v271 = vpack.c.b16 %v223, %v219
  %v272 = vpack.c.b16 %v228, %v224
  %v273 = vpack.c.b16 %v229, %v225
  %v274 = vpack.c.b16 %v230, %v226
  %v275 = vpack.c.b16 %v231, %v227
  %v276 = vpack.c.b16 %v236, %v232
  %v277 = vpack.c.b16 %v237, %v233
  %v278 = vpack.c.b16 %v238, %v234
  %v279 = vpack.c.b16 %v239, %v235
  %v280 = vpack.c.b16 %v244, %v240
  %v281 = vpack.c.b16 %v245, %v241
  %v282 = vpack.c.b16 %v246, %v242
  %v283 = vpack.c.b16 %v247, %v243
  %v284 = vpack.c.b16 %v252, %v248
  %v285 = vpack.c.b16 %v253, %v249
  %v286 = vpack.c.b16 %v254, %v250
  %v287 = vpack.c.b16 %v255, %v251
  %320 = vmatprep.subr.bf16.mxu0 %v285
  %321 = vmatpush1.bf16.msra.mxu0 %v284
  %322 = vmatprep.subr.bf16.mxu0 %v281
  %323 = vmatpush1.bf16.msra.mxu0 %v280
  %324 = vmatprep.subr.bf16.mxu0 %v277
  %325 = vmatpush1.bf16.msra.mxu0 %v276
  %326 = vmatprep.subr.bf16.mxu0 %v273
  %327 = vmatpush1.bf16.msra.mxu0 %v272
  %328 = vmatprep.subr.bf16.mxu0 %v269
  %329 = vmatpush1.bf16.msra.mxu0 %v268
  %330 = vmatprep.subr.bf16.mxu0 %v265
  %331 = vmatpush1.bf16.msra.mxu0 %v264
  %332 = vmatprep.subr.bf16.mxu0 %v261
  %333 = vmatpush1.bf16.msra.mxu0 %v260
  %334 = vmatprep.subr.bf16.mxu0 %v257
  %335 = vmatpush1.bf16.msra.mxu0 %v256
  %336 = vmatprep.subr.bf16.mxu0 0
  %337 = vmatpush2.bf16.msra.mxu0 0
  %338 = vmatprep.subr.bf16.mxu0 0
  %339 = vmatpush2.bf16.msra.mxu0 0
  %340 = vmatprep.subr.bf16.mxu0 0
  %341 = vmatpush2.bf16.msra.mxu0 0
  %342 = vmatprep.subr.bf16.mxu0 0
  %343 = vmatpush2.bf16.msra.mxu0 0
  %344 = vmatprep.subr.bf16.mxu0 0
  %345 = vmatpush2.bf16.msra.mxu0 0
  %346 = vmatprep.subr.bf16.mxu0 0
  %347 = vmatpush2.bf16.msra.mxu0 0
  %348 = vmatprep.subr.bf16.mxu0 0
  %349 = vmatpush2.bf16.msra.mxu0 0
  %350 = vmatprep.subr.bf16.mxu0 0
  %351 = vmatpush2.bf16.msra.mxu0 0
  %352 = vmatprep.mubr.bf16.mxu0 0
  %353 = vmatmul.mubr.bf16.gmra.mxu0 %v124
  %v354 = vpop.f32.mrf.mxu0
  %v355 = vadd.f32 0.0, %v354
  %v356 = vpop.f32.mrf.mxu0
  %v357 = vadd.f32 0.0, %v356
  %v358 = vpop.f32.mrf.mxu0
  %v359 = vadd.f32 0.0, %v358
  %v360 = vpop.f32.mrf.mxu0
  %v361 = vadd.f32 0.0, %v360
  %362 = vmatprep.mubr.bf16.mxu0 0
  %363 = vmatmul.mubr.bf16.gmra.mxu0 %v125
  %v364 = vpop.f32.mrf.mxu0
  %v365 = vadd.f32 0.0, %v364
  %v366 = vpop.f32.mrf.mxu0
  %v367 = vadd.f32 0.0, %v366
  %v368 = vpop.f32.mrf.mxu0
  %v369 = vadd.f32 0.0, %v368
  %v370 = vpop.f32.mrf.mxu0
  %v371 = vadd.f32 0.0, %v370
  %372 = vmatprep.mubr.bf16.mxu0 0
  %373 = vmatmul.mubr.bf16.gmra.mxu0 %v126
  %v374 = vpop.f32.mrf.mxu0
  %v375 = vadd.f32 0.0, %v374
  %v376 = vpop.f32.mrf.mxu0
  %v377 = vadd.f32 0.0, %v376
  %v378 = vpop.f32.mrf.mxu0
  %v379 = vadd.f32 0.0, %v378
  %v380 = vpop.f32.mrf.mxu0
  %v381 = vadd.f32 0.0, %v380
  %382 = vmatprep.mubr.bf16.mxu0 0
  %383 = vmatmul.mubr.bf16.gmra.mxu0 %v127
  %v384 = vpop.f32.mrf.mxu0
  %v385 = vadd.f32 0.0, %v384
  %v386 = vpop.f32.mrf.mxu0
  %v387 = vadd.f32 0.0, %v386
  %v388 = vpop.f32.mrf.mxu0
  %v389 = vadd.f32 0.0, %v388
  %v390 = vpop.f32.mrf.mxu0
  %v391 = vadd.f32 0.0, %v390
  %392 = vdwg.mxu0
  %393 = vmatprep.subr.bf16.mxu0 %v287
  %394 = vmatpush1.bf16.msra.mxu0 %v286
  %395 = vmatprep.subr.bf16.mxu0 %v283
  %396 = vmatpush1.bf16.msra.mxu0 %v282
  %397 = vmatprep.subr.bf16.mxu0 %v279
  %398 = vmatpush1.bf16.msra.mxu0 %v278
  %399 = vmatprep.subr.bf16.mxu0 %v275
  %400 = vmatpush1.bf16.msra.mxu0 %v274
  %401 = vmatprep.subr.bf16.mxu0 %v271
  %402 = vmatpush1.bf16.msra.mxu0 %v270
  %403 = vmatprep.subr.bf16.mxu0 %v267
  %404 = vmatpush1.bf16.msra.mxu0 %v266
  %405 = vmatprep.subr.bf16.mxu0 %v263
  %406 = vmatpush1.bf16.msra.mxu0 %v262
  %407 = vmatprep.subr.bf16.mxu0 %v259
  %408 = vmatpush1.bf16.msra.mxu0 %v258
  %409 = vmatprep.subr.bf16.mxu0 0
  %410 = vmatpush2.bf16.msra.mxu0 0
  %411 = vmatprep.subr.bf16.mxu0 0
  %412 = vmatpush2.bf16.msra.mxu0 0
  %413 = vmatprep.subr.bf16.mxu0 0
  %414 = vmatpush2.bf16.msra.mxu0 0
  %415 = vmatprep.subr.bf16.mxu0 0
  %416 = vmatpush2.bf16.msra.mxu0 0
  %417 = vmatprep.subr.bf16.mxu0 0
  %418 = vmatpush2.bf16.msra.mxu0 0
  %419 = vmatprep.subr.bf16.mxu0 0
  %420 = vmatpush2.bf16.msra.mxu0 0
  %421 = vmatprep.subr.bf16.mxu0 0
  %422 = vmatpush2.bf16.msra.mxu0 0
  %423 = vmatprep.subr.bf16.mxu0 0
  %424 = vmatpush2.bf16.msra.mxu0 0
  %425 = vmatprep.mubr.bf16.mxu0 0
  %426 = vmatmul.mubr.bf16.gmra.mxu0 %v124
  %v427 = vpop.f32.mrf.mxu0
  %v428 = vadd.f32 0.0, %v427
  %v429 = vpop.f32.mrf.mxu0
  %v430 = vadd.f32 0.0, %v429
  %v431 = vpop.f32.mrf.mxu0
  %v432 = vadd.f32 0.0, %v431
  %v433 = vpop.f32.mrf.mxu0
  %v434 = vadd.f32 0.0, %v433
  %435 = vmatprep.mubr.bf16.mxu0 0
  %436 = vmatmul.mubr.bf16.gmra.mxu0 %v125
  %v437 = vpop.f32.mrf.mxu0
  %v438 = vadd.f32 0.0, %v437
  %v439 = vpop.f32.mrf.mxu0
  %v440 = vadd.f32 0.0, %v439
  %v441 = vpop.f32.mrf.mxu0
  %v442 = vadd.f32 0.0, %v441
  %v443 = vpop.f32.mrf.mxu0
  %v444 = vadd.f32 0.0, %v443
  %445 = vmatprep.mubr.bf16.mxu0 0
  %446 = vmatmul.mubr.bf16.gmra.mxu0 %v126
  %v447 = vpop.f32.mrf.mxu0
  %v448 = vadd.f32 0.0, %v447
  %v449 = vpop.f32.mrf.mxu0
  %v450 = vadd.f32 0.0, %v449
  %v451 = vpop.f32.mrf.mxu0
  %v452 = vadd.f32 0.0, %v451
  %v453 = vpop.f32.mrf.mxu0
  %v454 = vadd.f32 0.0, %v453
  %455 = vmatprep.mubr.bf16.mxu0 0
  %456 = vmatmul.mubr.bf16.gmra.mxu0 %v127
  %v457 = vpop.f32.mrf.mxu0
  %v458 = vadd.f32 0.0, %v457
  %v459 = vpop.f32.mrf.mxu0
  %v460 = vadd.f32 0.0, %v459
  %v461 = vpop.f32.mrf.mxu0
  %v462 = vadd.f32 0.0, %v461
  %v463 = vpop.f32.mrf.mxu0
  %v464 = vadd.f32 0.0, %v463
  %465 = vdwg.mxu0
  %466 = vst [vmem:[#allocation2] sm:$0xff] %v355
  %467 = vst [vmem:[#allocation2 + $0x8] sm:$0xff] %v357
  %468 = vst [vmem:[#allocation2 + $0x10] sm:$0xff] %v428
  %469 = vst [vmem:[#allocation2 + $0x18] sm:$0xff] %v430
  %470 = vst [vmem:[#allocation2 + $0x20] sm:$0xff] %v359
  %471 = vst [vmem:[#allocation2 + $0x28] sm:$0xff] %v361
  %472 = vst [vmem:[#allocation2 + $0x30] sm:$0xff] %v432
  %473 = vst [vmem:[#allocation2 + $0x38] sm:$0xff] %v434
  %474 = vst [vmem:[#allocation2 + $0x40] sm:$0xff] %v365
  %475 = vst [vmem:[#allocation2 + $0x48] sm:$0xff] %v367
  %476 = vst [vmem:[#allocation2 + $0x50] sm:$0xff] %v438
  %477 = vst [vmem:[#allocation2 + $0x58] sm:$0xff] %v440
  %478 = vst [vmem:[#allocation2 + $0x60] sm:$0xff] %v369
  %479 = vst [vmem:[#allocation2 + $0x68] sm:$0xff] %v371
  %480 = vst [vmem:[#allocation2 + $0x70] sm:$0xff] %v442
  %481 = vst [vmem:[#allocation2 + $0x78] sm:$0xff] %v444
  %482 = vst [vmem:[#allocation2 + $0x80] sm:$0xff] %v375
  %483 = vst [vmem:[#allocation2 + $0x88] sm:$0xff] %v377
  %484 = vst [vmem:[#allocation2 + $0x90] sm:$0xff] %v448
  %485 = vst [vmem:[#allocation2 + $0x98] sm:$0xff] %v450
  %486 = vst [vmem:[#allocation2 + $0xa0] sm:$0xff] %v379
  %487 = vst [vmem:[#allocation2 + $0xa8] sm:$0xff] %v381
  %488 = vst [vmem:[#allocation2 + $0xb0] sm:$0xff] %v452
  %489 = vst [vmem:[#allocation2 + $0xb8] sm:$0xff] %v454
  %490 = vst [vmem:[#allocation2 + $0xc0] sm:$0xff] %v385
  %491 = vst [vmem:[#allocation2 + $0xc8] sm:$0xff] %v387
  %492 = vst [vmem:[#allocation2 + $0xd0] sm:$0xff] %v458
  %493 = vst [vmem:[#allocation2 + $0xd8] sm:$0xff] %v460
  %494 = vst [vmem:[#allocation2 + $0xe0] sm:$0xff] %v389
  %495 = vst [vmem:[#allocation2 + $0xe8] sm:$0xff] %v391
  %496 = vst [vmem:[#allocation2 + $0xf0] sm:$0xff] %v462
  %497 = vst [vmem:[#allocation2 + $0xf8] sm:$0xff] %v464
  %v498 = vld [vmem:[#allocation2] sm:$0xff]
  %v499 = vld [vmem:[#allocation2 + $0x8] sm:$0xff]
  %v500 = vld [vmem:[#allocation2 + $0x10] sm:$0xff]
  %v501 = vld [vmem:[#allocation2 + $0x18] sm:$0xff]
  %v502 = vld [vmem:[%s2] sm:$0xff]
  %v503 = vld [vmem:[%s2 + $0x8] sm:$0xff]
  %v504 = vld [vmem:[%s2 + $0x10] sm:$0xff]
  %v505 = vld [vmem:[%s2 + $0x18] sm:$0xff]
  %v506 = vadd.f32 %v498, %v502
  %v507 = vadd.f32 %v499, %v503
  %v508 = vadd.f32 %v500, %v504
  %v509 = vadd.f32 %v501, %v505
  %v510 = vxor.u32 %v506, 2147483648
  %v511 = vmul.f32 %v510, 1.442695
  %v512 = vpow.pop %v511
  %v513 = vadd.f32 %v512, 1.0
  %v514 = vrcp.pop %v513
  %v515 = vmul.f32 1.0, %v514
  %v516 = vxor.u32 %v507, 2147483648
  %v517 = vmul.f32 %v516, 1.442695
  %v518 = vpow.pop %v517
  %v519 = vadd.f32 %v518, 1.0
  %v520 = vrcp.pop %v519
  %v521 = vmul.f32 1.0, %v520
  %v522 = vtanh.pop %v508
  %v523 = vxor.u32 %v509, 2147483648
  %v524 = vmul.f32 %v523, 1.442695
  %v525 = vpow.pop %v524
  %v526 = vadd.f32 %v525, 1.0
  %v527 = vrcp.pop %v526
  %v528 = vmul.f32 1.0, %v527
  %v529 = vmul.f32 %v521, 0.0
  %v530 = vmul.f32 %v515, %v522
  %v531 = vadd.f32 %v529, %v530
  %v532 = vtanh.pop %v531
  %v533 = vmul.f32 %v528, %v532
  %v534 = vmul.f32 %v533, %v78
  %v535 = vmul.f32 %v533, %v83
  %536 = vst [vmem:[#allocation3] sm:$0x3] %v533
  %v538 = vrot.slane %v533, 6
  %540 = vst [vmem:[#allocation3 + $0xf0] sm:$0xc] %v538
  %v541 = vrot.slane %v533, 2
  %543 = vst [vmem:[#allocation3 + $0xe8] sm:$0x3] %v541
  %544 = vst [vmem:[#allocation3 + $0x18] sm:$0xc] %v533
  %v545 = vld [vmem:[#allocation2 + $0x20] sm:$0xff]
  %v546 = vld [vmem:[#allocation2 + $0x28] sm:$0xff]
  %v547 = vld [vmem:[#allocation2 + $0x30] sm:$0xff]
  %v548 = vld [vmem:[#allocation2 + $0x38] sm:$0xff]
  %v549 = vld [vmem:[%s2] sm:$0xff]
  %v550 = vld [vmem:[%s2 + $0x8] sm:$0xff]
  %v551 = vld [vmem:[%s2 + $0x10] sm:$0xff]
  %v552 = vld [vmem:[%s2 + $0x18] sm:$0xff]
  %v553 = vadd.f32 %v545, %v549
  %v554 = vadd.f32 %v546, %v550
  %v555 = vadd.f32 %v547, %v551
  %v556 = vadd.f32 %v548, %v552
  %v557 = vpack.c.bf16 %v534, %v534
  %v558 = vpack.c.bf16 %v535, %v535
  %v559 = vld [vmem:[%s3] sm:$0xff]
  %v560 = vld [vmem:[%s3 + $0x8] sm:$0xff]
  %v561 = vld [vmem:[%s3 + $0x10] sm:$0xff]
  %v562 = vld [vmem:[%s3 + $0x18] sm:$0xff]
  %v563 = vld [vmem:[%s3 + $0x20] sm:$0xff]
  %v564 = vld [vmem:[%s3 + $0x28] sm:$0xff]
  %v565 = vld [vmem:[%s3 + $0x30] sm:$0xff]
  %v566 = vld [vmem:[%s3 + $0x38] sm:$0xff]
  %v567 = vld [vmem:[%s3 + $0x40] sm:$0xff]
  %v568 = vld [vmem:[%s3 + $0x48] sm:$0xff]
  %v569 = vld [vmem:[%s3 + $0x50] sm:$0xff]
  %v570 = vld [vmem:[%s3 + $0x58] sm:$0xff]
  %v571 = vld [vmem:[%s3 + $0x60] sm:$0xff]
  %v572 = vld [vmem:[%s3 + $0x68] sm:$0xff]
  %v573 = vld [vmem:[%s3 + $0x70] sm:$0xff]
  %v574 = vld [vmem:[%s3 + $0x78] sm:$0xff]
  %v575 = vld [vmem:[%s3 + $0x80] sm:$0xff]
  %v576 = vld [vmem:[%s3 + $0x88] sm:$0xff]
  %v577 = vld [vmem:[%s3 + $0x90] sm:$0xff]
  %v578 = vld [vmem:[%s3 + $0x98] sm:$0xff]
  %v579 = vld [vmem:[%s3 + $0xa0] sm:$0xff]
  %v580 = vld [vmem:[%s3 + $0xa8] sm:$0xff]
  %v581 = vld [vmem:[%s3 + $0xb0] sm:$0xff]
  %v582 = vld [vmem:[%s3 + $0xb8] sm:$0xff]
  %v583 = vld [vmem:[%s3 + $0xc0] sm:$0xff]
  %v584 = vld [vmem:[%s3 + $0xc8] sm:$0xff]
  %v585 = vld [vmem:[%s3 + $0xd0] sm:$0xff]
  %v586 = vld [vmem:[%s3 + $0xd8] sm:$0xff]
  %v587 = vld [vmem:[%s3 + $0xe0] sm:$0xff]
  %v588 = vld [vmem:[%s3 + $0xe8] sm:$0xff]
  %v589 = vld [vmem:[%s3 + $0xf0] sm:$0xff]
  %v590 = vld [vmem:[%s3 + $0xf8] sm:$0xff]
  %v591 = vld [vmem:[%s3 + $0x100] sm:$0xff]
  %v592 = vld [vmem:[%s3 + $0x108] sm:$0xff]
  %v593 = vld [vmem:[%s3 + $0x110] sm:$0xff]
  %v594 = vld [vmem:[%s3 + $0x118] sm:$0xff]
  %v595 = vld [vmem:[%s3 + $0x120] sm:$0xff]
  %v596 = vld [vmem:[%s3 + $0x128] sm:$0xff]
  %v597 = vld [vmem:[%s3 + $0x130] sm:$0xff]
  %v598 = vld [vmem:[%s3 + $0x138] sm:$0xff]
  %v599 = vld [vmem:[%s3 + $0x140] sm:$0xff]
  %v600 = vld [vmem:[%s3 + $0x148] sm:$0xff]
  %v601 = vld [vmem:[%s3 + $0x150] sm:$0xff]
  %v602 = vld [vmem:[%s3 + $0x158] sm:$0xff]
  %v603 = vld [vmem:[%s3 + $0x160] sm:$0xff]
  %v604 = vld [vmem:[%s3 + $0x168] sm:$0xff]
  %v605 = vld [vmem:[%s3 + $0x170] sm:$0xff]
  %v606 = vld [vmem:[%s3 + $0x178] sm:$0xff]
  %v607 = vld [vmem:[%s3 + $0x180] sm:$0xff]
  %v608 = vld [vmem:[%s3 + $0x188] sm:$0xff]
  %v609 = vld [vmem:[%s3 + $0x190] sm:$0xff]
  %v610 = vld [vmem:[%s3 + $0x198] sm:$0xff]
  %v611 = vld [vmem:[%s3 + $0x1a0] sm:$0xff]
  %v612 = vld [vmem:[%s3 + $0x1a8] sm:$0xff]
  %v613 = vld [vmem:[%s3 + $0x1b0] sm:$0xff]
  %v614 = vld [vmem:[%s3 + $0x1b8] sm:$0xff]
  %v615 = vld [vmem:[%s3 + $0x1c0] sm:$0xff]
  %v616 = vld [vmem:[%s3 + $0x1c8] sm:$0xff]
  %v617 = vld [vmem:[%s3 + $0x1d0] sm:$0xff]
  %v618 = vld [vmem:[%s3 + $0x1d8] sm:$0xff]
  %v619 = vld [vmem:[%s3 + $0x1e0] sm:$0xff]
  %v620 = vld [vmem:[%s3 + $0x1e8] sm:$0xff]
  %v621 = vld [vmem:[%s3 + $0x1f0] sm:$0xff]
  %v622 = vld [vmem:[%s3 + $0x1f8] sm:$0xff]
  %v687 = vunpack.c.l.b16 %v559
  %v688 = vunpack.c.h.b16 %v559
  %v689 = vunpack.c.l.b16 %v560
  %v690 = vunpack.c.h.b16 %v560
  %v691 = vunpack.c.l.b16 %v561
  %v692 = vunpack.c.h.b16 %v561
  %v693 = vunpack.c.l.b16 %v562
  %v694 = vunpack.c.h.b16 %v562
  %v695 = vunpack.c.l.b16 %v563
  %v696 = vunpack.c.h.b16 %v563
  %v697 = vunpack.c.l.b16 %v564
  %v698 = vunpack.c.h.b16 %v564
  %v699 = vunpack.c.l.b16 %v565
  %v700 = vunpack.c.h.b16 %v565
  %v701 = vunpack.c.l.b16 %v566
  %v702 = vunpack.c.h.b16 %v566
  %v703 = vunpack.c.l.b16 %v567
  %v704 = vunpack.c.h.b16 %v567
  %v705 = vunpack.c.l.b16 %v568
  %v706 = vunpack.c.h.b16 %v568
  %v707 = vunpack.c.l.b16 %v569
  %v708 = vunpack.c.h.b16 %v569
  %v709 = vunpack.c.l.b16 %v570
  %v710 = vunpack.c.h.b16 %v570
  %v711 = vunpack.c.l.b16 %v571
  %v712 = vunpack.c.h.b16 %v571
  %v713 = vunpack.c.l.b16 %v572
  %v714 = vunpack.c.h.b16 %v572
  %v715 = vunpack.c.l.b16 %v573
  %v716 = vunpack.c.h.b16 %v573
  %v717 = vunpack.c.l.b16 %v574
  %v718 = vunpack.c.h.b16 %v574
  %v719 = vunpack.c.l.b16 %v575
  %v720 = vunpack.c.h.b16 %v575
  %v721 = vunpack.c.l.b16 %v576
  %v722 = vunpack.c.h.b16 %v576
  %v723 = vunpack.c.l.b16 %v577
  %v724 = vunpack.c.h.b16 %v577
  %v725 = vunpack.c.l.b16 %v578
  %v726 = vunpack.c.h.b16 %v578
  %v727 = vunpack.c.l.b16 %v579
  %v728 = vunpack.c.h.b16 %v579
  %v729 = vunpack.c.l.b16 %v580
  %v730 = vunpack.c.h.b16 %v580
  %v731 = vunpack.c.l.b16 %v581
  %v732 = vunpack.c.h.b16 %v581
  %v733 = vunpack.c.l.b16 %v582
  %v734 = vunpack.c.h.b16 %v582
  %v735 = vunpack.c.l.b16 %v583
  %v736 = vunpack.c.h.b16 %v583
  %v737 = vunpack.c.l.b16 %v584
  %v738 = vunpack.c.h.b16 %v584
  %v739 = vunpack.c.l.b16 %v585
  %v740 = vunpack.c.h.b16 %v585
  %v741 = vunpack.c.l.b16 %v586
  %v742 = vunpack.c.h.b16 %v586
  %v743 = vunpack.c.l.b16 %v587
  %v744 = vunpack.c.h.b16 %v587
  %v745 = vunpack.c.l.b16 %v588
  %v746 = vunpack.c.h.b16 %v588
  %v747 = vunpack.c.l.b16 %v589
  %v748 = vunpack.c.h.b16 %v589
  %v749 = vunpack.c.l.b16 %v590
  %v750 = vunpack.c.h.b16 %v590
  %v751 = vunpack.c.l.b16 %v591
  %v752 = vunpack.c.h.b16 %v591
  %v753 = vunpack.c.l.b16 %v592
  %v754 = vunpack.c.h.b16 %v592
  %v755 = vunpack.c.l.b16 %v593
  %v756 = vunpack.c.h.b16 %v593
  %v757 = vunpack.c.l.b16 %v594
  %v758 = vunpack.c.h.b16 %v594
  %v759 = vunpack.c.l.b16 %v595
  %v760 = vunpack.c.h.b16 %v595
  %v761 = vunpack.c.l.b16 %v596
  %v762 = vunpack.c.h.b16 %v596
  %v763 = vunpack.c.l.b16 %v597
  %v764 = vunpack.c.h.b16 %v597
  %v765 = vunpack.c.l.b16 %v598
  %v766 = vunpack.c.h.b16 %v598
  %v767 = vunpack.c.l.b16 %v599
  %v768 = vunpack.c.h.b16 %v599
  %v769 = vunpack.c.l.b16 %v600
  %v770 = vunpack.c.h.b16 %v600
  %v771 = vunpack.c.l.b16 %v601
  %v772 = vunpack.c.h.b16 %v601
  %v773 = vunpack.c.l.b16 %v602
  %v774 = vunpack.c.h.b16 %v602
  %v775 = vunpack.c.l.b16 %v603
  %v776 = vunpack.c.h.b16 %v603
  %v777 = vunpack.c.l.b16 %v604
  %v778 = vunpack.c.h.b16 %v604
  %v779 = vunpack.c.l.b16 %v605
  %v780 = vunpack.c.h.b16 %v605
  %v781 = vunpack.c.l.b16 %v606
  %v782 = vunpack.c.h.b16 %v606
  %v783 = vunpack.c.l.b16 %v607
  %v784 = vunpack.c.h.b16 %v607
  %v785 = vunpack.c.l.b16 %v608
  %v786 = vunpack.c.h.b16 %v608
  %v787 = vunpack.c.l.b16 %v609
  %v788 = vunpack.c.h.b16 %v609
  %v789 = vunpack.c.l.b16 %v610
  %v790 = vunpack.c.h.b16 %v610
  %v791 = vunpack.c.l.b16 %v611
  %v792 = vunpack.c.h.b16 %v611
  %v793 = vunpack.c.l.b16 %v612
  %v794 = vunpack.c.h.b16 %v612
  %v795 = vunpack.c.l.b16 %v613
  %v796 = vunpack.c.h.b16 %v613
  %v797 = vunpack.c.l.b16 %v614
  %v798 = vunpack.c.h.b16 %v614
  %v799 = vunpack.c.l.b16 %v615
  %v800 = vunpack.c.h.b16 %v615
  %v801 = vunpack.c.l.b16 %v616
  %v802 = vunpack.c.h.b16 %v616
  %v803 = vunpack.c.l.b16 %v617
  %v804 = vunpack.c.h.b16 %v617
  %v805 = vunpack.c.l.b16 %v618
  %v806 = vunpack.c.h.b16 %v618
  %v807 = vunpack.c.l.b16 %v619
  %v808 = vunpack.c.h.b16 %v619
  %v809 = vunpack.c.l.b16 %v620
  %v810 = vunpack.c.h.b16 %v620
  %v811 = vunpack.c.l.b16 %v621
  %v812 = vunpack.c.h.b16 %v621
  %v813 = vunpack.c.l.b16 %v622
  %v814 = vunpack.c.h.b16 %v622
  %v815 = vpack.c.b16 %v691, %v687
  %v816 = vpack.c.b16 %v692, %v688
  %v817 = vpack.c.b16 %v693, %v689
  %v818 = vpack.c.b16 %v694, %v690
  %v819 = vpack.c.b16 %v699, %v695
  %v820 = vpack.c.b16 %v700, %v696
  %v821 = vpack.c.b16 %v701, %v697
  %v822 = vpack.c.b16 %v702, %v698
  %v823 = vpack.c.b16 %v707, %v703
  %v824 = vpack.c.b16 %v708, %v704
  %v825 = vpack.c.b16 %v709, %v705
  %v826 = vpack.c.b16 %v710, %v706
  %v827 = vpack.c.b16 %v715, %v711
  %v828 = vpack.c.b16 %v716, %v712
  %v829 = vpack.c.b16 %v717, %v713
  %v830 = vpack.c.b16 %v718, %v714
  %v831 = vpack.c.b16 %v723, %v719
  %v832 = vpack.c.b16 %v724, %v720
  %v833 = vpack.c.b16 %v725, %v721
  %v834 = vpack.c.b16 %v726, %v722
  %v835 = vpack.c.b16 %v731, %v727
  %v836 = vpack.c.b16 %v732, %v728
  %v837 = vpack.c.b16 %v733, %v729
  %v838 = vpack.c.b16 %v734, %v730
  %v839 = vpack.c.b16 %v739, %v735
  %v840 = vpack.c.b16 %v740, %v736
  %v841 = vpack.c.b16 %v741, %v737
  %v842 = vpack.c.b16 %v742, %v738
  %v843 = vpack.c.b16 %v747, %v743
  %v844 = vpack.c.b16 %v748, %v744
  %v845 = vpack.c.b16 %v749, %v745
  %v846 = vpack.c.b16 %v750, %v746
  %v847 = vpack.c.b16 %v755, %v751
  %v848 = vpack.c.b16 %v756, %v752
  %v849 = vpack.c.b16 %v757, %v753
  %v850 = vpack.c.b16 %v758, %v754
  %v851 = vpack.c.b16 %v763, %v759
  %v852 = vpack.c.b16 %v764, %v760
  %v853 = vpack.c.b16 %v765, %v761
  %v854 = vpack.c.b16 %v766, %v762
  %v855 = vpack.c.b16 %v771, %v767
  %v856 = vpack.c.b16 %v772, %v768
  %v857 = vpack.c.b16 %v773, %v769
  %v858 = vpack.c.b16 %v774, %v770
  %v859 = vpack.c.b16 %v779, %v775
  %v860 = vpack.c.b16 %v780, %v776
  %v861 = vpack.c.b16 %v781, %v777
  %v862 = vpack.c.b16 %v782, %v778
  %v863 = vpack.c.b16 %v787, %v783
  %v864 = vpack.c.b16 %v788, %v784
  %v865 = vpack.c.b16 %v789, %v785
  %v866 = vpack.c.b16 %v790, %v786
  %v867 = vpack.c.b16 %v795, %v791
  %v868 = vpack.c.b16 %v796, %v792
  %v869 = vpack.c.b16 %v797, %v793
  %v870 = vpack.c.b16 %v798, %v794
  %v871 = vpack.c.b16 %v803, %v799
  %v872 = vpack.c.b16 %v804, %v800
  %v873 = vpack.c.b16 %v805, %v801
  %v874 = vpack.c.b16 %v806, %v802
  %v875 = vpack.c.b16 %v811, %v807
  %v876 = vpack.c.b16 %v812, %v808
  %v877 = vpack.c.b16 %v813, %v809
  %v878 = vpack.c.b16 %v814, %v810
  %943 = vmatprep.subr.bf16.mxu0 %v844
  %944 = vmatpush1.bf16.msra.mxu0 %v843
  %945 = vmatprep.subr.bf16.mxu0 %v840
  %946 = vmatpush1.bf16.msra.mxu0 %v839
  %947 = vmatprep.subr.bf16.mxu0 %v836
  %948 = vmatpush1.bf16.msra.mxu0 %v835
  %949 = vmatprep.subr.bf16.mxu0 %v832
  %950 = vmatpush1.bf16.msra.mxu0 %v831
  %951 = vmatprep.subr.bf16.mxu0 %v828
  %952 = vmatpush1.bf16.msra.mxu0 %v827
  %953 = vmatprep.subr.bf16.mxu0 %v824
  %954 = vmatpush1.bf16.msra.mxu0 %v823
  %955 = vmatprep.subr.bf16.mxu0 %v820
  %956 = vmatpush1.bf16.msra.mxu0 %v819
  %957 = vmatprep.subr.bf16.mxu0 %v816
  %958 = vmatpush1.bf16.msra.mxu0 %v815
  %959 = vmatprep.subr.bf16.mxu0 %v876
  %960 = vmatpush2.bf16.msra.mxu0 %v875
  %961 = vmatprep.subr.bf16.mxu0 %v872
  %962 = vmatpush2.bf16.msra.mxu0 %v871
  %963 = vmatprep.subr.bf16.mxu0 %v868
  %964 = vmatpush2.bf16.msra.mxu0 %v867
  %965 = vmatprep.subr.bf16.mxu0 %v864
  %966 = vmatpush2.bf16.msra.mxu0 %v863
  %967 = vmatprep.subr.bf16.mxu0 %v860
  %968 = vmatpush2.bf16.msra.mxu0 %v859
  %969 = vmatprep.subr.bf16.mxu0 %v856
  %970 = vmatpush2.bf16.msra.mxu0 %v855
  %971 = vmatprep.subr.bf16.mxu0 %v852
  %972 = vmatpush2.bf16.msra.mxu0 %v851
  %973 = vmatprep.subr.bf16.mxu0 %v848
  %974 = vmatpush2.bf16.msra.mxu0 %v847
  %975 = vmatprep.mubr.bf16.mxu0 %v558
  %976 = vmatmul.mubr.bf16.gmra.mxu0 %v557
  %v977 = vpop.f32.mrf.mxu0
  %v978 = vadd.f32 %v553, %v977
  %v979 = vpop.f32.mrf.mxu0
  %v980 = vadd.f32 %v554, %v979
  %v981 = vpop.f32.mrf.mxu0
  %v982 = vpop.f32.mrf.mxu0
  %983 = vdwg.mxu0
  %984 = vmatprep.subr.bf16.mxu0 %v846
  %985 = vmatpush1.bf16.msra.mxu0 %v845
  %986 = vmatprep.subr.bf16.mxu0 %v842
  %987 = vmatpush1.bf16.msra.mxu0 %v841
  %988 = vmatprep.subr.bf16.mxu0 %v838
  %989 = vmatpush1.bf16.msra.mxu0 %v837
  %990 = vmatprep.subr.bf16.mxu0 %v834
  %991 = vmatpush1.bf16.msra.mxu0 %v833
  %992 = vmatprep.subr.bf16.mxu0 %v830
  %993 = vmatpush1.bf16.msra.mxu0 %v829
  %994 = vmatprep.subr.bf16.mxu0 %v826
  %995 = vmatpush1.bf16.msra.mxu0 %v825
  %996 = vmatprep.subr.bf16.mxu0 %v822
  %997 = vmatpush1.bf16.msra.mxu0 %v821
  %998 = vmatprep.subr.bf16.mxu0 %v818
  %999 = vmatpush1.bf16.msra.mxu0 %v817
  %1000 = vmatprep.subr.bf16.mxu0 %v878
  %1001 = vmatpush2.bf16.msra.mxu0 %v877
  %1002 = vmatprep.subr.bf16.mxu0 %v874
  %1003 = vmatpush2.bf16.msra.mxu0 %v873
  %1004 = vmatprep.subr.bf16.mxu0 %v870
  %1005 = vmatpush2.bf16.msra.mxu0 %v869
  %1006 = vmatprep.subr.bf16.mxu0 %v866
  %1007 = vmatpush2.bf16.msra.mxu0 %v865
  %1008 = vmatprep.subr.bf16.mxu0 %v862
  %1009 = vmatpush2.bf16.msra.mxu0 %v861
  %1010 = vmatprep.subr.bf16.mxu0 %v858
  %1011 = vmatpush2.bf16.msra.mxu0 %v857
  %1012 = vmatprep.subr.bf16.mxu0 %v854
  %1013 = vmatpush2.bf16.msra.mxu0 %v853
  %1014 = vmatprep.subr.bf16.mxu0 %v850
  %1015 = vmatpush2.bf16.msra.mxu0 %v849
  %1016 = vmatprep.mubr.bf16.mxu0 %v558
  %1017 = vmatmul.mubr.bf16.gmra.mxu0 %v557
  %v1018 = vpop.f32.mrf.mxu0
  %v1019 = vadd.f32 %v555, %v1018
  %v1020 = vpop.f32.mrf.mxu0
  %v1021 = vadd.f32 %v556, %v1020
  %v1022 = vpop.f32.mrf.mxu0
  %v1023 = vpop.f32.mrf.mxu0
  %1024 = vdwg.mxu0
  %v1025 = vxor.u32 %v978, 2147483648
  %v1026 = vmul.f32 %v1025, 1.442695
  %v1027 = vpow.pop %v1026
  %v1028 = vadd.f32 %v1027, 1.0
  %v1029 = vrcp.pop %v1028
  %v1030 = vmul.f32 1.0, %v1029
  %v1031 = vxor.u32 %v980, 2147483648
  %v1032 = vmul.f32 %v1031, 1.442695
  %v1033 = vpow.pop %v1032
  %v1034 = vadd.f32 %v1033, 1.0
  %v1035 = vrcp.pop %v1034
  %v1036 = vmul.f32 1.0, %v1035
  %v1037 = vtanh.pop %v1019
  %v1038 = vxor.u32 %v1021, 2147483648
  %v1039 = vmul.f32 %v1038, 1.442695
  %v1040 = vpow.pop %v1039
  %v1041 = vadd.f32 %v1040, 1.0
  %v1042 = vrcp.pop %v1041
  %v1043 = vmul.f32 1.0, %v1042
  %v1044 = vmul.f32 %v1036, %v531
  %v1045 = vmul.f32 %v1030, %v1037
  %v1046 = vadd.f32 %v1044, %v1045
  %v1047 = vtanh.pop %v1046
  %v1048 = vmul.f32 %v1043, %v1047
  %v1049 = vmul.f32 %v1048, %v78
  %v1050 = vmul.f32 %v1048, %v83
  %1051 = vst [vmem:[#allocation3 + $0x20] sm:$0x3] %v1048
  %v1053 = vrot.slane %v1048, 6
  %1055 = vst [vmem:[#allocation3 + $0xd0] sm:$0xc] %v1053
  %v1056 = vrot.slane %v1048, 2
  %1058 = vst [vmem:[#allocation3 + $0xc8] sm:$0x3] %v1056
  %1059 = vst [vmem:[#allocation3 + $0x38] sm:$0xc] %v1048
  %v1060 = vld [vmem:[#allocation2 + $0x40] sm:$0xff]
  %v1061 = vld [vmem:[#allocation2 + $0x48] sm:$0xff]
  %v1062 = vld [vmem:[#allocation2 + $0x50] sm:$0xff]
  %v1063 = vld [vmem:[#allocation2 + $0x58] sm:$0xff]
  %v1064 = vld [vmem:[%s2] sm:$0xff]
  %v1065 = vld [vmem:[%s2 + $0x8] sm:$0xff]
  %v1066 = vld [vmem:[%s2 + $0x10] sm:$0xff]
  %v1067 = vld [vmem:[%s2 + $0x18] sm:$0xff]
  %v1068 = vadd.f32 %v1060, %v1064
  %v1069 = vadd.f32 %v1061, %v1065
  %v1070 = vadd.f32 %v1062, %v1066
  %v1071 = vadd.f32 %v1063, %v1067
  %v1072 = vpack.c.bf16 %v1049, %v1049
  %v1073 = vpack.c.bf16 %v1050, %v1050
  %v1074 = vld [vmem:[%s3] sm:$0xff]
  %v1075 = vld [vmem:[%s3 + $0x8] sm:$0xff]
  %v1076 = vld [vmem:[%s3 + $0x10] sm:$0xff]
  %v1077 = vld [vmem:[%s3 + $0x18] sm:$0xff]
  %v1078 = vld [vmem:[%s3 + $0x20] sm:$0xff]
  %v1079 = vld [vmem:[%s3 + $0x28] sm:$0xff]
  %v1080 = vld [vmem:[%s3 + $0x30] sm:$0xff]
  %v1081 = vld [vmem:[%s3 + $0x38] sm:$0xff]
  %v1082 = vld [vmem:[%s3 + $0x40] sm:$0xff]
  %v1083 = vld [vmem:[%s3 + $0x48] sm:$0xff]
  %v1084 = vld [vmem:[%s3 + $0x50] sm:$0xff]
  %v1085 = vld [vmem:[%s3 + $0x58] sm:$0xff]
  %v1086 = vld [vmem:[%s3 + $0x60] sm:$0xff]
  %v1087 = vld [vmem:[%s3 + $0x68] sm:$0xff]
  %v1088 = vld [vmem:[%s3 + $0x70] sm:$0xff]
  %v1089 = vld [vmem:[%s3 + $0x78] sm:$0xff]
  %v1090 = vld [vmem:[%s3 + $0x80] sm:$0xff]
  %v1091 = vld [vmem:[%s3 + $0x88] sm:$0xff]
  %v1092 = vld [vmem:[%s3 + $0x90] sm:$0xff]
  %v1093 = vld [vmem:[%s3 + $0x98] sm:$0xff]
  %v1094 = vld [vmem:[%s3 + $0xa0] sm:$0xff]
  %v1095 = vld [vmem:[%s3 + $0xa8] sm:$0xff]
  %v1096 = vld [vmem:[%s3 + $0xb0] sm:$0xff]
  %v1097 = vld [vmem:[%s3 + $0xb8] sm:$0xff]
  %v1098 = vld [vmem:[%s3 + $0xc0] sm:$0xff]
  %v1099 = vld [vmem:[%s3 + $0xc8] sm:$0xff]
  %v1100 = vld [vmem:[%s3 + $0xd0] sm:$0xff]
  %v1101 = vld [vmem:[%s3 + $0xd8] sm:$0xff]
  %v1102 = vld [vmem:[%s3 + $0xe0] sm:$0xff]
  %v1103 = vld [vmem:[%s3 + $0xe8] sm:$0xff]
  %v1104 = vld [vmem:[%s3 + $0xf0] sm:$0xff]
  %v1105 = vld [vmem:[%s3 + $0xf8] sm:$0xff]
  %v1106 = vld [vmem:[%s3 + $0x100] sm:$0xff]
  %v1107 = vld [vmem:[%s3 + $0x108] sm:$0xff]
  %v1108 = vld [vmem:[%s3 + $0x110] sm:$0xff]
  %v1109 = vld [vmem:[%s3 + $0x118] sm:$0xff]
  %v1110 = vld [vmem:[%s3 + $0x120] sm:$0xff]
  %v1111 = vld [vmem:[%s3 + $0x128] sm:$0xff]
  %v1112 = vld [vmem:[%s3 + $0x130] sm:$0xff]
  %v1113 = vld [vmem:[%s3 + $0x138] sm:$0xff]
  %v1114 = vld [vmem:[%s3 + $0x140] sm:$0xff]
  %v1115 = vld [vmem:[%s3 + $0x148] sm:$0xff]
  %v1116 = vld [vmem:[%s3 + $0x150] sm:$0xff]
  %v1117 = vld [vmem:[%s3 + $0x158] sm:$0xff]
  %v1118 = vld [vmem:[%s3 + $0x160] sm:$0xff]
  %v1119 = vld [vmem:[%s3 + $0x168] sm:$0xff]
  %v1120 = vld [vmem:[%s3 + $0x170] sm:$0xff]
  %v1121 = vld [vmem:[%s3 + $0x178] sm:$0xff]
  %v1122 = vld [vmem:[%s3 + $0x180] sm:$0xff]
  %v1123 = vld [vmem:[%s3 + $0x188] sm:$0xff]
  %v1124 = vld [vmem:[%s3 + $0x190] sm:$0xff]
  %v1125 = vld [vmem:[%s3 + $0x198] sm:$0xff]
  %v1126 = vld [vmem:[%s3 + $0x1a0] sm:$0xff]
  %v1127 = vld [vmem:[%s3 + $0x1a8] sm:$0xff]
  %v1128 = vld [vmem:[%s3 + $0x1b0] sm:$0xff]
  %v1129 = vld [vmem:[%s3 + $0x1b8] sm:$0xff]
  %v1130 = vld [vmem:[%s3 + $0x1c0] sm:$0xff]
  %v1131 = vld [vmem:[%s3 + $0x1c8] sm:$0xff]
  %v1132 = vld [vmem:[%s3 + $0x1d0] sm:$0xff]
  %v1133 = vld [vmem:[%s3 + $0x1d8] sm:$0xff]
  %v1134 = vld [vmem:[%s3 + $0x1e0] sm:$0xff]
  %v1135 = vld [vmem:[%s3 + $0x1e8] sm:$0xff]
  %v1136 = vld [vmem:[%s3 + $0x1f0] sm:$0xff]
  %v1137 = vld [vmem:[%s3 + $0x1f8] sm:$0xff]
  %v1202 = vunpack.c.l.b16 %v1074
  %v1203 = vunpack.c.h.b16 %v1074
  %v1204 = vunpack.c.l.b16 %v1075
  %v1205 = vunpack.c.h.b16 %v1075
  %v1206 = vunpack.c.l.b16 %v1076
  %v1207 = vunpack.c.h.b16 %v1076
  %v1208 = vunpack.c.l.b16 %v1077
  %v1209 = vunpack.c.h.b16 %v1077
  %v1210 = vunpack.c.l.b16 %v1078
  %v1211 = vunpack.c.h.b16 %v1078
  %v1212 = vunpack.c.l.b16 %v1079
  %v1213 = vunpack.c.h.b16 %v1079
  %v1214 = vunpack.c.l.b16 %v1080
  %v1215 = vunpack.c.h.b16 %v1080
  %v1216 = vunpack.c.l.b16 %v1081
  %v1217 = vunpack.c.h.b16 %v1081
  %v1218 = vunpack.c.l.b16 %v1082
  %v1219 = vunpack.c.h.b16 %v1082
  %v1220 = vunpack.c.l.b16 %v1083
  %v1221 = vunpack.c.h.b16 %v1083
  %v1222 = vunpack.c.l.b16 %v1084
  %v1223 = vunpack.c.h.b16 %v1084
  %v1224 = vunpack.c.l.b16 %v1085
  %v1225 = vunpack.c.h.b16 %v1085
  %v1226 = vunpack.c.l.b16 %v1086
  %v1227 = vunpack.c.h.b16 %v1086
  %v1228 = vunpack.c.l.b16 %v1087
  %v1229 = vunpack.c.h.b16 %v1087
  %v1230 = vunpack.c.l.b16 %v1088
  %v1231 = vunpack.c.h.b16 %v1088
  %v1232 = vunpack.c.l.b16 %v1089
  %v1233 = vunpack.c.h.b16 %v1089
  %v1234 = vunpack.c.l.b16 %v1090
  %v1235 = vunpack.c.h.b16 %v1090
  %v1236 = vunpack.c.l.b16 %v1091
  %v1237 = vunpack.c.h.b16 %v1091
  %v1238 = vunpack.c.l.b16 %v1092
  %v1239 = vunpack.c.h.b16 %v1092
  %v1240 = vunpack.c.l.b16 %v1093
  %v1241 = vunpack.c.h.b16 %v1093
  %v1242 = vunpack.c.l.b16 %v1094
  %v1243 = vunpack.c.h.b16 %v1094
  %v1244 = vunpack.c.l.b16 %v1095
  %v1245 = vunpack.c.h.b16 %v1095
  %v1246 = vunpack.c.l.b16 %v1096
  %v1247 = vunpack.c.h.b16 %v1096
  %v1248 = vunpack.c.l.b16 %v1097
  %v1249 = vunpack.c.h.b16 %v1097
  %v1250 = vunpack.c.l.b16 %v1098
  %v1251 = vunpack.c.h.b16 %v1098
  %v1252 = vunpack.c.l.b16 %v1099
  %v1253 = vunpack.c.h.b16 %v1099
  %v1254 = vunpack.c.l.b16 %v1100
  %v1255 = vunpack.c.h.b16 %v1100
  %v1256 = vunpack.c.l.b16 %v1101
  %v1257 = vunpack.c.h.b16 %v1101
  %v1258 = vunpack.c.l.b16 %v1102
  %v1259 = vunpack.c.h.b16 %v1102
  %v1260 = vunpack.c.l.b16 %v1103
  %v1261 = vunpack.c.h.b16 %v1103
  %v1262 = vunpack.c.l.b16 %v1104
  %v1263 = vunpack.c.h.b16 %v1104
  %v1264 = vunpack.c.l.b16 %v1105
  %v1265 = vunpack.c.h.b16 %v1105
  %v1266 = vunpack.c.l.b16 %v1106
  %v1267 = vunpack.c.h.b16 %v1106
  %v1268 = vunpack.c.l.b16 %v1107
  %v1269 = vunpack.c.h.b16 %v1107
  %v1270 = vunpack.c.l.b16 %v1108
  %v1271 = vunpack.c.h.b16 %v1108
  %v1272 = vunpack.c.l.b16 %v1109
  %v1273 = vunpack.c.h.b16 %v1109
  %v1274 = vunpack.c.l.b16 %v1110
  %v1275 = vunpack.c.h.b16 %v1110
  %v1276 = vunpack.c.l.b16 %v1111
  %v1277 = vunpack.c.h.b16 %v1111
  %v1278 = vunpack.c.l.b16 %v1112
  %v1279 = vunpack.c.h.b16 %v1112
  %v1280 = vunpack.c.l.b16 %v1113
  %v1281 = vunpack.c.h.b16 %v1113
  %v1282 = vunpack.c.l.b16 %v1114
  %v1283 = vunpack.c.h.b16 %v1114
  %v1284 = vunpack.c.l.b16 %v1115
  %v1285 = vunpack.c.h.b16 %v1115
  %v1286 = vunpack.c.l.b16 %v1116
  %v1287 = vunpack.c.h.b16 %v1116
  %v1288 = vunpack.c.l.b16 %v1117
  %v1289 = vunpack.c.h.b16 %v1117
  %v1290 = vunpack.c.l.b16 %v1118
  %v1291 = vunpack.c.h.b16 %v1118
  %v1292 = vunpack.c.l.b16 %v1119
  %v1293 = vunpack.c.h.b16 %v1119
  %v1294 = vunpack.c.l.b16 %v1120
  %v1295 = vunpack.c.h.b16 %v1120
  %v1296 = vunpack.c.l.b16 %v1121
  %v1297 = vunpack.c.h.b16 %v1121
  %v1298 = vunpack.c.l.b16 %v1122
  %v1299 = vunpack.c.h.b16 %v1122
  %v1300 = vunpack.c.l.b16 %v1123
  %v1301 = vunpack.c.h.b16 %v1123
  %v1302 = vunpack.c.l.b16 %v1124
  %v1303 = vunpack.c.h.b16 %v1124
  %v1304 = vunpack.c.l.b16 %v1125
  %v1305 = vunpack.c.h.b16 %v1125
  %v1306 = vunpack.c.l.b16 %v1126
  %v1307 = vunpack.c.h.b16 %v1126
  %v1308 = vunpack.c.l.b16 %v1127
  %v1309 = vunpack.c.h.b16 %v1127
  %v1310 = vunpack.c.l.b16 %v1128
  %v1311 = vunpack.c.h.b16 %v1128
  %v1312 = vunpack.c.l.b16 %v1129
  %v1313 = vunpack.c.h.b16 %v1129
  %v1314 = vunpack.c.l.b16 %v1130
  %v1315 = vunpack.c.h.b16 %v1130
  %v1316 = vunpack.c.l.b16 %v1131
  %v1317 = vunpack.c.h.b16 %v1131
  %v1318 = vunpack.c.l.b16 %v1132
  %v1319 = vunpack.c.h.b16 %v1132
  %v1320 = vunpack.c.l.b16 %v1133
  %v1321 = vunpack.c.h.b16 %v1133
  %v1322 = vunpack.c.l.b16 %v1134
  %v1323 = vunpack.c.h.b16 %v1134
  %v1324 = vunpack.c.l.b16 %v1135
  %v1325 = vunpack.c.h.b16 %v1135
  %v1326 = vunpack.c.l.b16 %v1136
  %v1327 = vunpack.c.h.b16 %v1136
  %v1328 = vunpack.c.l.b16 %v1137
  %v1329 = vunpack.c.h.b16 %v1137
  %v1330 = vpack.c.b16 %v1206, %v1202
  %v1331 = vpack.c.b16 %v1207, %v1203
  %v1332 = vpack.c.b16 %v1208, %v1204
  %v1333 = vpack.c.b16 %v1209, %v1205
  %v1334 = vpack.c.b16 %v1214, %v1210
  %v1335 = vpack.c.b16 %v1215, %v1211
  %v1336 = vpack.c.b16 %v1216, %v1212
  %v1337 = vpack.c.b16 %v1217, %v1213
  %v1338 = vpack.c.b16 %v1222, %v1218
  %v1339 = vpack.c.b16 %v1223, %v1219
  %v1340 = vpack.c.b16 %v1224, %v1220
  %v1341 = vpack.c.b16 %v1225, %v1221
  %v1342 = vpack.c.b16 %v1230, %v1226
  %v1343 = vpack.c.b16 %v1231, %v1227
  %v1344 = vpack.c.b16 %v1232, %v1228
  %v1345 = vpack.c.b16 %v1233, %v1229
  %v1346 = vpack.c.b16 %v1238, %v1234
  %v1347 = vpack.c.b16 %v1239, %v1235
  %v1348 = vpack.c.b16 %v1240, %v1236
  %v1349 = vpack.c.b16 %v1241, %v1237
  %v1350 = vpack.c.b16 %v1246, %v1242
  %v1351 = vpack.c.b16 %v1247, %v1243
  %v1352 = vpack.c.b16 %v1248, %v1244
  %v1353 = vpack.c.b16 %v1249, %v1245
  %v1354 = vpack.c.b16 %v1254, %v1250
  %v1355 = vpack.c.b16 %v1255, %v1251
  %v1356 = vpack.c.b16 %v1256, %v1252
  %v1357 = vpack.c.b16 %v1257, %v1253
  %v1358 = vpack.c.b16 %v1262, %v1258
  %v1359 = vpack.c.b16 %v1263, %v1259
  %v1360 = vpack.c.b16 %v1264, %v1260
  %v1361 = vpack.c.b16 %v1265, %v1261
  %v1362 = vpack.c.b16 %v1270, %v1266
  %v1363 = vpack.c.b16 %v1271, %v1267
  %v1364 = vpack.c.b16 %v1272, %v1268
  %v1365 = vpack.c.b16 %v1273, %v1269
  %v1366 = vpack.c.b16 %v1278, %v1274
  %v1367 = vpack.c.b16 %v1279, %v1275
  %v1368 = vpack.c.b16 %v1280, %v1276
  %v1369 = vpack.c.b16 %v1281, %v1277
  %v1370 = vpack.c.b16 %v1286, %v1282
  %v1371 = vpack.c.b16 %v1287, %v1283
  %v1372 = vpack.c.b16 %v1288, %v1284
  %v1373 = vpack.c.b16 %v1289, %v1285
  %v1374 = vpack.c.b16 %v1294, %v1290
  %v1375 = vpack.c.b16 %v1295, %v1291
  %v1376 = vpack.c.b16 %v1296, %v1292
  %v1377 = vpack.c.b16 %v1297, %v1293
  %v1378 = vpack.c.b16 %v1302, %v1298
  %v1379 = vpack.c.b16 %v1303, %v1299
  %v1380 = vpack.c.b16 %v1304, %v1300
  %v1381 = vpack.c.b16 %v1305, %v1301
  %v1382 = vpack.c.b16 %v1310, %v1306
  %v1383 = vpack.c.b16 %v1311, %v1307
  %v1384 = vpack.c.b16 %v1312, %v1308
  %v1385 = vpack.c.b16 %v1313, %v1309
  %v1386 = vpack.c.b16 %v1318, %v1314
  %v1387 = vpack.c.b16 %v1319, %v1315
  %v1388 = vpack.c.b16 %v1320, %v1316
  %v1389 = vpack.c.b16 %v1321, %v1317
  %v1390 = vpack.c.b16 %v1326, %v1322
  %v1391 = vpack.c.b16 %v1327, %v1323
  %v1392 = vpack.c.b16 %v1328, %v1324
  %v1393 = vpack.c.b16 %v1329, %v1325
  %1458 = vmatprep.subr.bf16.mxu0 %v1359
  %1459 = vmatpush1.bf16.msra.mxu0 %v1358
  %1460 = vmatprep.subr.bf16.mxu0 %v1355
  %1461 = vmatpush1.bf16.msra.mxu0 %v1354
  %1462 = vmatprep.subr.bf16.mxu0 %v1351
  %1463 = vmatpush1.bf16.msra.mxu0 %v1350
  %1464 = vmatprep.subr.bf16.mxu0 %v1347
  %1465 = vmatpush1.bf16.msra.mxu0 %v1346
  %1466 = vmatprep.subr.bf16.mxu0 %v1343
  %1467 = vmatpush1.bf16.msra.mxu0 %v1342
  %1468 = vmatprep.subr.bf16.mxu0 %v1339
  %1469 = vmatpush1.bf16.msra.mxu0 %v1338
  %1470 = vmatprep.subr.bf16.mxu0 %v1335
  %1471 = vmatpush1.bf16.msra.mxu0 %v1334
  %1472 = vmatprep.subr.bf16.mxu0 %v1331
  %1473 = vmatpush1.bf16.msra.mxu0 %v1330
  %1474 = vmatprep.subr.bf16.mxu0 %v1391
  %1475 = vmatpush2.bf16.msra.mxu0 %v1390
  %1476 = vmatprep.subr.bf16.mxu0 %v1387
  %1477 = vmatpush2.bf16.msra.mxu0 %v1386
  %1478 = vmatprep.subr.bf16.mxu0 %v1383
  %1479 = vmatpush2.bf16.msra.mxu0 %v1382
  %1480 = vmatprep.subr.bf16.mxu0 %v1379
  %1481 = vmatpush2.bf16.msra.mxu0 %v1378
  %1482 = vmatprep.subr.bf16.mxu0 %v1375
  %1483 = vmatpush2.bf16.msra.mxu0 %v1374
  %1484 = vmatprep.subr.bf16.mxu0 %v1371
  %1485 = vmatpush2.bf16.msra.mxu0 %v1370
  %1486 = vmatprep.subr.bf16.mxu0 %v1367
  %1487 = vmatpush2.bf16.msra.mxu0 %v1366
  %1488 = vmatprep.subr.bf16.mxu0 %v1363
  %1489 = vmatpush2.bf16.msra.mxu0 %v1362
  %1490 = vmatprep.mubr.bf16.mxu0 %v1073
  %1491 = vmatmul.mubr.bf16.gmra.mxu0 %v1072
  %v1492 = vpop.f32.mrf.mxu0
  %v1493 = vadd.f32 %v1068, %v1492
  %v1494 = vpop.f32.mrf.mxu0
  %v1495 = vadd.f32 %v1069, %v1494
  %v1496 = vpop.f32.mrf.mxu0
  %v1497 = vpop.f32.mrf.mxu0
  %1498 = vdwg.mxu0
  %1499 = vmatprep.subr.bf16.mxu0 %v1361
  %1500 = vmatpush1.bf16.msra.mxu0 %v1360
  %1501 = vmatprep.subr.bf16.mxu0 %v1357
  %1502 = vmatpush1.bf16.msra.mxu0 %v1356
  %1503 = vmatprep.subr.bf16.mxu0 %v1353
  %1504 = vmatpush1.bf16.msra.mxu0 %v1352
  %1505 = vmatprep.subr.bf16.mxu0 %v1349
  %1506 = vmatpush1.bf16.msra.mxu0 %v1348
  %1507 = vmatprep.subr.bf16.mxu0 %v1345
  %1508 = vmatpush1.bf16.msra.mxu0 %v1344
  %1509 = vmatprep.subr.bf16.mxu0 %v1341
  %1510 = vmatpush1.bf16.msra.mxu0 %v1340
  %1511 = vmatprep.subr.bf16.mxu0 %v1337
  %1512 = vmatpush1.bf16.msra.mxu0 %v1336
  %1513 = vmatprep.subr.bf16.mxu0 %v1333
  %1514 = vmatpush1.bf16.msra.mxu0 %v1332
  %1515 = vmatprep.subr.bf16.mxu0 %v1393
  %1516 = vmatpush2.bf16.msra.mxu0 %v1392
  %1517 = vmatprep.subr.bf16.mxu0 %v1389
  %1518 = vmatpush2.bf16.msra.mxu0 %v1388
  %1519 = vmatprep.subr.bf16.mxu0 %v1385
  %1520 = vmatpush2.bf16.msra.mxu0 %v1384
  %1521 = vmatprep.subr.bf16.mxu0 %v1381
  %1522 = vmatpush2.bf16.msra.mxu0 %v1380
  %1523 = vmatprep.subr.bf16.mxu0 %v1377
  %1524 = vmatpush2.bf16.msra.mxu0 %v1376
  %1525 = vmatprep.subr.bf16.mxu0 %v1373
  %1526 = vmatpush2.bf16.msra.mxu0 %v1372
  %1527 = vmatprep.subr.bf16.mxu0 %v1369
  %1528 = vmatpush2.bf16.msra.mxu0 %v1368
  %1529 = vmatprep.subr.bf16.mxu0 %v1365
  %1530 = vmatpush2.bf16.msra.mxu0 %v1364
  %1531 = vmatprep.mubr.bf16.mxu0 %v1073
  %1532 = vmatmul.mubr.bf16.gmra.mxu0 %v1072
  %v1533 = vpop.f32.mrf.mxu0
  %v1534 = vadd.f32 %v1070, %v1533
  %v1535 = vpop.f32.mrf.mxu0
  %v1536 = vadd.f32 %v1071, %v1535
  %v1537 = vpop.f32.mrf.mxu0
  %v1538 = vpop.f32.mrf.mxu0
  %1539 = vdwg.mxu0
  %v1540 = vxor.u32 %v1493, 2147483648
  %v1541 = vmul.f32 %v1540, 1.442695
  %v1542 = vpow.pop %v1541
  %v1543 = vadd.f32 %v1542, 1.0
  %v1544 = vrcp.pop %v1543
  %v1545 = vmul.f32 1.0, %v1544
  %v1546 = vxor.u32 %v1495, 2147483648
  %v1547 = vmul.f32 %v1546, 1.442695
  %v1548 = vpow.pop %v1547
  %v1549 = vadd.f32 %v1548, 1.0
  %v1550 = vrcp.pop %v1549
  %v1551 = vmul.f32 1.0, %v1550
  %v1552 = vtanh.pop %v1534
  %v1553 = vxor.u32 %v1536, 2147483648
  %v1554 = vmul.f32 %v1553, 1.442695
  %v1555 = vpow.pop %v1554
  %v1556 = vadd.f32 %v1555, 1.0
  %v1557 = vrcp.pop %v1556
  %v1558 = vmul.f32 1.0, %v1557
  %v1559 = vmul.f32 %v1551, %v1046
  %v1560 = vmul.f32 %v1545, %v1552
  %v1561 = vadd.f32 %v1559, %v1560
  %v1562 = vtanh.pop %v1561
  %v1563 = vmul.f32 %v1558, %v1562
  %v1564 = vmul.f32 %v1563, %v78
  %v1565 = vmul.f32 %v1563, %v83
  %1566 = vst [vmem:[#allocation3 + $0x40] sm:$0x3] %v1563
  %v1568 = vrot.slane %v1563, 6
  %1570 = vst [vmem:[#allocation3 + $0xb0] sm:$0xc] %v1568
  %v1571 = vrot.slane %v1563, 2
  %1573 = vst [vmem:[#allocation3 + $0xa8] sm:$0x3] %v1571
  %1574 = vst [vmem:[#allocation3 + $0x58] sm:$0xc] %v1563
  %v1575 = vld [vmem:[#allocation2 + $0x60] sm:$0xff]
  %v1576 = vld [vmem:[#allocation2 + $0x68] sm:$0xff]
  %v1577 = vld [vmem:[#allocation2 + $0x70] sm:$0xff]
  %v1578 = vld [vmem:[#allocation2 + $0x78] sm:$0xff]
  %v1579 = vld [vmem:[%s2] sm:$0xff]
  %v1580 = vld [vmem:[%s2 + $0x8] sm:$0xff]
  %v1581 = vld [vmem:[%s2 + $0x10] sm:$0xff]
  %v1582 = vld [vmem:[%s2 + $0x18] sm:$0xff]
  %v1583 = vadd.f32 %v1575, %v1579
  %v1584 = vadd.f32 %v1576, %v1580
  %v1585 = vadd.f32 %v1577, %v1581
  %v1586 = vadd.f32 %v1578, %v1582
  %v1587 = vpack.c.bf16 %v1564, %v1564
  %v1588 = vpack.c.bf16 %v1565, %v1565
  %v1589 = vld [vmem:[%s3] sm:$0xff]
  %v1590 = vld [vmem:[%s3 + $0x8] sm:$0xff]
  %v1591 = vld [vmem:[%s3 + $0x10] sm:$0xff]
  %v1592 = vld [vmem:[%s3 + $0x18] sm:$0xff]
  %v1593 = vld [vmem:[%s3 + $0x20] sm:$0xff]
  %v1594 = vld [vmem:[%s3 + $0x28] sm:$0xff]
  %v1595 = vld [vmem:[%s3 + $0x30] sm:$0xff]
  %v1596 = vld [vmem:[%s3 + $0x38] sm:$0xff]
  %v1597 = vld [vmem:[%s3 + $0x40] sm:$0xff]
  %v1598 = vld [vmem:[%s3 + $0x48] sm:$0xff]
  %v1599 = vld [vmem:[%s3 + $0x50] sm:$0xff]
  %v1600 = vld [vmem:[%s3 + $0x58] sm:$0xff]
  %v1601 = vld [vmem:[%s3 + $0x60] sm:$0xff]
  %v1602 = vld [vmem:[%s3 + $0x68] sm:$0xff]
  %v1603 = vld [vmem:[%s3 + $0x70] sm:$0xff]
  %v1604 = vld [vmem:[%s3 + $0x78] sm:$0xff]
  %v1605 = vld [vmem:[%s3 + $0x80] sm:$0xff]
  %v1606 = vld [vmem:[%s3 + $0x88] sm:$0xff]
  %v1607 = vld [vmem:[%s3 + $0x90] sm:$0xff]
  %v1608 = vld [vmem:[%s3 + $0x98] sm:$0xff]
  %v1609 = vld [vmem:[%s3 + $0xa0] sm:$0xff]
  %v1610 = vld [vmem:[%s3 + $0xa8] sm:$0xff]
  %v1611 = vld [vmem:[%s3 + $0xb0] sm:$0xff]
  %v1612 = vld [vmem:[%s3 + $0xb8] sm:$0xff]
  %v1613 = vld [vmem:[%s3 + $0xc0] sm:$0xff]
  %v1614 = vld [vmem:[%s3 + $0xc8] sm:$0xff]
  %v1615 = vld [vmem:[%s3 + $0xd0] sm:$0xff]
  %v1616 = vld [vmem:[%s3 + $0xd8] sm:$0xff]
  %v1617 = vld [vmem:[%s3 + $0xe0] sm:$0xff]
  %v1618 = vld [vmem:[%s3 + $0xe8] sm:$0xff]
  %v1619 = vld [vmem:[%s3 + $0xf0] sm:$0xff]
  %v1620 = vld [vmem:[%s3 + $0xf8] sm:$0xff]
  %v1621 = vld [vmem:[%s3 + $0x100] sm:$0xff]
  %v1622 = vld [vmem:[%s3 + $0x108] sm:$0xff]
  %v1623 = vld [vmem:[%s3 + $0x110] sm:$0xff]
  %v1624 = vld [vmem:[%s3 + $0x118] sm:$0xff]
  %v1625 = vld [vmem:[%s3 + $0x120] sm:$0xff]
  %v1626 = vld [vmem:[%s3 + $0x128] sm:$0xff]
  %v1627 = vld [vmem:[%s3 + $0x130] sm:$0xff]
  %v1628 = vld [vmem:[%s3 + $0x138] sm:$0xff]
  %v1629 = vld [vmem:[%s3 + $0x140] sm:$0xff]
  %v1630 = vld [vmem:[%s3 + $0x148] sm:$0xff]
  %v1631 = vld [vmem:[%s3 + $0x150] sm:$0xff]
  %v1632 = vld [vmem:[%s3 + $0x158] sm:$0xff]
  %v1633 = vld [vmem:[%s3 + $0x160] sm:$0xff]
  %v1634 = vld [vmem:[%s3 + $0x168] sm:$0xff]
  %v1635 = vld [vmem:[%s3 + $0x170] sm:$0xff]
  %v1636 = vld [vmem:[%s3 + $0x178] sm:$0xff]
  %v1637 = vld [vmem:[%s3 + $0x180] sm:$0xff]
  %v1638 = vld [vmem:[%s3 + $0x188] sm:$0xff]
  %v1639 = vld [vmem:[%s3 + $0x190] sm:$0xff]
  %v1640 = vld [vmem:[%s3 + $0x198] sm:$0xff]
  %v1641 = vld [vmem:[%s3 + $0x1a0] sm:$0xff]
  %v1642 = vld [vmem:[%s3 + $0x1a8] sm:$0xff]
  %v1643 = vld [vmem:[%s3 + $0x1b0] sm:$0xff]
  %v1644 = vld [vmem:[%s3 + $0x1b8] sm:$0xff]
  %v1645 = vld [vmem:[%s3 + $0x1c0] sm:$0xff]
  %v1646 = vld [vmem:[%s3 + $0x1c8] sm:$0xff]
  %v1647 = vld [vmem:[%s3 + $0x1d0] sm:$0xff]
  %v1648 = vld [vmem:[%s3 + $0x1d8] sm:$0xff]
  %v1649 = vld [vmem:[%s3 + $0x1e0] sm:$0xff]
  %v1650 = vld [vmem:[%s3 + $0x1e8] sm:$0xff]
  %v1651 = vld [vmem:[%s3 + $0x1f0] sm:$0xff]
  %v1652 = vld [vmem:[%s3 + $0x1f8] sm:$0xff]
  %v1717 = vunpack.c.l.b16 %v1589
  %v1718 = vunpack.c.h.b16 %v1589
  %v1719 = vunpack.c.l.b16 %v1590
  %v1720 = vunpack.c.h.b16 %v1590
  %v1721 = vunpack.c.l.b16 %v1591
  %v1722 = vunpack.c.h.b16 %v1591
  %v1723 = vunpack.c.l.b16 %v1592
  %v1724 = vunpack.c.h.b16 %v1592
  %v1725 = vunpack.c.l.b16 %v1593
  %v1726 = vunpack.c.h.b16 %v1593
  %v1727 = vunpack.c.l.b16 %v1594
  %v1728 = vunpack.c.h.b16 %v1594
  %v1729 = vunpack.c.l.b16 %v1595
  %v1730 = vunpack.c.h.b16 %v1595
  %v1731 = vunpack.c.l.b16 %v1596
  %v1732 = vunpack.c.h.b16 %v1596
  %v1733 = vunpack.c.l.b16 %v1597
  %v1734 = vunpack.c.h.b16 %v1597
  %v1735 = vunpack.c.l.b16 %v1598
  %v1736 = vunpack.c.h.b16 %v1598
  %v1737 = vunpack.c.l.b16 %v1599
  %v1738 = vunpack.c.h.b16 %v1599
  %v1739 = vunpack.c.l.b16 %v1600
  %v1740 = vunpack.c.h.b16 %v1600
  %v1741 = vunpack.c.l.b16 %v1601
  %v1742 = vunpack.c.h.b16 %v1601
  %v1743 = vunpack.c.l.b16 %v1602
  %v1744 = vunpack.c.h.b16 %v1602
  %v1745 = vunpack.c.l.b16 %v1603
  %v1746 = vunpack.c.h.b16 %v1603
  %v1747 = vunpack.c.l.b16 %v1604
  %v1748 = vunpack.c.h.b16 %v1604
  %v1749 = vunpack.c.l.b16 %v1605
  %v1750 = vunpack.c.h.b16 %v1605
  %v1751 = vunpack.c.l.b16 %v1606
  %v1752 = vunpack.c.h.b16 %v1606
  %v1753 = vunpack.c.l.b16 %v1607
  %v1754 = vunpack.c.h.b16 %v1607
  %v1755 = vunpack.c.l.b16 %v1608
  %v1756 = vunpack.c.h.b16 %v1608
  %v1757 = vunpack.c.l.b16 %v1609
  %v1758 = vunpack.c.h.b16 %v1609
  %v1759 = vunpack.c.l.b16 %v1610
  %v1760 = vunpack.c.h.b16 %v1610
  %v1761 = vunpack.c.l.b16 %v1611
  %v1762 = vunpack.c.h.b16 %v1611
  %v1763 = vunpack.c.l.b16 %v1612
  %v1764 = vunpack.c.h.b16 %v1612
  %v1765 = vunpack.c.l.b16 %v1613
  %v1766 = vunpack.c.h.b16 %v1613
  %v1767 = vunpack.c.l.b16 %v1614
  %v1768 = vunpack.c.h.b16 %v1614
  %v1769 = vunpack.c.l.b16 %v1615
  %v1770 = vunpack.c.h.b16 %v1615
  %v1771 = vunpack.c.l.b16 %v1616
  %v1772 = vunpack.c.h.b16 %v1616
  %v1773 = vunpack.c.l.b16 %v1617
  %v1774 = vunpack.c.h.b16 %v1617
  %v1775 = vunpack.c.l.b16 %v1618
  %v1776 = vunpack.c.h.b16 %v1618
  %v1777 = vunpack.c.l.b16 %v1619
  %v1778 = vunpack.c.h.b16 %v1619
  %v1779 = vunpack.c.l.b16 %v1620
  %v1780 = vunpack.c.h.b16 %v1620
  %v1781 = vunpack.c.l.b16 %v1621
  %v1782 = vunpack.c.h.b16 %v1621
  %v1783 = vunpack.c.l.b16 %v1622
  %v1784 = vunpack.c.h.b16 %v1622
  %v1785 = vunpack.c.l.b16 %v1623
  %v1786 = vunpack.c.h.b16 %v1623
  %v1787 = vunpack.c.l.b16 %v1624
  %v1788 = vunpack.c.h.b16 %v1624
  %v1789 = vunpack.c.l.b16 %v1625
  %v1790 = vunpack.c.h.b16 %v1625
  %v1791 = vunpack.c.l.b16 %v1626
  %v1792 = vunpack.c.h.b16 %v1626
  %v1793 = vunpack.c.l.b16 %v1627
  %v1794 = vunpack.c.h.b16 %v1627
  %v1795 = vunpack.c.l.b16 %v1628
  %v1796 = vunpack.c.h.b16 %v1628
  %v1797 = vunpack.c.l.b16 %v1629
  %v1798 = vunpack.c.h.b16 %v1629
  %v1799 = vunpack.c.l.b16 %v1630
  %v1800 = vunpack.c.h.b16 %v1630
  %v1801 = vunpack.c.l.b16 %v1631
  %v1802 = vunpack.c.h.b16 %v1631
  %v1803 = vunpack.c.l.b16 %v1632
  %v1804 = vunpack.c.h.b16 %v1632
  %v1805 = vunpack.c.l.b16 %v1633
  %v1806 = vunpack.c.h.b16 %v1633
  %v1807 = vunpack.c.l.b16 %v1634
  %v1808 = vunpack.c.h.b16 %v1634
  %v1809 = vunpack.c.l.b16 %v1635
  %v1810 = vunpack.c.h.b16 %v1635
  %v1811 = vunpack.c.l.b16 %v1636
  %v1812 = vunpack.c.h.b16 %v1636
  %v1813 = vunpack.c.l.b16 %v1637
  %v1814 = vunpack.c.h.b16 %v1637
  %v1815 = vunpack.c.l.b16 %v1638
  %v1816 = vunpack.c.h.b16 %v1638
  %v1817 = vunpack.c.l.b16 %v1639
  %v1818 = vunpack.c.h.b16 %v1639
  %v1819 = vunpack.c.l.b16 %v1640
  %v1820 = vunpack.c.h.b16 %v1640
  %v1821 = vunpack.c.l.b16 %v1641
  %v1822 = vunpack.c.h.b16 %v1641
  %v1823 = vunpack.c.l.b16 %v1642
  %v1824 = vunpack.c.h.b16 %v1642
  %v1825 = vunpack.c.l.b16 %v1643
  %v1826 = vunpack.c.h.b16 %v1643
  %v1827 = vunpack.c.l.b16 %v1644
  %v1828 = vunpack.c.h.b16 %v1644
  %v1829 = vunpack.c.l.b16 %v1645
  %v1830 = vunpack.c.h.b16 %v1645
  %v1831 = vunpack.c.l.b16 %v1646
  %v1832 = vunpack.c.h.b16 %v1646
  %v1833 = vunpack.c.l.b16 %v1647
  %v1834 = vunpack.c.h.b16 %v1647
  %v1835 = vunpack.c.l.b16 %v1648
  %v1836 = vunpack.c.h.b16 %v1648
  %v1837 = vunpack.c.l.b16 %v1649
  %v1838 = vunpack.c.h.b16 %v1649
  %v1839 = vunpack.c.l.b16 %v1650
  %v1840 = vunpack.c.h.b16 %v1650
  %v1841 = vunpack.c.l.b16 %v1651
  %v1842 = vunpack.c.h.b16 %v1651
  %v1843 = vunpack.c.l.b16 %v1652
  %v1844 = vunpack.c.h.b16 %v1652
  %v1845 = vpack.c.b16 %v1721, %v1717
  %v1846 = vpack.c.b16 %v1722, %v1718
  %v1847 = vpack.c.b16 %v1723, %v1719
  %v1848 = vpack.c.b16 %v1724, %v1720
  %v1849 = vpack.c.b16 %v1729, %v1725
  %v1850 = vpack.c.b16 %v1730, %v1726
  %v1851 = vpack.c.b16 %v1731, %v1727
  %v1852 = vpack.c.b16 %v1732, %v1728
  %v1853 = vpack.c.b16 %v1737, %v1733
  %v1854 = vpack.c.b16 %v1738, %v1734
  %v1855 = vpack.c.b16 %v1739, %v1735
  %v1856 = vpack.c.b16 %v1740, %v1736
  %v1857 = vpack.c.b16 %v1745, %v1741
  %v1858 = vpack.c.b16 %v1746, %v1742
  %v1859 = vpack.c.b16 %v1747, %v1743
  %v1860 = vpack.c.b16 %v1748, %v1744
  %v1861 = vpack.c.b16 %v1753, %v1749
  %v1862 = vpack.c.b16 %v1754, %v1750
  %v1863 = vpack.c.b16 %v1755, %v1751
  %v1864 = vpack.c.b16 %v1756, %v1752
  %v1865 = vpack.c.b16 %v1761, %v1757
  %v1866 = vpack.c.b16 %v1762, %v1758
  %v1867 = vpack.c.b16 %v1763, %v1759
  %v1868 = vpack.c.b16 %v1764, %v1760
  %v1869 = vpack.c.b16 %v1769, %v1765
  %v1870 = vpack.c.b16 %v1770, %v1766
  %v1871 = vpack.c.b16 %v1771, %v1767
  %v1872 = vpack.c.b16 %v1772, %v1768
  %v1873 = vpack.c.b16 %v1777, %v1773
  %v1874 = vpack.c.b16 %v1778, %v1774
  %v1875 = vpack.c.b16 %v1779, %v1775
  %v1876 = vpack.c.b16 %v1780, %v1776
  %v1877 = vpack.c.b16 %v1785, %v1781
  %v1878 = vpack.c.b16 %v1786, %v1782
  %v1879 = vpack.c.b16 %v1787, %v1783
  %v1880 = vpack.c.b16 %v1788, %v1784
  %v1881 = vpack.c.b16 %v1793, %v1789
  %v1882 = vpack.c.b16 %v1794, %v1790
  %v1883 = vpack.c.b16 %v1795, %v1791
  %v1884 = vpack.c.b16 %v1796, %v1792
  %v1885 = vpack.c.b16 %v1801, %v1797
  %v1886 = vpack.c.b16 %v1802, %v1798
  %v1887 = vpack.c.b16 %v1803, %v1799
  %v1888 = vpack.c.b16 %v1804, %v1800
  %v1889 = vpack.c.b16 %v1809, %v1805
  %v1890 = vpack.c.b16 %v1810, %v1806
  %v1891 = vpack.c.b16 %v1811, %v1807
  %v1892 = vpack.c.b16 %v1812, %v1808
  %v1893 = vpack.c.b16 %v1817, %v1813
  %v1894 = vpack.c.b16 %v1818, %v1814
  %v1895 = vpack.c.b16 %v1819, %v1815
  %v1896 = vpack.c.b16 %v1820, %v1816
  %v1897 = vpack.c.b16 %v1825, %v1821
  %v1898 = vpack.c.b16 %v1826, %v1822
  %v1899 = vpack.c.b16 %v1827, %v1823
  %v1900 = vpack.c.b16 %v1828, %v1824
  %v1901 = vpack.c.b16 %v1833, %v1829
  %v1902 = vpack.c.b16 %v1834, %v1830
  %v1903 = vpack.c.b16 %v1835, %v1831
  %v1904 = vpack.c.b16 %v1836, %v1832
  %v1905 = vpack.c.b16 %v1841, %v1837
  %v1906 = vpack.c.b16 %v1842, %v1838
  %v1907 = vpack.c.b16 %v1843, %v1839
  %v1908 = vpack.c.b16 %v1844, %v1840
  %1973 = vmatprep.subr.bf16.mxu0 %v1874
  %1974 = vmatpush1.bf16.msra.mxu0 %v1873
  %1975 = vmatprep.subr.bf16.mxu0 %v1870
  %1976 = vmatpush1.bf16.msra.mxu0 %v1869
  %1977 = vmatprep.subr.bf16.mxu0 %v1866
  %1978 = vmatpush1.bf16.msra.mxu0 %v1865
  %1979 = vmatprep.subr.bf16.mxu0 %v1862
  %1980 = vmatpush1.bf16.msra.mxu0 %v1861
  %1981 = vmatprep.subr.bf16.mxu0 %v1858
  %1982 = vmatpush1.bf16.msra.mxu0 %v1857
  %1983 = vmatprep.subr.bf16.mxu0 %v1854
  %1984 = vmatpush1.bf16.msra.mxu0 %v1853
  %1985 = vmatprep.subr.bf16.mxu0 %v1850
  %1986 = vmatpush1.bf16.msra.mxu0 %v1849
  %1987 = vmatprep.subr.bf16.mxu0 %v1846
  %1988 = vmatpush1.bf16.msra.mxu0 %v1845
  %1989 = vmatprep.subr.bf16.mxu0 %v1906
  %1990 = vmatpush2.bf16.msra.mxu0 %v1905
  %1991 = vmatprep.subr.bf16.mxu0 %v1902
  %1992 = vmatpush2.bf16.msra.mxu0 %v1901
  %1993 = vmatprep.subr.bf16.mxu0 %v1898
  %1994 = vmatpush2.bf16.msra.mxu0 %v1897
  %1995 = vmatprep.subr.bf16.mxu0 %v1894
  %1996 = vmatpush2.bf16.msra.mxu0 %v1893
  %1997 = vmatprep.subr.bf16.mxu0 %v1890
  %1998 = vmatpush2.bf16.msra.mxu0 %v1889
  %1999 = vmatprep.subr.bf16.mxu0 %v1886
  %2000 = vmatpush2.bf16.msra.mxu0 %v1885
  %2001 = vmatprep.subr.bf16.mxu0 %v1882
  %2002 = vmatpush2.bf16.msra.mxu0 %v1881
  %2003 = vmatprep.subr.bf16.mxu0 %v1878
  %2004 = vmatpush2.bf16.msra.mxu0 %v1877
  %2005 = vmatprep.mubr.bf16.mxu0 %v1588
  %2006 = vmatmul.mubr.bf16.gmra.mxu0 %v1587
  %v2007 = vpop.f32.mrf.mxu0
  %v2008 = vadd.f32 %v1583, %v2007
  %v2009 = vpop.f32.mrf.mxu0
  %v2010 = vadd.f32 %v1584, %v2009
  %v2011 = vpop.f32.mrf.mxu0
  %v2012 = vpop.f32.mrf.mxu0
  %2013 = vdwg.mxu0
  %2014 = vmatprep.subr.bf16.mxu0 %v1876
  %2015 = vmatpush1.bf16.msra.mxu0 %v1875
  %2016 = vmatprep.subr.bf16.mxu0 %v1872
  %2017 = vmatpush1.bf16.msra.mxu0 %v1871
  %2018 = vmatprep.subr.bf16.mxu0 %v1868
  %2019 = vmatpush1.bf16.msra.mxu0 %v1867
  %2020 = vmatprep.subr.bf16.mxu0 %v1864
  %2021 = vmatpush1.bf16.msra.mxu0 %v1863
  %2022 = vmatprep.subr.bf16.mxu0 %v1860
  %2023 = vmatpush1.bf16.msra.mxu0 %v1859
  %2024 = vmatprep.subr.bf16.mxu0 %v1856
  %2025 = vmatpush1.bf16.msra.mxu0 %v1855
  %2026 = vmatprep.subr.bf16.mxu0 %v1852
  %2027 = vmatpush1.bf16.msra.mxu0 %v1851
  %2028 = vmatprep.subr.bf16.mxu0 %v1848
  %2029 = vmatpush1.bf16.msra.mxu0 %v1847
  %2030 = vmatprep.subr.bf16.mxu0 %v1908
  %2031 = vmatpush2.bf16.msra.mxu0 %v1907
  %2032 = vmatprep.subr.bf16.mxu0 %v1904
  %2033 = vmatpush2.bf16.msra.mxu0 %v1903
  %2034 = vmatprep.subr.bf16.mxu0 %v1900
  %2035 = vmatpush2.bf16.msra.mxu0 %v1899
  %2036 = vmatprep.subr.bf16.mxu0 %v1896
  %2037 = vmatpush2.bf16.msra.mxu0 %v1895
  %2038 = vmatprep.subr.bf16.mxu0 %v1892
  %2039 = vmatpush2.bf16.msra.mxu0 %v1891
  %2040 = vmatprep.subr.bf16.mxu0 %v1888
  %2041 = vmatpush2.bf16.msra.mxu0 %v1887
  %2042 = vmatprep.subr.bf16.mxu0 %v1884
  %2043 = vmatpush2.bf16.msra.mxu0 %v1883
  %2044 = vmatprep.subr.bf16.mxu0 %v1880
  %2045 = vmatpush2.bf16.msra.mxu0 %v1879
  %2046 = vmatprep.mubr.bf16.mxu0 %v1588
  %2047 = vmatmul.mubr.bf16.gmra.mxu0 %v1587
  %v2048 = vpop.f32.mrf.mxu0
  %v2049 = vadd.f32 %v1585, %v2048
  %v2050 = vpop.f32.mrf.mxu0
  %v2051 = vadd.f32 %v1586, %v2050
  %v2052 = vpop.f32.mrf.mxu0
  %v2053 = vpop.f32.mrf.mxu0
  %2054 = vdwg.mxu0
  %v2055 = vxor.u32 %v2008, 2147483648
  %v2056 = vmul.f32 %v2055, 1.442695
  %v2057 = vpow.pop %v2056
  %v2058 = vadd.f32 %v2057, 1.0
  %v2059 = vrcp.pop %v2058
  %v2060 = vmul.f32 1.0, %v2059
  %v2061 = vxor.u32 %v2010, 2147483648
  %v2062 = vmul.f32 %v2061, 1.442695
  %v2063 = vpow.pop %v2062
  %v2064 = vadd.f32 %v2063, 1.0
  %v2065 = vrcp.pop %v2064
  %v2066 = vmul.f32 1.0, %v2065
  %v2067 = vtanh.pop %v2049
  %v2068 = vxor.u32 %v2051, 2147483648
  %v2069 = vmul.f32 %v2068, 1.442695
  %v2070 = vpow.pop %v2069
  %v2071 = vadd.f32 %v2070, 1.0
  %v2072 = vrcp.pop %v2071
  %v2073 = vmul.f32 1.0, %v2072
  %v2074 = vmul.f32 %v2066, %v1561
  %v2075 = vmul.f32 %v2060, %v2067
  %v2076 = vadd.f32 %v2074, %v2075
  %v2077 = vtanh.pop %v2076
  %v2078 = vmul.f32 %v2073, %v2077
  %v2079 = vmul.f32 %v2078, %v78
  %v2080 = vmul.f32 %v2078, %v83
  %2081 = vst [vmem:[#allocation3 + $0x60] sm:$0x3] %v2078
  %v2083 = vrot.slane %v2078, 6
  %2085 = vst [vmem:[#allocation3 + $0x90] sm:$0xc] %v2083
  %v2086 = vrot.slane %v2078, 2
  %2088 = vst [vmem:[#allocation3 + $0x88] sm:$0x3] %v2086
  %2089 = vst [vmem:[#allocation3 + $0x78] sm:$0xc] %v2078
  %v2090 = vld [vmem:[#allocation2 + $0x80] sm:$0xff]
  %v2091 = vld [vmem:[#allocation2 + $0x88] sm:$0xff]
  %v2092 = vld [vmem:[#allocation2 + $0x90] sm:$0xff]
  %v2093 = vld [vmem:[#allocation2 + $0x98] sm:$0xff]
  %v2094 = vld [vmem:[%s2] sm:$0xff]
  %v2095 = vld [vmem:[%s2 + $0x8] sm:$0xff]
  %v2096 = vld [vmem:[%s2 + $0x10] sm:$0xff]
  %v2097 = vld [vmem:[%s2 + $0x18] sm:$0xff]
  %v2098 = vadd.f32 %v2090, %v2094
  %v2099 = vadd.f32 %v2091, %v2095
  %v2100 = vadd.f32 %v2092, %v2096
  %v2101 = vadd.f32 %v2093, %v2097
  %v2102 = vpack.c.bf16 %v2079, %v2079
  %v2103 = vpack.c.bf16 %v2080, %v2080
  %v2104 = vld [vmem:[%s3] sm:$0xff]
  %v2105 = vld [vmem:[%s3 + $0x8] sm:$0xff]
  %v2106 = vld [vmem:[%s3 + $0x10] sm:$0xff]
  %v2107 = vld [vmem:[%s3 + $0x18] sm:$0xff]
  %v2108 = vld [vmem:[%s3 + $0x20] sm:$0xff]
  %v2109 = vld [vmem:[%s3 + $0x28] sm:$0xff]
  %v2110 = vld [vmem:[%s3 + $0x30] sm:$0xff]
  %v2111 = vld [vmem:[%s3 + $0x38] sm:$0xff]
  %v2112 = vld [vmem:[%s3 + $0x40] sm:$0xff]
  %v2113 = vld [vmem:[%s3 + $0x48] sm:$0xff]
  %v2114 = vld [vmem:[%s3 + $0x50] sm:$0xff]
  %v2115 = vld [vmem:[%s3 + $0x58] sm:$0xff]
  %v2116 = vld [vmem:[%s3 + $0x60] sm:$0xff]
  %v2117 = vld [vmem:[%s3 + $0x68] sm:$0xff]
  %v2118 = vld [vmem:[%s3 + $0x70] sm:$0xff]
  %v2119 = vld [vmem:[%s3 + $0x78] sm:$0xff]
  %v2120 = vld [vmem:[%s3 + $0x80] sm:$0xff]
  %v2121 = vld [vmem:[%s3 + $0x88] sm:$0xff]
  %v2122 = vld [vmem:[%s3 + $0x90] sm:$0xff]
  %v2123 = vld [vmem:[%s3 + $0x98] sm:$0xff]
  %v2124 = vld [vmem:[%s3 + $0xa0] sm:$0xff]
  %v2125 = vld [vmem:[%s3 + $0xa8] sm:$0xff]
  %v2126 = vld [vmem:[%s3 + $0xb0] sm:$0xff]
  %v2127 = vld [vmem:[%s3 + $0xb8] sm:$0xff]
  %v2128 = vld [vmem:[%s3 + $0xc0] sm:$0xff]
  %v2129 = vld [vmem:[%s3 + $0xc8] sm:$0xff]
  %v2130 = vld [vmem:[%s3 + $0xd0] sm:$0xff]
  %v2131 = vld [vmem:[%s3 + $0xd8] sm:$0xff]
  %v2132 = vld [vmem:[%s3 + $0xe0] sm:$0xff]
  %v2133 = vld [vmem:[%s3 + $0xe8] sm:$0xff]
  %v2134 = vld [vmem:[%s3 + $0xf0] sm:$0xff]
  %v2135 = vld [vmem:[%s3 + $0xf8] sm:$0xff]
  %v2136 = vld [vmem:[%s3 + $0x100] sm:$0xff]
  %v2137 = vld [vmem:[%s3 + $0x108] sm:$0xff]
  %v2138 = vld [vmem:[%s3 + $0x110] sm:$0xff]
  %v2139 = vld [vmem:[%s3 + $0x118] sm:$0xff]
  %v2140 = vld [vmem:[%s3 + $0x120] sm:$0xff]
  %v2141 = vld [vmem:[%s3 + $0x128] sm:$0xff]
  %v2142 = vld [vmem:[%s3 + $0x130] sm:$0xff]
  %v2143 = vld [vmem:[%s3 + $0x138] sm:$0xff]
  %v2144 = vld [vmem:[%s3 + $0x140] sm:$0xff]
  %v2145 = vld [vmem:[%s3 + $0x148] sm:$0xff]
  %v2146 = vld [vmem:[%s3 + $0x150] sm:$0xff]
  %v2147 = vld [vmem:[%s3 + $0x158] sm:$0xff]
  %v2148 = vld [vmem:[%s3 + $0x160] sm:$0xff]
  %v2149 = vld [vmem:[%s3 + $0x168] sm:$0xff]
  %v2150 = vld [vmem:[%s3 + $0x170] sm:$0xff]
  %v2151 = vld [vmem:[%s3 + $0x178] sm:$0xff]
  %v2152 = vld [vmem:[%s3 + $0x180] sm:$0xff]
  %v2153 = vld [vmem:[%s3 + $0x188] sm:$0xff]
  %v2154 = vld [vmem:[%s3 + $0x190] sm:$0xff]
  %v2155 = vld [vmem:[%s3 + $0x198] sm:$0xff]
  %v2156 = vld [vmem:[%s3 + $0x1a0] sm:$0xff]
  %v2157 = vld [vmem:[%s3 + $0x1a8] sm:$0xff]
  %v2158 = vld [vmem:[%s3 + $0x1b0] sm:$0xff]
  %v2159 = vld [vmem:[%s3 + $0x1b8] sm:$0xff]
  %v2160 = vld [vmem:[%s3 + $0x1c0] sm:$0xff]
  %v2161 = vld [vmem:[%s3 + $0x1c8] sm:$0xff]
  %v2162 = vld [vmem:[%s3 + $0x1d0] sm:$0xff]
  %v2163 = vld [vmem:[%s3 + $0x1d8] sm:$0xff]
  %v2164 = vld [vmem:[%s3 + $0x1e0] sm:$0xff]
  %v2165 = vld [vmem:[%s3 + $0x1e8] sm:$0xff]
  %v2166 = vld [vmem:[%s3 + $0x1f0] sm:$0xff]
  %v2167 = vld [vmem:[%s3 + $0x1f8] sm:$0xff]
  %v2232 = vunpack.c.l.b16 %v2104
  %v2233 = vunpack.c.h.b16 %v2104
  %v2234 = vunpack.c.l.b16 %v2105
  %v2235 = vunpack.c.h.b16 %v2105
  %v2236 = vunpack.c.l.b16 %v2106
  %v2237 = vunpack.c.h.b16 %v2106
  %v2238 = vunpack.c.l.b16 %v2107
  %v2239 = vunpack.c.h.b16 %v2107
  %v2240 = vunpack.c.l.b16 %v2108
  %v2241 = vunpack.c.h.b16 %v2108
  %v2242 = vunpack.c.l.b16 %v2109
  %v2243 = vunpack.c.h.b16 %v2109
  %v2244 = vunpack.c.l.b16 %v2110
  %v2245 = vunpack.c.h.b16 %v2110
  %v2246 = vunpack.c.l.b16 %v2111
  %v2247 = vunpack.c.h.b16 %v2111
  %v2248 = vunpack.c.l.b16 %v2112
  %v2249 = vunpack.c.h.b16 %v2112
  %v2250 = vunpack.c.l.b16 %v2113
  %v2251 = vunpack.c.h.b16 %v2113
  %v2252 = vunpack.c.l.b16 %v2114
  %v2253 = vunpack.c.h.b16 %v2114
  %v2254 = vunpack.c.l.b16 %v2115
  %v2255 = vunpack.c.h.b16 %v2115
  %v2256 = vunpack.c.l.b16 %v2116
  %v2257 = vunpack.c.h.b16 %v2116
  %v2258 = vunpack.c.l.b16 %v2117
  %v2259 = vunpack.c.h.b16 %v2117
  %v2260 = vunpack.c.l.b16 %v2118
  %v2261 = vunpack.c.h.b16 %v2118
  %v2262 = vunpack.c.l.b16 %v2119
  %v2263 = vunpack.c.h.b16 %v2119
  %v2264 = vunpack.c.l.b16 %v2120
  %v2265 = vunpack.c.h.b16 %v2120
  %v2266 = vunpack.c.l.b16 %v2121
  %v2267 = vunpack.c.h.b16 %v2121
  %v2268 = vunpack.c.l.b16 %v2122
  %v2269 = vunpack.c.h.b16 %v2122
  %v2270 = vunpack.c.l.b16 %v2123
  %v2271 = vunpack.c.h.b16 %v2123
  %v2272 = vunpack.c.l.b16 %v2124
  %v2273 = vunpack.c.h.b16 %v2124
  %v2274 = vunpack.c.l.b16 %v2125
  %v2275 = vunpack.c.h.b16 %v2125
  %v2276 = vunpack.c.l.b16 %v2126
  %v2277 = vunpack.c.h.b16 %v2126
  %v2278 = vunpack.c.l.b16 %v2127
  %v2279 = vunpack.c.h.b16 %v2127
  %v2280 = vunpack.c.l.b16 %v2128
  %v2281 = vunpack.c.h.b16 %v2128
  %v2282 = vunpack.c.l.b16 %v2129
  %v2283 = vunpack.c.h.b16 %v2129
  %v2284 = vunpack.c.l.b16 %v2130
  %v2285 = vunpack.c.h.b16 %v2130
  %v2286 = vunpack.c.l.b16 %v2131
  %v2287 = vunpack.c.h.b16 %v2131
  %v2288 = vunpack.c.l.b16 %v2132
  %v2289 = vunpack.c.h.b16 %v2132
  %v2290 = vunpack.c.l.b16 %v2133
  %v2291 = vunpack.c.h.b16 %v2133
  %v2292 = vunpack.c.l.b16 %v2134
  %v2293 = vunpack.c.h.b16 %v2134
  %v2294 = vunpack.c.l.b16 %v2135
  %v2295 = vunpack.c.h.b16 %v2135
  %v2296 = vunpack.c.l.b16 %v2136
  %v2297 = vunpack.c.h.b16 %v2136
  %v2298 = vunpack.c.l.b16 %v2137
  %v2299 = vunpack.c.h.b16 %v2137
  %v2300 = vunpack.c.l.b16 %v2138
  %v2301 = vunpack.c.h.b16 %v2138
  %v2302 = vunpack.c.l.b16 %v2139
  %v2303 = vunpack.c.h.b16 %v2139
  %v2304 = vunpack.c.l.b16 %v2140
  %v2305 = vunpack.c.h.b16 %v2140
  %v2306 = vunpack.c.l.b16 %v2141
  %v2307 = vunpack.c.h.b16 %v2141
  %v2308 = vunpack.c.l.b16 %v2142
  %v2309 = vunpack.c.h.b16 %v2142
  %v2310 = vunpack.c.l.b16 %v2143
  %v2311 = vunpack.c.h.b16 %v2143
  %v2312 = vunpack.c.l.b16 %v2144
  %v2313 = vunpack.c.h.b16 %v2144
  %v2314 = vunpack.c.l.b16 %v2145
  %v2315 = vunpack.c.h.b16 %v2145
  %v2316 = vunpack.c.l.b16 %v2146
  %v2317 = vunpack.c.h.b16 %v2146
  %v2318 = vunpack.c.l.b16 %v2147
  %v2319 = vunpack.c.h.b16 %v2147
  %v2320 = vunpack.c.l.b16 %v2148
  %v2321 = vunpack.c.h.b16 %v2148
  %v2322 = vunpack.c.l.b16 %v2149
  %v2323 = vunpack.c.h.b16 %v2149
  %v2324 = vunpack.c.l.b16 %v2150
  %v2325 = vunpack.c.h.b16 %v2150
  %v2326 = vunpack.c.l.b16 %v2151
  %v2327 = vunpack.c.h.b16 %v2151
  %v2328 = vunpack.c.l.b16 %v2152
  %v2329 = vunpack.c.h.b16 %v2152
  %v2330 = vunpack.c.l.b16 %v2153
  %v2331 = vunpack.c.h.b16 %v2153
  %v2332 = vunpack.c.l.b16 %v2154
  %v2333 = vunpack.c.h.b16 %v2154
  %v2334 = vunpack.c.l.b16 %v2155
  %v2335 = vunpack.c.h.b16 %v2155
  %v2336 = vunpack.c.l.b16 %v2156
  %v2337 = vunpack.c.h.b16 %v2156
  %v2338 = vunpack.c.l.b16 %v2157
  %v2339 = vunpack.c.h.b16 %v2157
  %v2340 = vunpack.c.l.b16 %v2158
  %v2341 = vunpack.c.h.b16 %v2158
  %v2342 = vunpack.c.l.b16 %v2159
  %v2343 = vunpack.c.h.b16 %v2159
  %v2344 = vunpack.c.l.b16 %v2160
  %v2345 = vunpack.c.h.b16 %v2160
  %v2346 = vunpack.c.l.b16 %v2161
  %v2347 = vunpack.c.h.b16 %v2161
  %v2348 = vunpack.c.l.b16 %v2162
  %v2349 = vunpack.c.h.b16 %v2162
  %v2350 = vunpack.c.l.b16 %v2163
  %v2351 = vunpack.c.h.b16 %v2163
  %v2352 = vunpack.c.l.b16 %v2164
  %v2353 = vunpack.c.h.b16 %v2164
  %v2354 = vunpack.c.l.b16 %v2165
  %v2355 = vunpack.c.h.b16 %v2165
  %v2356 = vunpack.c.l.b16 %v2166
  %v2357 = vunpack.c.h.b16 %v2166
  %v2358 = vunpack.c.l.b16 %v2167
  %v2359 = vunpack.c.h.b16 %v2167
  %v2360 = vpack.c.b16 %v2236, %v2232
  %v2361 = vpack.c.b16 %v2237, %v2233
  %v2362 = vpack.c.b16 %v2238, %v2234
  %v2363 = vpack.c.b16 %v2239, %v2235
  %v2364 = vpack.c.b16 %v2244, %v2240
  %v2365 = vpack.c.b16 %v2245, %v2241
  %v2366 = vpack.c.b16 %v2246, %v2242
  %v2367 = vpack.c.b16 %v2247, %v2243
  %v2368 = vpack.c.b16 %v2252, %v2248
  %v2369 = vpack.c.b16 %v2253, %v2249
  %v2370 = vpack.c.b16 %v2254, %v2250
  %v2371 = vpack.c.b16 %v2255, %v2251
  %v2372 = vpack.c.b16 %v2260, %v2256
  %v2373 = vpack.c.b16 %v2261, %v2257
  %v2374 = vpack.c.b16 %v2262, %v2258
  %v2375 = vpack.c.b16 %v2263, %v2259
  %v2376 = vpack.c.b16 %v2268, %v2264
  %v2377 = vpack.c.b16 %v2269, %v2265
  %v2378 = vpack.c.b16 %v2270, %v2266
  %v2379 = vpack.c.b16 %v2271, %v2267
  %v2380 = vpack.c.b16 %v2276, %v2272
  %v2381 = vpack.c.b16 %v2277, %v2273
  %v2382 = vpack.c.b16 %v2278, %v2274
  %v2383 = vpack.c.b16 %v2279, %v2275
  %v2384 = vpack.c.b16 %v2284, %v2280
  %v2385 = vpack.c.b16 %v2285, %v2281
  %v2386 = vpack.c.b16 %v2286, %v2282
  %v2387 = vpack.c.b16 %v2287, %v2283
  %v2388 = vpack.c.b16 %v2292, %v2288
  %v2389 = vpack.c.b16 %v2293, %v2289
  %v2390 = vpack.c.b16 %v2294, %v2290
  %v2391 = vpack.c.b16 %v2295, %v2291
  %v2392 = vpack.c.b16 %v2300, %v2296
  %v2393 = vpack.c.b16 %v2301, %v2297
  %v2394 = vpack.c.b16 %v2302, %v2298
  %v2395 = vpack.c.b16 %v2303, %v2299
  %v2396 = vpack.c.b16 %v2308, %v2304
  %v2397 = vpack.c.b16 %v2309, %v2305
  %v2398 = vpack.c.b16 %v2310, %v2306
  %v2399 = vpack.c.b16 %v2311, %v2307
  %v2400 = vpack.c.b16 %v2316, %v2312
  %v2401 = vpack.c.b16 %v2317, %v2313
  %v2402 = vpack.c.b16 %v2318, %v2314
  %v2403 = vpack.c.b16 %v2319, %v2315
  %v2404 = vpack.c.b16 %v2324, %v2320
  %v2405 = vpack.c.b16 %v2325, %v2321
  %v2406 = vpack.c.b16 %v2326, %v2322
  %v2407 = vpack.c.b16 %v2327, %v2323
  %v2408 = vpack.c.b16 %v2332, %v2328
  %v2409 = vpack.c.b16 %v2333, %v2329
  %v2410 = vpack.c.b16 %v2334, %v2330
  %v2411 = vpack.c.b16 %v2335, %v2331
  %v2412 = vpack.c.b16 %v2340, %v2336
  %v2413 = vpack.c.b16 %v2341, %v2337
  %v2414 = vpack.c.b16 %v2342, %v2338
  %v2415 = vpack.c.b16 %v2343, %v2339
  %v2416 = vpack.c.b16 %v2348, %v2344
  %v2417 = vpack.c.b16 %v2349, %v2345
  %v2418 = vpack.c.b16 %v2350, %v2346
  %v2419 = vpack.c.b16 %v2351, %v2347
  %v2420 = vpack.c.b16 %v2356, %v2352
  %v2421 = vpack.c.b16 %v2357, %v2353
  %v2422 = vpack.c.b16 %v2358, %v2354
  %v2423 = vpack.c.b16 %v2359, %v2355
  %2488 = vmatprep.subr.bf16.mxu0 %v2389
  %2489 = vmatpush1.bf16.msra.mxu0 %v2388
  %2490 = vmatprep.subr.bf16.mxu0 %v2385
  %2491 = vmatpush1.bf16.msra.mxu0 %v2384
  %2492 = vmatprep.subr.bf16.mxu0 %v2381
  %2493 = vmatpush1.bf16.msra.mxu0 %v2380
  %2494 = vmatprep.subr.bf16.mxu0 %v2377
  %2495 = vmatpush1.bf16.msra.mxu0 %v2376
  %2496 = vmatprep.subr.bf16.mxu0 %v2373
  %2497 = vmatpush1.bf16.msra.mxu0 %v2372
  %2498 = vmatprep.subr.bf16.mxu0 %v2369
  %2499 = vmatpush1.bf16.msra.mxu0 %v2368
  %2500 = vmatprep.subr.bf16.mxu0 %v2365
  %2501 = vmatpush1.bf16.msra.mxu0 %v2364
  %2502 = vmatprep.subr.bf16.mxu0 %v2361
  %2503 = vmatpush1.bf16.msra.mxu0 %v2360
  %2504 = vmatprep.subr.bf16.mxu0 %v2421
  %2505 = vmatpush2.bf16.msra.mxu0 %v2420
  %2506 = vmatprep.subr.bf16.mxu0 %v2417
  %2507 = vmatpush2.bf16.msra.mxu0 %v2416
  %2508 = vmatprep.subr.bf16.mxu0 %v2413
  %2509 = vmatpush2.bf16.msra.mxu0 %v2412
  %2510 = vmatprep.subr.bf16.mxu0 %v2409
  %2511 = vmatpush2.bf16.msra.mxu0 %v2408
  %2512 = vmatprep.subr.bf16.mxu0 %v2405
  %2513 = vmatpush2.bf16.msra.mxu0 %v2404
  %2514 = vmatprep.subr.bf16.mxu0 %v2401
  %2515 = vmatpush2.bf16.msra.mxu0 %v2400
  %2516 = vmatprep.subr.bf16.mxu0 %v2397
  %2517 = vmatpush2.bf16.msra.mxu0 %v2396
  %2518 = vmatprep.subr.bf16.mxu0 %v2393
  %2519 = vmatpush2.bf16.msra.mxu0 %v2392
  %2520 = vmatprep.mubr.bf16.mxu0 %v2103
  %2521 = vmatmul.mubr.bf16.gmra.mxu0 %v2102
  %v2522 = vpop.f32.mrf.mxu0
  %v2523 = vadd.f32 %v2098, %v2522
  %v2524 = vpop.f32.mrf.mxu0
  %v2525 = vadd.f32 %v2099, %v2524
  %v2526 = vpop.f32.mrf.mxu0
  %v2527 = vpop.f32.mrf.mxu0
  %2528 = vdwg.mxu0
  %2529 = vmatprep.subr.bf16.mxu0 %v2391
  %2530 = vmatpush1.bf16.msra.mxu0 %v2390
  %2531 = vmatprep.subr.bf16.mxu0 %v2387
  %2532 = vmatpush1.bf16.msra.mxu0 %v2386
  %2533 = vmatprep.subr.bf16.mxu0 %v2383
  %2534 = vmatpush1.bf16.msra.mxu0 %v2382
  %2535 = vmatprep.subr.bf16.mxu0 %v2379
  %2536 = vmatpush1.bf16.msra.mxu0 %v2378
  %2537 = vmatprep.subr.bf16.mxu0 %v2375
  %2538 = vmatpush1.bf16.msra.mxu0 %v2374
  %2539 = vmatprep.subr.bf16.mxu0 %v2371
  %2540 = vmatpush1.bf16.msra.mxu0 %v2370
  %2541 = vmatprep.subr.bf16.mxu0 %v2367
  %2542 = vmatpush1.bf16.msra.mxu0 %v2366
  %2543 = vmatprep.subr.bf16.mxu0 %v2363
  %2544 = vmatpush1.bf16.msra.mxu0 %v2362
  %2545 = vmatprep.subr.bf16.mxu0 %v2423
  %2546 = vmatpush2.bf16.msra.mxu0 %v2422
  %2547 = vmatprep.subr.bf16.mxu0 %v2419
  %2548 = vmatpush2.bf16.msra.mxu0 %v2418
  %2549 = vmatprep.subr.bf16.mxu0 %v2415
  %2550 = vmatpush2.bf16.msra.mxu0 %v2414
  %2551 = vmatprep.subr.bf16.mxu0 %v2411
  %2552 = vmatpush2.bf16.msra.mxu0 %v2410
  %2553 = vmatprep.subr.bf16.mxu0 %v2407
  %2554 = vmatpush2.bf16.msra.mxu0 %v2406
  %2555 = vmatprep.subr.bf16.mxu0 %v2403
  %2556 = vmatpush2.bf16.msra.mxu0 %v2402
  %2557 = vmatprep.subr.bf16.mxu0 %v2399
  %2558 = vmatpush2.bf16.msra.mxu0 %v2398
  %2559 = vmatprep.subr.bf16.mxu0 %v2395
  %2560 = vmatpush2.bf16.msra.mxu0 %v2394
  %2561 = vmatprep.mubr.bf16.mxu0 %v2103
  %2562 = vmatmul.mubr.bf16.gmra.mxu0 %v2102
  %v2563 = vpop.f32.mrf.mxu0
  %v2564 = vadd.f32 %v2100, %v2563
  %v2565 = vpop.f32.mrf.mxu0
  %v2566 = vadd.f32 %v2101, %v2565
  %v2567 = vpop.f32.mrf.mxu0
  %v2568 = vpop.f32.mrf.mxu0
  %2569 = vdwg.mxu0
  %v2570 = vxor.u32 %v2523, 2147483648
  %v2571 = vmul.f32 %v2570, 1.442695
  %v2572 = vpow.pop %v2571
  %v2573 = vadd.f32 %v2572, 1.0
  %v2574 = vrcp.pop %v2573
  %v2575 = vmul.f32 1.0, %v2574
  %v2576 = vxor.u32 %v2525, 2147483648
  %v2577 = vmul.f32 %v2576, 1.442695
  %v2578 = vpow.pop %v2577
  %v2579 = vadd.f32 %v2578, 1.0
  %v2580 = vrcp.pop %v2579
  %v2581 = vmul.f32 1.0, %v2580
  %v2582 = vtanh.pop %v2564
  %v2583 = vxor.u32 %v2566, 2147483648
  %v2584 = vmul.f32 %v2583, 1.442695
  %v2585 = vpow.pop %v2584
  %v2586 = vadd.f32 %v2585, 1.0
  %v2587 = vrcp.pop %v2586
  %v2588 = vmul.f32 1.0, %v2587
  %v2589 = vmul.f32 %v2581, %v2076
  %v2590 = vmul.f32 %v2575, %v2582
  %v2591 = vadd.f32 %v2589, %v2590
  %v2592 = vtanh.pop %v2591
  %v2593 = vmul.f32 %v2588, %v2592
  %v2594 = vmul.f32 %v2593, %v78
  %v2595 = vmul.f32 %v2593, %v83
  %2596 = vst [vmem:[#allocation3 + $0x80] sm:$0x3] %v2593
  %v2598 = vrot.slane %v2593, 6
  %2600 = vst [vmem:[#allocation3 + $0x70] sm:$0xc] %v2598
  %v2601 = vrot.slane %v2593, 2
  %2603 = vst [vmem:[#allocation3 + $0x68] sm:$0x3] %v2601
  %2604 = vst [vmem:[#allocation3 + $0x98] sm:$0xc] %v2593
  %v2605 = vld [vmem:[#allocation2 + $0xa0] sm:$0xff]
  %v2606 = vld [vmem:[#allocation2 + $0xa8] sm:$0xff]
  %v2607 = vld [vmem:[#allocation2 + $0xb0] sm:$0xff]
  %v2608 = vld [vmem:[#allocation2 + $0xb8] sm:$0xff]
  %v2609 = vld [vmem:[%s2] sm:$0xff]
  %v2610 = vld [vmem:[%s2 + $0x8] sm:$0xff]
  %v2611 = vld [vmem:[%s2 + $0x10] sm:$0xff]
  %v2612 = vld [vmem:[%s2 + $0x18] sm:$0xff]
  %v2613 = vadd.f32 %v2605, %v2609
  %v2614 = vadd.f32 %v2606, %v2610
  %v2615 = vadd.f32 %v2607, %v2611
  %v2616 = vadd.f32 %v2608, %v2612
  %v2617 = vpack.c.bf16 %v2594, %v2594
  %v2618 = vpack.c.bf16 %v2595, %v2595
  %v2619 = vld [vmem:[%s3] sm:$0xff]
  %v2620 = vld [vmem:[%s3 + $0x8] sm:$0xff]
  %v2621 = vld [vmem:[%s3 + $0x10] sm:$0xff]
  %v2622 = vld [vmem:[%s3 + $0x18] sm:$0xff]
  %v2623 = vld [vmem:[%s3 + $0x20] sm:$0xff]
  %v2624 = vld [vmem:[%s3 + $0x28] sm:$0xff]
  %v2625 = vld [vmem:[%s3 + $0x30] sm:$0xff]
  %v2626 = vld [vmem:[%s3 + $0x38] sm:$0xff]
  %v2627 = vld [vmem:[%s3 + $0x40] sm:$0xff]
  %v2628 = vld [vmem:[%s3 + $0x48] sm:$0xff]
  %v2629 = vld [vmem:[%s3 + $0x50] sm:$0xff]
  %v2630 = vld [vmem:[%s3 + $0x58] sm:$0xff]
  %v2631 = vld [vmem:[%s3 + $0x60] sm:$0xff]
  %v2632 = vld [vmem:[%s3 + $0x68] sm:$0xff]
  %v2633 = vld [vmem:[%s3 + $0x70] sm:$0xff]
  %v2634 = vld [vmem:[%s3 + $0x78] sm:$0xff]
  %v2635 = vld [vmem:[%s3 + $0x80] sm:$0xff]
  %v2636 = vld [vmem:[%s3 + $0x88] sm:$0xff]
  %v2637 = vld [vmem:[%s3 + $0x90] sm:$0xff]
  %v2638 = vld [vmem:[%s3 + $0x98] sm:$0xff]
  %v2639 = vld [vmem:[%s3 + $0xa0] sm:$0xff]
  %v2640 = vld [vmem:[%s3 + $0xa8] sm:$0xff]
  %v2641 = vld [vmem:[%s3 + $0xb0] sm:$0xff]
  %v2642 = vld [vmem:[%s3 + $0xb8] sm:$0xff]
  %v2643 = vld [vmem:[%s3 + $0xc0] sm:$0xff]
  %v2644 = vld [vmem:[%s3 + $0xc8] sm:$0xff]
  %v2645 = vld [vmem:[%s3 + $0xd0] sm:$0xff]
  %v2646 = vld [vmem:[%s3 + $0xd8] sm:$0xff]
  %v2647 = vld [vmem:[%s3 + $0xe0] sm:$0xff]
  %v2648 = vld [vmem:[%s3 + $0xe8] sm:$0xff]
  %v2649 = vld [vmem:[%s3 + $0xf0] sm:$0xff]
  %v2650 = vld [vmem:[%s3 + $0xf8] sm:$0xff]
  %v2651 = vld [vmem:[%s3 + $0x100] sm:$0xff]
  %v2652 = vld [vmem:[%s3 + $0x108] sm:$0xff]
  %v2653 = vld [vmem:[%s3 + $0x110] sm:$0xff]
  %v2654 = vld [vmem:[%s3 + $0x118] sm:$0xff]
  %v2655 = vld [vmem:[%s3 + $0x120] sm:$0xff]
  %v2656 = vld [vmem:[%s3 + $0x128] sm:$0xff]
  %v2657 = vld [vmem:[%s3 + $0x130] sm:$0xff]
  %v2658 = vld [vmem:[%s3 + $0x138] sm:$0xff]
  %v2659 = vld [vmem:[%s3 + $0x140] sm:$0xff]
  %v2660 = vld [vmem:[%s3 + $0x148] sm:$0xff]
  %v2661 = vld [vmem:[%s3 + $0x150] sm:$0xff]
  %v2662 = vld [vmem:[%s3 + $0x158] sm:$0xff]
  %v2663 = vld [vmem:[%s3 + $0x160] sm:$0xff]
  %v2664 = vld [vmem:[%s3 + $0x168] sm:$0xff]
  %v2665 = vld [vmem:[%s3 + $0x170] sm:$0xff]
  %v2666 = vld [vmem:[%s3 + $0x178] sm:$0xff]
  %v2667 = vld [vmem:[%s3 + $0x180] sm:$0xff]
  %v2668 = vld [vmem:[%s3 + $0x188] sm:$0xff]
  %v2669 = vld [vmem:[%s3 + $0x190] sm:$0xff]
  %v2670 = vld [vmem:[%s3 + $0x198] sm:$0xff]
  %v2671 = vld [vmem:[%s3 + $0x1a0] sm:$0xff]
  %v2672 = vld [vmem:[%s3 + $0x1a8] sm:$0xff]
  %v2673 = vld [vmem:[%s3 + $0x1b0] sm:$0xff]
  %v2674 = vld [vmem:[%s3 + $0x1b8] sm:$0xff]
  %v2675 = vld [vmem:[%s3 + $0x1c0] sm:$0xff]
  %v2676 = vld [vmem:[%s3 + $0x1c8] sm:$0xff]
  %v2677 = vld [vmem:[%s3 + $0x1d0] sm:$0xff]
  %v2678 = vld [vmem:[%s3 + $0x1d8] sm:$0xff]
  %v2679 = vld [vmem:[%s3 + $0x1e0] sm:$0xff]
  %v2680 = vld [vmem:[%s3 + $0x1e8] sm:$0xff]
  %v2681 = vld [vmem:[%s3 + $0x1f0] sm:$0xff]
  %v2682 = vld [vmem:[%s3 + $0x1f8] sm:$0xff]
  %v2747 = vunpack.c.l.b16 %v2619
  %v2748 = vunpack.c.h.b16 %v2619
  %v2749 = vunpack.c.l.b16 %v2620
  %v2750 = vunpack.c.h.b16 %v2620
  %v2751 = vunpack.c.l.b16 %v2621
  %v2752 = vunpack.c.h.b16 %v2621
  %v2753 = vunpack.c.l.b16 %v2622
  %v2754 = vunpack.c.h.b16 %v2622
  %v2755 = vunpack.c.l.b16 %v2623
  %v2756 = vunpack.c.h.b16 %v2623
  %v2757 = vunpack.c.l.b16 %v2624
  %v2758 = vunpack.c.h.b16 %v2624
  %v2759 = vunpack.c.l.b16 %v2625
  %v2760 = vunpack.c.h.b16 %v2625
  %v2761 = vunpack.c.l.b16 %v2626
  %v2762 = vunpack.c.h.b16 %v2626
  %v2763 = vunpack.c.l.b16 %v2627
  %v2764 = vunpack.c.h.b16 %v2627
  %v2765 = vunpack.c.l.b16 %v2628
  %v2766 = vunpack.c.h.b16 %v2628
  %v2767 = vunpack.c.l.b16 %v2629
  %v2768 = vunpack.c.h.b16 %v2629
  %v2769 = vunpack.c.l.b16 %v2630
  %v2770 = vunpack.c.h.b16 %v2630
  %v2771 = vunpack.c.l.b16 %v2631
  %v2772 = vunpack.c.h.b16 %v2631
  %v2773 = vunpack.c.l.b16 %v2632
  %v2774 = vunpack.c.h.b16 %v2632
  %v2775 = vunpack.c.l.b16 %v2633
  %v2776 = vunpack.c.h.b16 %v2633
  %v2777 = vunpack.c.l.b16 %v2634
  %v2778 = vunpack.c.h.b16 %v2634
  %v2779 = vunpack.c.l.b16 %v2635
  %v2780 = vunpack.c.h.b16 %v2635
  %v2781 = vunpack.c.l.b16 %v2636
  %v2782 = vunpack.c.h.b16 %v2636
  %v2783 = vunpack.c.l.b16 %v2637
  %v2784 = vunpack.c.h.b16 %v2637
  %v2785 = vunpack.c.l.b16 %v2638
  %v2786 = vunpack.c.h.b16 %v2638
  %v2787 = vunpack.c.l.b16 %v2639
  %v2788 = vunpack.c.h.b16 %v2639
  %v2789 = vunpack.c.l.b16 %v2640
  %v2790 = vunpack.c.h.b16 %v2640
  %v2791 = vunpack.c.l.b16 %v2641
  %v2792 = vunpack.c.h.b16 %v2641
  %v2793 = vunpack.c.l.b16 %v2642
  %v2794 = vunpack.c.h.b16 %v2642
  %v2795 = vunpack.c.l.b16 %v2643
  %v2796 = vunpack.c.h.b16 %v2643
  %v2797 = vunpack.c.l.b16 %v2644
  %v2798 = vunpack.c.h.b16 %v2644
  %v2799 = vunpack.c.l.b16 %v2645
  %v2800 = vunpack.c.h.b16 %v2645
  %v2801 = vunpack.c.l.b16 %v2646
  %v2802 = vunpack.c.h.b16 %v2646
  %v2803 = vunpack.c.l.b16 %v2647
  %v2804 = vunpack.c.h.b16 %v2647
  %v2805 = vunpack.c.l.b16 %v2648
  %v2806 = vunpack.c.h.b16 %v2648
  %v2807 = vunpack.c.l.b16 %v2649
  %v2808 = vunpack.c.h.b16 %v2649
  %v2809 = vunpack.c.l.b16 %v2650
  %v2810 = vunpack.c.h.b16 %v2650
  %v2811 = vunpack.c.l.b16 %v2651
  %v2812 = vunpack.c.h.b16 %v2651
  %v2813 = vunpack.c.l.b16 %v2652
  %v2814 = vunpack.c.h.b16 %v2652
  %v2815 = vunpack.c.l.b16 %v2653
  %v2816 = vunpack.c.h.b16 %v2653
  %v2817 = vunpack.c.l.b16 %v2654
  %v2818 = vunpack.c.h.b16 %v2654
  %v2819 = vunpack.c.l.b16 %v2655
  %v2820 = vunpack.c.h.b16 %v2655
  %v2821 = vunpack.c.l.b16 %v2656
  %v2822 = vunpack.c.h.b16 %v2656
  %v2823 = vunpack.c.l.b16 %v2657
  %v2824 = vunpack.c.h.b16 %v2657
  %v2825 = vunpack.c.l.b16 %v2658
  %v2826 = vunpack.c.h.b16 %v2658
  %v2827 = vunpack.c.l.b16 %v2659
  %v2828 = vunpack.c.h.b16 %v2659
  %v2829 = vunpack.c.l.b16 %v2660
  %v2830 = vunpack.c.h.b16 %v2660
  %v2831 = vunpack.c.l.b16 %v2661
  %v2832 = vunpack.c.h.b16 %v2661
  %v2833 = vunpack.c.l.b16 %v2662
  %v2834 = vunpack.c.h.b16 %v2662
  %v2835 = vunpack.c.l.b16 %v2663
  %v2836 = vunpack.c.h.b16 %v2663
  %v2837 = vunpack.c.l.b16 %v2664
  %v2838 = vunpack.c.h.b16 %v2664
  %v2839 = vunpack.c.l.b16 %v2665
  %v2840 = vunpack.c.h.b16 %v2665
  %v2841 = vunpack.c.l.b16 %v2666
  %v2842 = vunpack.c.h.b16 %v2666
  %v2843 = vunpack.c.l.b16 %v2667
  %v2844 = vunpack.c.h.b16 %v2667
  %v2845 = vunpack.c.l.b16 %v2668
  %v2846 = vunpack.c.h.b16 %v2668
  %v2847 = vunpack.c.l.b16 %v2669
  %v2848 = vunpack.c.h.b16 %v2669
  %v2849 = vunpack.c.l.b16 %v2670
  %v2850 = vunpack.c.h.b16 %v2670
  %v2851 = vunpack.c.l.b16 %v2671
  %v2852 = vunpack.c.h.b16 %v2671
  %v2853 = vunpack.c.l.b16 %v2672
  %v2854 = vunpack.c.h.b16 %v2672
  %v2855 = vunpack.c.l.b16 %v2673
  %v2856 = vunpack.c.h.b16 %v2673
  %v2857 = vunpack.c.l.b16 %v2674
  %v2858 = vunpack.c.h.b16 %v2674
  %v2859 = vunpack.c.l.b16 %v2675
  %v2860 = vunpack.c.h.b16 %v2675
  %v2861 = vunpack.c.l.b16 %v2676
  %v2862 = vunpack.c.h.b16 %v2676
  %v2863 = vunpack.c.l.b16 %v2677
  %v2864 = vunpack.c.h.b16 %v2677
  %v2865 = vunpack.c.l.b16 %v2678
  %v2866 = vunpack.c.h.b16 %v2678
  %v2867 = vunpack.c.l.b16 %v2679
  %v2868 = vunpack.c.h.b16 %v2679
  %v2869 = vunpack.c.l.b16 %v2680
  %v2870 = vunpack.c.h.b16 %v2680
  %v2871 = vunpack.c.l.b16 %v2681
  %v2872 = vunpack.c.h.b16 %v2681
  %v2873 = vunpack.c.l.b16 %v2682
  %v2874 = vunpack.c.h.b16 %v2682
  %v2875 = vpack.c.b16 %v2751, %v2747
  %v2876 = vpack.c.b16 %v2752, %v2748
  %v2877 = vpack.c.b16 %v2753, %v2749
  %v2878 = vpack.c.b16 %v2754, %v2750
  %v2879 = vpack.c.b16 %v2759, %v2755
  %v2880 = vpack.c.b16 %v2760, %v2756
  %v2881 = vpack.c.b16 %v2761, %v2757
  %v2882 = vpack.c.b16 %v2762, %v2758
  %v2883 = vpack.c.b16 %v2767, %v2763
  %v2884 = vpack.c.b16 %v2768, %v2764
  %v2885 = vpack.c.b16 %v2769, %v2765
  %v2886 = vpack.c.b16 %v2770, %v2766
  %v2887 = vpack.c.b16 %v2775, %v2771
  %v2888 = vpack.c.b16 %v2776, %v2772
  %v2889 = vpack.c.b16 %v2777, %v2773
  %v2890 = vpack.c.b16 %v2778, %v2774
  %v2891 = vpack.c.b16 %v2783, %v2779
  %v2892 = vpack.c.b16 %v2784, %v2780
  %v2893 = vpack.c.b16 %v2785, %v2781
  %v2894 = vpack.c.b16 %v2786, %v2782
  %v2895 = vpack.c.b16 %v2791, %v2787
  %v2896 = vpack.c.b16 %v2792, %v2788
  %v2897 = vpack.c.b16 %v2793, %v2789
  %v2898 = vpack.c.b16 %v2794, %v2790
  %v2899 = vpack.c.b16 %v2799, %v2795
  %v2900 = vpack.c.b16 %v2800, %v2796
  %v2901 = vpack.c.b16 %v2801, %v2797
  %v2902 = vpack.c.b16 %v2802, %v2798
  %v2903 = vpack.c.b16 %v2807, %v2803
  %v2904 = vpack.c.b16 %v2808, %v2804
  %v2905 = vpack.c.b16 %v2809, %v2805
  %v2906 = vpack.c.b16 %v2810, %v2806
  %v2907 = vpack.c.b16 %v2815, %v2811
  %v2908 = vpack.c.b16 %v2816, %v2812
  %v2909 = vpack.c.b16 %v2817, %v2813
  %v2910 = vpack.c.b16 %v2818, %v2814
  %v2911 = vpack.c.b16 %v2823, %v2819
  %v2912 = vpack.c.b16 %v2824, %v2820
  %v2913 = vpack.c.b16 %v2825, %v2821
  %v2914 = vpack.c.b16 %v2826, %v2822
  %v2915 = vpack.c.b16 %v2831, %v2827
  %v2916 = vpack.c.b16 %v2832, %v2828
  %v2917 = vpack.c.b16 %v2833, %v2829
  %v2918 = vpack.c.b16 %v2834, %v2830
  %v2919 = vpack.c.b16 %v2839, %v2835
  %v2920 = vpack.c.b16 %v2840, %v2836
  %v2921 = vpack.c.b16 %v2841, %v2837
  %v2922 = vpack.c.b16 %v2842, %v2838
  %v2923 = vpack.c.b16 %v2847, %v2843
  %v2924 = vpack.c.b16 %v2848, %v2844
  %v2925 = vpack.c.b16 %v2849, %v2845
  %v2926 = vpack.c.b16 %v2850, %v2846
  %v2927 = vpack.c.b16 %v2855, %v2851
  %v2928 = vpack.c.b16 %v2856, %v2852
  %v2929 = vpack.c.b16 %v2857, %v2853
  %v2930 = vpack.c.b16 %v2858, %v2854
  %v2931 = vpack.c.b16 %v2863, %v2859
  %v2932 = vpack.c.b16 %v2864, %v2860
  %v2933 = vpack.c.b16 %v2865, %v2861
  %v2934 = vpack.c.b16 %v2866, %v2862
  %v2935 = vpack.c.b16 %v2871, %v2867
  %v2936 = vpack.c.b16 %v2872, %v2868
  %v2937 = vpack.c.b16 %v2873, %v2869
  %v2938 = vpack.c.b16 %v2874, %v2870
  %3003 = vmatprep.subr.bf16.mxu0 %v2904
  %3004 = vmatpush1.bf16.msra.mxu0 %v2903
  %3005 = vmatprep.subr.bf16.mxu0 %v2900
  %3006 = vmatpush1.bf16.msra.mxu0 %v2899
  %3007 = vmatprep.subr.bf16.mxu0 %v2896
  %3008 = vmatpush1.bf16.msra.mxu0 %v2895
  %3009 = vmatprep.subr.bf16.mxu0 %v2892
  %3010 = vmatpush1.bf16.msra.mxu0 %v2891
  %3011 = vmatprep.subr.bf16.mxu0 %v2888
  %3012 = vmatpush1.bf16.msra.mxu0 %v2887
  %3013 = vmatprep.subr.bf16.mxu0 %v2884
  %3014 = vmatpush1.bf16.msra.mxu0 %v2883
  %3015 = vmatprep.subr.bf16.mxu0 %v2880
  %3016 = vmatpush1.bf16.msra.mxu0 %v2879
  %3017 = vmatprep.subr.bf16.mxu0 %v2876
  %3018 = vmatpush1.bf16.msra.mxu0 %v2875
  %3019 = vmatprep.subr.bf16.mxu0 %v2936
  %3020 = vmatpush2.bf16.msra.mxu0 %v2935
  %3021 = vmatprep.subr.bf16.mxu0 %v2932
  %3022 = vmatpush2.bf16.msra.mxu0 %v2931
  %3023 = vmatprep.subr.bf16.mxu0 %v2928
  %3024 = vmatpush2.bf16.msra.mxu0 %v2927
  %3025 = vmatprep.subr.bf16.mxu0 %v2924
  %3026 = vmatpush2.bf16.msra.mxu0 %v2923
  %3027 = vmatprep.subr.bf16.mxu0 %v2920
  %3028 = vmatpush2.bf16.msra.mxu0 %v2919
  %3029 = vmatprep.subr.bf16.mxu0 %v2916
  %3030 = vmatpush2.bf16.msra.mxu0 %v2915
  %3031 = vmatprep.subr.bf16.mxu0 %v2912
  %3032 = vmatpush2.bf16.msra.mxu0 %v2911
  %3033 = vmatprep.subr.bf16.mxu0 %v2908
  %3034 = vmatpush2.bf16.msra.mxu0 %v2907
  %3035 = vmatprep.mubr.bf16.mxu0 %v2618
  %3036 = vmatmul.mubr.bf16.gmra.mxu0 %v2617
  %v3037 = vpop.f32.mrf.mxu0
  %v3038 = vadd.f32 %v2613, %v3037
  %v3039 = vpop.f32.mrf.mxu0
  %v3040 = vadd.f32 %v2614, %v3039
  %v3041 = vpop.f32.mrf.mxu0
  %v3042 = vpop.f32.mrf.mxu0
  %3043 = vdwg.mxu0
  %3044 = vmatprep.subr.bf16.mxu0 %v2906
  %3045 = vmatpush1.bf16.msra.mxu0 %v2905
  %3046 = vmatprep.subr.bf16.mxu0 %v2902
  %3047 = vmatpush1.bf16.msra.mxu0 %v2901
  %3048 = vmatprep.subr.bf16.mxu0 %v2898
  %3049 = vmatpush1.bf16.msra.mxu0 %v2897
  %3050 = vmatprep.subr.bf16.mxu0 %v2894
  %3051 = vmatpush1.bf16.msra.mxu0 %v2893
  %3052 = vmatprep.subr.bf16.mxu0 %v2890
  %3053 = vmatpush1.bf16.msra.mxu0 %v2889
  %3054 = vmatprep.subr.bf16.mxu0 %v2886
  %3055 = vmatpush1.bf16.msra.mxu0 %v2885
  %3056 = vmatprep.subr.bf16.mxu0 %v2882
  %3057 = vmatpush1.bf16.msra.mxu0 %v2881
  %3058 = vmatprep.subr.bf16.mxu0 %v2878
  %3059 = vmatpush1.bf16.msra.mxu0 %v2877
  %3060 = vmatprep.subr.bf16.mxu0 %v2938
  %3061 = vmatpush2.bf16.msra.mxu0 %v2937
  %3062 = vmatprep.subr.bf16.mxu0 %v2934
  %3063 = vmatpush2.bf16.msra.mxu0 %v2933
  %3064 = vmatprep.subr.bf16.mxu0 %v2930
  %3065 = vmatpush2.bf16.msra.mxu0 %v2929
  %3066 = vmatprep.subr.bf16.mxu0 %v2926
  %3067 = vmatpush2.bf16.msra.mxu0 %v2925
  %3068 = vmatprep.subr.bf16.mxu0 %v2922
  %3069 = vmatpush2.bf16.msra.mxu0 %v2921
  %3070 = vmatprep.subr.bf16.mxu0 %v2918
  %3071 = vmatpush2.bf16.msra.mxu0 %v2917
  %3072 = vmatprep.subr.bf16.mxu0 %v2914
  %3073 = vmatpush2.bf16.msra.mxu0 %v2913
  %3074 = vmatprep.subr.bf16.mxu0 %v2910
  %3075 = vmatpush2.bf16.msra.mxu0 %v2909
  %3076 = vmatprep.mubr.bf16.mxu0 %v2618
  %3077 = vmatmul.mubr.bf16.gmra.mxu0 %v2617
  %v3078 = vpop.f32.mrf.mxu0
  %v3079 = vadd.f32 %v2615, %v3078
  %v3080 = vpop.f32.mrf.mxu0
  %v3081 = vadd.f32 %v2616, %v3080
  %v3082 = vpop.f32.mrf.mxu0
  %v3083 = vpop.f32.mrf.mxu0
  %3084 = vdwg.mxu0
  %v3085 = vxor.u32 %v3038, 2147483648
  %v3086 = vmul.f32 %v3085, 1.442695
  %v3087 = vpow.pop %v3086
  %v3088 = vadd.f32 %v3087, 1.0
  %v3089 = vrcp.pop %v3088
  %v3090 = vmul.f32 1.0, %v3089
  %v3091 = vxor.u32 %v3040, 2147483648
  %v3092 = vmul.f32 %v3091, 1.442695
  %v3093 = vpow.pop %v3092
  %v3094 = vadd.f32 %v3093, 1.0
  %v3095 = vrcp.pop %v3094
  %v3096 = vmul.f32 1.0, %v3095
  %v3097 = vtanh.pop %v3079
  %v3098 = vxor.u32 %v3081, 2147483648
  %v3099 = vmul.f32 %v3098, 1.442695
  %v3100 = vpow.pop %v3099
  %v3101 = vadd.f32 %v3100, 1.0
  %v3102 = vrcp.pop %v3101
  %v3103 = vmul.f32 1.0, %v3102
  %v3104 = vmul.f32 %v3096, %v2591
  %v3105 = vmul.f32 %v3090, %v3097
  %v3106 = vadd.f32 %v3104, %v3105
  %v3107 = vtanh.pop %v3106
  %v3108 = vmul.f32 %v3103, %v3107
  %v3109 = vmul.f32 %v3108, %v78
  %v3110 = vmul.f32 %v3108, %v83
  %3111 = vst [vmem:[#allocation3 + $0xa0] sm:$0x3] %v3108
  %v3113 = vrot.slane %v3108, 6
  %3115 = vst [vmem:[#allocation3 + $0x50] sm:$0xc] %v3113
  %v3116 = vrot.slane %v3108, 2
  %3118 = vst [vmem:[#allocation3 + $0x48] sm:$0x3] %v3116
  %3119 = vst [vmem:[#allocation3 + $0xb8] sm:$0xc] %v3108
  %v3120 = vld [vmem:[#allocation2 + $0xc0] sm:$0xff]
  %v3121 = vld [vmem:[#allocation2 + $0xc8] sm:$0xff]
  %v3122 = vld [vmem:[#allocation2 + $0xd0] sm:$0xff]
  %v3123 = vld [vmem:[#allocation2 + $0xd8] sm:$0xff]
  %v3124 = vld [vmem:[%s2] sm:$0xff]
  %v3125 = vld [vmem:[%s2 + $0x8] sm:$0xff]
  %v3126 = vld [vmem:[%s2 + $0x10] sm:$0xff]
  %v3127 = vld [vmem:[%s2 + $0x18] sm:$0xff]
  %v3128 = vadd.f32 %v3120, %v3124
  %v3129 = vadd.f32 %v3121, %v3125
  %v3130 = vadd.f32 %v3122, %v3126
  %v3131 = vadd.f32 %v3123, %v3127
  %v3132 = vpack.c.bf16 %v3109, %v3109
  %v3133 = vpack.c.bf16 %v3110, %v3110
  %v3134 = vld [vmem:[%s3] sm:$0xff]
  %v3135 = vld [vmem:[%s3 + $0x8] sm:$0xff]
  %v3136 = vld [vmem:[%s3 + $0x10] sm:$0xff]
  %v3137 = vld [vmem:[%s3 + $0x18] sm:$0xff]
  %v3138 = vld [vmem:[%s3 + $0x20] sm:$0xff]
  %v3139 = vld [vmem:[%s3 + $0x28] sm:$0xff]
  %v3140 = vld [vmem:[%s3 + $0x30] sm:$0xff]
  %v3141 = vld [vmem:[%s3 + $0x38] sm:$0xff]
  %v3142 = vld [vmem:[%s3 + $0x40] sm:$0xff]
  %v3143 = vld [vmem:[%s3 + $0x48] sm:$0xff]
  %v3144 = vld [vmem:[%s3 + $0x50] sm:$0xff]
  %v3145 = vld [vmem:[%s3 + $0x58] sm:$0xff]
  %v3146 = vld [vmem:[%s3 + $0x60] sm:$0xff]
  %v3147 = vld [vmem:[%s3 + $0x68] sm:$0xff]
  %v3148 = vld [vmem:[%s3 + $0x70] sm:$0xff]
  %v3149 = vld [vmem:[%s3 + $0x78] sm:$0xff]
  %v3150 = vld [vmem:[%s3 + $0x80] sm:$0xff]
  %v3151 = vld [vmem:[%s3 + $0x88] sm:$0xff]
  %v3152 = vld [vmem:[%s3 + $0x90] sm:$0xff]
  %v3153 = vld [vmem:[%s3 + $0x98] sm:$0xff]
  %v3154 = vld [vmem:[%s3 + $0xa0] sm:$0xff]
  %v3155 = vld [vmem:[%s3 + $0xa8] sm:$0xff]
  %v3156 = vld [vmem:[%s3 + $0xb0] sm:$0xff]
  %v3157 = vld [vmem:[%s3 + $0xb8] sm:$0xff]
  %v3158 = vld [vmem:[%s3 + $0xc0] sm:$0xff]
  %v3159 = vld [vmem:[%s3 + $0xc8] sm:$0xff]
  %v3160 = vld [vmem:[%s3 + $0xd0] sm:$0xff]
  %v3161 = vld [vmem:[%s3 + $0xd8] sm:$0xff]
  %v3162 = vld [vmem:[%s3 + $0xe0] sm:$0xff]
  %v3163 = vld [vmem:[%s3 + $0xe8] sm:$0xff]
  %v3164 = vld [vmem:[%s3 + $0xf0] sm:$0xff]
  %v3165 = vld [vmem:[%s3 + $0xf8] sm:$0xff]
  %v3166 = vld [vmem:[%s3 + $0x100] sm:$0xff]
  %v3167 = vld [vmem:[%s3 + $0x108] sm:$0xff]
  %v3168 = vld [vmem:[%s3 + $0x110] sm:$0xff]
  %v3169 = vld [vmem:[%s3 + $0x118] sm:$0xff]
  %v3170 = vld [vmem:[%s3 + $0x120] sm:$0xff]
  %v3171 = vld [vmem:[%s3 + $0x128] sm:$0xff]
  %v3172 = vld [vmem:[%s3 + $0x130] sm:$0xff]
  %v3173 = vld [vmem:[%s3 + $0x138] sm:$0xff]
  %v3174 = vld [vmem:[%s3 + $0x140] sm:$0xff]
  %v3175 = vld [vmem:[%s3 + $0x148] sm:$0xff]
  %v3176 = vld [vmem:[%s3 + $0x150] sm:$0xff]
  %v3177 = vld [vmem:[%s3 + $0x158] sm:$0xff]
  %v3178 = vld [vmem:[%s3 + $0x160] sm:$0xff]
  %v3179 = vld [vmem:[%s3 + $0x168] sm:$0xff]
  %v3180 = vld [vmem:[%s3 + $0x170] sm:$0xff]
  %v3181 = vld [vmem:[%s3 + $0x178] sm:$0xff]
  %v3182 = vld [vmem:[%s3 + $0x180] sm:$0xff]
  %v3183 = vld [vmem:[%s3 + $0x188] sm:$0xff]
  %v3184 = vld [vmem:[%s3 + $0x190] sm:$0xff]
  %v3185 = vld [vmem:[%s3 + $0x198] sm:$0xff]
  %v3186 = vld [vmem:[%s3 + $0x1a0] sm:$0xff]
  %v3187 = vld [vmem:[%s3 + $0x1a8] sm:$0xff]
  %v3188 = vld [vmem:[%s3 + $0x1b0] sm:$0xff]
  %v3189 = vld [vmem:[%s3 + $0x1b8] sm:$0xff]
  %v3190 = vld [vmem:[%s3 + $0x1c0] sm:$0xff]
  %v3191 = vld [vmem:[%s3 + $0x1c8] sm:$0xff]
  %v3192 = vld [vmem:[%s3 + $0x1d0] sm:$0xff]
  %v3193 = vld [vmem:[%s3 + $0x1d8] sm:$0xff]
  %v3194 = vld [vmem:[%s3 + $0x1e0] sm:$0xff]
  %v3195 = vld [vmem:[%s3 + $0x1e8] sm:$0xff]
  %v3196 = vld [vmem:[%s3 + $0x1f0] sm:$0xff]
  %v3197 = vld [vmem:[%s3 + $0x1f8] sm:$0xff]
  %v3262 = vunpack.c.l.b16 %v3134
  %v3263 = vunpack.c.h.b16 %v3134
  %v3264 = vunpack.c.l.b16 %v3135
  %v3265 = vunpack.c.h.b16 %v3135
  %v3266 = vunpack.c.l.b16 %v3136
  %v3267 = vunpack.c.h.b16 %v3136
  %v3268 = vunpack.c.l.b16 %v3137
  %v3269 = vunpack.c.h.b16 %v3137
  %v3270 = vunpack.c.l.b16 %v3138
  %v3271 = vunpack.c.h.b16 %v3138
  %v3272 = vunpack.c.l.b16 %v3139
  %v3273 = vunpack.c.h.b16 %v3139
  %v3274 = vunpack.c.l.b16 %v3140
  %v3275 = vunpack.c.h.b16 %v3140
  %v3276 = vunpack.c.l.b16 %v3141
  %v3277 = vunpack.c.h.b16 %v3141
  %v3278 = vunpack.c.l.b16 %v3142
  %v3279 = vunpack.c.h.b16 %v3142
  %v3280 = vunpack.c.l.b16 %v3143
  %v3281 = vunpack.c.h.b16 %v3143
  %v3282 = vunpack.c.l.b16 %v3144
  %v3283 = vunpack.c.h.b16 %v3144
  %v3284 = vunpack.c.l.b16 %v3145
  %v3285 = vunpack.c.h.b16 %v3145
  %v3286 = vunpack.c.l.b16 %v3146
  %v3287 = vunpack.c.h.b16 %v3146
  %v3288 = vunpack.c.l.b16 %v3147
  %v3289 = vunpack.c.h.b16 %v3147
  %v3290 = vunpack.c.l.b16 %v3148
  %v3291 = vunpack.c.h.b16 %v3148
  %v3292 = vunpack.c.l.b16 %v3149
  %v3293 = vunpack.c.h.b16 %v3149
  %v3294 = vunpack.c.l.b16 %v3150
  %v3295 = vunpack.c.h.b16 %v3150
  %v3296 = vunpack.c.l.b16 %v3151
  %v3297 = vunpack.c.h.b16 %v3151
  %v3298 = vunpack.c.l.b16 %v3152
  %v3299 = vunpack.c.h.b16 %v3152
  %v3300 = vunpack.c.l.b16 %v3153
  %v3301 = vunpack.c.h.b16 %v3153
  %v3302 = vunpack.c.l.b16 %v3154
  %v3303 = vunpack.c.h.b16 %v3154
  %v3304 = vunpack.c.l.b16 %v3155
  %v3305 = vunpack.c.h.b16 %v3155
  %v3306 = vunpack.c.l.b16 %v3156
  %v3307 = vunpack.c.h.b16 %v3156
  %v3308 = vunpack.c.l.b16 %v3157
  %v3309 = vunpack.c.h.b16 %v3157
  %v3310 = vunpack.c.l.b16 %v3158
  %v3311 = vunpack.c.h.b16 %v3158
  %v3312 = vunpack.c.l.b16 %v3159
  %v3313 = vunpack.c.h.b16 %v3159
  %v3314 = vunpack.c.l.b16 %v3160
  %v3315 = vunpack.c.h.b16 %v3160
  %v3316 = vunpack.c.l.b16 %v3161
  %v3317 = vunpack.c.h.b16 %v3161
  %v3318 = vunpack.c.l.b16 %v3162
  %v3319 = vunpack.c.h.b16 %v3162
  %v3320 = vunpack.c.l.b16 %v3163
  %v3321 = vunpack.c.h.b16 %v3163
  %v3322 = vunpack.c.l.b16 %v3164
  %v3323 = vunpack.c.h.b16 %v3164
  %v3324 = vunpack.c.l.b16 %v3165
  %v3325 = vunpack.c.h.b16 %v3165
  %v3326 = vunpack.c.l.b16 %v3166
  %v3327 = vunpack.c.h.b16 %v3166
  %v3328 = vunpack.c.l.b16 %v3167
  %v3329 = vunpack.c.h.b16 %v3167
  %v3330 = vunpack.c.l.b16 %v3168
  %v3331 = vunpack.c.h.b16 %v3168
  %v3332 = vunpack.c.l.b16 %v3169
  %v3333 = vunpack.c.h.b16 %v3169
  %v3334 = vunpack.c.l.b16 %v3170
  %v3335 = vunpack.c.h.b16 %v3170
  %v3336 = vunpack.c.l.b16 %v3171
  %v3337 = vunpack.c.h.b16 %v3171
  %v3338 = vunpack.c.l.b16 %v3172
  %v3339 = vunpack.c.h.b16 %v3172
  %v3340 = vunpack.c.l.b16 %v3173
  %v3341 = vunpack.c.h.b16 %v3173
  %v3342 = vunpack.c.l.b16 %v3174
  %v3343 = vunpack.c.h.b16 %v3174
  %v3344 = vunpack.c.l.b16 %v3175
  %v3345 = vunpack.c.h.b16 %v3175
  %v3346 = vunpack.c.l.b16 %v3176
  %v3347 = vunpack.c.h.b16 %v3176
  %v3348 = vunpack.c.l.b16 %v3177
  %v3349 = vunpack.c.h.b16 %v3177
  %v3350 = vunpack.c.l.b16 %v3178
  %v3351 = vunpack.c.h.b16 %v3178
  %v3352 = vunpack.c.l.b16 %v3179
  %v3353 = vunpack.c.h.b16 %v3179
  %v3354 = vunpack.c.l.b16 %v3180
  %v3355 = vunpack.c.h.b16 %v3180
  %v3356 = vunpack.c.l.b16 %v3181
  %v3357 = vunpack.c.h.b16 %v3181
  %v3358 = vunpack.c.l.b16 %v3182
  %v3359 = vunpack.c.h.b16 %v3182
  %v3360 = vunpack.c.l.b16 %v3183
  %v3361 = vunpack.c.h.b16 %v3183
  %v3362 = vunpack.c.l.b16 %v3184
  %v3363 = vunpack.c.h.b16 %v3184
  %v3364 = vunpack.c.l.b16 %v3185
  %v3365 = vunpack.c.h.b16 %v3185
  %v3366 = vunpack.c.l.b16 %v3186
  %v3367 = vunpack.c.h.b16 %v3186
  %v3368 = vunpack.c.l.b16 %v3187
  %v3369 = vunpack.c.h.b16 %v3187
  %v3370 = vunpack.c.l.b16 %v3188
  %v3371 = vunpack.c.h.b16 %v3188
  %v3372 = vunpack.c.l.b16 %v3189
  %v3373 = vunpack.c.h.b16 %v3189
  %v3374 = vunpack.c.l.b16 %v3190
  %v3375 = vunpack.c.h.b16 %v3190
  %v3376 = vunpack.c.l.b16 %v3191
  %v3377 = vunpack.c.h.b16 %v3191
  %v3378 = vunpack.c.l.b16 %v3192
  %v3379 = vunpack.c.h.b16 %v3192
  %v3380 = vunpack.c.l.b16 %v3193
  %v3381 = vunpack.c.h.b16 %v3193
  %v3382 = vunpack.c.l.b16 %v3194
  %v3383 = vunpack.c.h.b16 %v3194
  %v3384 = vunpack.c.l.b16 %v3195
  %v3385 = vunpack.c.h.b16 %v3195
  %v3386 = vunpack.c.l.b16 %v3196
  %v3387 = vunpack.c.h.b16 %v3196
  %v3388 = vunpack.c.l.b16 %v3197
  %v3389 = vunpack.c.h.b16 %v3197
  %v3390 = vpack.c.b16 %v3266, %v3262
  %v3391 = vpack.c.b16 %v3267, %v3263
  %v3392 = vpack.c.b16 %v3268, %v3264
  %v3393 = vpack.c.b16 %v3269, %v3265
  %v3394 = vpack.c.b16 %v3274, %v3270
  %v3395 = vpack.c.b16 %v3275, %v3271
  %v3396 = vpack.c.b16 %v3276, %v3272
  %v3397 = vpack.c.b16 %v3277, %v3273
  %v3398 = vpack.c.b16 %v3282, %v3278
  %v3399 = vpack.c.b16 %v3283, %v3279
  %v3400 = vpack.c.b16 %v3284, %v3280
  %v3401 = vpack.c.b16 %v3285, %v3281
  %v3402 = vpack.c.b16 %v3290, %v3286
  %v3403 = vpack.c.b16 %v3291, %v3287
  %v3404 = vpack.c.b16 %v3292, %v3288
  %v3405 = vpack.c.b16 %v3293, %v3289
  %v3406 = vpack.c.b16 %v3298, %v3294
  %v3407 = vpack.c.b16 %v3299, %v3295
  %v3408 = vpack.c.b16 %v3300, %v3296
  %v3409 = vpack.c.b16 %v3301, %v3297
  %v3410 = vpack.c.b16 %v3306, %v3302
  %v3411 = vpack.c.b16 %v3307, %v3303
  %v3412 = vpack.c.b16 %v3308, %v3304
  %v3413 = vpack.c.b16 %v3309, %v3305
  %v3414 = vpack.c.b16 %v3314, %v3310
  %v3415 = vpack.c.b16 %v3315, %v3311
  %v3416 = vpack.c.b16 %v3316, %v3312
  %v3417 = vpack.c.b16 %v3317, %v3313
  %v3418 = vpack.c.b16 %v3322, %v3318
  %v3419 = vpack.c.b16 %v3323, %v3319
  %v3420 = vpack.c.b16 %v3324, %v3320
  %v3421 = vpack.c.b16 %v3325, %v3321
  %v3422 = vpack.c.b16 %v3330, %v3326
  %v3423 = vpack.c.b16 %v3331, %v3327
  %v3424 = vpack.c.b16 %v3332, %v3328
  %v3425 = vpack.c.b16 %v3333, %v3329
  %v3426 = vpack.c.b16 %v3338, %v3334
  %v3427 = vpack.c.b16 %v3339, %v3335
  %v3428 = vpack.c.b16 %v3340, %v3336
  %v3429 = vpack.c.b16 %v3341, %v3337
  %v3430 = vpack.c.b16 %v3346, %v3342
  %v3431 = vpack.c.b16 %v3347, %v3343
  %v3432 = vpack.c.b16 %v3348, %v3344
  %v3433 = vpack.c.b16 %v3349, %v3345
  %v3434 = vpack.c.b16 %v3354, %v3350
  %v3435 = vpack.c.b16 %v3355, %v3351
  %v3436 = vpack.c.b16 %v3356, %v3352
  %v3437 = vpack.c.b16 %v3357, %v3353
  %v3438 = vpack.c.b16 %v3362, %v3358
  %v3439 = vpack.c.b16 %v3363, %v3359
  %v3440 = vpack.c.b16 %v3364, %v3360
  %v3441 = vpack.c.b16 %v3365, %v3361
  %v3442 = vpack.c.b16 %v3370, %v3366
  %v3443 = vpack.c.b16 %v3371, %v3367
  %v3444 = vpack.c.b16 %v3372, %v3368
  %v3445 = vpack.c.b16 %v3373, %v3369
  %v3446 = vpack.c.b16 %v3378, %v3374
  %v3447 = vpack.c.b16 %v3379, %v3375
  %v3448 = vpack.c.b16 %v3380, %v3376
  %v3449 = vpack.c.b16 %v3381, %v3377
  %v3450 = vpack.c.b16 %v3386, %v3382
  %v3451 = vpack.c.b16 %v3387, %v3383
  %v3452 = vpack.c.b16 %v3388, %v3384
  %v3453 = vpack.c.b16 %v3389, %v3385
  %3518 = vmatprep.subr.bf16.mxu0 %v3419
  %3519 = vmatpush1.bf16.msra.mxu0 %v3418
  %3520 = vmatprep.subr.bf16.mxu0 %v3415
  %3521 = vmatpush1.bf16.msra.mxu0 %v3414
  %3522 = vmatprep.subr.bf16.mxu0 %v3411
  %3523 = vmatpush1.bf16.msra.mxu0 %v3410
  %3524 = vmatprep.subr.bf16.mxu0 %v3407
  %3525 = vmatpush1.bf16.msra.mxu0 %v3406
  %3526 = vmatprep.subr.bf16.mxu0 %v3403
  %3527 = vmatpush1.bf16.msra.mxu0 %v3402
  %3528 = vmatprep.subr.bf16.mxu0 %v3399
  %3529 = vmatpush1.bf16.msra.mxu0 %v3398
  %3530 = vmatprep.subr.bf16.mxu0 %v3395
  %3531 = vmatpush1.bf16.msra.mxu0 %v3394
  %3532 = vmatprep.subr.bf16.mxu0 %v3391
  %3533 = vmatpush1.bf16.msra.mxu0 %v3390
  %3534 = vmatprep.subr.bf16.mxu0 %v3451
  %3535 = vmatpush2.bf16.msra.mxu0 %v3450
  %3536 = vmatprep.subr.bf16.mxu0 %v3447
  %3537 = vmatpush2.bf16.msra.mxu0 %v3446
  %3538 = vmatprep.subr.bf16.mxu0 %v3443
  %3539 = vmatpush2.bf16.msra.mxu0 %v3442
  %3540 = vmatprep.subr.bf16.mxu0 %v3439
  %3541 = vmatpush2.bf16.msra.mxu0 %v3438
  %3542 = vmatprep.subr.bf16.mxu0 %v3435
  %3543 = vmatpush2.bf16.msra.mxu0 %v3434
  %3544 = vmatprep.subr.bf16.mxu0 %v3431
  %3545 = vmatpush2.bf16.msra.mxu0 %v3430
  %3546 = vmatprep.subr.bf16.mxu0 %v3427
  %3547 = vmatpush2.bf16.msra.mxu0 %v3426
  %3548 = vmatprep.subr.bf16.mxu0 %v3423
  %3549 = vmatpush2.bf16.msra.mxu0 %v3422
  %3550 = vmatprep.mubr.bf16.mxu0 %v3133
  %3551 = vmatmul.mubr.bf16.gmra.mxu0 %v3132
  %v3552 = vpop.f32.mrf.mxu0
  %v3553 = vadd.f32 %v3128, %v3552
  %v3554 = vpop.f32.mrf.mxu0
  %v3555 = vadd.f32 %v3129, %v3554
  %v3556 = vpop.f32.mrf.mxu0
  %v3557 = vpop.f32.mrf.mxu0
  %3558 = vdwg.mxu0
  %3559 = vmatprep.subr.bf16.mxu0 %v3421
  %3560 = vmatpush1.bf16.msra.mxu0 %v3420
  %3561 = vmatprep.subr.bf16.mxu0 %v3417
  %3562 = vmatpush1.bf16.msra.mxu0 %v3416
  %3563 = vmatprep.subr.bf16.mxu0 %v3413
  %3564 = vmatpush1.bf16.msra.mxu0 %v3412
  %3565 = vmatprep.subr.bf16.mxu0 %v3409
  %3566 = vmatpush1.bf16.msra.mxu0 %v3408
  %3567 = vmatprep.subr.bf16.mxu0 %v3405
  %3568 = vmatpush1.bf16.msra.mxu0 %v3404
  %3569 = vmatprep.subr.bf16.mxu0 %v3401
  %3570 = vmatpush1.bf16.msra.mxu0 %v3400
  %3571 = vmatprep.subr.bf16.mxu0 %v3397
  %3572 = vmatpush1.bf16.msra.mxu0 %v3396
  %3573 = vmatprep.subr.bf16.mxu0 %v3393
  %3574 = vmatpush1.bf16.msra.mxu0 %v3392
  %3575 = vmatprep.subr.bf16.mxu0 %v3453
  %3576 = vmatpush2.bf16.msra.mxu0 %v3452
  %3577 = vmatprep.subr.bf16.mxu0 %v3449
  %3578 = vmatpush2.bf16.msra.mxu0 %v3448
  %3579 = vmatprep.subr.bf16.mxu0 %v3445
  %3580 = vmatpush2.bf16.msra.mxu0 %v3444
  %3581 = vmatprep.subr.bf16.mxu0 %v3441
  %3582 = vmatpush2.bf16.msra.mxu0 %v3440
  %3583 = vmatprep.subr.bf16.mxu0 %v3437
  %3584 = vmatpush2.bf16.msra.mxu0 %v3436
  %3585 = vmatprep.subr.bf16.mxu0 %v3433
  %3586 = vmatpush2.bf16.msra.mxu0 %v3432
  %3587 = vmatprep.subr.bf16.mxu0 %v3429
  %3588 = vmatpush2.bf16.msra.mxu0 %v3428
  %3589 = vmatprep.subr.bf16.mxu0 %v3425
  %3590 = vmatpush2.bf16.msra.mxu0 %v3424
  %3591 = vmatprep.mubr.bf16.mxu0 %v3133
  %3592 = vmatmul.mubr.bf16.gmra.mxu0 %v3132
  %v3593 = vpop.f32.mrf.mxu0
  %v3594 = vadd.f32 %v3130, %v3593
  %v3595 = vpop.f32.mrf.mxu0
  %v3596 = vadd.f32 %v3131, %v3595
  %v3597 = vpop.f32.mrf.mxu0
  %v3598 = vpop.f32.mrf.mxu0
  %3599 = vdwg.mxu0
  %v3600 = vxor.u32 %v3553, 2147483648
  %v3601 = vmul.f32 %v3600, 1.442695
  %v3602 = vpow.pop %v3601
  %v3603 = vadd.f32 %v3602, 1.0
  %v3604 = vrcp.pop %v3603
  %v3605 = vmul.f32 1.0, %v3604
  %v3606 = vxor.u32 %v3555, 2147483648
  %v3607 = vmul.f32 %v3606, 1.442695
  %v3608 = vpow.pop %v3607
  %v3609 = vadd.f32 %v3608, 1.0
  %v3610 = vrcp.pop %v3609
  %v3611 = vmul.f32 1.0, %v3610
  %v3612 = vtanh.pop %v3594
  %v3613 = vxor.u32 %v3596, 2147483648
  %v3614 = vmul.f32 %v3613, 1.442695
  %v3615 = vpow.pop %v3614
  %v3616 = vadd.f32 %v3615, 1.0
  %v3617 = vrcp.pop %v3616
  %v3618 = vmul.f32 1.0, %v3617
  %v3619 = vmul.f32 %v3611, %v3106
  %v3620 = vmul.f32 %v3605, %v3612
  %v3621 = vadd.f32 %v3619, %v3620
  %v3622 = vtanh.pop %v3621
  %v3623 = vmul.f32 %v3618, %v3622
  %v3624 = vmul.f32 %v3623, %v78
  %v3625 = vmul.f32 %v3623, %v83
  %3626 = vst [vmem:[#allocation3 + $0xc0] sm:$0x3] %v3623
  %v3628 = vrot.slane %v3623, 6
  %3630 = vst [vmem:[#allocation3 + $0x30] sm:$0xc] %v3628
  %v3631 = vrot.slane %v3623, 2
  %3633 = vst [vmem:[#allocation3 + $0x28] sm:$0x3] %v3631
  %3634 = vst [vmem:[#allocation3 + $0xd8] sm:$0xc] %v3623
  %v3635 = vld [vmem:[#allocation2 + $0xe0] sm:$0xff]
  %v3636 = vld [vmem:[#allocation2 + $0xe8] sm:$0xff]
  %v3637 = vld [vmem:[#allocation2 + $0xf0] sm:$0xff]
  %v3638 = vld [vmem:[#allocation2 + $0xf8] sm:$0xff]
  %v3639 = vld [vmem:[%s2] sm:$0xff]
  %v3640 = vld [vmem:[%s2 + $0x8] sm:$0xff]
  %v3641 = vld [vmem:[%s2 + $0x10] sm:$0xff]
  %v3642 = vld [vmem:[%s2 + $0x18] sm:$0xff]
  %v3643 = vadd.f32 %v3635, %v3639
  %v3644 = vadd.f32 %v3636, %v3640
  %v3645 = vadd.f32 %v3637, %v3641
  %v3646 = vadd.f32 %v3638, %v3642
  %v3647 = vpack.c.bf16 %v3624, %v3624
  %v3648 = vpack.c.bf16 %v3625, %v3625
  %v3649 = vld [vmem:[%s3] sm:$0xff]
  %v3650 = vld [vmem:[%s3 + $0x8] sm:$0xff]
  %v3651 = vld [vmem:[%s3 + $0x10] sm:$0xff]
  %v3652 = vld [vmem:[%s3 + $0x18] sm:$0xff]
  %v3653 = vld [vmem:[%s3 + $0x20] sm:$0xff]
  %v3654 = vld [vmem:[%s3 + $0x28] sm:$0xff]
  %v3655 = vld [vmem:[%s3 + $0x30] sm:$0xff]
  %v3656 = vld [vmem:[%s3 + $0x38] sm:$0xff]
  %v3657 = vld [vmem:[%s3 + $0x40] sm:$0xff]
  %v3658 = vld [vmem:[%s3 + $0x48] sm:$0xff]
  %v3659 = vld [vmem:[%s3 + $0x50] sm:$0xff]
  %v3660 = vld [vmem:[%s3 + $0x58] sm:$0xff]
  %v3661 = vld [vmem:[%s3 + $0x60] sm:$0xff]
  %v3662 = vld [vmem:[%s3 + $0x68] sm:$0xff]
  %v3663 = vld [vmem:[%s3 + $0x70] sm:$0xff]
  %v3664 = vld [vmem:[%s3 + $0x78] sm:$0xff]
  %v3665 = vld [vmem:[%s3 + $0x80] sm:$0xff]
  %v3666 = vld [vmem:[%s3 + $0x88] sm:$0xff]
  %v3667 = vld [vmem:[%s3 + $0x90] sm:$0xff]
  %v3668 = vld [vmem:[%s3 + $0x98] sm:$0xff]
  %v3669 = vld [vmem:[%s3 + $0xa0] sm:$0xff]
  %v3670 = vld [vmem:[%s3 + $0xa8] sm:$0xff]
  %v3671 = vld [vmem:[%s3 + $0xb0] sm:$0xff]
  %v3672 = vld [vmem:[%s3 + $0xb8] sm:$0xff]
  %v3673 = vld [vmem:[%s3 + $0xc0] sm:$0xff]
  %v3674 = vld [vmem:[%s3 + $0xc8] sm:$0xff]
  %v3675 = vld [vmem:[%s3 + $0xd0] sm:$0xff]
  %v3676 = vld [vmem:[%s3 + $0xd8] sm:$0xff]
  %v3677 = vld [vmem:[%s3 + $0xe0] sm:$0xff]
  %v3678 = vld [vmem:[%s3 + $0xe8] sm:$0xff]
  %v3679 = vld [vmem:[%s3 + $0xf0] sm:$0xff]
  %v3680 = vld [vmem:[%s3 + $0xf8] sm:$0xff]
  %v3681 = vld [vmem:[%s3 + $0x100] sm:$0xff]
  %v3682 = vld [vmem:[%s3 + $0x108] sm:$0xff]
  %v3683 = vld [vmem:[%s3 + $0x110] sm:$0xff]
  %v3684 = vld [vmem:[%s3 + $0x118] sm:$0xff]
  %v3685 = vld [vmem:[%s3 + $0x120] sm:$0xff]
  %v3686 = vld [vmem:[%s3 + $0x128] sm:$0xff]
  %v3687 = vld [vmem:[%s3 + $0x130] sm:$0xff]
  %v3688 = vld [vmem:[%s3 + $0x138] sm:$0xff]
  %v3689 = vld [vmem:[%s3 + $0x140] sm:$0xff]
  %v3690 = vld [vmem:[%s3 + $0x148] sm:$0xff]
  %v3691 = vld [vmem:[%s3 + $0x150] sm:$0xff]
  %v3692 = vld [vmem:[%s3 + $0x158] sm:$0xff]
  %v3693 = vld [vmem:[%s3 + $0x160] sm:$0xff]
  %v3694 = vld [vmem:[%s3 + $0x168] sm:$0xff]
  %v3695 = vld [vmem:[%s3 + $0x170] sm:$0xff]
  %v3696 = vld [vmem:[%s3 + $0x178] sm:$0xff]
  %v3697 = vld [vmem:[%s3 + $0x180] sm:$0xff]
  %v3698 = vld [vmem:[%s3 + $0x188] sm:$0xff]
  %v3699 = vld [vmem:[%s3 + $0x190] sm:$0xff]
  %v3700 = vld [vmem:[%s3 + $0x198] sm:$0xff]
  %v3701 = vld [vmem:[%s3 + $0x1a0] sm:$0xff]
  %v3702 = vld [vmem:[%s3 + $0x1a8] sm:$0xff]
  %v3703 = vld [vmem:[%s3 + $0x1b0] sm:$0xff]
  %v3704 = vld [vmem:[%s3 + $0x1b8] sm:$0xff]
  %v3705 = vld [vmem:[%s3 + $0x1c0] sm:$0xff]
  %v3706 = vld [vmem:[%s3 + $0x1c8] sm:$0xff]
  %v3707 = vld [vmem:[%s3 + $0x1d0] sm:$0xff]
  %v3708 = vld [vmem:[%s3 + $0x1d8] sm:$0xff]
  %v3709 = vld [vmem:[%s3 + $0x1e0] sm:$0xff]
  %v3710 = vld [vmem:[%s3 + $0x1e8] sm:$0xff]
  %v3711 = vld [vmem:[%s3 + $0x1f0] sm:$0xff]
  %v3712 = vld [vmem:[%s3 + $0x1f8] sm:$0xff]
  %v3777 = vunpack.c.l.b16 %v3649
  %v3778 = vunpack.c.h.b16 %v3649
  %v3779 = vunpack.c.l.b16 %v3650
  %v3780 = vunpack.c.h.b16 %v3650
  %v3781 = vunpack.c.l.b16 %v3651
  %v3782 = vunpack.c.h.b16 %v3651
  %v3783 = vunpack.c.l.b16 %v3652
  %v3784 = vunpack.c.h.b16 %v3652
  %v3785 = vunpack.c.l.b16 %v3653
  %v3786 = vunpack.c.h.b16 %v3653
  %v3787 = vunpack.c.l.b16 %v3654
  %v3788 = vunpack.c.h.b16 %v3654
  %v3789 = vunpack.c.l.b16 %v3655
  %v3790 = vunpack.c.h.b16 %v3655
  %v3791 = vunpack.c.l.b16 %v3656
  %v3792 = vunpack.c.h.b16 %v3656
  %v3793 = vunpack.c.l.b16 %v3657
  %v3794 = vunpack.c.h.b16 %v3657
  %v3795 = vunpack.c.l.b16 %v3658
  %v3796 = vunpack.c.h.b16 %v3658
  %v3797 = vunpack.c.l.b16 %v3659
  %v3798 = vunpack.c.h.b16 %v3659
  %v3799 = vunpack.c.l.b16 %v3660
  %v3800 = vunpack.c.h.b16 %v3660
  %v3801 = vunpack.c.l.b16 %v3661
  %v3802 = vunpack.c.h.b16 %v3661
  %v3803 = vunpack.c.l.b16 %v3662
  %v3804 = vunpack.c.h.b16 %v3662
  %v3805 = vunpack.c.l.b16 %v3663
  %v3806 = vunpack.c.h.b16 %v3663
  %v3807 = vunpack.c.l.b16 %v3664
  %v3808 = vunpack.c.h.b16 %v3664
  %v3809 = vunpack.c.l.b16 %v3665
  %v3810 = vunpack.c.h.b16 %v3665
  %v3811 = vunpack.c.l.b16 %v3666
  %v3812 = vunpack.c.h.b16 %v3666
  %v3813 = vunpack.c.l.b16 %v3667
  %v3814 = vunpack.c.h.b16 %v3667
  %v3815 = vunpack.c.l.b16 %v3668
  %v3816 = vunpack.c.h.b16 %v3668
  %v3817 = vunpack.c.l.b16 %v3669
  %v3818 = vunpack.c.h.b16 %v3669
  %v3819 = vunpack.c.l.b16 %v3670
  %v3820 = vunpack.c.h.b16 %v3670
  %v3821 = vunpack.c.l.b16 %v3671
  %v3822 = vunpack.c.h.b16 %v3671
  %v3823 = vunpack.c.l.b16 %v3672
  %v3824 = vunpack.c.h.b16 %v3672
  %v3825 = vunpack.c.l.b16 %v3673
  %v3826 = vunpack.c.h.b16 %v3673
  %v3827 = vunpack.c.l.b16 %v3674
  %v3828 = vunpack.c.h.b16 %v3674
  %v3829 = vunpack.c.l.b16 %v3675
  %v3830 = vunpack.c.h.b16 %v3675
  %v3831 = vunpack.c.l.b16 %v3676
  %v3832 = vunpack.c.h.b16 %v3676
  %v3833 = vunpack.c.l.b16 %v3677
  %v3834 = vunpack.c.h.b16 %v3677
  %v3835 = vunpack.c.l.b16 %v3678
  %v3836 = vunpack.c.h.b16 %v3678
  %v3837 = vunpack.c.l.b16 %v3679
  %v3838 = vunpack.c.h.b16 %v3679
  %v3839 = vunpack.c.l.b16 %v3680
  %v3840 = vunpack.c.h.b16 %v3680
  %v3841 = vunpack.c.l.b16 %v3681
  %v3842 = vunpack.c.h.b16 %v3681
  %v3843 = vunpack.c.l.b16 %v3682
  %v3844 = vunpack.c.h.b16 %v3682
  %v3845 = vunpack.c.l.b16 %v3683
  %v3846 = vunpack.c.h.b16 %v3683
  %v3847 = vunpack.c.l.b16 %v3684
  %v3848 = vunpack.c.h.b16 %v3684
  %v3849 = vunpack.c.l.b16 %v3685
  %v3850 = vunpack.c.h.b16 %v3685
  %v3851 = vunpack.c.l.b16 %v3686
  %v3852 = vunpack.c.h.b16 %v3686
  %v3853 = vunpack.c.l.b16 %v3687
  %v3854 = vunpack.c.h.b16 %v3687
  %v3855 = vunpack.c.l.b16 %v3688
  %v3856 = vunpack.c.h.b16 %v3688
  %v3857 = vunpack.c.l.b16 %v3689
  %v3858 = vunpack.c.h.b16 %v3689
  %v3859 = vunpack.c.l.b16 %v3690
  %v3860 = vunpack.c.h.b16 %v3690
  %v3861 = vunpack.c.l.b16 %v3691
  %v3862 = vunpack.c.h.b16 %v3691
  %v3863 = vunpack.c.l.b16 %v3692
  %v3864 = vunpack.c.h.b16 %v3692
  %v3865 = vunpack.c.l.b16 %v3693
  %v3866 = vunpack.c.h.b16 %v3693
  %v3867 = vunpack.c.l.b16 %v3694
  %v3868 = vunpack.c.h.b16 %v3694
  %v3869 = vunpack.c.l.b16 %v3695
  %v3870 = vunpack.c.h.b16 %v3695
  %v3871 = vunpack.c.l.b16 %v3696
  %v3872 = vunpack.c.h.b16 %v3696
  %v3873 = vunpack.c.l.b16 %v3697
  %v3874 = vunpack.c.h.b16 %v3697
  %v3875 = vunpack.c.l.b16 %v3698
  %v3876 = vunpack.c.h.b16 %v3698
  %v3877 = vunpack.c.l.b16 %v3699
  %v3878 = vunpack.c.h.b16 %v3699
  %v3879 = vunpack.c.l.b16 %v3700
  %v3880 = vunpack.c.h.b16 %v3700
  %v3881 = vunpack.c.l.b16 %v3701
  %v3882 = vunpack.c.h.b16 %v3701
  %v3883 = vunpack.c.l.b16 %v3702
  %v3884 = vunpack.c.h.b16 %v3702
  %v3885 = vunpack.c.l.b16 %v3703
  %v3886 = vunpack.c.h.b16 %v3703
  %v3887 = vunpack.c.l.b16 %v3704
  %v3888 = vunpack.c.h.b16 %v3704
  %v3889 = vunpack.c.l.b16 %v3705
  %v3890 = vunpack.c.h.b16 %v3705
  %v3891 = vunpack.c.l.b16 %v3706
  %v3892 = vunpack.c.h.b16 %v3706
  %v3893 = vunpack.c.l.b16 %v3707
  %v3894 = vunpack.c.h.b16 %v3707
  %v3895 = vunpack.c.l.b16 %v3708
  %v3896 = vunpack.c.h.b16 %v3708
  %v3897 = vunpack.c.l.b16 %v3709
  %v3898 = vunpack.c.h.b16 %v3709
  %v3899 = vunpack.c.l.b16 %v3710
  %v3900 = vunpack.c.h.b16 %v3710
  %v3901 = vunpack.c.l.b16 %v3711
  %v3902 = vunpack.c.h.b16 %v3711
  %v3903 = vunpack.c.l.b16 %v3712
  %v3904 = vunpack.c.h.b16 %v3712
  %v3905 = vpack.c.b16 %v3781, %v3777
  %v3906 = vpack.c.b16 %v3782, %v3778
  %v3907 = vpack.c.b16 %v3783, %v3779
  %v3908 = vpack.c.b16 %v3784, %v3780
  %v3909 = vpack.c.b16 %v3789, %v3785
  %v3910 = vpack.c.b16 %v3790, %v3786
  %v3911 = vpack.c.b16 %v3791, %v3787
  %v3912 = vpack.c.b16 %v3792, %v3788
  %v3913 = vpack.c.b16 %v3797, %v3793
  %v3914 = vpack.c.b16 %v3798, %v3794
  %v3915 = vpack.c.b16 %v3799, %v3795
  %v3916 = vpack.c.b16 %v3800, %v3796
  %v3917 = vpack.c.b16 %v3805, %v3801
  %v3918 = vpack.c.b16 %v3806, %v3802
  %v3919 = vpack.c.b16 %v3807, %v3803
  %v3920 = vpack.c.b16 %v3808, %v3804
  %v3921 = vpack.c.b16 %v3813, %v3809
  %v3922 = vpack.c.b16 %v3814, %v3810
  %v3923 = vpack.c.b16 %v3815, %v3811
  %v3924 = vpack.c.b16 %v3816, %v3812
  %v3925 = vpack.c.b16 %v3821, %v3817
  %v3926 = vpack.c.b16 %v3822, %v3818
  %v3927 = vpack.c.b16 %v3823, %v3819
  %v3928 = vpack.c.b16 %v3824, %v3820
  %v3929 = vpack.c.b16 %v3829, %v3825
  %v3930 = vpack.c.b16 %v3830, %v3826
  %v3931 = vpack.c.b16 %v3831, %v3827
  %v3932 = vpack.c.b16 %v3832, %v3828
  %v3933 = vpack.c.b16 %v3837, %v3833
  %v3934 = vpack.c.b16 %v3838, %v3834
  %v3935 = vpack.c.b16 %v3839, %v3835
  %v3936 = vpack.c.b16 %v3840, %v3836
  %v3937 = vpack.c.b16 %v3845, %v3841
  %v3938 = vpack.c.b16 %v3846, %v3842
  %v3939 = vpack.c.b16 %v3847, %v3843
  %v3940 = vpack.c.b16 %v3848, %v3844
  %v3941 = vpack.c.b16 %v3853, %v3849
  %v3942 = vpack.c.b16 %v3854, %v3850
  %v3943 = vpack.c.b16 %v3855, %v3851
  %v3944 = vpack.c.b16 %v3856, %v3852
  %v3945 = vpack.c.b16 %v3861, %v3857
  %v3946 = vpack.c.b16 %v3862, %v3858
  %v3947 = vpack.c.b16 %v3863, %v3859
  %v3948 = vpack.c.b16 %v3864, %v3860
  %v3949 = vpack.c.b16 %v3869, %v3865
  %v3950 = vpack.c.b16 %v3870, %v3866
  %v3951 = vpack.c.b16 %v3871, %v3867
  %v3952 = vpack.c.b16 %v3872, %v3868
  %v3953 = vpack.c.b16 %v3877, %v3873
  %v3954 = vpack.c.b16 %v3878, %v3874
  %v3955 = vpack.c.b16 %v3879, %v3875
  %v3956 = vpack.c.b16 %v3880, %v3876
  %v3957 = vpack.c.b16 %v3885, %v3881
  %v3958 = vpack.c.b16 %v3886, %v3882
  %v3959 = vpack.c.b16 %v3887, %v3883
  %v3960 = vpack.c.b16 %v3888, %v3884
  %v3961 = vpack.c.b16 %v3893, %v3889
  %v3962 = vpack.c.b16 %v3894, %v3890
  %v3963 = vpack.c.b16 %v3895, %v3891
  %v3964 = vpack.c.b16 %v3896, %v3892
  %v3965 = vpack.c.b16 %v3901, %v3897
  %v3966 = vpack.c.b16 %v3902, %v3898
  %v3967 = vpack.c.b16 %v3903, %v3899
  %v3968 = vpack.c.b16 %v3904, %v3900
  %4033 = vmatprep.subr.bf16.mxu0 %v3934
  %4034 = vmatpush1.bf16.msra.mxu0 %v3933
  %4035 = vmatprep.subr.bf16.mxu0 %v3930
  %4036 = vmatpush1.bf16.msra.mxu0 %v3929
  %4037 = vmatprep.subr.bf16.mxu0 %v3926
  %4038 = vmatpush1.bf16.msra.mxu0 %v3925
  %4039 = vmatprep.subr.bf16.mxu0 %v3922
  %4040 = vmatpush1.bf16.msra.mxu0 %v3921
  %4041 = vmatprep.subr.bf16.mxu0 %v3918
  %4042 = vmatpush1.bf16.msra.mxu0 %v3917
  %4043 = vmatprep.subr.bf16.mxu0 %v3914
  %4044 = vmatpush1.bf16.msra.mxu0 %v3913
  %4045 = vmatprep.subr.bf16.mxu0 %v3910
  %4046 = vmatpush1.bf16.msra.mxu0 %v3909
  %4047 = vmatprep.subr.bf16.mxu0 %v3906
  %4048 = vmatpush1.bf16.msra.mxu0 %v3905
  %4049 = vmatprep.subr.bf16.mxu0 %v3966
  %4050 = vmatpush2.bf16.msra.mxu0 %v3965
  %4051 = vmatprep.subr.bf16.mxu0 %v3962
  %4052 = vmatpush2.bf16.msra.mxu0 %v3961
  %4053 = vmatprep.subr.bf16.mxu0 %v3958
  %4054 = vmatpush2.bf16.msra.mxu0 %v3957
  %4055 = vmatprep.subr.bf16.mxu0 %v3954
  %4056 = vmatpush2.bf16.msra.mxu0 %v3953
  %4057 = vmatprep.subr.bf16.mxu0 %v3950
  %4058 = vmatpush2.bf16.msra.mxu0 %v3949
  %4059 = vmatprep.subr.bf16.mxu0 %v3946
  %4060 = vmatpush2.bf16.msra.mxu0 %v3945
  %4061 = vmatprep.subr.bf16.mxu0 %v3942
  %4062 = vmatpush2.bf16.msra.mxu0 %v3941
  %4063 = vmatprep.subr.bf16.mxu0 %v3938
  %4064 = vmatpush2.bf16.msra.mxu0 %v3937
  %4065 = vmatprep.mubr.bf16.mxu0 %v3648
  %4066 = vmatmul.mubr.bf16.gmra.mxu0 %v3647
  %v4067 = vpop.f32.mrf.mxu0
  %v4068 = vadd.f32 %v3643, %v4067
  %v4069 = vpop.f32.mrf.mxu0
  %v4070 = vadd.f32 %v3644, %v4069
  %v4071 = vpop.f32.mrf.mxu0
  %v4072 = vpop.f32.mrf.mxu0
  %4073 = vdwg.mxu0
  %4074 = vmatprep.subr.bf16.mxu0 %v3936
  %4075 = vmatpush1.bf16.msra.mxu0 %v3935
  %4076 = vmatprep.subr.bf16.mxu0 %v3932
  %4077 = vmatpush1.bf16.msra.mxu0 %v3931
  %4078 = vmatprep.subr.bf16.mxu0 %v3928
  %4079 = vmatpush1.bf16.msra.mxu0 %v3927
  %4080 = vmatprep.subr.bf16.mxu0 %v3924
  %4081 = vmatpush1.bf16.msra.mxu0 %v3923
  %4082 = vmatprep.subr.bf16.mxu0 %v3920
  %4083 = vmatpush1.bf16.msra.mxu0 %v3919
  %4084 = vmatprep.subr.bf16.mxu0 %v3916
  %4085 = vmatpush1.bf16.msra.mxu0 %v3915
  %4086 = vmatprep.subr.bf16.mxu0 %v3912
  %4087 = vmatpush1.bf16.msra.mxu0 %v3911
  %4088 = vmatprep.subr.bf16.mxu0 %v3908
  %4089 = vmatpush1.bf16.msra.mxu0 %v3907
  %4090 = vmatprep.subr.bf16.mxu0 %v3968
  %4091 = vmatpush2.bf16.msra.mxu0 %v3967
  %4092 = vmatprep.subr.bf16.mxu0 %v3964
  %4093 = vmatpush2.bf16.msra.mxu0 %v3963
  %4094 = vmatprep.subr.bf16.mxu0 %v3960
  %4095 = vmatpush2.bf16.msra.mxu0 %v3959
  %4096 = vmatprep.subr.bf16.mxu0 %v3956
  %4097 = vmatpush2.bf16.msra.mxu0 %v3955
  %4098 = vmatprep.subr.bf16.mxu0 %v3952
  %4099 = vmatpush2.bf16.msra.mxu0 %v3951
  %4100 = vmatprep.subr.bf16.mxu0 %v3948
  %4101 = vmatpush2.bf16.msra.mxu0 %v3947
  %4102 = vmatprep.subr.bf16.mxu0 %v3944
  %4103 = vmatpush2.bf16.msra.mxu0 %v3943
  %4104 = vmatprep.subr.bf16.mxu0 %v3940
  %4105 = vmatpush2.bf16.msra.mxu0 %v3939
  %4106 = vmatprep.mubr.bf16.mxu0 %v3648
  %4107 = vmatmul.mubr.bf16.gmra.mxu0 %v3647
  %v4108 = vpop.f32.mrf.mxu0
  %v4109 = vadd.f32 %v3645, %v4108
  %v4110 = vpop.f32.mrf.mxu0
  %v4111 = vadd.f32 %v3646, %v4110
  %v4112 = vpop.f32.mrf.mxu0
  %v4113 = vpop.f32.mrf.mxu0
  %4114 = vdwg.mxu0
  %v4115 = vxor.u32 %v4068, 2147483648
  %v4116 = vmul.f32 %v4115, 1.442695
  %v4117 = vpow.pop %v4116
  %v4118 = vadd.f32 %v4117, 1.0
  %v4119 = vrcp.pop %v4118
  %v4120 = vmul.f32 1.0, %v4119
  %v4121 = vxor.u32 %v4070, 2147483648
  %v4122 = vmul.f32 %v4121, 1.442695
  %v4123 = vpow.pop %v4122
  %v4124 = vadd.f32 %v4123, 1.0
  %v4125 = vrcp.pop %v4124
  %v4126 = vmul.f32 1.0, %v4125
  %v4127 = vtanh.pop %v4109
  %v4128 = vxor.u32 %v4111, 2147483648
  %v4129 = vmul.f32 %v4128, 1.442695
  %v4130 = vpow.pop %v4129
  %v4131 = vadd.f32 %v4130, 1.0
  %v4132 = vrcp.pop %v4131
  %v4133 = vmul.f32 1.0, %v4132
  %v4134 = vmul.f32 %v4126, %v3621
  %v4135 = vmul.f32 %v4120, %v4127
  %v4136 = vadd.f32 %v4134, %v4135
  %v4137 = vtanh.pop %v4136
  %v4138 = vmul.f32 %v4133, %v4137
  %4139 = vst [vmem:[#allocation3 + $0xe0] sm:$0x3] %v4138
  %v4141 = vrot.slane %v4138, 6
  %4143 = vst [vmem:[#allocation3 + $0x10] sm:$0xc] %v4141
  %v4144 = vrot.slane %v4138, 2
  %4146 = vst [vmem:[#allocation3 + $0x8] sm:$0x3] %v4144
  %4147 = vst [vmem:[#allocation3 + $0xf8] sm:$0xc] %v4138
  %4148 = vst [vmem:[%s22] sm:$0xff] %v4138
  %4149 = vst [vmem:[%s23] sm:$0xff] %v4136
  %v4150 = vld [vmem:[#allocation3] sm:$0xff]
  %v4151 = vld [vmem:[#allocation3 + $0x8] sm:$0xff]
  %v4152 = vld [vmem:[#allocation3 + $0x10] sm:$0xff]
  %v4153 = vld [vmem:[#allocation3 + $0x18] sm:$0xff]
  %v4154 = vld [vmem:[#allocation3 + $0x20] sm:$0xff]
  %v4155 = vld [vmem:[#allocation3 + $0x28] sm:$0xff]
  %v4156 = vld [vmem:[#allocation3 + $0x30] sm:$0xff]
  %v4157 = vld [vmem:[#allocation3 + $0x38] sm:$0xff]
  %v4158 = vld [vmem:[#allocation3 + $0x40] sm:$0xff]
  %v4159 = vld [vmem:[#allocation3 + $0x48] sm:$0xff]
  %v4160 = vld [vmem:[#allocation3 + $0x50] sm:$0xff]
  %v4161 = vld [vmem:[#allocation3 + $0x58] sm:$0xff]
  %v4162 = vld [vmem:[#allocation3 + $0x60] sm:$0xff]
  %v4163 = vld [vmem:[#allocation3 + $0x68] sm:$0xff]
  %v4164 = vld [vmem:[#allocation3 + $0x70] sm:$0xff]
  %v4165 = vld [vmem:[#allocation3 + $0x78] sm:$0xff]
  %v4166 = vld [vmem:[#allocation3 + $0x80] sm:$0xff]
  %v4167 = vld [vmem:[#allocation3 + $0x88] sm:$0xff]
  %v4168 = vld [vmem:[#allocation3 + $0x90] sm:$0xff]
  %v4169 = vld [vmem:[#allocation3 + $0x98] sm:$0xff]
  %v4170 = vld [vmem:[#allocation3 + $0xa0] sm:$0xff]
  %v4171 = vld [vmem:[#allocation3 + $0xa8] sm:$0xff]
  %v4172 = vld [vmem:[#allocation3 + $0xb0] sm:$0xff]
  %v4173 = vld [vmem:[#allocation3 + $0xb8] sm:$0xff]
  %v4174 = vld [vmem:[#allocation3 + $0xc0] sm:$0xff]
  %v4175 = vld [vmem:[#allocation3 + $0xc8] sm:$0xff]
  %v4176 = vld [vmem:[#allocation3 + $0xd0] sm:$0xff]
  %v4177 = vld [vmem:[#allocation3 + $0xd8] sm:$0xff]
  %v4178 = vld [vmem:[#allocation3 + $0xe0] sm:$0xff]
  %v4179 = vld [vmem:[#allocation3 + $0xe8] sm:$0xff]
  %v4180 = vld [vmem:[#allocation3 + $0xf0] sm:$0xff]
  %v4181 = vld [vmem:[#allocation3 + $0xf8] sm:$0xff]
  %v4182 = vpack.c.bf16 %v4154, %v4150
  %v4183 = vpack.c.bf16 %v4155, %v4151
  %v4184 = vpack.c.bf16 %v4156, %v4152
  %v4185 = vpack.c.bf16 %v4157, %v4153
  %v4186 = vpack.c.bf16 %v4162, %v4158
  %v4187 = vpack.c.bf16 %v4163, %v4159
  %v4188 = vpack.c.bf16 %v4164, %v4160
  %v4189 = vpack.c.bf16 %v4165, %v4161
  %v4190 = vpack.c.bf16 %v4170, %v4166
  %v4191 = vpack.c.bf16 %v4171, %v4167
  %v4192 = vpack.c.bf16 %v4172, %v4168
  %v4193 = vpack.c.bf16 %v4173, %v4169
  %v4194 = vpack.c.bf16 %v4178, %v4174
  %v4195 = vpack.c.bf16 %v4179, %v4175
  %v4196 = vpack.c.bf16 %v4180, %v4176
  %v4197 = vpack.c.bf16 %v4181, %v4177
  %v4198 = vld [vmem:[%s4] sm:$0xff]
  %v4199 = vld [vmem:[%s4 + $0x8] sm:$0xff]
  %v4200 = vld [vmem:[%s4 + $0x10] sm:$0xff]
  %v4201 = vld [vmem:[%s4 + $0x18] sm:$0xff]
  %v4202 = vld [vmem:[%s4 + $0x20] sm:$0xff]
  %v4203 = vld [vmem:[%s4 + $0x28] sm:$0xff]
  %v4204 = vld [vmem:[%s4 + $0x30] sm:$0xff]
  %v4205 = vld [vmem:[%s4 + $0x38] sm:$0xff]
  %v4206 = vld [vmem:[%s4 + $0x40] sm:$0xff]
  %v4207 = vld [vmem:[%s4 + $0x48] sm:$0xff]
  %v4208 = vld [vmem:[%s4 + $0x50] sm:$0xff]
  %v4209 = vld [vmem:[%s4 + $0x58] sm:$0xff]
  %v4210 = vld [vmem:[%s4 + $0x60] sm:$0xff]
  %v4211 = vld [vmem:[%s4 + $0x68] sm:$0xff]
  %v4212 = vld [vmem:[%s4 + $0x70] sm:$0xff]
  %v4213 = vld [vmem:[%s4 + $0x78] sm:$0xff]
  %v4214 = vld [vmem:[%s4 + $0x80] sm:$0xff]
  %v4215 = vld [vmem:[%s4 + $0x88] sm:$0xff]
  %v4216 = vld [vmem:[%s4 + $0x90] sm:$0xff]
  %v4217 = vld [vmem:[%s4 + $0x98] sm:$0xff]
  %v4218 = vld [vmem:[%s4 + $0xa0] sm:$0xff]
  %v4219 = vld [vmem:[%s4 + $0xa8] sm:$0xff]
  %v4220 = vld [vmem:[%s4 + $0xb0] sm:$0xff]
  %v4221 = vld [vmem:[%s4 + $0xb8] sm:$0xff]
  %v4222 = vld [vmem:[%s4 + $0xc0] sm:$0xff]
  %v4223 = vld [vmem:[%s4 + $0xc8] sm:$0xff]
  %v4224 = vld [vmem:[%s4 + $0xd0] sm:$0xff]
  %v4225 = vld [vmem:[%s4 + $0xd8] sm:$0xff]
  %v4226 = vld [vmem:[%s4 + $0xe0] sm:$0xff]
  %v4227 = vld [vmem:[%s4 + $0xe8] sm:$0xff]
  %v4228 = vld [vmem:[%s4 + $0xf0] sm:$0xff]
  %v4229 = vld [vmem:[%s4 + $0xf8] sm:$0xff]
  %v4230 = vld [vmem:[%s4 + $0x100] sm:$0xff]
  %v4231 = vld [vmem:[%s4 + $0x108] sm:$0xff]
  %v4232 = vld [vmem:[%s4 + $0x110] sm:$0xff]
  %v4233 = vld [vmem:[%s4 + $0x118] sm:$0xff]
  %v4234 = vld [vmem:[%s4 + $0x120] sm:$0xff]
  %v4235 = vld [vmem:[%s4 + $0x128] sm:$0xff]
  %v4236 = vld [vmem:[%s4 + $0x130] sm:$0xff]
  %v4237 = vld [vmem:[%s4 + $0x138] sm:$0xff]
  %v4238 = vld [vmem:[%s4 + $0x140] sm:$0xff]
  %v4239 = vld [vmem:[%s4 + $0x148] sm:$0xff]
  %v4240 = vld [vmem:[%s4 + $0x150] sm:$0xff]
  %v4241 = vld [vmem:[%s4 + $0x158] sm:$0xff]
  %v4242 = vld [vmem:[%s4 + $0x160] sm:$0xff]
  %v4243 = vld [vmem:[%s4 + $0x168] sm:$0xff]
  %v4244 = vld [vmem:[%s4 + $0x170] sm:$0xff]
  %v4245 = vld [vmem:[%s4 + $0x178] sm:$0xff]
  %v4246 = vld [vmem:[%s4 + $0x180] sm:$0xff]
  %v4247 = vld [vmem:[%s4 + $0x188] sm:$0xff]
  %v4248 = vld [vmem:[%s4 + $0x190] sm:$0xff]
  %v4249 = vld [vmem:[%s4 + $0x198] sm:$0xff]
  %v4250 = vld [vmem:[%s4 + $0x1a0] sm:$0xff]
  %v4251 = vld [vmem:[%s4 + $0x1a8] sm:$0xff]
  %v4252 = vld [vmem:[%s4 + $0x1b0] sm:$0xff]
  %v4253 = vld [vmem:[%s4 + $0x1b8] sm:$0xff]
  %v4254 = vld [vmem:[%s4 + $0x1c0] sm:$0xff]
  %v4255 = vld [vmem:[%s4 + $0x1c8] sm:$0xff]
  %v4256 = vld [vmem:[%s4 + $0x1d0] sm:$0xff]
  %v4257 = vld [vmem:[%s4 + $0x1d8] sm:$0xff]
  %v4258 = vld [vmem:[%s4 + $0x1e0] sm:$0xff]
  %v4259 = vld [vmem:[%s4 + $0x1e8] sm:$0xff]
  %v4260 = vld [vmem:[%s4 + $0x1f0] sm:$0xff]
  %v4261 = vld [vmem:[%s4 + $0x1f8] sm:$0xff]
  %v4262 = vld [vmem:[%s4 + $0x200] sm:$0xff]
  %v4263 = vld [vmem:[%s4 + $0x208] sm:$0xff]
  %v4264 = vld [vmem:[%s4 + $0x210] sm:$0xff]
  %v4265 = vld [vmem:[%s4 + $0x218] sm:$0xff]
  %v4266 = vld [vmem:[%s4 + $0x220] sm:$0xff]
  %v4267 = vld [vmem:[%s4 + $0x228] sm:$0xff]
  %v4268 = vld [vmem:[%s4 + $0x230] sm:$0xff]
  %v4269 = vld [vmem:[%s4 + $0x238] sm:$0xff]
  %v4270 = vld [vmem:[%s4 + $0x240] sm:$0xff]
  %v4271 = vld [vmem:[%s4 + $0x248] sm:$0xff]
  %v4272 = vld [vmem:[%s4 + $0x250] sm:$0xff]
  %v4273 = vld [vmem:[%s4 + $0x258] sm:$0xff]
  %v4274 = vld [vmem:[%s4 + $0x260] sm:$0xff]
  %v4275 = vld [vmem:[%s4 + $0x268] sm:$0xff]
  %v4276 = vld [vmem:[%s4 + $0x270] sm:$0xff]
  %v4277 = vld [vmem:[%s4 + $0x278] sm:$0xff]
  %v4278 = vld [vmem:[%s4 + $0x280] sm:$0xff]
  %v4279 = vld [vmem:[%s4 + $0x288] sm:$0xff]
  %v4280 = vld [vmem:[%s4 + $0x290] sm:$0xff]
  %v4281 = vld [vmem:[%s4 + $0x298] sm:$0xff]
  %v4282 = vld [vmem:[%s4 + $0x2a0] sm:$0xff]
  %v4283 = vld [vmem:[%s4 + $0x2a8] sm:$0xff]
  %v4284 = vld [vmem:[%s4 + $0x2b0] sm:$0xff]
  %v4285 = vld [vmem:[%s4 + $0x2b8] sm:$0xff]
  %v4286 = vld [vmem:[%s4 + $0x2c0] sm:$0xff]
  %v4287 = vld [vmem:[%s4 + $0x2c8] sm:$0xff]
  %v4288 = vld [vmem:[%s4 + $0x2d0] sm:$0xff]
  %v4289 = vld [vmem:[%s4 + $0x2d8] sm:$0xff]
  %v4290 = vld [vmem:[%s4 + $0x2e0] sm:$0xff]
  %v4291 = vld [vmem:[%s4 + $0x2e8] sm:$0xff]
  %v4292 = vld [vmem:[%s4 + $0x2f0] sm:$0xff]
  %v4293 = vld [vmem:[%s4 + $0x2f8] sm:$0xff]
  %v4294 = vld [vmem:[%s4 + $0x300] sm:$0xff]
  %v4295 = vld [vmem:[%s4 + $0x308] sm:$0xff]
  %v4296 = vld [vmem:[%s4 + $0x310] sm:$0xff]
  %v4297 = vld [vmem:[%s4 + $0x318] sm:$0xff]
  %v4298 = vld [vmem:[%s4 + $0x320] sm:$0xff]
  %v4299 = vld [vmem:[%s4 + $0x328] sm:$0xff]
  %v4300 = vld [vmem:[%s4 + $0x330] sm:$0xff]
  %v4301 = vld [vmem:[%s4 + $0x338] sm:$0xff]
  %v4302 = vld [vmem:[%s4 + $0x340] sm:$0xff]
  %v4303 = vld [vmem:[%s4 + $0x348] sm:$0xff]
  %v4304 = vld [vmem:[%s4 + $0x350] sm:$0xff]
  %v4305 = vld [vmem:[%s4 + $0x358] sm:$0xff]
  %v4306 = vld [vmem:[%s4 + $0x360] sm:$0xff]
  %v4307 = vld [vmem:[%s4 + $0x368] sm:$0xff]
  %v4308 = vld [vmem:[%s4 + $0x370] sm:$0xff]
  %v4309 = vld [vmem:[%s4 + $0x378] sm:$0xff]
  %v4310 = vld [vmem:[%s4 + $0x380] sm:$0xff]
  %v4311 = vld [vmem:[%s4 + $0x388] sm:$0xff]
  %v4312 = vld [vmem:[%s4 + $0x390] sm:$0xff]
  %v4313 = vld [vmem:[%s4 + $0x398] sm:$0xff]
  %v4314 = vld [vmem:[%s4 + $0x3a0] sm:$0xff]
  %v4315 = vld [vmem:[%s4 + $0x3a8] sm:$0xff]
  %v4316 = vld [vmem:[%s4 + $0x3b0] sm:$0xff]
  %v4317 = vld [vmem:[%s4 + $0x3b8] sm:$0xff]
  %v4318 = vld [vmem:[%s4 + $0x3c0] sm:$0xff]
  %v4319 = vld [vmem:[%s4 + $0x3c8] sm:$0xff]
  %v4320 = vld [vmem:[%s4 + $0x3d0] sm:$0xff]
  %v4321 = vld [vmem:[%s4 + $0x3d8] sm:$0xff]
  %v4322 = vld [vmem:[%s4 + $0x3e0] sm:$0xff]
  %v4323 = vld [vmem:[%s4 + $0x3e8] sm:$0xff]
  %v4324 = vld [vmem:[%s4 + $0x3f0] sm:$0xff]
  %v4325 = vld [vmem:[%s4 + $0x3f8] sm:$0xff]
  %v4454 = vunpack.c.l.b16 %v4198
  %v4455 = vunpack.c.h.b16 %v4198
  %v4456 = vunpack.c.l.b16 %v4199
  %v4457 = vunpack.c.h.b16 %v4199
  %v4458 = vunpack.c.l.b16 %v4200
  %v4459 = vunpack.c.h.b16 %v4200
  %v4460 = vunpack.c.l.b16 %v4201
  %v4461 = vunpack.c.h.b16 %v4201
  %v4462 = vunpack.c.l.b16 %v4202
  %v4463 = vunpack.c.h.b16 %v4202
  %v4464 = vunpack.c.l.b16 %v4203
  %v4465 = vunpack.c.h.b16 %v4203
  %v4466 = vunpack.c.l.b16 %v4204
  %v4467 = vunpack.c.h.b16 %v4204
  %v4468 = vunpack.c.l.b16 %v4205
  %v4469 = vunpack.c.h.b16 %v4205
  %v4470 = vunpack.c.l.b16 %v4206
  %v4471 = vunpack.c.h.b16 %v4206
  %v4472 = vunpack.c.l.b16 %v4207
  %v4473 = vunpack.c.h.b16 %v4207
  %v4474 = vunpack.c.l.b16 %v4208
  %v4475 = vunpack.c.h.b16 %v4208
  %v4476 = vunpack.c.l.b16 %v4209
  %v4477 = vunpack.c.h.b16 %v4209
  %v4478 = vunpack.c.l.b16 %v4210
  %v4479 = vunpack.c.h.b16 %v4210
  %v4480 = vunpack.c.l.b16 %v4211
  %v4481 = vunpack.c.h.b16 %v4211
  %v4482 = vunpack.c.l.b16 %v4212
  %v4483 = vunpack.c.h.b16 %v4212
  %v4484 = vunpack.c.l.b16 %v4213
  %v4485 = vunpack.c.h.b16 %v4213
  %v4486 = vunpack.c.l.b16 %v4214
  %v4487 = vunpack.c.h.b16 %v4214
  %v4488 = vunpack.c.l.b16 %v4215
  %v4489 = vunpack.c.h.b16 %v4215
  %v4490 = vunpack.c.l.b16 %v4216
  %v4491 = vunpack.c.h.b16 %v4216
  %v4492 = vunpack.c.l.b16 %v4217
  %v4493 = vunpack.c.h.b16 %v4217
  %v4494 = vunpack.c.l.b16 %v4218
  %v4495 = vunpack.c.h.b16 %v4218
  %v4496 = vunpack.c.l.b16 %v4219
  %v4497 = vunpack.c.h.b16 %v4219
  %v4498 = vunpack.c.l.b16 %v4220
  %v4499 = vunpack.c.h.b16 %v4220
  %v4500 = vunpack.c.l.b16 %v4221
  %v4501 = vunpack.c.h.b16 %v4221
  %v4502 = vunpack.c.l.b16 %v4222
  %v4503 = vunpack.c.h.b16 %v4222
  %v4504 = vunpack.c.l.b16 %v4223
  %v4505 = vunpack.c.h.b16 %v4223
  %v4506 = vunpack.c.l.b16 %v4224
  %v4507 = vunpack.c.h.b16 %v4224
  %v4508 = vunpack.c.l.b16 %v4225
  %v4509 = vunpack.c.h.b16 %v4225
  %v4510 = vunpack.c.l.b16 %v4226
  %v4511 = vunpack.c.h.b16 %v4226
  %v4512 = vunpack.c.l.b16 %v4227
  %v4513 = vunpack.c.h.b16 %v4227
  %v4514 = vunpack.c.l.b16 %v4228
  %v4515 = vunpack.c.h.b16 %v4228
  %v4516 = vunpack.c.l.b16 %v4229
  %v4517 = vunpack.c.h.b16 %v4229
  %v4518 = vunpack.c.l.b16 %v4230
  %v4519 = vunpack.c.h.b16 %v4230
  %v4520 = vunpack.c.l.b16 %v4231
  %v4521 = vunpack.c.h.b16 %v4231
  %v4522 = vunpack.c.l.b16 %v4232
  %v4523 = vunpack.c.h.b16 %v4232
  %v4524 = vunpack.c.l.b16 %v4233
  %v4525 = vunpack.c.h.b16 %v4233
  %v4526 = vunpack.c.l.b16 %v4234
  %v4527 = vunpack.c.h.b16 %v4234
  %v4528 = vunpack.c.l.b16 %v4235
  %v4529 = vunpack.c.h.b16 %v4235
  %v4530 = vunpack.c.l.b16 %v4236
  %v4531 = vunpack.c.h.b16 %v4236
  %v4532 = vunpack.c.l.b16 %v4237
  %v4533 = vunpack.c.h.b16 %v4237
  %v4534 = vunpack.c.l.b16 %v4238
  %v4535 = vunpack.c.h.b16 %v4238
  %v4536 = vunpack.c.l.b16 %v4239
  %v4537 = vunpack.c.h.b16 %v4239
  %v4538 = vunpack.c.l.b16 %v4240
  %v4539 = vunpack.c.h.b16 %v4240
  %v4540 = vunpack.c.l.b16 %v4241
  %v4541 = vunpack.c.h.b16 %v4241
  %v4542 = vunpack.c.l.b16 %v4242
  %v4543 = vunpack.c.h.b16 %v4242
  %v4544 = vunpack.c.l.b16 %v4243
  %v4545 = vunpack.c.h.b16 %v4243
  %v4546 = vunpack.c.l.b16 %v4244
  %v4547 = vunpack.c.h.b16 %v4244
  %v4548 = vunpack.c.l.b16 %v4245
  %v4549 = vunpack.c.h.b16 %v4245
  %v4550 = vunpack.c.l.b16 %v4246
  %v4551 = vunpack.c.h.b16 %v4246
  %v4552 = vunpack.c.l.b16 %v4247
  %v4553 = vunpack.c.h.b16 %v4247
  %v4554 = vunpack.c.l.b16 %v4248
  %v4555 = vunpack.c.h.b16 %v4248
  %v4556 = vunpack.c.l.b16 %v4249
  %v4557 = vunpack.c.h.b16 %v4249
  %v4558 = vunpack.c.l.b16 %v4250
  %v4559 = vunpack.c.h.b16 %v4250
  %v4560 = vunpack.c.l.b16 %v4251
  %v4561 = vunpack.c.h.b16 %v4251
  %v4562 = vunpack.c.l.b16 %v4252
  %v4563 = vunpack.c.h.b16 %v4252
  %v4564 = vunpack.c.l.b16 %v4253
  %v4565 = vunpack.c.h.b16 %v4253
  %v4566 = vunpack.c.l.b16 %v4254
  %v4567 = vunpack.c.h.b16 %v4254
  %v4568 = vunpack.c.l.b16 %v4255
  %v4569 = vunpack.c.h.b16 %v4255
  %v4570 = vunpack.c.l.b16 %v4256
  %v4571 = vunpack.c.h.b16 %v4256
  %v4572 = vunpack.c.l.b16 %v4257
  %v4573 = vunpack.c.h.b16 %v4257
  %v4574 = vunpack.c.l.b16 %v4258
  %v4575 = vunpack.c.h.b16 %v4258
  %v4576 = vunpack.c.l.b16 %v4259
  %v4577 = vunpack.c.h.b16 %v4259
  %v4578 = vunpack.c.l.b16 %v4260
  %v4579 = vunpack.c.h.b16 %v4260
  %v4580 = vunpack.c.l.b16 %v4261
  %v4581 = vunpack.c.h.b16 %v4261
  %v4582 = vunpack.c.l.b16 %v4262
  %v4583 = vunpack.c.h.b16 %v4262
  %v4584 = vunpack.c.l.b16 %v4263
  %v4585 = vunpack.c.h.b16 %v4263
  %v4586 = vunpack.c.l.b16 %v4264
  %v4587 = vunpack.c.h.b16 %v4264
  %v4588 = vunpack.c.l.b16 %v4265
  %v4589 = vunpack.c.h.b16 %v4265
  %v4590 = vunpack.c.l.b16 %v4266
  %v4591 = vunpack.c.h.b16 %v4266
  %v4592 = vunpack.c.l.b16 %v4267
  %v4593 = vunpack.c.h.b16 %v4267
  %v4594 = vunpack.c.l.b16 %v4268
  %v4595 = vunpack.c.h.b16 %v4268
  %v4596 = vunpack.c.l.b16 %v4269
  %v4597 = vunpack.c.h.b16 %v4269
  %v4598 = vunpack.c.l.b16 %v4270
  %v4599 = vunpack.c.h.b16 %v4270
  %v4600 = vunpack.c.l.b16 %v4271
  %v4601 = vunpack.c.h.b16 %v4271
  %v4602 = vunpack.c.l.b16 %v4272
  %v4603 = vunpack.c.h.b16 %v4272
  %v4604 = vunpack.c.l.b16 %v4273
  %v4605 = vunpack.c.h.b16 %v4273
  %v4606 = vunpack.c.l.b16 %v4274
  %v4607 = vunpack.c.h.b16 %v4274
  %v4608 = vunpack.c.l.b16 %v4275
  %v4609 = vunpack.c.h.b16 %v4275
  %v4610 = vunpack.c.l.b16 %v4276
  %v4611 = vunpack.c.h.b16 %v4276
  %v4612 = vunpack.c.l.b16 %v4277
  %v4613 = vunpack.c.h.b16 %v4277
  %v4614 = vunpack.c.l.b16 %v4278
  %v4615 = vunpack.c.h.b16 %v4278
  %v4616 = vunpack.c.l.b16 %v4279
  %v4617 = vunpack.c.h.b16 %v4279
  %v4618 = vunpack.c.l.b16 %v4280
  %v4619 = vunpack.c.h.b16 %v4280
  %v4620 = vunpack.c.l.b16 %v4281
  %v4621 = vunpack.c.h.b16 %v4281
  %v4622 = vunpack.c.l.b16 %v4282
  %v4623 = vunpack.c.h.b16 %v4282
  %v4624 = vunpack.c.l.b16 %v4283
  %v4625 = vunpack.c.h.b16 %v4283
  %v4626 = vunpack.c.l.b16 %v4284
  %v4627 = vunpack.c.h.b16 %v4284
  %v4628 = vunpack.c.l.b16 %v4285
  %v4629 = vunpack.c.h.b16 %v4285
  %v4630 = vunpack.c.l.b16 %v4286
  %v4631 = vunpack.c.h.b16 %v4286
  %v4632 = vunpack.c.l.b16 %v4287
  %v4633 = vunpack.c.h.b16 %v4287
  %v4634 = vunpack.c.l.b16 %v4288
  %v4635 = vunpack.c.h.b16 %v4288
  %v4636 = vunpack.c.l.b16 %v4289
  %v4637 = vunpack.c.h.b16 %v4289
  %v4638 = vunpack.c.l.b16 %v4290
  %v4639 = vunpack.c.h.b16 %v4290
  %v4640 = vunpack.c.l.b16 %v4291
  %v4641 = vunpack.c.h.b16 %v4291
  %v4642 = vunpack.c.l.b16 %v4292
  %v4643 = vunpack.c.h.b16 %v4292
  %v4644 = vunpack.c.l.b16 %v4293
  %v4645 = vunpack.c.h.b16 %v4293
  %v4646 = vunpack.c.l.b16 %v4294
  %v4647 = vunpack.c.h.b16 %v4294
  %v4648 = vunpack.c.l.b16 %v4295
  %v4649 = vunpack.c.h.b16 %v4295
  %v4650 = vunpack.c.l.b16 %v4296
  %v4651 = vunpack.c.h.b16 %v4296
  %v4652 = vunpack.c.l.b16 %v4297
  %v4653 = vunpack.c.h.b16 %v4297
  %v4654 = vunpack.c.l.b16 %v4298
  %v4655 = vunpack.c.h.b16 %v4298
  %v4656 = vunpack.c.l.b16 %v4299
  %v4657 = vunpack.c.h.b16 %v4299
  %v4658 = vunpack.c.l.b16 %v4300
  %v4659 = vunpack.c.h.b16 %v4300
  %v4660 = vunpack.c.l.b16 %v4301
  %v4661 = vunpack.c.h.b16 %v4301
  %v4662 = vunpack.c.l.b16 %v4302
  %v4663 = vunpack.c.h.b16 %v4302
  %v4664 = vunpack.c.l.b16 %v4303
  %v4665 = vunpack.c.h.b16 %v4303
  %v4666 = vunpack.c.l.b16 %v4304
  %v4667 = vunpack.c.h.b16 %v4304
  %v4668 = vunpack.c.l.b16 %v4305
  %v4669 = vunpack.c.h.b16 %v4305
  %v4670 = vunpack.c.l.b16 %v4306
  %v4671 = vunpack.c.h.b16 %v4306
  %v4672 = vunpack.c.l.b16 %v4307
  %v4673 = vunpack.c.h.b16 %v4307
  %v4674 = vunpack.c.l.b16 %v4308
  %v4675 = vunpack.c.h.b16 %v4308
  %v4676 = vunpack.c.l.b16 %v4309
  %v4677 = vunpack.c.h.b16 %v4309
  %v4678 = vunpack.c.l.b16 %v4310
  %v4679 = vunpack.c.h.b16 %v4310
  %v4680 = vunpack.c.l.b16 %v4311
  %v4681 = vunpack.c.h.b16 %v4311
  %v4682 = vunpack.c.l.b16 %v4312
  %v4683 = vunpack.c.h.b16 %v4312
  %v4684 = vunpack.c.l.b16 %v4313
  %v4685 = vunpack.c.h.b16 %v4313
  %v4686 = vunpack.c.l.b16 %v4314
  %v4687 = vunpack.c.h.b16 %v4314
  %v4688 = vunpack.c.l.b16 %v4315
  %v4689 = vunpack.c.h.b16 %v4315
  %v4690 = vunpack.c.l.b16 %v4316
  %v4691 = vunpack.c.h.b16 %v4316
  %v4692 = vunpack.c.l.b16 %v4317
  %v4693 = vunpack.c.h.b16 %v4317
  %v4694 = vunpack.c.l.b16 %v4318
  %v4695 = vunpack.c.h.b16 %v4318
  %v4696 = vunpack.c.l.b16 %v4319
  %v4697 = vunpack.c.h.b16 %v4319
  %v4698 = vunpack.c.l.b16 %v4320
  %v4699 = vunpack.c.h.b16 %v4320
  %v4700 = vunpack.c.l.b16 %v4321
  %v4701 = vunpack.c.h.b16 %v4321
  %v4702 = vunpack.c.l.b16 %v4322
  %v4703 = vunpack.c.h.b16 %v4322
  %v4704 = vunpack.c.l.b16 %v4323
  %v4705 = vunpack.c.h.b16 %v4323
  %v4706 = vunpack.c.l.b16 %v4324
  %v4707 = vunpack.c.h.b16 %v4324
  %v4708 = vunpack.c.l.b16 %v4325
  %v4709 = vunpack.c.h.b16 %v4325
  %v4710 = vpack.c.b16 %v4458, %v4454
  %v4711 = vpack.c.b16 %v4459, %v4455
  %v4712 = vpack.c.b16 %v4460, %v4456
  %v4713 = vpack.c.b16 %v4461, %v4457
  %v4714 = vpack.c.b16 %v4466, %v4462
  %v4715 = vpack.c.b16 %v4467, %v4463
  %v4716 = vpack.c.b16 %v4468, %v4464
  %v4717 = vpack.c.b16 %v4469, %v4465
  %v4718 = vpack.c.b16 %v4474, %v4470
  %v4719 = vpack.c.b16 %v4475, %v4471
  %v4720 = vpack.c.b16 %v4476, %v4472
  %v4721 = vpack.c.b16 %v4477, %v4473
  %v4722 = vpack.c.b16 %v4482, %v4478
  %v4723 = vpack.c.b16 %v4483, %v4479
  %v4724 = vpack.c.b16 %v4484, %v4480
  %v4725 = vpack.c.b16 %v4485, %v4481
  %v4726 = vpack.c.b16 %v4490, %v4486
  %v4727 = vpack.c.b16 %v4491, %v4487
  %v4728 = vpack.c.b16 %v4492, %v4488
  %v4729 = vpack.c.b16 %v4493, %v4489
  %v4730 = vpack.c.b16 %v4498, %v4494
  %v4731 = vpack.c.b16 %v4499, %v4495
  %v4732 = vpack.c.b16 %v4500, %v4496
  %v4733 = vpack.c.b16 %v4501, %v4497
  %v4734 = vpack.c.b16 %v4506, %v4502
  %v4735 = vpack.c.b16 %v4507, %v4503
  %v4736 = vpack.c.b16 %v4508, %v4504
  %v4737 = vpack.c.b16 %v4509, %v4505
  %v4738 = vpack.c.b16 %v4514, %v4510
  %v4739 = vpack.c.b16 %v4515, %v4511
  %v4740 = vpack.c.b16 %v4516, %v4512
  %v4741 = vpack.c.b16 %v4517, %v4513
  %v4742 = vpack.c.b16 %v4522, %v4518
  %v4743 = vpack.c.b16 %v4523, %v4519
  %v4744 = vpack.c.b16 %v4524, %v4520
  %v4745 = vpack.c.b16 %v4525, %v4521
  %v4746 = vpack.c.b16 %v4530, %v4526
  %v4747 = vpack.c.b16 %v4531, %v4527
  %v4748 = vpack.c.b16 %v4532, %v4528
  %v4749 = vpack.c.b16 %v4533, %v4529
  %v4750 = vpack.c.b16 %v4538, %v4534
  %v4751 = vpack.c.b16 %v4539, %v4535
  %v4752 = vpack.c.b16 %v4540, %v4536
  %v4753 = vpack.c.b16 %v4541, %v4537
  %v4754 = vpack.c.b16 %v4546, %v4542
  %v4755 = vpack.c.b16 %v4547, %v4543
  %v4756 = vpack.c.b16 %v4548, %v4544
  %v4757 = vpack.c.b16 %v4549, %v4545
  %v4758 = vpack.c.b16 %v4554, %v4550
  %v4759 = vpack.c.b16 %v4555, %v4551
  %v4760 = vpack.c.b16 %v4556, %v4552
  %v4761 = vpack.c.b16 %v4557, %v4553
  %v4762 = vpack.c.b16 %v4562, %v4558
  %v4763 = vpack.c.b16 %v4563, %v4559
  %v4764 = vpack.c.b16 %v4564, %v4560
  %v4765 = vpack.c.b16 %v4565, %v4561
  %v4766 = vpack.c.b16 %v4570, %v4566
  %v4767 = vpack.c.b16 %v4571, %v4567
  %v4768 = vpack.c.b16 %v4572, %v4568
  %v4769 = vpack.c.b16 %v4573, %v4569
  %v4770 = vpack.c.b16 %v4578, %v4574
  %v4771 = vpack.c.b16 %v4579, %v4575
  %v4772 = vpack.c.b16 %v4580, %v4576
  %v4773 = vpack.c.b16 %v4581, %v4577
  %v4774 = vpack.c.b16 %v4586, %v4582
  %v4775 = vpack.c.b16 %v4587, %v4583
  %v4776 = vpack.c.b16 %v4588, %v4584
  %v4777 = vpack.c.b16 %v4589, %v4585
  %v4778 = vpack.c.b16 %v4594, %v4590
  %v4779 = vpack.c.b16 %v4595, %v4591
  %v4780 = vpack.c.b16 %v4596, %v4592
  %v4781 = vpack.c.b16 %v4597, %v4593
  %v4782 = vpack.c.b16 %v4602, %v4598
  %v4783 = vpack.c.b16 %v4603, %v4599
  %v4784 = vpack.c.b16 %v4604, %v4600
  %v4785 = vpack.c.b16 %v4605, %v4601
  %v4786 = vpack.c.b16 %v4610, %v4606
  %v4787 = vpack.c.b16 %v4611, %v4607
  %v4788 = vpack.c.b16 %v4612, %v4608
  %v4789 = vpack.c.b16 %v4613, %v4609
  %v4790 = vpack.c.b16 %v4618, %v4614
  %v4791 = vpack.c.b16 %v4619, %v4615
  %v4792 = vpack.c.b16 %v4620, %v4616
  %v4793 = vpack.c.b16 %v4621, %v4617
  %v4794 = vpack.c.b16 %v4626, %v4622
  %v4795 = vpack.c.b16 %v4627, %v4623
  %v4796 = vpack.c.b16 %v4628, %v4624
  %v4797 = vpack.c.b16 %v4629, %v4625
  %v4798 = vpack.c.b16 %v4634, %v4630
  %v4799 = vpack.c.b16 %v4635, %v4631
  %v4800 = vpack.c.b16 %v4636, %v4632
  %v4801 = vpack.c.b16 %v4637, %v4633
  %v4802 = vpack.c.b16 %v4642, %v4638
  %v4803 = vpack.c.b16 %v4643, %v4639
  %v4804 = vpack.c.b16 %v4644, %v4640
  %v4805 = vpack.c.b16 %v4645, %v4641
  %v4806 = vpack.c.b16 %v4650, %v4646
  %v4807 = vpack.c.b16 %v4651, %v4647
  %v4808 = vpack.c.b16 %v4652, %v4648
  %v4809 = vpack.c.b16 %v4653, %v4649
  %v4810 = vpack.c.b16 %v4658, %v4654
  %v4811 = vpack.c.b16 %v4659, %v4655
  %v4812 = vpack.c.b16 %v4660, %v4656
  %v4813 = vpack.c.b16 %v4661, %v4657
  %v4814 = vpack.c.b16 %v4666, %v4662
  %v4815 = vpack.c.b16 %v4667, %v4663
  %v4816 = vpack.c.b16 %v4668, %v4664
  %v4817 = vpack.c.b16 %v4669, %v4665
  %v4818 = vpack.c.b16 %v4674, %v4670
  %v4819 = vpack.c.b16 %v4675, %v4671
  %v4820 = vpack.c.b16 %v4676, %v4672
  %v4821 = vpack.c.b16 %v4677, %v4673
  %v4822 = vpack.c.b16 %v4682, %v4678
  %v4823 = vpack.c.b16 %v4683, %v4679
  %v4824 = vpack.c.b16 %v4684, %v4680
  %v4825 = vpack.c.b16 %v4685, %v4681
  %v4826 = vpack.c.b16 %v4690, %v4686
  %v4827 = vpack.c.b16 %v4691, %v4687
  %v4828 = vpack.c.b16 %v4692, %v4688
  %v4829 = vpack.c.b16 %v4693, %v4689
  %v4830 = vpack.c.b16 %v4698, %v4694
  %v4831 = vpack.c.b16 %v4699, %v4695
  %v4832 = vpack.c.b16 %v4700, %v4696
  %v4833 = vpack.c.b16 %v4701, %v4697
  %v4834 = vpack.c.b16 %v4706, %v4702
  %v4835 = vpack.c.b16 %v4707, %v4703
  %v4836 = vpack.c.b16 %v4708, %v4704
  %v4837 = vpack.c.b16 %v4709, %v4705
  %4966 = vmatprep.subr.bf16.mxu0 %v4739
  %4967 = vmatpush1.bf16.msra.mxu0 %v4738
  %4968 = vmatprep.subr.bf16.mxu0 %v4735
  %4969 = vmatpush1.bf16.msra.mxu0 %v4734
  %4970 = vmatprep.subr.bf16.mxu0 %v4731
  %4971 = vmatpush1.bf16.msra.mxu0 %v4730
  %4972 = vmatprep.subr.bf16.mxu0 %v4727
  %4973 = vmatpush1.bf16.msra.mxu0 %v4726
  %4974 = vmatprep.subr.bf16.mxu0 %v4723
  %4975 = vmatpush1.bf16.msra.mxu0 %v4722
  %4976 = vmatprep.subr.bf16.mxu0 %v4719
  %4977 = vmatpush1.bf16.msra.mxu0 %v4718
  %4978 = vmatprep.subr.bf16.mxu0 %v4715
  %4979 = vmatpush1.bf16.msra.mxu0 %v4714
  %4980 = vmatprep.subr.bf16.mxu0 %v4711
  %4981 = vmatpush1.bf16.msra.mxu0 %v4710
  %4982 = vmatprep.subr.bf16.mxu0 %v4771
  %4983 = vmatpush2.bf16.msra.mxu0 %v4770
  %4984 = vmatprep.subr.bf16.mxu0 %v4767
  %4985 = vmatpush2.bf16.msra.mxu0 %v4766
  %4986 = vmatprep.subr.bf16.mxu0 %v4763
  %4987 = vmatpush2.bf16.msra.mxu0 %v4762
  %4988 = vmatprep.subr.bf16.mxu0 %v4759
  %4989 = vmatpush2.bf16.msra.mxu0 %v4758
  %4990 = vmatprep.subr.bf16.mxu0 %v4755
  %4991 = vmatpush2.bf16.msra.mxu0 %v4754
  %4992 = vmatprep.subr.bf16.mxu0 %v4751
  %4993 = vmatpush2.bf16.msra.mxu0 %v4750
  %4994 = vmatprep.subr.bf16.mxu0 %v4747
  %4995 = vmatpush2.bf16.msra.mxu0 %v4746
  %4996 = vmatprep.subr.bf16.mxu0 %v4743
  %4997 = vmatpush2.bf16.msra.mxu0 %v4742
  %4998 = vmatprep.mubr.bf16.mxu0 %v4183
  %4999 = vmatmul.mubr.bf16.gmra.mxu0 %v4182
  %v5000 = vpop.f32.mrf.mxu0
  %v5001 = vadd.f32 0.0, %v5000
  %v5002 = vpop.f32.mrf.mxu0
  %v5003 = vadd.f32 0.0, %v5002
  %v5004 = vpop.f32.mrf.mxu0
  %v5005 = vadd.f32 0.0, %v5004
  %v5006 = vpop.f32.mrf.mxu0
  %v5007 = vadd.f32 0.0, %v5006
  %5008 = vmatprep.mubr.bf16.mxu0 %v4187
  %5009 = vmatmul.mubr.bf16.gmra.mxu0 %v4186
  %v5010 = vpop.f32.mrf.mxu0
  %v5011 = vadd.f32 0.0, %v5010
  %v5012 = vpop.f32.mrf.mxu0
  %v5013 = vadd.f32 0.0, %v5012
  %v5014 = vpop.f32.mrf.mxu0
  %v5015 = vadd.f32 0.0, %v5014
  %v5016 = vpop.f32.mrf.mxu0
  %v5017 = vadd.f32 0.0, %v5016
  %5018 = vmatprep.mubr.bf16.mxu0 %v4191
  %5019 = vmatmul.mubr.bf16.gmra.mxu0 %v4190
  %v5020 = vpop.f32.mrf.mxu0
  %v5021 = vadd.f32 0.0, %v5020
  %v5022 = vpop.f32.mrf.mxu0
  %v5023 = vadd.f32 0.0, %v5022
  %v5024 = vpop.f32.mrf.mxu0
  %v5025 = vadd.f32 0.0, %v5024
  %v5026 = vpop.f32.mrf.mxu0
  %v5027 = vadd.f32 0.0, %v5026
  %5028 = vmatprep.mubr.bf16.mxu0 %v4195
  %5029 = vmatmul.mubr.bf16.gmra.mxu0 %v4194
  %v5030 = vpop.f32.mrf.mxu0
  %v5031 = vadd.f32 0.0, %v5030
  %v5032 = vpop.f32.mrf.mxu0
  %v5033 = vadd.f32 0.0, %v5032
  %v5034 = vpop.f32.mrf.mxu0
  %v5035 = vadd.f32 0.0, %v5034
  %v5036 = vpop.f32.mrf.mxu0
  %v5037 = vadd.f32 0.0, %v5036
  %5038 = vdwg.mxu0
  %5039 = vmatprep.subr.bf16.mxu0 %v4803
  %5040 = vmatpush1.bf16.msra.mxu0 %v4802
  %5041 = vmatprep.subr.bf16.mxu0 %v4799
  %5042 = vmatpush1.bf16.msra.mxu0 %v4798
  %5043 = vmatprep.subr.bf16.mxu0 %v4795
  %5044 = vmatpush1.bf16.msra.mxu0 %v4794
  %5045 = vmatprep.subr.bf16.mxu0 %v4791
  %5046 = vmatpush1.bf16.msra.mxu0 %v4790
  %5047 = vmatprep.subr.bf16.mxu0 %v4787
  %5048 = vmatpush1.bf16.msra.mxu0 %v4786
  %5049 = vmatprep.subr.bf16.mxu0 %v4783
  %5050 = vmatpush1.bf16.msra.mxu0 %v4782
  %5051 = vmatprep.subr.bf16.mxu0 %v4779
  %5052 = vmatpush1.bf16.msra.mxu0 %v4778
  %5053 = vmatprep.subr.bf16.mxu0 %v4775
  %5054 = vmatpush1.bf16.msra.mxu0 %v4774
  %5055 = vmatprep.subr.bf16.mxu0 %v4835
  %5056 = vmatpush2.bf16.msra.mxu0 %v4834
  %5057 = vmatprep.subr.bf16.mxu0 %v4831
  %5058 = vmatpush2.bf16.msra.mxu0 %v4830
  %5059 = vmatprep.subr.bf16.mxu0 %v4827
  %5060 = vmatpush2.bf16.msra.mxu0 %v4826
  %5061 = vmatprep.subr.bf16.mxu0 %v4823
  %5062 = vmatpush2.bf16.msra.mxu0 %v4822
  %5063 = vmatprep.subr.bf16.mxu0 %v4819
  %5064 = vmatpush2.bf16.msra.mxu0 %v4818
  %5065 = vmatprep.subr.bf16.mxu0 %v4815
  %5066 = vmatpush2.bf16.msra.mxu0 %v4814
  %5067 = vmatprep.subr.bf16.mxu0 %v4811
  %5068 = vmatpush2.bf16.msra.mxu0 %v4810
  %5069 = vmatprep.subr.bf16.mxu0 %v4807
  %5070 = vmatpush2.bf16.msra.mxu0 %v4806
  %5071 = vmatprep.mubr.bf16.mxu0 %v4185
  %5072 = vmatmul.mubr.bf16.gmra.mxu0 %v4184
  %v5073 = vpop.f32.mrf.mxu0
  %v5074 = vadd.f32 %v5001, %v5073
  %v5075 = vpop.f32.mrf.mxu0
  %v5076 = vadd.f32 %v5003, %v5075
  %v5077 = vpop.f32.mrf.mxu0
  %v5078 = vadd.f32 %v5005, %v5077
  %v5079 = vpop.f32.mrf.mxu0
  %v5080 = vadd.f32 %v5007, %v5079
  %5081 = vmatprep.mubr.bf16.mxu0 %v4189
  %5082 = vmatmul.mubr.bf16.gmra.mxu0 %v4188
  %v5083 = vpop.f32.mrf.mxu0
  %v5084 = vadd.f32 %v5011, %v5083
  %v5085 = vpop.f32.mrf.mxu0
  %v5086 = vadd.f32 %v5013, %v5085
  %v5087 = vpop.f32.mrf.mxu0
  %v5088 = vadd.f32 %v5015, %v5087
  %v5089 = vpop.f32.mrf.mxu0
  %v5090 = vadd.f32 %v5017, %v5089
  %5091 = vmatprep.mubr.bf16.mxu0 %v4193
  %5092 = vmatmul.mubr.bf16.gmra.mxu0 %v4192
  %v5093 = vpop.f32.mrf.mxu0
  %v5094 = vadd.f32 %v5021, %v5093
  %v5095 = vpop.f32.mrf.mxu0
  %v5096 = vadd.f32 %v5023, %v5095
  %v5097 = vpop.f32.mrf.mxu0
  %v5098 = vadd.f32 %v5025, %v5097
  %v5099 = vpop.f32.mrf.mxu0
  %v5100 = vadd.f32 %v5027, %v5099
  %5101 = vmatprep.mubr.bf16.mxu0 %v4197
  %5102 = vmatmul.mubr.bf16.gmra.mxu0 %v4196
  %v5103 = vpop.f32.mrf.mxu0
  %v5104 = vadd.f32 %v5031, %v5103
  %v5105 = vpop.f32.mrf.mxu0
  %v5106 = vadd.f32 %v5033, %v5105
  %v5107 = vpop.f32.mrf.mxu0
  %v5108 = vadd.f32 %v5035, %v5107
  %v5109 = vpop.f32.mrf.mxu0
  %v5110 = vadd.f32 %v5037, %v5109
  %5111 = vdwg.mxu0
  %5112 = vmatprep.subr.bf16.mxu0 %v4741
  %5113 = vmatpush1.bf16.msra.mxu0 %v4740
  %5114 = vmatprep.subr.bf16.mxu0 %v4737
  %5115 = vmatpush1.bf16.msra.mxu0 %v4736
  %5116 = vmatprep.subr.bf16.mxu0 %v4733
  %5117 = vmatpush1.bf16.msra.mxu0 %v4732
  %5118 = vmatprep.subr.bf16.mxu0 %v4729
  %5119 = vmatpush1.bf16.msra.mxu0 %v4728
  %5120 = vmatprep.subr.bf16.mxu0 %v4725
  %5121 = vmatpush1.bf16.msra.mxu0 %v4724
  %5122 = vmatprep.subr.bf16.mxu0 %v4721
  %5123 = vmatpush1.bf16.msra.mxu0 %v4720
  %5124 = vmatprep.subr.bf16.mxu0 %v4717
  %5125 = vmatpush1.bf16.msra.mxu0 %v4716
  %5126 = vmatprep.subr.bf16.mxu0 %v4713
  %5127 = vmatpush1.bf16.msra.mxu0 %v4712
  %5128 = vmatprep.subr.bf16.mxu0 %v4773
  %5129 = vmatpush2.bf16.msra.mxu0 %v4772
  %5130 = vmatprep.subr.bf16.mxu0 %v4769
  %5131 = vmatpush2.bf16.msra.mxu0 %v4768
  %5132 = vmatprep.subr.bf16.mxu0 %v4765
  %5133 = vmatpush2.bf16.msra.mxu0 %v4764
  %5134 = vmatprep.subr.bf16.mxu0 %v4761
  %5135 = vmatpush2.bf16.msra.mxu0 %v4760
  %5136 = vmatprep.subr.bf16.mxu0 %v4757
  %5137 = vmatpush2.bf16.msra.mxu0 %v4756
  %5138 = vmatprep.subr.bf16.mxu0 %v4753
  %5139 = vmatpush2.bf16.msra.mxu0 %v4752
  %5140 = vmatprep.subr.bf16.mxu0 %v4749
  %5141 = vmatpush2.bf16.msra.mxu0 %v4748
  %5142 = vmatprep.subr.bf16.mxu0 %v4745
  %5143 = vmatpush2.bf16.msra.mxu0 %v4744
  %5144 = vmatprep.mubr.bf16.mxu0 %v4183
  %5145 = vmatmul.mubr.bf16.gmra.mxu0 %v4182
  %v5146 = vpop.f32.mrf.mxu0
  %v5147 = vadd.f32 0.0, %v5146
  %v5148 = vpop.f32.mrf.mxu0
  %v5149 = vadd.f32 0.0, %v5148
  %v5150 = vpop.f32.mrf.mxu0
  %v5151 = vadd.f32 0.0, %v5150
  %v5152 = vpop.f32.mrf.mxu0
  %v5153 = vadd.f32 0.0, %v5152
  %5154 = vmatprep.mubr.bf16.mxu0 %v4187
  %5155 = vmatmul.mubr.bf16.gmra.mxu0 %v4186
  %v5156 = vpop.f32.mrf.mxu0
  %v5157 = vadd.f32 0.0, %v5156
  %v5158 = vpop.f32.mrf.mxu0
  %v5159 = vadd.f32 0.0, %v5158
  %v5160 = vpop.f32.mrf.mxu0
  %v5161 = vadd.f32 0.0, %v5160
  %v5162 = vpop.f32.mrf.mxu0
  %v5163 = vadd.f32 0.0, %v5162
  %5164 = vmatprep.mubr.bf16.mxu0 %v4191
  %5165 = vmatmul.mubr.bf16.gmra.mxu0 %v4190
  %v5166 = vpop.f32.mrf.mxu0
  %v5167 = vadd.f32 0.0, %v5166
  %v5168 = vpop.f32.mrf.mxu0
  %v5169 = vadd.f32 0.0, %v5168
  %v5170 = vpop.f32.mrf.mxu0
  %v5171 = vadd.f32 0.0, %v5170
  %v5172 = vpop.f32.mrf.mxu0
  %v5173 = vadd.f32 0.0, %v5172
  %5174 = vmatprep.mubr.bf16.mxu0 %v4195
  %5175 = vmatmul.mubr.bf16.gmra.mxu0 %v4194
  %v5176 = vpop.f32.mrf.mxu0
  %v5177 = vadd.f32 0.0, %v5176
  %v5178 = vpop.f32.mrf.mxu0
  %v5179 = vadd.f32 0.0, %v5178
  %v5180 = vpop.f32.mrf.mxu0
  %v5181 = vadd.f32 0.0, %v5180
  %v5182 = vpop.f32.mrf.mxu0
  %v5183 = vadd.f32 0.0, %v5182
  %5184 = vdwg.mxu0
  %5185 = vmatprep.subr.bf16.mxu0 %v4805
  %5186 = vmatpush1.bf16.msra.mxu0 %v4804
  %5187 = vmatprep.subr.bf16.mxu0 %v4801
  %5188 = vmatpush1.bf16.msra.mxu0 %v4800
  %5189 = vmatprep.subr.bf16.mxu0 %v4797
  %5190 = vmatpush1.bf16.msra.mxu0 %v4796
  %5191 = vmatprep.subr.bf16.mxu0 %v4793
  %5192 = vmatpush1.bf16.msra.mxu0 %v4792
  %5193 = vmatprep.subr.bf16.mxu0 %v4789
  %5194 = vmatpush1.bf16.msra.mxu0 %v4788
  %5195 = vmatprep.subr.bf16.mxu0 %v4785
  %5196 = vmatpush1.bf16.msra.mxu0 %v4784
  %5197 = vmatprep.subr.bf16.mxu0 %v4781
  %5198 = vmatpush1.bf16.msra.mxu0 %v4780
  %5199 = vmatprep.subr.bf16.mxu0 %v4777
  %5200 = vmatpush1.bf16.msra.mxu0 %v4776
  %5201 = vmatprep.subr.bf16.mxu0 %v4837
  %5202 = vmatpush2.bf16.msra.mxu0 %v4836
  %5203 = vmatprep.subr.bf16.mxu0 %v4833
  %5204 = vmatpush2.bf16.msra.mxu0 %v4832
  %5205 = vmatprep.subr.bf16.mxu0 %v4829
  %5206 = vmatpush2.bf16.msra.mxu0 %v4828
  %5207 = vmatprep.subr.bf16.mxu0 %v4825
  %5208 = vmatpush2.bf16.msra.mxu0 %v4824
  %5209 = vmatprep.subr.bf16.mxu0 %v4821
  %5210 = vmatpush2.bf16.msra.mxu0 %v4820
  %5211 = vmatprep.subr.bf16.mxu0 %v4817
  %5212 = vmatpush2.bf16.msra.mxu0 %v4816
  %5213 = vmatprep.subr.bf16.mxu0 %v4813
  %5214 = vmatpush2.bf16.msra.mxu0 %v4812
  %5215 = vmatprep.subr.bf16.mxu0 %v4809
  %5216 = vmatpush2.bf16.msra.mxu0 %v4808
  %5217 = vmatprep.mubr.bf16.mxu0 %v4185
  %5218 = vmatmul.mubr.bf16.gmra.mxu0 %v4184
  %v5219 = vpop.f32.mrf.mxu0
  %v5220 = vadd.f32 %v5147, %v5219
  %v5221 = vpop.f32.mrf.mxu0
  %v5222 = vadd.f32 %v5149, %v5221
  %v5223 = vpop.f32.mrf.mxu0
  %v5224 = vadd.f32 %v5151, %v5223
  %v5225 = vpop.f32.mrf.mxu0
  %v5226 = vadd.f32 %v5153, %v5225
  %5227 = vmatprep.mubr.bf16.mxu0 %v4189
  %5228 = vmatmul.mubr.bf16.gmra.mxu0 %v4188
  %v5229 = vpop.f32.mrf.mxu0
  %v5230 = vadd.f32 %v5157, %v5229
  %v5231 = vpop.f32.mrf.mxu0
  %v5232 = vadd.f32 %v5159, %v5231
  %v5233 = vpop.f32.mrf.mxu0
  %v5234 = vadd.f32 %v5161, %v5233
  %v5235 = vpop.f32.mrf.mxu0
  %v5236 = vadd.f32 %v5163, %v5235
  %5237 = vmatprep.mubr.bf16.mxu0 %v4193
  %5238 = vmatmul.mubr.bf16.gmra.mxu0 %v4192
  %v5239 = vpop.f32.mrf.mxu0
  %v5240 = vadd.f32 %v5167, %v5239
  %v5241 = vpop.f32.mrf.mxu0
  %v5242 = vadd.f32 %v5169, %v5241
  %v5243 = vpop.f32.mrf.mxu0
  %v5244 = vadd.f32 %v5171, %v5243
  %v5245 = vpop.f32.mrf.mxu0
  %v5246 = vadd.f32 %v5173, %v5245
  %5247 = vmatprep.mubr.bf16.mxu0 %v4197
  %5248 = vmatmul.mubr.bf16.gmra.mxu0 %v4196
  %v5249 = vpop.f32.mrf.mxu0
  %v5250 = vadd.f32 %v5177, %v5249
  %v5251 = vpop.f32.mrf.mxu0
  %v5252 = vadd.f32 %v5179, %v5251
  %v5253 = vpop.f32.mrf.mxu0
  %v5254 = vadd.f32 %v5181, %v5253
  %v5255 = vpop.f32.mrf.mxu0
  %v5256 = vadd.f32 %v5183, %v5255
  %5257 = vdwg.mxu0
  %5258 = vst [vmem:[#allocation2] sm:$0xff] %v5074
  %5259 = vst [vmem:[#allocation2 + $0x8] sm:$0xff] %v5076
  %5260 = vst [vmem:[#allocation2 + $0x10] sm:$0xff] %v5220
  %5261 = vst [vmem:[#allocation2 + $0x18] sm:$0xff] %v5222
  %5262 = vst [vmem:[#allocation2 + $0x20] sm:$0xff] %v5078
  %5263 = vst [vmem:[#allocation2 + $0x28] sm:$0xff] %v5080
  %5264 = vst [vmem:[#allocation2 + $0x30] sm:$0xff] %v5224
  %5265 = vst [vmem:[#allocation2 + $0x38] sm:$0xff] %v5226
  %5266 = vst [vmem:[#allocation2 + $0x40] sm:$0xff] %v5084
  %5267 = vst [vmem:[#allocation2 + $0x48] sm:$0xff] %v5086
  %5268 = vst [vmem:[#allocation2 + $0x50] sm:$0xff] %v5230
  %5269 = vst [vmem:[#allocation2 + $0x58] sm:$0xff] %v5232
  %5270 = vst [vmem:[#allocation2 + $0x60] sm:$0xff] %v5088
  %5271 = vst [vmem:[#allocation2 + $0x68] sm:$0xff] %v5090
  %5272 = vst [vmem:[#allocation2 + $0x70] sm:$0xff] %v5234
  %5273 = vst [vmem:[#allocation2 + $0x78] sm:$0xff] %v5236
  %5274 = vst [vmem:[#allocation2 + $0x80] sm:$0xff] %v5094
  %5275 = vst [vmem:[#allocation2 + $0x88] sm:$0xff] %v5096
  %5276 = vst [vmem:[#allocation2 + $0x90] sm:$0xff] %v5240
  %5277 = vst [vmem:[#allocation2 + $0x98] sm:$0xff] %v5242
  %5278 = vst [vmem:[#allocation2 + $0xa0] sm:$0xff] %v5098
  %5279 = vst [vmem:[#allocation2 + $0xa8] sm:$0xff] %v5100
  %5280 = vst [vmem:[#allocation2 + $0xb0] sm:$0xff] %v5244
  %5281 = vst [vmem:[#allocation2 + $0xb8] sm:$0xff] %v5246
  %5282 = vst [vmem:[#allocation2 + $0xc0] sm:$0xff] %v5104
  %5283 = vst [vmem:[#allocation2 + $0xc8] sm:$0xff] %v5106
  %5284 = vst [vmem:[#allocation2 + $0xd0] sm:$0xff] %v5250
  %5285 = vst [vmem:[#allocation2 + $0xd8] sm:$0xff] %v5252
  %5286 = vst [vmem:[#allocation2 + $0xe0] sm:$0xff] %v5108
  %5287 = vst [vmem:[#allocation2 + $0xe8] sm:$0xff] %v5110
  %5288 = vst [vmem:[#allocation2 + $0xf0] sm:$0xff] %v5254
  %5289 = vst [vmem:[#allocation2 + $0xf8] sm:$0xff] %v5256
  %v5290 = vld [vmem:[#allocation2] sm:$0xff]
  %v5291 = vld [vmem:[#allocation2 + $0x8] sm:$0xff]
  %v5292 = vld [vmem:[#allocation2 + $0x10] sm:$0xff]
  %v5293 = vld [vmem:[#allocation2 + $0x18] sm:$0xff]
  %v5294 = vld [vmem:[%s5] sm:$0xff]
  %v5295 = vld [vmem:[%s5 + $0x8] sm:$0xff]
  %v5296 = vld [vmem:[%s5 + $0x10] sm:$0xff]
  %v5297 = vld [vmem:[%s5 + $0x18] sm:$0xff]
  %v5298 = vadd.f32 %v5290, %v5294
  %v5299 = vadd.f32 %v5291, %v5295
  %v5300 = vadd.f32 %v5292, %v5296
  %v5301 = vadd.f32 %v5293, %v5297
  %v5302 = vxor.u32 %v5298, 2147483648
  %v5303 = vmul.f32 %v5302, 1.442695
  %v5304 = vpow.pop %v5303
  %v5305 = vadd.f32 %v5304, 1.0
  %v5306 = vrcp.pop %v5305
  %v5307 = vmul.f32 1.0, %v5306
  %v5308 = vxor.u32 %v5299, 2147483648
  %v5309 = vmul.f32 %v5308, 1.442695
  %v5310 = vpow.pop %v5309
  %v5311 = vadd.f32 %v5310, 1.0
  %v5312 = vrcp.pop %v5311
  %v5313 = vmul.f32 1.0, %v5312
  %v5314 = vtanh.pop %v5300
  %v5315 = vxor.u32 %v5301, 2147483648
  %v5316 = vmul.f32 %v5315, 1.442695
  %v5317 = vpow.pop %v5316
  %v5318 = vadd.f32 %v5317, 1.0
  %v5319 = vrcp.pop %v5318
  %v5320 = vmul.f32 1.0, %v5319
  %v5321 = vmul.f32 %v5313, 0.0
  %v5322 = vmul.f32 %v5307, %v5314
  %v5323 = vadd.f32 %v5321, %v5322
  %v5324 = vtanh.pop %v5323
  %v5325 = vmul.f32 %v5320, %v5324
  %v5326 = vmul.f32 %v5325, %v78
  %v5327 = vmul.f32 %v5325, %v83
  %5328 = vst [vmem:[#allocation4] sm:$0x3] %v5325
  %v5330 = vrot.slane %v5325, 4
  %5332 = vst [vmem:[#allocation4 + $0x18] sm:$0xc0] %v5330
  %v5333 = vld [vmem:[#allocation2 + $0x20] sm:$0xff]
  %v5334 = vld [vmem:[#allocation2 + $0x28] sm:$0xff]
  %v5335 = vld [vmem:[#allocation2 + $0x30] sm:$0xff]
  %v5336 = vld [vmem:[#allocation2 + $0x38] sm:$0xff]
  %v5337 = vld [vmem:[%s5] sm:$0xff]
  %v5338 = vld [vmem:[%s5 + $0x8] sm:$0xff]
  %v5339 = vld [vmem:[%s5 + $0x10] sm:$0xff]
  %v5340 = vld [vmem:[%s5 + $0x18] sm:$0xff]
  %v5341 = vadd.f32 %v5333, %v5337
  %v5342 = vadd.f32 %v5334, %v5338
  %v5343 = vadd.f32 %v5335, %v5339
  %v5344 = vadd.f32 %v5336, %v5340
  %v5345 = vpack.c.bf16 %v5326, %v5326
  %v5346 = vpack.c.bf16 %v5327, %v5327
  %v5347 = vld [vmem:[%s6] sm:$0xff]
  %v5348 = vld [vmem:[%s6 + $0x8] sm:$0xff]
  %v5349 = vld [vmem:[%s6 + $0x10] sm:$0xff]
  %v5350 = vld [vmem:[%s6 + $0x18] sm:$0xff]
  %v5351 = vld [vmem:[%s6 + $0x20] sm:$0xff]
  %v5352 = vld [vmem:[%s6 + $0x28] sm:$0xff]
  %v5353 = vld [vmem:[%s6 + $0x30] sm:$0xff]
  %v5354 = vld [vmem:[%s6 + $0x38] sm:$0xff]
  %v5355 = vld [vmem:[%s6 + $0x40] sm:$0xff]
  %v5356 = vld [vmem:[%s6 + $0x48] sm:$0xff]
  %v5357 = vld [vmem:[%s6 + $0x50] sm:$0xff]
  %v5358 = vld [vmem:[%s6 + $0x58] sm:$0xff]
  %v5359 = vld [vmem:[%s6 + $0x60] sm:$0xff]
  %v5360 = vld [vmem:[%s6 + $0x68] sm:$0xff]
  %v5361 = vld [vmem:[%s6 + $0x70] sm:$0xff]
  %v5362 = vld [vmem:[%s6 + $0x78] sm:$0xff]
  %v5363 = vld [vmem:[%s6 + $0x80] sm:$0xff]
  %v5364 = vld [vmem:[%s6 + $0x88] sm:$0xff]
  %v5365 = vld [vmem:[%s6 + $0x90] sm:$0xff]
  %v5366 = vld [vmem:[%s6 + $0x98] sm:$0xff]
  %v5367 = vld [vmem:[%s6 + $0xa0] sm:$0xff]
  %v5368 = vld [vmem:[%s6 + $0xa8] sm:$0xff]
  %v5369 = vld [vmem:[%s6 + $0xb0] sm:$0xff]
  %v5370 = vld [vmem:[%s6 + $0xb8] sm:$0xff]
  %v5371 = vld [vmem:[%s6 + $0xc0] sm:$0xff]
  %v5372 = vld [vmem:[%s6 + $0xc8] sm:$0xff]
  %v5373 = vld [vmem:[%s6 + $0xd0] sm:$0xff]
  %v5374 = vld [vmem:[%s6 + $0xd8] sm:$0xff]
  %v5375 = vld [vmem:[%s6 + $0xe0] sm:$0xff]
  %v5376 = vld [vmem:[%s6 + $0xe8] sm:$0xff]
  %v5377 = vld [vmem:[%s6 + $0xf0] sm:$0xff]
  %v5378 = vld [vmem:[%s6 + $0xf8] sm:$0xff]
  %v5379 = vld [vmem:[%s6 + $0x100] sm:$0xff]
  %v5380 = vld [vmem:[%s6 + $0x108] sm:$0xff]
  %v5381 = vld [vmem:[%s6 + $0x110] sm:$0xff]
  %v5382 = vld [vmem:[%s6 + $0x118] sm:$0xff]
  %v5383 = vld [vmem:[%s6 + $0x120] sm:$0xff]
  %v5384 = vld [vmem:[%s6 + $0x128] sm:$0xff]
  %v5385 = vld [vmem:[%s6 + $0x130] sm:$0xff]
  %v5386 = vld [vmem:[%s6 + $0x138] sm:$0xff]
  %v5387 = vld [vmem:[%s6 + $0x140] sm:$0xff]
  %v5388 = vld [vmem:[%s6 + $0x148] sm:$0xff]
  %v5389 = vld [vmem:[%s6 + $0x150] sm:$0xff]
  %v5390 = vld [vmem:[%s6 + $0x158] sm:$0xff]
  %v5391 = vld [vmem:[%s6 + $0x160] sm:$0xff]
  %v5392 = vld [vmem:[%s6 + $0x168] sm:$0xff]
  %v5393 = vld [vmem:[%s6 + $0x170] sm:$0xff]
  %v5394 = vld [vmem:[%s6 + $0x178] sm:$0xff]
  %v5395 = vld [vmem:[%s6 + $0x180] sm:$0xff]
  %v5396 = vld [vmem:[%s6 + $0x188] sm:$0xff]
  %v5397 = vld [vmem:[%s6 + $0x190] sm:$0xff]
  %v5398 = vld [vmem:[%s6 + $0x198] sm:$0xff]
  %v5399 = vld [vmem:[%s6 + $0x1a0] sm:$0xff]
  %v5400 = vld [vmem:[%s6 + $0x1a8] sm:$0xff]
  %v5401 = vld [vmem:[%s6 + $0x1b0] sm:$0xff]
  %v5402 = vld [vmem:[%s6 + $0x1b8] sm:$0xff]
  %v5403 = vld [vmem:[%s6 + $0x1c0] sm:$0xff]
  %v5404 = vld [vmem:[%s6 + $0x1c8] sm:$0xff]
  %v5405 = vld [vmem:[%s6 + $0x1d0] sm:$0xff]
  %v5406 = vld [vmem:[%s6 + $0x1d8] sm:$0xff]
  %v5407 = vld [vmem:[%s6 + $0x1e0] sm:$0xff]
  %v5408 = vld [vmem:[%s6 + $0x1e8] sm:$0xff]
  %v5409 = vld [vmem:[%s6 + $0x1f0] sm:$0xff]
  %v5410 = vld [vmem:[%s6 + $0x1f8] sm:$0xff]
  %v5475 = vunpack.c.l.b16 %v5347
  %v5476 = vunpack.c.h.b16 %v5347
  %v5477 = vunpack.c.l.b16 %v5348
  %v5478 = vunpack.c.h.b16 %v5348
  %v5479 = vunpack.c.l.b16 %v5349
  %v5480 = vunpack.c.h.b16 %v5349
  %v5481 = vunpack.c.l.b16 %v5350
  %v5482 = vunpack.c.h.b16 %v5350
  %v5483 = vunpack.c.l.b16 %v5351
  %v5484 = vunpack.c.h.b16 %v5351
  %v5485 = vunpack.c.l.b16 %v5352
  %v5486 = vunpack.c.h.b16 %v5352
  %v5487 = vunpack.c.l.b16 %v5353
  %v5488 = vunpack.c.h.b16 %v5353
  %v5489 = vunpack.c.l.b16 %v5354
  %v5490 = vunpack.c.h.b16 %v5354
  %v5491 = vunpack.c.l.b16 %v5355
  %v5492 = vunpack.c.h.b16 %v5355
  %v5493 = vunpack.c.l.b16 %v5356
  %v5494 = vunpack.c.h.b16 %v5356
  %v5495 = vunpack.c.l.b16 %v5357
  %v5496 = vunpack.c.h.b16 %v5357
  %v5497 = vunpack.c.l.b16 %v5358
  %v5498 = vunpack.c.h.b16 %v5358
  %v5499 = vunpack.c.l.b16 %v5359
  %v5500 = vunpack.c.h.b16 %v5359
  %v5501 = vunpack.c.l.b16 %v5360
  %v5502 = vunpack.c.h.b16 %v5360
  %v5503 = vunpack.c.l.b16 %v5361
  %v5504 = vunpack.c.h.b16 %v5361
  %v5505 = vunpack.c.l.b16 %v5362
  %v5506 = vunpack.c.h.b16 %v5362
  %v5507 = vunpack.c.l.b16 %v5363
  %v5508 = vunpack.c.h.b16 %v5363
  %v5509 = vunpack.c.l.b16 %v5364
  %v5510 = vunpack.c.h.b16 %v5364
  %v5511 = vunpack.c.l.b16 %v5365
  %v5512 = vunpack.c.h.b16 %v5365
  %v5513 = vunpack.c.l.b16 %v5366
  %v5514 = vunpack.c.h.b16 %v5366
  %v5515 = vunpack.c.l.b16 %v5367
  %v5516 = vunpack.c.h.b16 %v5367
  %v5517 = vunpack.c.l.b16 %v5368
  %v5518 = vunpack.c.h.b16 %v5368
  %v5519 = vunpack.c.l.b16 %v5369
  %v5520 = vunpack.c.h.b16 %v5369
  %v5521 = vunpack.c.l.b16 %v5370
  %v5522 = vunpack.c.h.b16 %v5370
  %v5523 = vunpack.c.l.b16 %v5371
  %v5524 = vunpack.c.h.b16 %v5371
  %v5525 = vunpack.c.l.b16 %v5372
  %v5526 = vunpack.c.h.b16 %v5372
  %v5527 = vunpack.c.l.b16 %v5373
  %v5528 = vunpack.c.h.b16 %v5373
  %v5529 = vunpack.c.l.b16 %v5374
  %v5530 = vunpack.c.h.b16 %v5374
  %v5531 = vunpack.c.l.b16 %v5375
  %v5532 = vunpack.c.h.b16 %v5375
  %v5533 = vunpack.c.l.b16 %v5376
  %v5534 = vunpack.c.h.b16 %v5376
  %v5535 = vunpack.c.l.b16 %v5377
  %v5536 = vunpack.c.h.b16 %v5377
  %v5537 = vunpack.c.l.b16 %v5378
  %v5538 = vunpack.c.h.b16 %v5378
  %v5539 = vunpack.c.l.b16 %v5379
  %v5540 = vunpack.c.h.b16 %v5379
  %v5541 = vunpack.c.l.b16 %v5380
  %v5542 = vunpack.c.h.b16 %v5380
  %v5543 = vunpack.c.l.b16 %v5381
  %v5544 = vunpack.c.h.b16 %v5381
  %v5545 = vunpack.c.l.b16 %v5382
  %v5546 = vunpack.c.h.b16 %v5382
  %v5547 = vunpack.c.l.b16 %v5383
  %v5548 = vunpack.c.h.b16 %v5383
  %v5549 = vunpack.c.l.b16 %v5384
  %v5550 = vunpack.c.h.b16 %v5384
  %v5551 = vunpack.c.l.b16 %v5385
  %v5552 = vunpack.c.h.b16 %v5385
  %v5553 = vunpack.c.l.b16 %v5386
  %v5554 = vunpack.c.h.b16 %v5386
  %v5555 = vunpack.c.l.b16 %v5387
  %v5556 = vunpack.c.h.b16 %v5387
  %v5557 = vunpack.c.l.b16 %v5388
  %v5558 = vunpack.c.h.b16 %v5388
  %v5559 = vunpack.c.l.b16 %v5389
  %v5560 = vunpack.c.h.b16 %v5389
  %v5561 = vunpack.c.l.b16 %v5390
  %v5562 = vunpack.c.h.b16 %v5390
  %v5563 = vunpack.c.l.b16 %v5391
  %v5564 = vunpack.c.h.b16 %v5391
  %v5565 = vunpack.c.l.b16 %v5392
  %v5566 = vunpack.c.h.b16 %v5392
  %v5567 = vunpack.c.l.b16 %v5393
  %v5568 = vunpack.c.h.b16 %v5393
  %v5569 = vunpack.c.l.b16 %v5394
  %v5570 = vunpack.c.h.b16 %v5394
  %v5571 = vunpack.c.l.b16 %v5395
  %v5572 = vunpack.c.h.b16 %v5395
  %v5573 = vunpack.c.l.b16 %v5396
  %v5574 = vunpack.c.h.b16 %v5396
  %v5575 = vunpack.c.l.b16 %v5397
  %v5576 = vunpack.c.h.b16 %v5397
  %v5577 = vunpack.c.l.b16 %v5398
  %v5578 = vunpack.c.h.b16 %v5398
  %v5579 = vunpack.c.l.b16 %v5399
  %v5580 = vunpack.c.h.b16 %v5399
  %v5581 = vunpack.c.l.b16 %v5400
  %v5582 = vunpack.c.h.b16 %v5400
  %v5583 = vunpack.c.l.b16 %v5401
  %v5584 = vunpack.c.h.b16 %v5401
  %v5585 = vunpack.c.l.b16 %v5402
  %v5586 = vunpack.c.h.b16 %v5402
  %v5587 = vunpack.c.l.b16 %v5403
  %v5588 = vunpack.c.h.b16 %v5403
  %v5589 = vunpack.c.l.b16 %v5404
  %v5590 = vunpack.c.h.b16 %v5404
  %v5591 = vunpack.c.l.b16 %v5405
  %v5592 = vunpack.c.h.b16 %v5405
  %v5593 = vunpack.c.l.b16 %v5406
  %v5594 = vunpack.c.h.b16 %v5406
  %v5595 = vunpack.c.l.b16 %v5407
  %v5596 = vunpack.c.h.b16 %v5407
  %v5597 = vunpack.c.l.b16 %v5408
  %v5598 = vunpack.c.h.b16 %v5408
  %v5599 = vunpack.c.l.b16 %v5409
  %v5600 = vunpack.c.h.b16 %v5409
  %v5601 = vunpack.c.l.b16 %v5410
  %v5602 = vunpack.c.h.b16 %v5410
  %v5603 = vpack.c.b16 %v5479, %v5475
  %v5604 = vpack.c.b16 %v5480, %v5476
  %v5605 = vpack.c.b16 %v5481, %v5477
  %v5606 = vpack.c.b16 %v5482, %v5478
  %v5607 = vpack.c.b16 %v5487, %v5483
  %v5608 = vpack.c.b16 %v5488, %v5484
  %v5609 = vpack.c.b16 %v5489, %v5485
  %v5610 = vpack.c.b16 %v5490, %v5486
  %v5611 = vpack.c.b16 %v5495, %v5491
  %v5612 = vpack.c.b16 %v5496, %v5492
  %v5613 = vpack.c.b16 %v5497, %v5493
  %v5614 = vpack.c.b16 %v5498, %v5494
  %v5615 = vpack.c.b16 %v5503, %v5499
  %v5616 = vpack.c.b16 %v5504, %v5500
  %v5617 = vpack.c.b16 %v5505, %v5501
  %v5618 = vpack.c.b16 %v5506, %v5502
  %v5619 = vpack.c.b16 %v5511, %v5507
  %v5620 = vpack.c.b16 %v5512, %v5508
  %v5621 = vpack.c.b16 %v5513, %v5509
  %v5622 = vpack.c.b16 %v5514, %v5510
  %v5623 = vpack.c.b16 %v5519, %v5515
  %v5624 = vpack.c.b16 %v5520, %v5516
  %v5625 = vpack.c.b16 %v5521, %v5517
  %v5626 = vpack.c.b16 %v5522, %v5518
  %v5627 = vpack.c.b16 %v5527, %v5523
  %v5628 = vpack.c.b16 %v5528, %v5524
  %v5629 = vpack.c.b16 %v5529, %v5525
  %v5630 = vpack.c.b16 %v5530, %v5526
  %v5631 = vpack.c.b16 %v5535, %v5531
  %v5632 = vpack.c.b16 %v5536, %v5532
  %v5633 = vpack.c.b16 %v5537, %v5533
  %v5634 = vpack.c.b16 %v5538, %v5534
  %v5635 = vpack.c.b16 %v5543, %v5539
  %v5636 = vpack.c.b16 %v5544, %v5540
  %v5637 = vpack.c.b16 %v5545, %v5541
  %v5638 = vpack.c.b16 %v5546, %v5542
  %v5639 = vpack.c.b16 %v5551, %v5547
  %v5640 = vpack.c.b16 %v5552, %v5548
  %v5641 = vpack.c.b16 %v5553, %v5549
  %v5642 = vpack.c.b16 %v5554, %v5550
  %v5643 = vpack.c.b16 %v5559, %v5555
  %v5644 = vpack.c.b16 %v5560, %v5556
  %v5645 = vpack.c.b16 %v5561, %v5557
  %v5646 = vpack.c.b16 %v5562, %v5558
  %v5647 = vpack.c.b16 %v5567, %v5563
  %v5648 = vpack.c.b16 %v5568, %v5564
  %v5649 = vpack.c.b16 %v5569, %v5565
  %v5650 = vpack.c.b16 %v5570, %v5566
  %v5651 = vpack.c.b16 %v5575, %v5571
  %v5652 = vpack.c.b16 %v5576, %v5572
  %v5653 = vpack.c.b16 %v5577, %v5573
  %v5654 = vpack.c.b16 %v5578, %v5574
  %v5655 = vpack.c.b16 %v5583, %v5579
  %v5656 = vpack.c.b16 %v5584, %v5580
  %v5657 = vpack.c.b16 %v5585, %v5581
  %v5658 = vpack.c.b16 %v5586, %v5582
  %v5659 = vpack.c.b16 %v5591, %v5587
  %v5660 = vpack.c.b16 %v5592, %v5588
  %v5661 = vpack.c.b16 %v5593, %v5589
  %v5662 = vpack.c.b16 %v5594, %v5590
  %v5663 = vpack.c.b16 %v5599, %v5595
  %v5664 = vpack.c.b16 %v5600, %v5596
  %v5665 = vpack.c.b16 %v5601, %v5597
  %v5666 = vpack.c.b16 %v5602, %v5598
  %5731 = vmatprep.subr.bf16.mxu0 %v5632
  %5732 = vmatpush1.bf16.msra.mxu0 %v5631
  %5733 = vmatprep.subr.bf16.mxu0 %v5628
  %5734 = vmatpush1.bf16.msra.mxu0 %v5627
  %5735 = vmatprep.subr.bf16.mxu0 %v5624
  %5736 = vmatpush1.bf16.msra.mxu0 %v5623
  %5737 = vmatprep.subr.bf16.mxu0 %v5620
  %5738 = vmatpush1.bf16.msra.mxu0 %v5619
  %5739 = vmatprep.subr.bf16.mxu0 %v5616
  %5740 = vmatpush1.bf16.msra.mxu0 %v5615
  %5741 = vmatprep.subr.bf16.mxu0 %v5612
  %5742 = vmatpush1.bf16.msra.mxu0 %v5611
  %5743 = vmatprep.subr.bf16.mxu0 %v5608
  %5744 = vmatpush1.bf16.msra.mxu0 %v5607
  %5745 = vmatprep.subr.bf16.mxu0 %v5604
  %5746 = vmatpush1.bf16.msra.mxu0 %v5603
  %5747 = vmatprep.subr.bf16.mxu0 %v5664
  %5748 = vmatpush2.bf16.msra.mxu0 %v5663
  %5749 = vmatprep.subr.bf16.mxu0 %v5660
  %5750 = vmatpush2.bf16.msra.mxu0 %v5659
  %5751 = vmatprep.subr.bf16.mxu0 %v5656
  %5752 = vmatpush2.bf16.msra.mxu0 %v5655
  %5753 = vmatprep.subr.bf16.mxu0 %v5652
  %5754 = vmatpush2.bf16.msra.mxu0 %v5651
  %5755 = vmatprep.subr.bf16.mxu0 %v5648
  %5756 = vmatpush2.bf16.msra.mxu0 %v5647
  %5757 = vmatprep.subr.bf16.mxu0 %v5644
  %5758 = vmatpush2.bf16.msra.mxu0 %v5643
  %5759 = vmatprep.subr.bf16.mxu0 %v5640
  %5760 = vmatpush2.bf16.msra.mxu0 %v5639
  %5761 = vmatprep.subr.bf16.mxu0 %v5636
  %5762 = vmatpush2.bf16.msra.mxu0 %v5635
  %5763 = vmatprep.mubr.bf16.mxu0 %v5346
  %5764 = vmatmul.mubr.bf16.gmra.mxu0 %v5345
  %v5765 = vpop.f32.mrf.mxu0
  %v5766 = vadd.f32 %v5341, %v5765
  %v5767 = vpop.f32.mrf.mxu0
  %v5768 = vadd.f32 %v5342, %v5767
  %v5769 = vpop.f32.mrf.mxu0
  %v5770 = vpop.f32.mrf.mxu0
  %5771 = vdwg.mxu0
  %5772 = vmatprep.subr.bf16.mxu0 %v5634
  %5773 = vmatpush1.bf16.msra.mxu0 %v5633
  %5774 = vmatprep.subr.bf16.mxu0 %v5630
  %5775 = vmatpush1.bf16.msra.mxu0 %v5629
  %5776 = vmatprep.subr.bf16.mxu0 %v5626
  %5777 = vmatpush1.bf16.msra.mxu0 %v5625
  %5778 = vmatprep.subr.bf16.mxu0 %v5622
  %5779 = vmatpush1.bf16.msra.mxu0 %v5621
  %5780 = vmatprep.subr.bf16.mxu0 %v5618
  %5781 = vmatpush1.bf16.msra.mxu0 %v5617
  %5782 = vmatprep.subr.bf16.mxu0 %v5614
  %5783 = vmatpush1.bf16.msra.mxu0 %v5613
  %5784 = vmatprep.subr.bf16.mxu0 %v5610
  %5785 = vmatpush1.bf16.msra.mxu0 %v5609
  %5786 = vmatprep.subr.bf16.mxu0 %v5606
  %5787 = vmatpush1.bf16.msra.mxu0 %v5605
  %5788 = vmatprep.subr.bf16.mxu0 %v5666
  %5789 = vmatpush2.bf16.msra.mxu0 %v5665
  %5790 = vmatprep.subr.bf16.mxu0 %v5662
  %5791 = vmatpush2.bf16.msra.mxu0 %v5661
  %5792 = vmatprep.subr.bf16.mxu0 %v5658
  %5793 = vmatpush2.bf16.msra.mxu0 %v5657
  %5794 = vmatprep.subr.bf16.mxu0 %v5654
  %5795 = vmatpush2.bf16.msra.mxu0 %v5653
  %5796 = vmatprep.subr.bf16.mxu0 %v5650
  %5797 = vmatpush2.bf16.msra.mxu0 %v5649
  %5798 = vmatprep.subr.bf16.mxu0 %v5646
  %5799 = vmatpush2.bf16.msra.mxu0 %v5645
  %5800 = vmatprep.subr.bf16.mxu0 %v5642
  %5801 = vmatpush2.bf16.msra.mxu0 %v5641
  %5802 = vmatprep.subr.bf16.mxu0 %v5638
  %5803 = vmatpush2.bf16.msra.mxu0 %v5637
  %5804 = vmatprep.mubr.bf16.mxu0 %v5346
  %5805 = vmatmul.mubr.bf16.gmra.mxu0 %v5345
  %v5806 = vpop.f32.mrf.mxu0
  %v5807 = vadd.f32 %v5343, %v5806
  %v5808 = vpop.f32.mrf.mxu0
  %v5809 = vadd.f32 %v5344, %v5808
  %v5810 = vpop.f32.mrf.mxu0
  %v5811 = vpop.f32.mrf.mxu0
  %5812 = vdwg.mxu0
  %v5813 = vxor.u32 %v5766, 2147483648
  %v5814 = vmul.f32 %v5813, 1.442695
  %v5815 = vpow.pop %v5814
  %v5816 = vadd.f32 %v5815, 1.0
  %v5817 = vrcp.pop %v5816
  %v5818 = vmul.f32 1.0, %v5817
  %v5819 = vxor.u32 %v5768, 2147483648
  %v5820 = vmul.f32 %v5819, 1.442695
  %v5821 = vpow.pop %v5820
  %v5822 = vadd.f32 %v5821, 1.0
  %v5823 = vrcp.pop %v5822
  %v5824 = vmul.f32 1.0, %v5823
  %v5825 = vtanh.pop %v5807
  %v5826 = vxor.u32 %v5809, 2147483648
  %v5827 = vmul.f32 %v5826, 1.442695
  %v5828 = vpow.pop %v5827
  %v5829 = vadd.f32 %v5828, 1.0
  %v5830 = vrcp.pop %v5829
  %v5831 = vmul.f32 1.0, %v5830
  %v5832 = vmul.f32 %v5824, %v5323
  %v5833 = vmul.f32 %v5818, %v5825
  %v5834 = vadd.f32 %v5832, %v5833
  %v5835 = vtanh.pop %v5834
  %v5836 = vmul.f32 %v5831, %v5835
  %v5837 = vmul.f32 %v5836, %v78
  %v5838 = vmul.f32 %v5836, %v83
  %v5840 = vrot.slane %v5836, 6
  %5842 = vst [vmem:[#allocation4] sm:$0xc] %v5840
  %5843 = vst [vmem:[#allocation4 + $0x18] sm:$0x30] %v5840
  %v5844 = vld [vmem:[#allocation2 + $0x40] sm:$0xff]
  %v5845 = vld [vmem:[#allocation2 + $0x48] sm:$0xff]
  %v5846 = vld [vmem:[#allocation2 + $0x50] sm:$0xff]
  %v5847 = vld [vmem:[#allocation2 + $0x58] sm:$0xff]
  %v5848 = vld [vmem:[%s5] sm:$0xff]
  %v5849 = vld [vmem:[%s5 + $0x8] sm:$0xff]
  %v5850 = vld [vmem:[%s5 + $0x10] sm:$0xff]
  %v5851 = vld [vmem:[%s5 + $0x18] sm:$0xff]
  %v5852 = vadd.f32 %v5844, %v5848
  %v5853 = vadd.f32 %v5845, %v5849
  %v5854 = vadd.f32 %v5846, %v5850
  %v5855 = vadd.f32 %v5847, %v5851
  %v5856 = vpack.c.bf16 %v5837, %v5837
  %v5857 = vpack.c.bf16 %v5838, %v5838
  %v5858 = vld [vmem:[%s6] sm:$0xff]
  %v5859 = vld [vmem:[%s6 + $0x8] sm:$0xff]
  %v5860 = vld [vmem:[%s6 + $0x10] sm:$0xff]
  %v5861 = vld [vmem:[%s6 + $0x18] sm:$0xff]
  %v5862 = vld [vmem:[%s6 + $0x20] sm:$0xff]
  %v5863 = vld [vmem:[%s6 + $0x28] sm:$0xff]
  %v5864 = vld [vmem:[%s6 + $0x30] sm:$0xff]
  %v5865 = vld [vmem:[%s6 + $0x38] sm:$0xff]
  %v5866 = vld [vmem:[%s6 + $0x40] sm:$0xff]
  %v5867 = vld [vmem:[%s6 + $0x48] sm:$0xff]
  %v5868 = vld [vmem:[%s6 + $0x50] sm:$0xff]
  %v5869 = vld [vmem:[%s6 + $0x58] sm:$0xff]
  %v5870 = vld [vmem:[%s6 + $0x60] sm:$0xff]
  %v5871 = vld [vmem:[%s6 + $0x68] sm:$0xff]
  %v5872 = vld [vmem:[%s6 + $0x70] sm:$0xff]
  %v5873 = vld [vmem:[%s6 + $0x78] sm:$0xff]
  %v5874 = vld [vmem:[%s6 + $0x80] sm:$0xff]
  %v5875 = vld [vmem:[%s6 + $0x88] sm:$0xff]
  %v5876 = vld [vmem:[%s6 + $0x90] sm:$0xff]
  %v5877 = vld [vmem:[%s6 + $0x98] sm:$0xff]
  %v5878 = vld [vmem:[%s6 + $0xa0] sm:$0xff]
  %v5879 = vld [vmem:[%s6 + $0xa8] sm:$0xff]
  %v5880 = vld [vmem:[%s6 + $0xb0] sm:$0xff]
  %v5881 = vld [vmem:[%s6 + $0xb8] sm:$0xff]
  %v5882 = vld [vmem:[%s6 + $0xc0] sm:$0xff]
  %v5883 = vld [vmem:[%s6 + $0xc8] sm:$0xff]
  %v5884 = vld [vmem:[%s6 + $0xd0] sm:$0xff]
  %v5885 = vld [vmem:[%s6 + $0xd8] sm:$0xff]
  %v5886 = vld [vmem:[%s6 + $0xe0] sm:$0xff]
  %v5887 = vld [vmem:[%s6 + $0xe8] sm:$0xff]
  %v5888 = vld [vmem:[%s6 + $0xf0] sm:$0xff]
  %v5889 = vld [vmem:[%s6 + $0xf8] sm:$0xff]
  %v5890 = vld [vmem:[%s6 + $0x100] sm:$0xff]
  %v5891 = vld [vmem:[%s6 + $0x108] sm:$0xff]
  %v5892 = vld [vmem:[%s6 + $0x110] sm:$0xff]
  %v5893 = vld [vmem:[%s6 + $0x118] sm:$0xff]
  %v5894 = vld [vmem:[%s6 + $0x120] sm:$0xff]
  %v5895 = vld [vmem:[%s6 + $0x128] sm:$0xff]
  %v5896 = vld [vmem:[%s6 + $0x130] sm:$0xff]
  %v5897 = vld [vmem:[%s6 + $0x138] sm:$0xff]
  %v5898 = vld [vmem:[%s6 + $0x140] sm:$0xff]
  %v5899 = vld [vmem:[%s6 + $0x148] sm:$0xff]
  %v5900 = vld [vmem:[%s6 + $0x150] sm:$0xff]
  %v5901 = vld [vmem:[%s6 + $0x158] sm:$0xff]
  %v5902 = vld [vmem:[%s6 + $0x160] sm:$0xff]
  %v5903 = vld [vmem:[%s6 + $0x168] sm:$0xff]
  %v5904 = vld [vmem:[%s6 + $0x170] sm:$0xff]
  %v5905 = vld [vmem:[%s6 + $0x178] sm:$0xff]
  %v5906 = vld [vmem:[%s6 + $0x180] sm:$0xff]
  %v5907 = vld [vmem:[%s6 + $0x188] sm:$0xff]
  %v5908 = vld [vmem:[%s6 + $0x190] sm:$0xff]
  %v5909 = vld [vmem:[%s6 + $0x198] sm:$0xff]
  %v5910 = vld [vmem:[%s6 + $0x1a0] sm:$0xff]
  %v5911 = vld [vmem:[%s6 + $0x1a8] sm:$0xff]
  %v5912 = vld [vmem:[%s6 + $0x1b0] sm:$0xff]
  %v5913 = vld [vmem:[%s6 + $0x1b8] sm:$0xff]
  %v5914 = vld [vmem:[%s6 + $0x1c0] sm:$0xff]
  %v5915 = vld [vmem:[%s6 + $0x1c8] sm:$0xff]
  %v5916 = vld [vmem:[%s6 + $0x1d0] sm:$0xff]
  %v5917 = vld [vmem:[%s6 + $0x1d8] sm:$0xff]
  %v5918 = vld [vmem:[%s6 + $0x1e0] sm:$0xff]
  %v5919 = vld [vmem:[%s6 + $0x1e8] sm:$0xff]
  %v5920 = vld [vmem:[%s6 + $0x1f0] sm:$0xff]
  %v5921 = vld [vmem:[%s6 + $0x1f8] sm:$0xff]
  %v5986 = vunpack.c.l.b16 %v5858
  %v5987 = vunpack.c.h.b16 %v5858
  %v5988 = vunpack.c.l.b16 %v5859
  %v5989 = vunpack.c.h.b16 %v5859
  %v5990 = vunpack.c.l.b16 %v5860
  %v5991 = vunpack.c.h.b16 %v5860
  %v5992 = vunpack.c.l.b16 %v5861
  %v5993 = vunpack.c.h.b16 %v5861
  %v5994 = vunpack.c.l.b16 %v5862
  %v5995 = vunpack.c.h.b16 %v5862
  %v5996 = vunpack.c.l.b16 %v5863
  %v5997 = vunpack.c.h.b16 %v5863
  %v5998 = vunpack.c.l.b16 %v5864
  %v5999 = vunpack.c.h.b16 %v5864
  %v6000 = vunpack.c.l.b16 %v5865
  %v6001 = vunpack.c.h.b16 %v5865
  %v6002 = vunpack.c.l.b16 %v5866
  %v6003 = vunpack.c.h.b16 %v5866
  %v6004 = vunpack.c.l.b16 %v5867
  %v6005 = vunpack.c.h.b16 %v5867
  %v6006 = vunpack.c.l.b16 %v5868
  %v6007 = vunpack.c.h.b16 %v5868
  %v6008 = vunpack.c.l.b16 %v5869
  %v6009 = vunpack.c.h.b16 %v5869
  %v6010 = vunpack.c.l.b16 %v5870
  %v6011 = vunpack.c.h.b16 %v5870
  %v6012 = vunpack.c.l.b16 %v5871
  %v6013 = vunpack.c.h.b16 %v5871
  %v6014 = vunpack.c.l.b16 %v5872
  %v6015 = vunpack.c.h.b16 %v5872
  %v6016 = vunpack.c.l.b16 %v5873
  %v6017 = vunpack.c.h.b16 %v5873
  %v6018 = vunpack.c.l.b16 %v5874
  %v6019 = vunpack.c.h.b16 %v5874
  %v6020 = vunpack.c.l.b16 %v5875
  %v6021 = vunpack.c.h.b16 %v5875
  %v6022 = vunpack.c.l.b16 %v5876
  %v6023 = vunpack.c.h.b16 %v5876
  %v6024 = vunpack.c.l.b16 %v5877
  %v6025 = vunpack.c.h.b16 %v5877
  %v6026 = vunpack.c.l.b16 %v5878
  %v6027 = vunpack.c.h.b16 %v5878
  %v6028 = vunpack.c.l.b16 %v5879
  %v6029 = vunpack.c.h.b16 %v5879
  %v6030 = vunpack.c.l.b16 %v5880
  %v6031 = vunpack.c.h.b16 %v5880
  %v6032 = vunpack.c.l.b16 %v5881
  %v6033 = vunpack.c.h.b16 %v5881
  %v6034 = vunpack.c.l.b16 %v5882
  %v6035 = vunpack.c.h.b16 %v5882
  %v6036 = vunpack.c.l.b16 %v5883
  %v6037 = vunpack.c.h.b16 %v5883
  %v6038 = vunpack.c.l.b16 %v5884
  %v6039 = vunpack.c.h.b16 %v5884
  %v6040 = vunpack.c.l.b16 %v5885
  %v6041 = vunpack.c.h.b16 %v5885
  %v6042 = vunpack.c.l.b16 %v5886
  %v6043 = vunpack.c.h.b16 %v5886
  %v6044 = vunpack.c.l.b16 %v5887
  %v6045 = vunpack.c.h.b16 %v5887
  %v6046 = vunpack.c.l.b16 %v5888
  %v6047 = vunpack.c.h.b16 %v5888
  %v6048 = vunpack.c.l.b16 %v5889
  %v6049 = vunpack.c.h.b16 %v5889
  %v6050 = vunpack.c.l.b16 %v5890
  %v6051 = vunpack.c.h.b16 %v5890
  %v6052 = vunpack.c.l.b16 %v5891
  %v6053 = vunpack.c.h.b16 %v5891
  %v6054 = vunpack.c.l.b16 %v5892
  %v6055 = vunpack.c.h.b16 %v5892
  %v6056 = vunpack.c.l.b16 %v5893
  %v6057 = vunpack.c.h.b16 %v5893
  %v6058 = vunpack.c.l.b16 %v5894
  %v6059 = vunpack.c.h.b16 %v5894
  %v6060 = vunpack.c.l.b16 %v5895
  %v6061 = vunpack.c.h.b16 %v5895
  %v6062 = vunpack.c.l.b16 %v5896
  %v6063 = vunpack.c.h.b16 %v5896
  %v6064 = vunpack.c.l.b16 %v5897
  %v6065 = vunpack.c.h.b16 %v5897
  %v6066 = vunpack.c.l.b16 %v5898
  %v6067 = vunpack.c.h.b16 %v5898
  %v6068 = vunpack.c.l.b16 %v5899
  %v6069 = vunpack.c.h.b16 %v5899
  %v6070 = vunpack.c.l.b16 %v5900
  %v6071 = vunpack.c.h.b16 %v5900
  %v6072 = vunpack.c.l.b16 %v5901
  %v6073 = vunpack.c.h.b16 %v5901
  %v6074 = vunpack.c.l.b16 %v5902
  %v6075 = vunpack.c.h.b16 %v5902
  %v6076 = vunpack.c.l.b16 %v5903
  %v6077 = vunpack.c.h.b16 %v5903
  %v6078 = vunpack.c.l.b16 %v5904
  %v6079 = vunpack.c.h.b16 %v5904
  %v6080 = vunpack.c.l.b16 %v5905
  %v6081 = vunpack.c.h.b16 %v5905
  %v6082 = vunpack.c.l.b16 %v5906
  %v6083 = vunpack.c.h.b16 %v5906
  %v6084 = vunpack.c.l.b16 %v5907
  %v6085 = vunpack.c.h.b16 %v5907
  %v6086 = vunpack.c.l.b16 %v5908
  %v6087 = vunpack.c.h.b16 %v5908
  %v6088 = vunpack.c.l.b16 %v5909
  %v6089 = vunpack.c.h.b16 %v5909
  %v6090 = vunpack.c.l.b16 %v5910
  %v6091 = vunpack.c.h.b16 %v5910
  %v6092 = vunpack.c.l.b16 %v5911
  %v6093 = vunpack.c.h.b16 %v5911
  %v6094 = vunpack.c.l.b16 %v5912
  %v6095 = vunpack.c.h.b16 %v5912
  %v6096 = vunpack.c.l.b16 %v5913
  %v6097 = vunpack.c.h.b16 %v5913
  %v6098 = vunpack.c.l.b16 %v5914
  %v6099 = vunpack.c.h.b16 %v5914
  %v6100 = vunpack.c.l.b16 %v5915
  %v6101 = vunpack.c.h.b16 %v5915
  %v6102 = vunpack.c.l.b16 %v5916
  %v6103 = vunpack.c.h.b16 %v5916
  %v6104 = vunpack.c.l.b16 %v5917
  %v6105 = vunpack.c.h.b16 %v5917
  %v6106 = vunpack.c.l.b16 %v5918
  %v6107 = vunpack.c.h.b16 %v5918
  %v6108 = vunpack.c.l.b16 %v5919
  %v6109 = vunpack.c.h.b16 %v5919
  %v6110 = vunpack.c.l.b16 %v5920
  %v6111 = vunpack.c.h.b16 %v5920
  %v6112 = vunpack.c.l.b16 %v5921
  %v6113 = vunpack.c.h.b16 %v5921
  %v6114 = vpack.c.b16 %v5990, %v5986
  %v6115 = vpack.c.b16 %v5991, %v5987
  %v6116 = vpack.c.b16 %v5992, %v5988
  %v6117 = vpack.c.b16 %v5993, %v5989
  %v6118 = vpack.c.b16 %v5998, %v5994
  %v6119 = vpack.c.b16 %v5999, %v5995
  %v6120 = vpack.c.b16 %v6000, %v5996
  %v6121 = vpack.c.b16 %v6001, %v5997
  %v6122 = vpack.c.b16 %v6006, %v6002
  %v6123 = vpack.c.b16 %v6007, %v6003
  %v6124 = vpack.c.b16 %v6008, %v6004
  %v6125 = vpack.c.b16 %v6009, %v6005
  %v6126 = vpack.c.b16 %v6014, %v6010
  %v6127 = vpack.c.b16 %v6015, %v6011
  %v6128 = vpack.c.b16 %v6016, %v6012
  %v6129 = vpack.c.b16 %v6017, %v6013
  %v6130 = vpack.c.b16 %v6022, %v6018
  %v6131 = vpack.c.b16 %v6023, %v6019
  %v6132 = vpack.c.b16 %v6024, %v6020
  %v6133 = vpack.c.b16 %v6025, %v6021
  %v6134 = vpack.c.b16 %v6030, %v6026
  %v6135 = vpack.c.b16 %v6031, %v6027
  %v6136 = vpack.c.b16 %v6032, %v6028
  %v6137 = vpack.c.b16 %v6033, %v6029
  %v6138 = vpack.c.b16 %v6038, %v6034
  %v6139 = vpack.c.b16 %v6039, %v6035
  %v6140 = vpack.c.b16 %v6040, %v6036
  %v6141 = vpack.c.b16 %v6041, %v6037
  %v6142 = vpack.c.b16 %v6046, %v6042
  %v6143 = vpack.c.b16 %v6047, %v6043
  %v6144 = vpack.c.b16 %v6048, %v6044
  %v6145 = vpack.c.b16 %v6049, %v6045
  %v6146 = vpack.c.b16 %v6054, %v6050
  %v6147 = vpack.c.b16 %v6055, %v6051
  %v6148 = vpack.c.b16 %v6056, %v6052
  %v6149 = vpack.c.b16 %v6057, %v6053
  %v6150 = vpack.c.b16 %v6062, %v6058
  %v6151 = vpack.c.b16 %v6063, %v6059
  %v6152 = vpack.c.b16 %v6064, %v6060
  %v6153 = vpack.c.b16 %v6065, %v6061
  %v6154 = vpack.c.b16 %v6070, %v6066
  %v6155 = vpack.c.b16 %v6071, %v6067
  %v6156 = vpack.c.b16 %v6072, %v6068
  %v6157 = vpack.c.b16 %v6073, %v6069
  %v6158 = vpack.c.b16 %v6078, %v6074
  %v6159 = vpack.c.b16 %v6079, %v6075
  %v6160 = vpack.c.b16 %v6080, %v6076
  %v6161 = vpack.c.b16 %v6081, %v6077
  %v6162 = vpack.c.b16 %v6086, %v6082
  %v6163 = vpack.c.b16 %v6087, %v6083
  %v6164 = vpack.c.b16 %v6088, %v6084
  %v6165 = vpack.c.b16 %v6089, %v6085
  %v6166 = vpack.c.b16 %v6094, %v6090
  %v6167 = vpack.c.b16 %v6095, %v6091
  %v6168 = vpack.c.b16 %v6096, %v6092
  %v6169 = vpack.c.b16 %v6097, %v6093
  %v6170 = vpack.c.b16 %v6102, %v6098
  %v6171 = vpack.c.b16 %v6103, %v6099
  %v6172 = vpack.c.b16 %v6104, %v6100
  %v6173 = vpack.c.b16 %v6105, %v6101
  %v6174 = vpack.c.b16 %v6110, %v6106
  %v6175 = vpack.c.b16 %v6111, %v6107
  %v6176 = vpack.c.b16 %v6112, %v6108
  %v6177 = vpack.c.b16 %v6113, %v6109
  %6242 = vmatprep.subr.bf16.mxu0 %v6143
  %6243 = vmatpush1.bf16.msra.mxu0 %v6142
  %6244 = vmatprep.subr.bf16.mxu0 %v6139
  %6245 = vmatpush1.bf16.msra.mxu0 %v6138
  %6246 = vmatprep.subr.bf16.mxu0 %v6135
  %6247 = vmatpush1.bf16.msra.mxu0 %v6134
  %6248 = vmatprep.subr.bf16.mxu0 %v6131
  %6249 = vmatpush1.bf16.msra.mxu0 %v6130
  %6250 = vmatprep.subr.bf16.mxu0 %v6127
  %6251 = vmatpush1.bf16.msra.mxu0 %v6126
  %6252 = vmatprep.subr.bf16.mxu0 %v6123
  %6253 = vmatpush1.bf16.msra.mxu0 %v6122
  %6254 = vmatprep.subr.bf16.mxu0 %v6119
  %6255 = vmatpush1.bf16.msra.mxu0 %v6118
  %6256 = vmatprep.subr.bf16.mxu0 %v6115
  %6257 = vmatpush1.bf16.msra.mxu0 %v6114
  %6258 = vmatprep.subr.bf16.mxu0 %v6175
  %6259 = vmatpush2.bf16.msra.mxu0 %v6174
  %6260 = vmatprep.subr.bf16.mxu0 %v6171
  %6261 = vmatpush2.bf16.msra.mxu0 %v6170
  %6262 = vmatprep.subr.bf16.mxu0 %v6167
  %6263 = vmatpush2.bf16.msra.mxu0 %v6166
  %6264 = vmatprep.subr.bf16.mxu0 %v6163
  %6265 = vmatpush2.bf16.msra.mxu0 %v6162
  %6266 = vmatprep.subr.bf16.mxu0 %v6159
  %6267 = vmatpush2.bf16.msra.mxu0 %v6158
  %6268 = vmatprep.subr.bf16.mxu0 %v6155
  %6269 = vmatpush2.bf16.msra.mxu0 %v6154
  %6270 = vmatprep.subr.bf16.mxu0 %v6151
  %6271 = vmatpush2.bf16.msra.mxu0 %v6150
  %6272 = vmatprep.subr.bf16.mxu0 %v6147
  %6273 = vmatpush2.bf16.msra.mxu0 %v6146
  %6274 = vmatprep.mubr.bf16.mxu0 %v5857
  %6275 = vmatmul.mubr.bf16.gmra.mxu0 %v5856
  %v6276 = vpop.f32.mrf.mxu0
  %v6277 = vadd.f32 %v5852, %v6276
  %v6278 = vpop.f32.mrf.mxu0
  %v6279 = vadd.f32 %v5853, %v6278
  %v6280 = vpop.f32.mrf.mxu0
  %v6281 = vpop.f32.mrf.mxu0
  %6282 = vdwg.mxu0
  %6283 = vmatprep.subr.bf16.mxu0 %v6145
  %6284 = vmatpush1.bf16.msra.mxu0 %v6144
  %6285 = vmatprep.subr.bf16.mxu0 %v6141
  %6286 = vmatpush1.bf16.msra.mxu0 %v6140
  %6287 = vmatprep.subr.bf16.mxu0 %v6137
  %6288 = vmatpush1.bf16.msra.mxu0 %v6136
  %6289 = vmatprep.subr.bf16.mxu0 %v6133
  %6290 = vmatpush1.bf16.msra.mxu0 %v6132
  %6291 = vmatprep.subr.bf16.mxu0 %v6129
  %6292 = vmatpush1.bf16.msra.mxu0 %v6128
  %6293 = vmatprep.subr.bf16.mxu0 %v6125
  %6294 = vmatpush1.bf16.msra.mxu0 %v6124
  %6295 = vmatprep.subr.bf16.mxu0 %v6121
  %6296 = vmatpush1.bf16.msra.mxu0 %v6120
  %6297 = vmatprep.subr.bf16.mxu0 %v6117
  %6298 = vmatpush1.bf16.msra.mxu0 %v6116
  %6299 = vmatprep.subr.bf16.mxu0 %v6177
  %6300 = vmatpush2.bf16.msra.mxu0 %v6176
  %6301 = vmatprep.subr.bf16.mxu0 %v6173
  %6302 = vmatpush2.bf16.msra.mxu0 %v6172
  %6303 = vmatprep.subr.bf16.mxu0 %v6169
  %6304 = vmatpush2.bf16.msra.mxu0 %v6168
  %6305 = vmatprep.subr.bf16.mxu0 %v6165
  %6306 = vmatpush2.bf16.msra.mxu0 %v6164
  %6307 = vmatprep.subr.bf16.mxu0 %v6161
  %6308 = vmatpush2.bf16.msra.mxu0 %v6160
  %6309 = vmatprep.subr.bf16.mxu0 %v6157
  %6310 = vmatpush2.bf16.msra.mxu0 %v6156
  %6311 = vmatprep.subr.bf16.mxu0 %v6153
  %6312 = vmatpush2.bf16.msra.mxu0 %v6152
  %6313 = vmatprep.subr.bf16.mxu0 %v6149
  %6314 = vmatpush2.bf16.msra.mxu0 %v6148
  %6315 = vmatprep.mubr.bf16.mxu0 %v5857
  %6316 = vmatmul.mubr.bf16.gmra.mxu0 %v5856
  %v6317 = vpop.f32.mrf.mxu0
  %v6318 = vadd.f32 %v5854, %v6317
  %v6319 = vpop.f32.mrf.mxu0
  %v6320 = vadd.f32 %v5855, %v6319
  %v6321 = vpop.f32.mrf.mxu0
  %v6322 = vpop.f32.mrf.mxu0
  %6323 = vdwg.mxu0
  %v6324 = vxor.u32 %v6277, 2147483648
  %v6325 = vmul.f32 %v6324, 1.442695
  %v6326 = vpow.pop %v6325
  %v6327 = vadd.f32 %v6326, 1.0
  %v6328 = vrcp.pop %v6327
  %v6329 = vmul.f32 1.0, %v6328
  %v6330 = vxor.u32 %v6279, 2147483648
  %v6331 = vmul.f32 %v6330, 1.442695
  %v6332 = vpow.pop %v6331
  %v6333 = vadd.f32 %v6332, 1.0
  %v6334 = vrcp.pop %v6333
  %v6335 = vmul.f32 1.0, %v6334
  %v6336 = vtanh.pop %v6318
  %v6337 = vxor.u32 %v6320, 2147483648
  %v6338 = vmul.f32 %v6337, 1.442695
  %v6339 = vpow.pop %v6338
  %v6340 = vadd.f32 %v6339, 1.0
  %v6341 = vrcp.pop %v6340
  %v6342 = vmul.f32 1.0, %v6341
  %v6343 = vmul.f32 %v6335, %v5834
  %v6344 = vmul.f32 %v6329, %v6336
  %v6345 = vadd.f32 %v6343, %v6344
  %v6346 = vtanh.pop %v6345
  %v6347 = vmul.f32 %v6342, %v6346
  %v6348 = vmul.f32 %v6347, %v78
  %v6349 = vmul.f32 %v6347, %v83
  %v6351 = vrot.slane %v6347, 4
  %6353 = vst [vmem:[#allocation4] sm:$0x30] %v6351
  %6354 = vst [vmem:[#allocation4 + $0x18] sm:$0xc] %v6347
  %v6355 = vld [vmem:[#allocation2 + $0x60] sm:$0xff]
  %v6356 = vld [vmem:[#allocation2 + $0x68] sm:$0xff]
  %v6357 = vld [vmem:[#allocation2 + $0x70] sm:$0xff]
  %v6358 = vld [vmem:[#allocation2 + $0x78] sm:$0xff]
  %v6359 = vld [vmem:[%s5] sm:$0xff]
  %v6360 = vld [vmem:[%s5 + $0x8] sm:$0xff]
  %v6361 = vld [vmem:[%s5 + $0x10] sm:$0xff]
  %v6362 = vld [vmem:[%s5 + $0x18] sm:$0xff]
  %v6363 = vadd.f32 %v6355, %v6359
  %v6364 = vadd.f32 %v6356, %v6360
  %v6365 = vadd.f32 %v6357, %v6361
  %v6366 = vadd.f32 %v6358, %v6362
  %v6367 = vpack.c.bf16 %v6348, %v6348
  %v6368 = vpack.c.bf16 %v6349, %v6349
  %v6369 = vld [vmem:[%s6] sm:$0xff]
  %v6370 = vld [vmem:[%s6 + $0x8] sm:$0xff]
  %v6371 = vld [vmem:[%s6 + $0x10] sm:$0xff]
  %v6372 = vld [vmem:[%s6 + $0x18] sm:$0xff]
  %v6373 = vld [vmem:[%s6 + $0x20] sm:$0xff]
  %v6374 = vld [vmem:[%s6 + $0x28] sm:$0xff]
  %v6375 = vld [vmem:[%s6 + $0x30] sm:$0xff]
  %v6376 = vld [vmem:[%s6 + $0x38] sm:$0xff]
  %v6377 = vld [vmem:[%s6 + $0x40] sm:$0xff]
  %v6378 = vld [vmem:[%s6 + $0x48] sm:$0xff]
  %v6379 = vld [vmem:[%s6 + $0x50] sm:$0xff]
  %v6380 = vld [vmem:[%s6 + $0x58] sm:$0xff]
  %v6381 = vld [vmem:[%s6 + $0x60] sm:$0xff]
  %v6382 = vld [vmem:[%s6 + $0x68] sm:$0xff]
  %v6383 = vld [vmem:[%s6 + $0x70] sm:$0xff]
  %v6384 = vld [vmem:[%s6 + $0x78] sm:$0xff]
  %v6385 = vld [vmem:[%s6 + $0x80] sm:$0xff]
  %v6386 = vld [vmem:[%s6 + $0x88] sm:$0xff]
  %v6387 = vld [vmem:[%s6 + $0x90] sm:$0xff]
  %v6388 = vld [vmem:[%s6 + $0x98] sm:$0xff]
  %v6389 = vld [vmem:[%s6 + $0xa0] sm:$0xff]
  %v6390 = vld [vmem:[%s6 + $0xa8] sm:$0xff]
  %v6391 = vld [vmem:[%s6 + $0xb0] sm:$0xff]
  %v6392 = vld [vmem:[%s6 + $0xb8] sm:$0xff]
  %v6393 = vld [vmem:[%s6 + $0xc0] sm:$0xff]
  %v6394 = vld [vmem:[%s6 + $0xc8] sm:$0xff]
  %v6395 = vld [vmem:[%s6 + $0xd0] sm:$0xff]
  %v6396 = vld [vmem:[%s6 + $0xd8] sm:$0xff]
  %v6397 = vld [vmem:[%s6 + $0xe0] sm:$0xff]
  %v6398 = vld [vmem:[%s6 + $0xe8] sm:$0xff]
  %v6399 = vld [vmem:[%s6 + $0xf0] sm:$0xff]
  %v6400 = vld [vmem:[%s6 + $0xf8] sm:$0xff]
  %v6401 = vld [vmem:[%s6 + $0x100] sm:$0xff]
  %v6402 = vld [vmem:[%s6 + $0x108] sm:$0xff]
  %v6403 = vld [vmem:[%s6 + $0x110] sm:$0xff]
  %v6404 = vld [vmem:[%s6 + $0x118] sm:$0xff]
  %v6405 = vld [vmem:[%s6 + $0x120] sm:$0xff]
  %v6406 = vld [vmem:[%s6 + $0x128] sm:$0xff]
  %v6407 = vld [vmem:[%s6 + $0x130] sm:$0xff]
  %v6408 = vld [vmem:[%s6 + $0x138] sm:$0xff]
  %v6409 = vld [vmem:[%s6 + $0x140] sm:$0xff]
  %v6410 = vld [vmem:[%s6 + $0x148] sm:$0xff]
  %v6411 = vld [vmem:[%s6 + $0x150] sm:$0xff]
  %v6412 = vld [vmem:[%s6 + $0x158] sm:$0xff]
  %v6413 = vld [vmem:[%s6 + $0x160] sm:$0xff]
  %v6414 = vld [vmem:[%s6 + $0x168] sm:$0xff]
  %v6415 = vld [vmem:[%s6 + $0x170] sm:$0xff]
  %v6416 = vld [vmem:[%s6 + $0x178] sm:$0xff]
  %v6417 = vld [vmem:[%s6 + $0x180] sm:$0xff]
  %v6418 = vld [vmem:[%s6 + $0x188] sm:$0xff]
  %v6419 = vld [vmem:[%s6 + $0x190] sm:$0xff]
  %v6420 = vld [vmem:[%s6 + $0x198] sm:$0xff]
  %v6421 = vld [vmem:[%s6 + $0x1a0] sm:$0xff]
  %v6422 = vld [vmem:[%s6 + $0x1a8] sm:$0xff]
  %v6423 = vld [vmem:[%s6 + $0x1b0] sm:$0xff]
  %v6424 = vld [vmem:[%s6 + $0x1b8] sm:$0xff]
  %v6425 = vld [vmem:[%s6 + $0x1c0] sm:$0xff]
  %v6426 = vld [vmem:[%s6 + $0x1c8] sm:$0xff]
  %v6427 = vld [vmem:[%s6 + $0x1d0] sm:$0xff]
  %v6428 = vld [vmem:[%s6 + $0x1d8] sm:$0xff]
  %v6429 = vld [vmem:[%s6 + $0x1e0] sm:$0xff]
  %v6430 = vld [vmem:[%s6 + $0x1e8] sm:$0xff]
  %v6431 = vld [vmem:[%s6 + $0x1f0] sm:$0xff]
  %v6432 = vld [vmem:[%s6 + $0x1f8] sm:$0xff]
  %v6497 = vunpack.c.l.b16 %v6369
  %v6498 = vunpack.c.h.b16 %v6369
  %v6499 = vunpack.c.l.b16 %v6370
  %v6500 = vunpack.c.h.b16 %v6370
  %v6501 = vunpack.c.l.b16 %v6371
  %v6502 = vunpack.c.h.b16 %v6371
  %v6503 = vunpack.c.l.b16 %v6372
  %v6504 = vunpack.c.h.b16 %v6372
  %v6505 = vunpack.c.l.b16 %v6373
  %v6506 = vunpack.c.h.b16 %v6373
  %v6507 = vunpack.c.l.b16 %v6374
  %v6508 = vunpack.c.h.b16 %v6374
  %v6509 = vunpack.c.l.b16 %v6375
  %v6510 = vunpack.c.h.b16 %v6375
  %v6511 = vunpack.c.l.b16 %v6376
  %v6512 = vunpack.c.h.b16 %v6376
  %v6513 = vunpack.c.l.b16 %v6377
  %v6514 = vunpack.c.h.b16 %v6377
  %v6515 = vunpack.c.l.b16 %v6378
  %v6516 = vunpack.c.h.b16 %v6378
  %v6517 = vunpack.c.l.b16 %v6379
  %v6518 = vunpack.c.h.b16 %v6379
  %v6519 = vunpack.c.l.b16 %v6380
  %v6520 = vunpack.c.h.b16 %v6380
  %v6521 = vunpack.c.l.b16 %v6381
  %v6522 = vunpack.c.h.b16 %v6381
  %v6523 = vunpack.c.l.b16 %v6382
  %v6524 = vunpack.c.h.b16 %v6382
  %v6525 = vunpack.c.l.b16 %v6383
  %v6526 = vunpack.c.h.b16 %v6383
  %v6527 = vunpack.c.l.b16 %v6384
  %v6528 = vunpack.c.h.b16 %v6384
  %v6529 = vunpack.c.l.b16 %v6385
  %v6530 = vunpack.c.h.b16 %v6385
  %v6531 = vunpack.c.l.b16 %v6386
  %v6532 = vunpack.c.h.b16 %v6386
  %v6533 = vunpack.c.l.b16 %v6387
  %v6534 = vunpack.c.h.b16 %v6387
  %v6535 = vunpack.c.l.b16 %v6388
  %v6536 = vunpack.c.h.b16 %v6388
  %v6537 = vunpack.c.l.b16 %v6389
  %v6538 = vunpack.c.h.b16 %v6389
  %v6539 = vunpack.c.l.b16 %v6390
  %v6540 = vunpack.c.h.b16 %v6390
  %v6541 = vunpack.c.l.b16 %v6391
  %v6542 = vunpack.c.h.b16 %v6391
  %v6543 = vunpack.c.l.b16 %v6392
  %v6544 = vunpack.c.h.b16 %v6392
  %v6545 = vunpack.c.l.b16 %v6393
  %v6546 = vunpack.c.h.b16 %v6393
  %v6547 = vunpack.c.l.b16 %v6394
  %v6548 = vunpack.c.h.b16 %v6394
  %v6549 = vunpack.c.l.b16 %v6395
  %v6550 = vunpack.c.h.b16 %v6395
  %v6551 = vunpack.c.l.b16 %v6396
  %v6552 = vunpack.c.h.b16 %v6396
  %v6553 = vunpack.c.l.b16 %v6397
  %v6554 = vunpack.c.h.b16 %v6397
  %v6555 = vunpack.c.l.b16 %v6398
  %v6556 = vunpack.c.h.b16 %v6398
  %v6557 = vunpack.c.l.b16 %v6399
  %v6558 = vunpack.c.h.b16 %v6399
  %v6559 = vunpack.c.l.b16 %v6400
  %v6560 = vunpack.c.h.b16 %v6400
  %v6561 = vunpack.c.l.b16 %v6401
  %v6562 = vunpack.c.h.b16 %v6401
  %v6563 = vunpack.c.l.b16 %v6402
  %v6564 = vunpack.c.h.b16 %v6402
  %v6565 = vunpack.c.l.b16 %v6403
  %v6566 = vunpack.c.h.b16 %v6403
  %v6567 = vunpack.c.l.b16 %v6404
  %v6568 = vunpack.c.h.b16 %v6404
  %v6569 = vunpack.c.l.b16 %v6405
  %v6570 = vunpack.c.h.b16 %v6405
  %v6571 = vunpack.c.l.b16 %v6406
  %v6572 = vunpack.c.h.b16 %v6406
  %v6573 = vunpack.c.l.b16 %v6407
  %v6574 = vunpack.c.h.b16 %v6407
  %v6575 = vunpack.c.l.b16 %v6408
  %v6576 = vunpack.c.h.b16 %v6408
  %v6577 = vunpack.c.l.b16 %v6409
  %v6578 = vunpack.c.h.b16 %v6409
  %v6579 = vunpack.c.l.b16 %v6410
  %v6580 = vunpack.c.h.b16 %v6410
  %v6581 = vunpack.c.l.b16 %v6411
  %v6582 = vunpack.c.h.b16 %v6411
  %v6583 = vunpack.c.l.b16 %v6412
  %v6584 = vunpack.c.h.b16 %v6412
  %v6585 = vunpack.c.l.b16 %v6413
  %v6586 = vunpack.c.h.b16 %v6413
  %v6587 = vunpack.c.l.b16 %v6414
  %v6588 = vunpack.c.h.b16 %v6414
  %v6589 = vunpack.c.l.b16 %v6415
  %v6590 = vunpack.c.h.b16 %v6415
  %v6591 = vunpack.c.l.b16 %v6416
  %v6592 = vunpack.c.h.b16 %v6416
  %v6593 = vunpack.c.l.b16 %v6417
  %v6594 = vunpack.c.h.b16 %v6417
  %v6595 = vunpack.c.l.b16 %v6418
  %v6596 = vunpack.c.h.b16 %v6418
  %v6597 = vunpack.c.l.b16 %v6419
  %v6598 = vunpack.c.h.b16 %v6419
  %v6599 = vunpack.c.l.b16 %v6420
  %v6600 = vunpack.c.h.b16 %v6420
  %v6601 = vunpack.c.l.b16 %v6421
  %v6602 = vunpack.c.h.b16 %v6421
  %v6603 = vunpack.c.l.b16 %v6422
  %v6604 = vunpack.c.h.b16 %v6422
  %v6605 = vunpack.c.l.b16 %v6423
  %v6606 = vunpack.c.h.b16 %v6423
  %v6607 = vunpack.c.l.b16 %v6424
  %v6608 = vunpack.c.h.b16 %v6424
  %v6609 = vunpack.c.l.b16 %v6425
  %v6610 = vunpack.c.h.b16 %v6425
  %v6611 = vunpack.c.l.b16 %v6426
  %v6612 = vunpack.c.h.b16 %v6426
  %v6613 = vunpack.c.l.b16 %v6427
  %v6614 = vunpack.c.h.b16 %v6427
  %v6615 = vunpack.c.l.b16 %v6428
  %v6616 = vunpack.c.h.b16 %v6428
  %v6617 = vunpack.c.l.b16 %v6429
  %v6618 = vunpack.c.h.b16 %v6429
  %v6619 = vunpack.c.l.b16 %v6430
  %v6620 = vunpack.c.h.b16 %v6430
  %v6621 = vunpack.c.l.b16 %v6431
  %v6622 = vunpack.c.h.b16 %v6431
  %v6623 = vunpack.c.l.b16 %v6432
  %v6624 = vunpack.c.h.b16 %v6432
  %v6625 = vpack.c.b16 %v6501, %v6497
  %v6626 = vpack.c.b16 %v6502, %v6498
  %v6627 = vpack.c.b16 %v6503, %v6499
  %v6628 = vpack.c.b16 %v6504, %v6500
  %v6629 = vpack.c.b16 %v6509, %v6505
  %v6630 = vpack.c.b16 %v6510, %v6506
  %v6631 = vpack.c.b16 %v6511, %v6507
  %v6632 = vpack.c.b16 %v6512, %v6508
  %v6633 = vpack.c.b16 %v6517, %v6513
  %v6634 = vpack.c.b16 %v6518, %v6514
  %v6635 = vpack.c.b16 %v6519, %v6515
  %v6636 = vpack.c.b16 %v6520, %v6516
  %v6637 = vpack.c.b16 %v6525, %v6521
  %v6638 = vpack.c.b16 %v6526, %v6522
  %v6639 = vpack.c.b16 %v6527, %v6523
  %v6640 = vpack.c.b16 %v6528, %v6524
  %v6641 = vpack.c.b16 %v6533, %v6529
  %v6642 = vpack.c.b16 %v6534, %v6530
  %v6643 = vpack.c.b16 %v6535, %v6531
  %v6644 = vpack.c.b16 %v6536, %v6532
  %v6645 = vpack.c.b16 %v6541, %v6537
  %v6646 = vpack.c.b16 %v6542, %v6538
  %v6647 = vpack.c.b16 %v6543, %v6539
  %v6648 = vpack.c.b16 %v6544, %v6540
  %v6649 = vpack.c.b16 %v6549, %v6545
  %v6650 = vpack.c.b16 %v6550, %v6546
  %v6651 = vpack.c.b16 %v6551, %v6547
  %v6652 = vpack.c.b16 %v6552, %v6548
  %v6653 = vpack.c.b16 %v6557, %v6553
  %v6654 = vpack.c.b16 %v6558, %v6554
  %v6655 = vpack.c.b16 %v6559, %v6555
  %v6656 = vpack.c.b16 %v6560, %v6556
  %v6657 = vpack.c.b16 %v6565, %v6561
  %v6658 = vpack.c.b16 %v6566, %v6562
  %v6659 = vpack.c.b16 %v6567, %v6563
  %v6660 = vpack.c.b16 %v6568, %v6564
  %v6661 = vpack.c.b16 %v6573, %v6569
  %v6662 = vpack.c.b16 %v6574, %v6570
  %v6663 = vpack.c.b16 %v6575, %v6571
  %v6664 = vpack.c.b16 %v6576, %v6572
  %v6665 = vpack.c.b16 %v6581, %v6577
  %v6666 = vpack.c.b16 %v6582, %v6578
  %v6667 = vpack.c.b16 %v6583, %v6579
  %v6668 = vpack.c.b16 %v6584, %v6580
  %v6669 = vpack.c.b16 %v6589, %v6585
  %v6670 = vpack.c.b16 %v6590, %v6586
  %v6671 = vpack.c.b16 %v6591, %v6587
  %v6672 = vpack.c.b16 %v6592, %v6588
  %v6673 = vpack.c.b16 %v6597, %v6593
  %v6674 = vpack.c.b16 %v6598, %v6594
  %v6675 = vpack.c.b16 %v6599, %v6595
  %v6676 = vpack.c.b16 %v6600, %v6596
  %v6677 = vpack.c.b16 %v6605, %v6601
  %v6678 = vpack.c.b16 %v6606, %v6602
  %v6679 = vpack.c.b16 %v6607, %v6603
  %v6680 = vpack.c.b16 %v6608, %v6604
  %v6681 = vpack.c.b16 %v6613, %v6609
  %v6682 = vpack.c.b16 %v6614, %v6610
  %v6683 = vpack.c.b16 %v6615, %v6611
  %v6684 = vpack.c.b16 %v6616, %v6612
  %v6685 = vpack.c.b16 %v6621, %v6617
  %v6686 = vpack.c.b16 %v6622, %v6618
  %v6687 = vpack.c.b16 %v6623, %v6619
  %v6688 = vpack.c.b16 %v6624, %v6620
  %6753 = vmatprep.subr.bf16.mxu0 %v6654
  %6754 = vmatpush1.bf16.msra.mxu0 %v6653
  %6755 = vmatprep.subr.bf16.mxu0 %v6650
  %6756 = vmatpush1.bf16.msra.mxu0 %v6649
  %6757 = vmatprep.subr.bf16.mxu0 %v6646
  %6758 = vmatpush1.bf16.msra.mxu0 %v6645
  %6759 = vmatprep.subr.bf16.mxu0 %v6642
  %6760 = vmatpush1.bf16.msra.mxu0 %v6641
  %6761 = vmatprep.subr.bf16.mxu0 %v6638
  %6762 = vmatpush1.bf16.msra.mxu0 %v6637
  %6763 = vmatprep.subr.bf16.mxu0 %v6634
  %6764 = vmatpush1.bf16.msra.mxu0 %v6633
  %6765 = vmatprep.subr.bf16.mxu0 %v6630
  %6766 = vmatpush1.bf16.msra.mxu0 %v6629
  %6767 = vmatprep.subr.bf16.mxu0 %v6626
  %6768 = vmatpush1.bf16.msra.mxu0 %v6625
  %6769 = vmatprep.subr.bf16.mxu0 %v6686
  %6770 = vmatpush2.bf16.msra.mxu0 %v6685
  %6771 = vmatprep.subr.bf16.mxu0 %v6682
  %6772 = vmatpush2.bf16.msra.mxu0 %v6681
  %6773 = vmatprep.subr.bf16.mxu0 %v6678
  %6774 = vmatpush2.bf16.msra.mxu0 %v6677
  %6775 = vmatprep.subr.bf16.mxu0 %v6674
  %6776 = vmatpush2.bf16.msra.mxu0 %v6673
  %6777 = vmatprep.subr.bf16.mxu0 %v6670
  %6778 = vmatpush2.bf16.msra.mxu0 %v6669
  %6779 = vmatprep.subr.bf16.mxu0 %v6666
  %6780 = vmatpush2.bf16.msra.mxu0 %v6665
  %6781 = vmatprep.subr.bf16.mxu0 %v6662
  %6782 = vmatpush2.bf16.msra.mxu0 %v6661
  %6783 = vmatprep.subr.bf16.mxu0 %v6658
  %6784 = vmatpush2.bf16.msra.mxu0 %v6657
  %6785 = vmatprep.mubr.bf16.mxu0 %v6368
  %6786 = vmatmul.mubr.bf16.gmra.mxu0 %v6367
  %v6787 = vpop.f32.mrf.mxu0
  %v6788 = vadd.f32 %v6363, %v6787
  %v6789 = vpop.f32.mrf.mxu0
  %v6790 = vadd.f32 %v6364, %v6789
  %v6791 = vpop.f32.mrf.mxu0
  %v6792 = vpop.f32.mrf.mxu0
  %6793 = vdwg.mxu0
  %6794 = vmatprep.subr.bf16.mxu0 %v6656
  %6795 = vmatpush1.bf16.msra.mxu0 %v6655
  %6796 = vmatprep.subr.bf16.mxu0 %v6652
  %6797 = vmatpush1.bf16.msra.mxu0 %v6651
  %6798 = vmatprep.subr.bf16.mxu0 %v6648
  %6799 = vmatpush1.bf16.msra.mxu0 %v6647
  %6800 = vmatprep.subr.bf16.mxu0 %v6644
  %6801 = vmatpush1.bf16.msra.mxu0 %v6643
  %6802 = vmatprep.subr.bf16.mxu0 %v6640
  %6803 = vmatpush1.bf16.msra.mxu0 %v6639
  %6804 = vmatprep.subr.bf16.mxu0 %v6636
  %6805 = vmatpush1.bf16.msra.mxu0 %v6635
  %6806 = vmatprep.subr.bf16.mxu0 %v6632
  %6807 = vmatpush1.bf16.msra.mxu0 %v6631
  %6808 = vmatprep.subr.bf16.mxu0 %v6628
  %6809 = vmatpush1.bf16.msra.mxu0 %v6627
  %6810 = vmatprep.subr.bf16.mxu0 %v6688
  %6811 = vmatpush2.bf16.msra.mxu0 %v6687
  %6812 = vmatprep.subr.bf16.mxu0 %v6684
  %6813 = vmatpush2.bf16.msra.mxu0 %v6683
  %6814 = vmatprep.subr.bf16.mxu0 %v6680
  %6815 = vmatpush2.bf16.msra.mxu0 %v6679
  %6816 = vmatprep.subr.bf16.mxu0 %v6676
  %6817 = vmatpush2.bf16.msra.mxu0 %v6675
  %6818 = vmatprep.subr.bf16.mxu0 %v6672
  %6819 = vmatpush2.bf16.msra.mxu0 %v6671
  %6820 = vmatprep.subr.bf16.mxu0 %v6668
  %6821 = vmatpush2.bf16.msra.mxu0 %v6667
  %6822 = vmatprep.subr.bf16.mxu0 %v6664
  %6823 = vmatpush2.bf16.msra.mxu0 %v6663
  %6824 = vmatprep.subr.bf16.mxu0 %v6660
  %6825 = vmatpush2.bf16.msra.mxu0 %v6659
  %6826 = vmatprep.mubr.bf16.mxu0 %v6368
  %6827 = vmatmul.mubr.bf16.gmra.mxu0 %v6367
  %v6828 = vpop.f32.mrf.mxu0
  %v6829 = vadd.f32 %v6365, %v6828
  %v6830 = vpop.f32.mrf.mxu0
  %v6831 = vadd.f32 %v6366, %v6830
  %v6832 = vpop.f32.mrf.mxu0
  %v6833 = vpop.f32.mrf.mxu0
  %6834 = vdwg.mxu0
  %v6835 = vxor.u32 %v6788, 2147483648
  %v6836 = vmul.f32 %v6835, 1.442695
  %v6837 = vpow.pop %v6836
  %v6838 = vadd.f32 %v6837, 1.0
  %v6839 = vrcp.pop %v6838
  %v6840 = vmul.f32 1.0, %v6839
  %v6841 = vxor.u32 %v6790, 2147483648
  %v6842 = vmul.f32 %v6841, 1.442695
  %v6843 = vpow.pop %v6842
  %v6844 = vadd.f32 %v6843, 1.0
  %v6845 = vrcp.pop %v6844
  %v6846 = vmul.f32 1.0, %v6845
  %v6847 = vtanh.pop %v6829
  %v6848 = vxor.u32 %v6831, 2147483648
  %v6849 = vmul.f32 %v6848, 1.442695
  %v6850 = vpow.pop %v6849
  %v6851 = vadd.f32 %v6850, 1.0
  %v6852 = vrcp.pop %v6851
  %v6853 = vmul.f32 1.0, %v6852
  %v6854 = vmul.f32 %v6846, %v6345
  %v6855 = vmul.f32 %v6840, %v6847
  %v6856 = vadd.f32 %v6854, %v6855
  %v6857 = vtanh.pop %v6856
  %v6858 = vmul.f32 %v6853, %v6857
  %v6859 = vmul.f32 %v6858, %v78
  %v6860 = vmul.f32 %v6858, %v83
  %v6862 = vrot.slane %v6858, 2
  %6864 = vst [vmem:[#allocation4] sm:$0xc0] %v6862
  %6865 = vst [vmem:[#allocation4 + $0x18] sm:$0x3] %v6862
  %v6866 = vld [vmem:[#allocation2 + $0x80] sm:$0xff]
  %v6867 = vld [vmem:[#allocation2 + $0x88] sm:$0xff]
  %v6868 = vld [vmem:[#allocation2 + $0x90] sm:$0xff]
  %v6869 = vld [vmem:[#allocation2 + $0x98] sm:$0xff]
  %v6870 = vld [vmem:[%s5] sm:$0xff]
  %v6871 = vld [vmem:[%s5 + $0x8] sm:$0xff]
  %v6872 = vld [vmem:[%s5 + $0x10] sm:$0xff]
  %v6873 = vld [vmem:[%s5 + $0x18] sm:$0xff]
  %v6874 = vadd.f32 %v6866, %v6870
  %v6875 = vadd.f32 %v6867, %v6871
  %v6876 = vadd.f32 %v6868, %v6872
  %v6877 = vadd.f32 %v6869, %v6873
  %v6878 = vpack.c.bf16 %v6859, %v6859
  %v6879 = vpack.c.bf16 %v6860, %v6860
  %v6880 = vld [vmem:[%s6] sm:$0xff]
  %v6881 = vld [vmem:[%s6 + $0x8] sm:$0xff]
  %v6882 = vld [vmem:[%s6 + $0x10] sm:$0xff]
  %v6883 = vld [vmem:[%s6 + $0x18] sm:$0xff]
  %v6884 = vld [vmem:[%s6 + $0x20] sm:$0xff]
  %v6885 = vld [vmem:[%s6 + $0x28] sm:$0xff]
  %v6886 = vld [vmem:[%s6 + $0x30] sm:$0xff]
  %v6887 = vld [vmem:[%s6 + $0x38] sm:$0xff]
  %v6888 = vld [vmem:[%s6 + $0x40] sm:$0xff]
  %v6889 = vld [vmem:[%s6 + $0x48] sm:$0xff]
  %v6890 = vld [vmem:[%s6 + $0x50] sm:$0xff]
  %v6891 = vld [vmem:[%s6 + $0x58] sm:$0xff]
  %v6892 = vld [vmem:[%s6 + $0x60] sm:$0xff]
  %v6893 = vld [vmem:[%s6 + $0x68] sm:$0xff]
  %v6894 = vld [vmem:[%s6 + $0x70] sm:$0xff]
  %v6895 = vld [vmem:[%s6 + $0x78] sm:$0xff]
  %v6896 = vld [vmem:[%s6 + $0x80] sm:$0xff]
  %v6897 = vld [vmem:[%s6 + $0x88] sm:$0xff]
  %v6898 = vld [vmem:[%s6 + $0x90] sm:$0xff]
  %v6899 = vld [vmem:[%s6 + $0x98] sm:$0xff]
  %v6900 = vld [vmem:[%s6 + $0xa0] sm:$0xff]
  %v6901 = vld [vmem:[%s6 + $0xa8] sm:$0xff]
  %v6902 = vld [vmem:[%s6 + $0xb0] sm:$0xff]
  %v6903 = vld [vmem:[%s6 + $0xb8] sm:$0xff]
  %v6904 = vld [vmem:[%s6 + $0xc0] sm:$0xff]
  %v6905 = vld [vmem:[%s6 + $0xc8] sm:$0xff]
  %v6906 = vld [vmem:[%s6 + $0xd0] sm:$0xff]
  %v6907 = vld [vmem:[%s6 + $0xd8] sm:$0xff]
  %v6908 = vld [vmem:[%s6 + $0xe0] sm:$0xff]
  %v6909 = vld [vmem:[%s6 + $0xe8] sm:$0xff]
  %v6910 = vld [vmem:[%s6 + $0xf0] sm:$0xff]
  %v6911 = vld [vmem:[%s6 + $0xf8] sm:$0xff]
  %v6912 = vld [vmem:[%s6 + $0x100] sm:$0xff]
  %v6913 = vld [vmem:[%s6 + $0x108] sm:$0xff]
  %v6914 = vld [vmem:[%s6 + $0x110] sm:$0xff]
  %v6915 = vld [vmem:[%s6 + $0x118] sm:$0xff]
  %v6916 = vld [vmem:[%s6 + $0x120] sm:$0xff]
  %v6917 = vld [vmem:[%s6 + $0x128] sm:$0xff]
  %v6918 = vld [vmem:[%s6 + $0x130] sm:$0xff]
  %v6919 = vld [vmem:[%s6 + $0x138] sm:$0xff]
  %v6920 = vld [vmem:[%s6 + $0x140] sm:$0xff]
  %v6921 = vld [vmem:[%s6 + $0x148] sm:$0xff]
  %v6922 = vld [vmem:[%s6 + $0x150] sm:$0xff]
  %v6923 = vld [vmem:[%s6 + $0x158] sm:$0xff]
  %v6924 = vld [vmem:[%s6 + $0x160] sm:$0xff]
  %v6925 = vld [vmem:[%s6 + $0x168] sm:$0xff]
  %v6926 = vld [vmem:[%s6 + $0x170] sm:$0xff]
  %v6927 = vld [vmem:[%s6 + $0x178] sm:$0xff]
  %v6928 = vld [vmem:[%s6 + $0x180] sm:$0xff]
  %v6929 = vld [vmem:[%s6 + $0x188] sm:$0xff]
  %v6930 = vld [vmem:[%s6 + $0x190] sm:$0xff]
  %v6931 = vld [vmem:[%s6 + $0x198] sm:$0xff]
  %v6932 = vld [vmem:[%s6 + $0x1a0] sm:$0xff]
  %v6933 = vld [vmem:[%s6 + $0x1a8] sm:$0xff]
  %v6934 = vld [vmem:[%s6 + $0x1b0] sm:$0xff]
  %v6935 = vld [vmem:[%s6 + $0x1b8] sm:$0xff]
  %v6936 = vld [vmem:[%s6 + $0x1c0] sm:$0xff]
  %v6937 = vld [vmem:[%s6 + $0x1c8] sm:$0xff]
  %v6938 = vld [vmem:[%s6 + $0x1d0] sm:$0xff]
  %v6939 = vld [vmem:[%s6 + $0x1d8] sm:$0xff]
  %v6940 = vld [vmem:[%s6 + $0x1e0] sm:$0xff]
  %v6941 = vld [vmem:[%s6 + $0x1e8] sm:$0xff]
  %v6942 = vld [vmem:[%s6 + $0x1f0] sm:$0xff]
  %v6943 = vld [vmem:[%s6 + $0x1f8] sm:$0xff]
  %v7008 = vunpack.c.l.b16 %v6880
  %v7009 = vunpack.c.h.b16 %v6880
  %v7010 = vunpack.c.l.b16 %v6881
  %v7011 = vunpack.c.h.b16 %v6881
  %v7012 = vunpack.c.l.b16 %v6882
  %v7013 = vunpack.c.h.b16 %v6882
  %v7014 = vunpack.c.l.b16 %v6883
  %v7015 = vunpack.c.h.b16 %v6883
  %v7016 = vunpack.c.l.b16 %v6884
  %v7017 = vunpack.c.h.b16 %v6884
  %v7018 = vunpack.c.l.b16 %v6885
  %v7019 = vunpack.c.h.b16 %v6885
  %v7020 = vunpack.c.l.b16 %v6886
  %v7021 = vunpack.c.h.b16 %v6886
  %v7022 = vunpack.c.l.b16 %v6887
  %v7023 = vunpack.c.h.b16 %v6887
  %v7024 = vunpack.c.l.b16 %v6888
  %v7025 = vunpack.c.h.b16 %v6888
  %v7026 = vunpack.c.l.b16 %v6889
  %v7027 = vunpack.c.h.b16 %v6889
  %v7028 = vunpack.c.l.b16 %v6890
  %v7029 = vunpack.c.h.b16 %v6890
  %v7030 = vunpack.c.l.b16 %v6891
  %v7031 = vunpack.c.h.b16 %v6891
  %v7032 = vunpack.c.l.b16 %v6892
  %v7033 = vunpack.c.h.b16 %v6892
  %v7034 = vunpack.c.l.b16 %v6893
  %v7035 = vunpack.c.h.b16 %v6893
  %v7036 = vunpack.c.l.b16 %v6894
  %v7037 = vunpack.c.h.b16 %v6894
  %v7038 = vunpack.c.l.b16 %v6895
  %v7039 = vunpack.c.h.b16 %v6895
  %v7040 = vunpack.c.l.b16 %v6896
  %v7041 = vunpack.c.h.b16 %v6896
  %v7042 = vunpack.c.l.b16 %v6897
  %v7043 = vunpack.c.h.b16 %v6897
  %v7044 = vunpack.c.l.b16 %v6898
  %v7045 = vunpack.c.h.b16 %v6898
  %v7046 = vunpack.c.l.b16 %v6899
  %v7047 = vunpack.c.h.b16 %v6899
  %v7048 = vunpack.c.l.b16 %v6900
  %v7049 = vunpack.c.h.b16 %v6900
  %v7050 = vunpack.c.l.b16 %v6901
  %v7051 = vunpack.c.h.b16 %v6901
  %v7052 = vunpack.c.l.b16 %v6902
  %v7053 = vunpack.c.h.b16 %v6902
  %v7054 = vunpack.c.l.b16 %v6903
  %v7055 = vunpack.c.h.b16 %v6903
  %v7056 = vunpack.c.l.b16 %v6904
  %v7057 = vunpack.c.h.b16 %v6904
  %v7058 = vunpack.c.l.b16 %v6905
  %v7059 = vunpack.c.h.b16 %v6905
  %v7060 = vunpack.c.l.b16 %v6906
  %v7061 = vunpack.c.h.b16 %v6906
  %v7062 = vunpack.c.l.b16 %v6907
  %v7063 = vunpack.c.h.b16 %v6907
  %v7064 = vunpack.c.l.b16 %v6908
  %v7065 = vunpack.c.h.b16 %v6908
  %v7066 = vunpack.c.l.b16 %v6909
  %v7067 = vunpack.c.h.b16 %v6909
  %v7068 = vunpack.c.l.b16 %v6910
  %v7069 = vunpack.c.h.b16 %v6910
  %v7070 = vunpack.c.l.b16 %v6911
  %v7071 = vunpack.c.h.b16 %v6911
  %v7072 = vunpack.c.l.b16 %v6912
  %v7073 = vunpack.c.h.b16 %v6912
  %v7074 = vunpack.c.l.b16 %v6913
  %v7075 = vunpack.c.h.b16 %v6913
  %v7076 = vunpack.c.l.b16 %v6914
  %v7077 = vunpack.c.h.b16 %v6914
  %v7078 = vunpack.c.l.b16 %v6915
  %v7079 = vunpack.c.h.b16 %v6915
  %v7080 = vunpack.c.l.b16 %v6916
  %v7081 = vunpack.c.h.b16 %v6916
  %v7082 = vunpack.c.l.b16 %v6917
  %v7083 = vunpack.c.h.b16 %v6917
  %v7084 = vunpack.c.l.b16 %v6918
  %v7085 = vunpack.c.h.b16 %v6918
  %v7086 = vunpack.c.l.b16 %v6919
  %v7087 = vunpack.c.h.b16 %v6919
  %v7088 = vunpack.c.l.b16 %v6920
  %v7089 = vunpack.c.h.b16 %v6920
  %v7090 = vunpack.c.l.b16 %v6921
  %v7091 = vunpack.c.h.b16 %v6921
  %v7092 = vunpack.c.l.b16 %v6922
  %v7093 = vunpack.c.h.b16 %v6922
  %v7094 = vunpack.c.l.b16 %v6923
  %v7095 = vunpack.c.h.b16 %v6923
  %v7096 = vunpack.c.l.b16 %v6924
  %v7097 = vunpack.c.h.b16 %v6924
  %v7098 = vunpack.c.l.b16 %v6925
  %v7099 = vunpack.c.h.b16 %v6925
  %v7100 = vunpack.c.l.b16 %v6926
  %v7101 = vunpack.c.h.b16 %v6926
  %v7102 = vunpack.c.l.b16 %v6927
  %v7103 = vunpack.c.h.b16 %v6927
  %v7104 = vunpack.c.l.b16 %v6928
  %v7105 = vunpack.c.h.b16 %v6928
  %v7106 = vunpack.c.l.b16 %v6929
  %v7107 = vunpack.c.h.b16 %v6929
  %v7108 = vunpack.c.l.b16 %v6930
  %v7109 = vunpack.c.h.b16 %v6930
  %v7110 = vunpack.c.l.b16 %v6931
  %v7111 = vunpack.c.h.b16 %v6931
  %v7112 = vunpack.c.l.b16 %v6932
  %v7113 = vunpack.c.h.b16 %v6932
  %v7114 = vunpack.c.l.b16 %v6933
  %v7115 = vunpack.c.h.b16 %v6933
  %v7116 = vunpack.c.l.b16 %v6934
  %v7117 = vunpack.c.h.b16 %v6934
  %v7118 = vunpack.c.l.b16 %v6935
  %v7119 = vunpack.c.h.b16 %v6935
  %v7120 = vunpack.c.l.b16 %v6936
  %v7121 = vunpack.c.h.b16 %v6936
  %v7122 = vunpack.c.l.b16 %v6937
  %v7123 = vunpack.c.h.b16 %v6937
  %v7124 = vunpack.c.l.b16 %v6938
  %v7125 = vunpack.c.h.b16 %v6938
  %v7126 = vunpack.c.l.b16 %v6939
  %v7127 = vunpack.c.h.b16 %v6939
  %v7128 = vunpack.c.l.b16 %v6940
  %v7129 = vunpack.c.h.b16 %v6940
  %v7130 = vunpack.c.l.b16 %v6941
  %v7131 = vunpack.c.h.b16 %v6941
  %v7132 = vunpack.c.l.b16 %v6942
  %v7133 = vunpack.c.h.b16 %v6942
  %v7134 = vunpack.c.l.b16 %v6943
  %v7135 = vunpack.c.h.b16 %v6943
  %v7136 = vpack.c.b16 %v7012, %v7008
  %v7137 = vpack.c.b16 %v7013, %v7009
  %v7138 = vpack.c.b16 %v7014, %v7010
  %v7139 = vpack.c.b16 %v7015, %v7011
  %v7140 = vpack.c.b16 %v7020, %v7016
  %v7141 = vpack.c.b16 %v7021, %v7017
  %v7142 = vpack.c.b16 %v7022, %v7018
  %v7143 = vpack.c.b16 %v7023, %v7019
  %v7144 = vpack.c.b16 %v7028, %v7024
  %v7145 = vpack.c.b16 %v7029, %v7025
  %v7146 = vpack.c.b16 %v7030, %v7026
  %v7147 = vpack.c.b16 %v7031, %v7027
  %v7148 = vpack.c.b16 %v7036, %v7032
  %v7149 = vpack.c.b16 %v7037, %v7033
  %v7150 = vpack.c.b16 %v7038, %v7034
  %v7151 = vpack.c.b16 %v7039, %v7035
  %v7152 = vpack.c.b16 %v7044, %v7040
  %v7153 = vpack.c.b16 %v7045, %v7041
  %v7154 = vpack.c.b16 %v7046, %v7042
  %v7155 = vpack.c.b16 %v7047, %v7043
  %v7156 = vpack.c.b16 %v7052, %v7048
  %v7157 = vpack.c.b16 %v7053, %v7049
  %v7158 = vpack.c.b16 %v7054, %v7050
  %v7159 = vpack.c.b16 %v7055, %v7051
  %v7160 = vpack.c.b16 %v7060, %v7056
  %v7161 = vpack.c.b16 %v7061, %v7057
  %v7162 = vpack.c.b16 %v7062, %v7058
  %v7163 = vpack.c.b16 %v7063, %v7059
  %v7164 = vpack.c.b16 %v7068, %v7064
  %v7165 = vpack.c.b16 %v7069, %v7065
  %v7166 = vpack.c.b16 %v7070, %v7066
  %v7167 = vpack.c.b16 %v7071, %v7067
  %v7168 = vpack.c.b16 %v7076, %v7072
  %v7169 = vpack.c.b16 %v7077, %v7073
  %v7170 = vpack.c.b16 %v7078, %v7074
  %v7171 = vpack.c.b16 %v7079, %v7075
  %v7172 = vpack.c.b16 %v7084, %v7080
  %v7173 = vpack.c.b16 %v7085, %v7081
  %v7174 = vpack.c.b16 %v7086, %v7082
  %v7175 = vpack.c.b16 %v7087, %v7083
  %v7176 = vpack.c.b16 %v7092, %v7088
  %v7177 = vpack.c.b16 %v7093, %v7089
  %v7178 = vpack.c.b16 %v7094, %v7090
  %v7179 = vpack.c.b16 %v7095, %v7091
  %v7180 = vpack.c.b16 %v7100, %v7096
  %v7181 = vpack.c.b16 %v7101, %v7097
  %v7182 = vpack.c.b16 %v7102, %v7098
  %v7183 = vpack.c.b16 %v7103, %v7099
  %v7184 = vpack.c.b16 %v7108, %v7104
  %v7185 = vpack.c.b16 %v7109, %v7105
  %v7186 = vpack.c.b16 %v7110, %v7106
  %v7187 = vpack.c.b16 %v7111, %v7107
  %v7188 = vpack.c.b16 %v7116, %v7112
  %v7189 = vpack.c.b16 %v7117, %v7113
  %v7190 = vpack.c.b16 %v7118, %v7114
  %v7191 = vpack.c.b16 %v7119, %v7115
  %v7192 = vpack.c.b16 %v7124, %v7120
  %v7193 = vpack.c.b16 %v7125, %v7121
  %v7194 = vpack.c.b16 %v7126, %v7122
  %v7195 = vpack.c.b16 %v7127, %v7123
  %v7196 = vpack.c.b16 %v7132, %v7128
  %v7197 = vpack.c.b16 %v7133, %v7129
  %v7198 = vpack.c.b16 %v7134, %v7130
  %v7199 = vpack.c.b16 %v7135, %v7131
  %7264 = vmatprep.subr.bf16.mxu0 %v7165
  %7265 = vmatpush1.bf16.msra.mxu0 %v7164
  %7266 = vmatprep.subr.bf16.mxu0 %v7161
  %7267 = vmatpush1.bf16.msra.mxu0 %v7160
  %7268 = vmatprep.subr.bf16.mxu0 %v7157
  %7269 = vmatpush1.bf16.msra.mxu0 %v7156
  %7270 = vmatprep.subr.bf16.mxu0 %v7153
  %7271 = vmatpush1.bf16.msra.mxu0 %v7152
  %7272 = vmatprep.subr.bf16.mxu0 %v7149
  %7273 = vmatpush1.bf16.msra.mxu0 %v7148
  %7274 = vmatprep.subr.bf16.mxu0 %v7145
  %7275 = vmatpush1.bf16.msra.mxu0 %v7144
  %7276 = vmatprep.subr.bf16.mxu0 %v7141
  %7277 = vmatpush1.bf16.msra.mxu0 %v7140
  %7278 = vmatprep.subr.bf16.mxu0 %v7137
  %7279 = vmatpush1.bf16.msra.mxu0 %v7136
  %7280 = vmatprep.subr.bf16.mxu0 %v7197
  %7281 = vmatpush2.bf16.msra.mxu0 %v7196
  %7282 = vmatprep.subr.bf16.mxu0 %v7193
  %7283 = vmatpush2.bf16.msra.mxu0 %v7192
  %7284 = vmatprep.subr.bf16.mxu0 %v7189
  %7285 = vmatpush2.bf16.msra.mxu0 %v7188
  %7286 = vmatprep.subr.bf16.mxu0 %v7185
  %7287 = vmatpush2.bf16.msra.mxu0 %v7184
  %7288 = vmatprep.subr.bf16.mxu0 %v7181
  %7289 = vmatpush2.bf16.msra.mxu0 %v7180
  %7290 = vmatprep.subr.bf16.mxu0 %v7177
  %7291 = vmatpush2.bf16.msra.mxu0 %v7176
  %7292 = vmatprep.subr.bf16.mxu0 %v7173
  %7293 = vmatpush2.bf16.msra.mxu0 %v7172
  %7294 = vmatprep.subr.bf16.mxu0 %v7169
  %7295 = vmatpush2.bf16.msra.mxu0 %v7168
  %7296 = vmatprep.mubr.bf16.mxu0 %v6879
  %7297 = vmatmul.mubr.bf16.gmra.mxu0 %v6878
  %v7298 = vpop.f32.mrf.mxu0
  %v7299 = vadd.f32 %v6874, %v7298
  %v7300 = vpop.f32.mrf.mxu0
  %v7301 = vadd.f32 %v6875, %v7300
  %v7302 = vpop.f32.mrf.mxu0
  %v7303 = vpop.f32.mrf.mxu0
  %7304 = vdwg.mxu0
  %7305 = vmatprep.subr.bf16.mxu0 %v7167
  %7306 = vmatpush1.bf16.msra.mxu0 %v7166
  %7307 = vmatprep.subr.bf16.mxu0 %v7163
  %7308 = vmatpush1.bf16.msra.mxu0 %v7162
  %7309 = vmatprep.subr.bf16.mxu0 %v7159
  %7310 = vmatpush1.bf16.msra.mxu0 %v7158
  %7311 = vmatprep.subr.bf16.mxu0 %v7155
  %7312 = vmatpush1.bf16.msra.mxu0 %v7154
  %7313 = vmatprep.subr.bf16.mxu0 %v7151
  %7314 = vmatpush1.bf16.msra.mxu0 %v7150
  %7315 = vmatprep.subr.bf16.mxu0 %v7147
  %7316 = vmatpush1.bf16.msra.mxu0 %v7146
  %7317 = vmatprep.subr.bf16.mxu0 %v7143
  %7318 = vmatpush1.bf16.msra.mxu0 %v7142
  %7319 = vmatprep.subr.bf16.mxu0 %v7139
  %7320 = vmatpush1.bf16.msra.mxu0 %v7138
  %7321 = vmatprep.subr.bf16.mxu0 %v7199
  %7322 = vmatpush2.bf16.msra.mxu0 %v7198
  %7323 = vmatprep.subr.bf16.mxu0 %v7195
  %7324 = vmatpush2.bf16.msra.mxu0 %v7194
  %7325 = vmatprep.subr.bf16.mxu0 %v7191
  %7326 = vmatpush2.bf16.msra.mxu0 %v7190
  %7327 = vmatprep.subr.bf16.mxu0 %v7187
  %7328 = vmatpush2.bf16.msra.mxu0 %v7186
  %7329 = vmatprep.subr.bf16.mxu0 %v7183
  %7330 = vmatpush2.bf16.msra.mxu0 %v7182
  %7331 = vmatprep.subr.bf16.mxu0 %v7179
  %7332 = vmatpush2.bf16.msra.mxu0 %v7178
  %7333 = vmatprep.subr.bf16.mxu0 %v7175
  %7334 = vmatpush2.bf16.msra.mxu0 %v7174
  %7335 = vmatprep.subr.bf16.mxu0 %v7171
  %7336 = vmatpush2.bf16.msra.mxu0 %v7170
  %7337 = vmatprep.mubr.bf16.mxu0 %v6879
  %7338 = vmatmul.mubr.bf16.gmra.mxu0 %v6878
  %v7339 = vpop.f32.mrf.mxu0
  %v7340 = vadd.f32 %v6876, %v7339
  %v7341 = vpop.f32.mrf.mxu0
  %v7342 = vadd.f32 %v6877, %v7341
  %v7343 = vpop.f32.mrf.mxu0
  %v7344 = vpop.f32.mrf.mxu0
  %7345 = vdwg.mxu0
  %v7346 = vxor.u32 %v7299, 2147483648
  %v7347 = vmul.f32 %v7346, 1.442695
  %v7348 = vpow.pop %v7347
  %v7349 = vadd.f32 %v7348, 1.0
  %v7350 = vrcp.pop %v7349
  %v7351 = vmul.f32 1.0, %v7350
  %v7352 = vxor.u32 %v7301, 2147483648
  %v7353 = vmul.f32 %v7352, 1.442695
  %v7354 = vpow.pop %v7353
  %v7355 = vadd.f32 %v7354, 1.0
  %v7356 = vrcp.pop %v7355
  %v7357 = vmul.f32 1.0, %v7356
  %v7358 = vtanh.pop %v7340
  %v7359 = vxor.u32 %v7342, 2147483648
  %v7360 = vmul.f32 %v7359, 1.442695
  %v7361 = vpow.pop %v7360
  %v7362 = vadd.f32 %v7361, 1.0
  %v7363 = vrcp.pop %v7362
  %v7364 = vmul.f32 1.0, %v7363
  %v7365 = vmul.f32 %v7357, %v6856
  %v7366 = vmul.f32 %v7351, %v7358
  %v7367 = vadd.f32 %v7365, %v7366
  %v7368 = vtanh.pop %v7367
  %v7369 = vmul.f32 %v7364, %v7368
  %v7370 = vmul.f32 %v7369, %v78
  %v7371 = vmul.f32 %v7369, %v83
  %7372 = vst [vmem:[#allocation4 + $0x10] sm:$0x3] %v7369
  %v7374 = vrot.slane %v7369, 4
  %7376 = vst [vmem:[#allocation4 + $0x8] sm:$0xc0] %v7374
  %v7377 = vld [vmem:[#allocation2 + $0xa0] sm:$0xff]
  %v7378 = vld [vmem:[#allocation2 + $0xa8] sm:$0xff]
  %v7379 = vld [vmem:[#allocation2 + $0xb0] sm:$0xff]
  %v7380 = vld [vmem:[#allocation2 + $0xb8] sm:$0xff]
  %v7381 = vld [vmem:[%s5] sm:$0xff]
  %v7382 = vld [vmem:[%s5 + $0x8] sm:$0xff]
  %v7383 = vld [vmem:[%s5 + $0x10] sm:$0xff]
  %v7384 = vld [vmem:[%s5 + $0x18] sm:$0xff]
  %v7385 = vadd.f32 %v7377, %v7381
  %v7386 = vadd.f32 %v7378, %v7382
  %v7387 = vadd.f32 %v7379, %v7383
  %v7388 = vadd.f32 %v7380, %v7384
  %v7389 = vpack.c.bf16 %v7370, %v7370
  %v7390 = vpack.c.bf16 %v7371, %v7371
  %v7391 = vld [vmem:[%s6] sm:$0xff]
  %v7392 = vld [vmem:[%s6 + $0x8] sm:$0xff]
  %v7393 = vld [vmem:[%s6 + $0x10] sm:$0xff]
  %v7394 = vld [vmem:[%s6 + $0x18] sm:$0xff]
  %v7395 = vld [vmem:[%s6 + $0x20] sm:$0xff]
  %v7396 = vld [vmem:[%s6 + $0x28] sm:$0xff]
  %v7397 = vld [vmem:[%s6 + $0x30] sm:$0xff]
  %v7398 = vld [vmem:[%s6 + $0x38] sm:$0xff]
  %v7399 = vld [vmem:[%s6 + $0x40] sm:$0xff]
  %v7400 = vld [vmem:[%s6 + $0x48] sm:$0xff]
  %v7401 = vld [vmem:[%s6 + $0x50] sm:$0xff]
  %v7402 = vld [vmem:[%s6 + $0x58] sm:$0xff]
  %v7403 = vld [vmem:[%s6 + $0x60] sm:$0xff]
  %v7404 = vld [vmem:[%s6 + $0x68] sm:$0xff]
  %v7405 = vld [vmem:[%s6 + $0x70] sm:$0xff]
  %v7406 = vld [vmem:[%s6 + $0x78] sm:$0xff]
  %v7407 = vld [vmem:[%s6 + $0x80] sm:$0xff]
  %v7408 = vld [vmem:[%s6 + $0x88] sm:$0xff]
  %v7409 = vld [vmem:[%s6 + $0x90] sm:$0xff]
  %v7410 = vld [vmem:[%s6 + $0x98] sm:$0xff]
  %v7411 = vld [vmem:[%s6 + $0xa0] sm:$0xff]
  %v7412 = vld [vmem:[%s6 + $0xa8] sm:$0xff]
  %v7413 = vld [vmem:[%s6 + $0xb0] sm:$0xff]
  %v7414 = vld [vmem:[%s6 + $0xb8] sm:$0xff]
  %v7415 = vld [vmem:[%s6 + $0xc0] sm:$0xff]
  %v7416 = vld [vmem:[%s6 + $0xc8] sm:$0xff]
  %v7417 = vld [vmem:[%s6 + $0xd0] sm:$0xff]
  %v7418 = vld [vmem:[%s6 + $0xd8] sm:$0xff]
  %v7419 = vld [vmem:[%s6 + $0xe0] sm:$0xff]
  %v7420 = vld [vmem:[%s6 + $0xe8] sm:$0xff]
  %v7421 = vld [vmem:[%s6 + $0xf0] sm:$0xff]
  %v7422 = vld [vmem:[%s6 + $0xf8] sm:$0xff]
  %v7423 = vld [vmem:[%s6 + $0x100] sm:$0xff]
  %v7424 = vld [vmem:[%s6 + $0x108] sm:$0xff]
  %v7425 = vld [vmem:[%s6 + $0x110] sm:$0xff]
  %v7426 = vld [vmem:[%s6 + $0x118] sm:$0xff]
  %v7427 = vld [vmem:[%s6 + $0x120] sm:$0xff]
  %v7428 = vld [vmem:[%s6 + $0x128] sm:$0xff]
  %v7429 = vld [vmem:[%s6 + $0x130] sm:$0xff]
  %v7430 = vld [vmem:[%s6 + $0x138] sm:$0xff]
  %v7431 = vld [vmem:[%s6 + $0x140] sm:$0xff]
  %v7432 = vld [vmem:[%s6 + $0x148] sm:$0xff]
  %v7433 = vld [vmem:[%s6 + $0x150] sm:$0xff]
  %v7434 = vld [vmem:[%s6 + $0x158] sm:$0xff]
  %v7435 = vld [vmem:[%s6 + $0x160] sm:$0xff]
  %v7436 = vld [vmem:[%s6 + $0x168] sm:$0xff]
  %v7437 = vld [vmem:[%s6 + $0x170] sm:$0xff]
  %v7438 = vld [vmem:[%s6 + $0x178] sm:$0xff]
  %v7439 = vld [vmem:[%s6 + $0x180] sm:$0xff]
  %v7440 = vld [vmem:[%s6 + $0x188] sm:$0xff]
  %v7441 = vld [vmem:[%s6 + $0x190] sm:$0xff]
  %v7442 = vld [vmem:[%s6 + $0x198] sm:$0xff]
  %v7443 = vld [vmem:[%s6 + $0x1a0] sm:$0xff]
  %v7444 = vld [vmem:[%s6 + $0x1a8] sm:$0xff]
  %v7445 = vld [vmem:[%s6 + $0x1b0] sm:$0xff]
  %v7446 = vld [vmem:[%s6 + $0x1b8] sm:$0xff]
  %v7447 = vld [vmem:[%s6 + $0x1c0] sm:$0xff]
  %v7448 = vld [vmem:[%s6 + $0x1c8] sm:$0xff]
  %v7449 = vld [vmem:[%s6 + $0x1d0] sm:$0xff]
  %v7450 = vld [vmem:[%s6 + $0x1d8] sm:$0xff]
  %v7451 = vld [vmem:[%s6 + $0x1e0] sm:$0xff]
  %v7452 = vld [vmem:[%s6 + $0x1e8] sm:$0xff]
  %v7453 = vld [vmem:[%s6 + $0x1f0] sm:$0xff]
  %v7454 = vld [vmem:[%s6 + $0x1f8] sm:$0xff]
  %v7519 = vunpack.c.l.b16 %v7391
  %v7520 = vunpack.c.h.b16 %v7391
  %v7521 = vunpack.c.l.b16 %v7392
  %v7522 = vunpack.c.h.b16 %v7392
  %v7523 = vunpack.c.l.b16 %v7393
  %v7524 = vunpack.c.h.b16 %v7393
  %v7525 = vunpack.c.l.b16 %v7394
  %v7526 = vunpack.c.h.b16 %v7394
  %v7527 = vunpack.c.l.b16 %v7395
  %v7528 = vunpack.c.h.b16 %v7395
  %v7529 = vunpack.c.l.b16 %v7396
  %v7530 = vunpack.c.h.b16 %v7396
  %v7531 = vunpack.c.l.b16 %v7397
  %v7532 = vunpack.c.h.b16 %v7397
  %v7533 = vunpack.c.l.b16 %v7398
  %v7534 = vunpack.c.h.b16 %v7398
  %v7535 = vunpack.c.l.b16 %v7399
  %v7536 = vunpack.c.h.b16 %v7399
  %v7537 = vunpack.c.l.b16 %v7400
  %v7538 = vunpack.c.h.b16 %v7400
  %v7539 = vunpack.c.l.b16 %v7401
  %v7540 = vunpack.c.h.b16 %v7401
  %v7541 = vunpack.c.l.b16 %v7402
  %v7542 = vunpack.c.h.b16 %v7402
  %v7543 = vunpack.c.l.b16 %v7403
  %v7544 = vunpack.c.h.b16 %v7403
  %v7545 = vunpack.c.l.b16 %v7404
  %v7546 = vunpack.c.h.b16 %v7404
  %v7547 = vunpack.c.l.b16 %v7405
  %v7548 = vunpack.c.h.b16 %v7405
  %v7549 = vunpack.c.l.b16 %v7406
  %v7550 = vunpack.c.h.b16 %v7406
  %v7551 = vunpack.c.l.b16 %v7407
  %v7552 = vunpack.c.h.b16 %v7407
  %v7553 = vunpack.c.l.b16 %v7408
  %v7554 = vunpack.c.h.b16 %v7408
  %v7555 = vunpack.c.l.b16 %v7409
  %v7556 = vunpack.c.h.b16 %v7409
  %v7557 = vunpack.c.l.b16 %v7410
  %v7558 = vunpack.c.h.b16 %v7410
  %v7559 = vunpack.c.l.b16 %v7411
  %v7560 = vunpack.c.h.b16 %v7411
  %v7561 = vunpack.c.l.b16 %v7412
  %v7562 = vunpack.c.h.b16 %v7412
  %v7563 = vunpack.c.l.b16 %v7413
  %v7564 = vunpack.c.h.b16 %v7413
  %v7565 = vunpack.c.l.b16 %v7414
  %v7566 = vunpack.c.h.b16 %v7414
  %v7567 = vunpack.c.l.b16 %v7415
  %v7568 = vunpack.c.h.b16 %v7415
  %v7569 = vunpack.c.l.b16 %v7416
  %v7570 = vunpack.c.h.b16 %v7416
  %v7571 = vunpack.c.l.b16 %v7417
  %v7572 = vunpack.c.h.b16 %v7417
  %v7573 = vunpack.c.l.b16 %v7418
  %v7574 = vunpack.c.h.b16 %v7418
  %v7575 = vunpack.c.l.b16 %v7419
  %v7576 = vunpack.c.h.b16 %v7419
  %v7577 = vunpack.c.l.b16 %v7420
  %v7578 = vunpack.c.h.b16 %v7420
  %v7579 = vunpack.c.l.b16 %v7421
  %v7580 = vunpack.c.h.b16 %v7421
  %v7581 = vunpack.c.l.b16 %v7422
  %v7582 = vunpack.c.h.b16 %v7422
  %v7583 = vunpack.c.l.b16 %v7423
  %v7584 = vunpack.c.h.b16 %v7423
  %v7585 = vunpack.c.l.b16 %v7424
  %v7586 = vunpack.c.h.b16 %v7424
  %v7587 = vunpack.c.l.b16 %v7425
  %v7588 = vunpack.c.h.b16 %v7425
  %v7589 = vunpack.c.l.b16 %v7426
  %v7590 = vunpack.c.h.b16 %v7426
  %v7591 = vunpack.c.l.b16 %v7427
  %v7592 = vunpack.c.h.b16 %v7427
  %v7593 = vunpack.c.l.b16 %v7428
  %v7594 = vunpack.c.h.b16 %v7428
  %v7595 = vunpack.c.l.b16 %v7429
  %v7596 = vunpack.c.h.b16 %v7429
  %v7597 = vunpack.c.l.b16 %v7430
  %v7598 = vunpack.c.h.b16 %v7430
  %v7599 = vunpack.c.l.b16 %v7431
  %v7600 = vunpack.c.h.b16 %v7431
  %v7601 = vunpack.c.l.b16 %v7432
  %v7602 = vunpack.c.h.b16 %v7432
  %v7603 = vunpack.c.l.b16 %v7433
  %v7604 = vunpack.c.h.b16 %v7433
  %v7605 = vunpack.c.l.b16 %v7434
  %v7606 = vunpack.c.h.b16 %v7434
  %v7607 = vunpack.c.l.b16 %v7435
  %v7608 = vunpack.c.h.b16 %v7435
  %v7609 = vunpack.c.l.b16 %v7436
  %v7610 = vunpack.c.h.b16 %v7436
  %v7611 = vunpack.c.l.b16 %v7437
  %v7612 = vunpack.c.h.b16 %v7437
  %v7613 = vunpack.c.l.b16 %v7438
  %v7614 = vunpack.c.h.b16 %v7438
  %v7615 = vunpack.c.l.b16 %v7439
  %v7616 = vunpack.c.h.b16 %v7439
  %v7617 = vunpack.c.l.b16 %v7440
  %v7618 = vunpack.c.h.b16 %v7440
  %v7619 = vunpack.c.l.b16 %v7441
  %v7620 = vunpack.c.h.b16 %v7441
  %v7621 = vunpack.c.l.b16 %v7442
  %v7622 = vunpack.c.h.b16 %v7442
  %v7623 = vunpack.c.l.b16 %v7443
  %v7624 = vunpack.c.h.b16 %v7443
  %v7625 = vunpack.c.l.b16 %v7444
  %v7626 = vunpack.c.h.b16 %v7444
  %v7627 = vunpack.c.l.b16 %v7445
  %v7628 = vunpack.c.h.b16 %v7445
  %v7629 = vunpack.c.l.b16 %v7446
  %v7630 = vunpack.c.h.b16 %v7446
  %v7631 = vunpack.c.l.b16 %v7447
  %v7632 = vunpack.c.h.b16 %v7447
  %v7633 = vunpack.c.l.b16 %v7448
  %v7634 = vunpack.c.h.b16 %v7448
  %v7635 = vunpack.c.l.b16 %v7449
  %v7636 = vunpack.c.h.b16 %v7449
  %v7637 = vunpack.c.l.b16 %v7450
  %v7638 = vunpack.c.h.b16 %v7450
  %v7639 = vunpack.c.l.b16 %v7451
  %v7640 = vunpack.c.h.b16 %v7451
  %v7641 = vunpack.c.l.b16 %v7452
  %v7642 = vunpack.c.h.b16 %v7452
  %v7643 = vunpack.c.l.b16 %v7453
  %v7644 = vunpack.c.h.b16 %v7453
  %v7645 = vunpack.c.l.b16 %v7454
  %v7646 = vunpack.c.h.b16 %v7454
  %v7647 = vpack.c.b16 %v7523, %v7519
  %v7648 = vpack.c.b16 %v7524, %v7520
  %v7649 = vpack.c.b16 %v7525, %v7521
  %v7650 = vpack.c.b16 %v7526, %v7522
  %v7651 = vpack.c.b16 %v7531, %v7527
  %v7652 = vpack.c.b16 %v7532, %v7528
  %v7653 = vpack.c.b16 %v7533, %v7529
  %v7654 = vpack.c.b16 %v7534, %v7530
  %v7655 = vpack.c.b16 %v7539, %v7535
  %v7656 = vpack.c.b16 %v7540, %v7536
  %v7657 = vpack.c.b16 %v7541, %v7537
  %v7658 = vpack.c.b16 %v7542, %v7538
  %v7659 = vpack.c.b16 %v7547, %v7543
  %v7660 = vpack.c.b16 %v7548, %v7544
  %v7661 = vpack.c.b16 %v7549, %v7545
  %v7662 = vpack.c.b16 %v7550, %v7546
  %v7663 = vpack.c.b16 %v7555, %v7551
  %v7664 = vpack.c.b16 %v7556, %v7552
  %v7665 = vpack.c.b16 %v7557, %v7553
  %v7666 = vpack.c.b16 %v7558, %v7554
  %v7667 = vpack.c.b16 %v7563, %v7559
  %v7668 = vpack.c.b16 %v7564, %v7560
  %v7669 = vpack.c.b16 %v7565, %v7561
  %v7670 = vpack.c.b16 %v7566, %v7562
  %v7671 = vpack.c.b16 %v7571, %v7567
  %v7672 = vpack.c.b16 %v7572, %v7568
  %v7673 = vpack.c.b16 %v7573, %v7569
  %v7674 = vpack.c.b16 %v7574, %v7570
  %v7675 = vpack.c.b16 %v7579, %v7575
  %v7676 = vpack.c.b16 %v7580, %v7576
  %v7677 = vpack.c.b16 %v7581, %v7577
  %v7678 = vpack.c.b16 %v7582, %v7578
  %v7679 = vpack.c.b16 %v7587, %v7583
  %v7680 = vpack.c.b16 %v7588, %v7584
  %v7681 = vpack.c.b16 %v7589, %v7585
  %v7682 = vpack.c.b16 %v7590, %v7586
  %v7683 = vpack.c.b16 %v7595, %v7591
  %v7684 = vpack.c.b16 %v7596, %v7592
  %v7685 = vpack.c.b16 %v7597, %v7593
  %v7686 = vpack.c.b16 %v7598, %v7594
  %v7687 = vpack.c.b16 %v7603, %v7599
  %v7688 = vpack.c.b16 %v7604, %v7600
  %v7689 = vpack.c.b16 %v7605, %v7601
  %v7690 = vpack.c.b16 %v7606, %v7602
  %v7691 = vpack.c.b16 %v7611, %v7607
  %v7692 = vpack.c.b16 %v7612, %v7608
  %v7693 = vpack.c.b16 %v7613, %v7609
  %v7694 = vpack.c.b16 %v7614, %v7610
  %v7695 = vpack.c.b16 %v7619, %v7615
  %v7696 = vpack.c.b16 %v7620, %v7616
  %v7697 = vpack.c.b16 %v7621, %v7617
  %v7698 = vpack.c.b16 %v7622, %v7618
  %v7699 = vpack.c.b16 %v7627, %v7623
  %v7700 = vpack.c.b16 %v7628, %v7624
  %v7701 = vpack.c.b16 %v7629, %v7625
  %v7702 = vpack.c.b16 %v7630, %v7626
  %v7703 = vpack.c.b16 %v7635, %v7631
  %v7704 = vpack.c.b16 %v7636, %v7632
  %v7705 = vpack.c.b16 %v7637, %v7633
  %v7706 = vpack.c.b16 %v7638, %v7634
  %v7707 = vpack.c.b16 %v7643, %v7639
  %v7708 = vpack.c.b16 %v7644, %v7640
  %v7709 = vpack.c.b16 %v7645, %v7641
  %v7710 = vpack.c.b16 %v7646, %v7642
  %7775 = vmatprep.subr.bf16.mxu0 %v7676
  %7776 = vmatpush1.bf16.msra.mxu0 %v7675
  %7777 = vmatprep.subr.bf16.mxu0 %v7672
  %7778 = vmatpush1.bf16.msra.mxu0 %v7671
  %7779 = vmatprep.subr.bf16.mxu0 %v7668
  %7780 = vmatpush1.bf16.msra.mxu0 %v7667
  %7781 = vmatprep.subr.bf16.mxu0 %v7664
  %7782 = vmatpush1.bf16.msra.mxu0 %v7663
  %7783 = vmatprep.subr.bf16.mxu0 %v7660
  %7784 = vmatpush1.bf16.msra.mxu0 %v7659
  %7785 = vmatprep.subr.bf16.mxu0 %v7656
  %7786 = vmatpush1.bf16.msra.mxu0 %v7655
  %7787 = vmatprep.subr.bf16.mxu0 %v7652
  %7788 = vmatpush1.bf16.msra.mxu0 %v7651
  %7789 = vmatprep.subr.bf16.mxu0 %v7648
  %7790 = vmatpush1.bf16.msra.mxu0 %v7647
  %7791 = vmatprep.subr.bf16.mxu0 %v7708
  %7792 = vmatpush2.bf16.msra.mxu0 %v7707
  %7793 = vmatprep.subr.bf16.mxu0 %v7704
  %7794 = vmatpush2.bf16.msra.mxu0 %v7703
  %7795 = vmatprep.subr.bf16.mxu0 %v7700
  %7796 = vmatpush2.bf16.msra.mxu0 %v7699
  %7797 = vmatprep.subr.bf16.mxu0 %v7696
  %7798 = vmatpush2.bf16.msra.mxu0 %v7695
  %7799 = vmatprep.subr.bf16.mxu0 %v7692
  %7800 = vmatpush2.bf16.msra.mxu0 %v7691
  %7801 = vmatprep.subr.bf16.mxu0 %v7688
  %7802 = vmatpush2.bf16.msra.mxu0 %v7687
  %7803 = vmatprep.subr.bf16.mxu0 %v7684
  %7804 = vmatpush2.bf16.msra.mxu0 %v7683
  %7805 = vmatprep.subr.bf16.mxu0 %v7680
  %7806 = vmatpush2.bf16.msra.mxu0 %v7679
  %7807 = vmatprep.mubr.bf16.mxu0 %v7390
  %7808 = vmatmul.mubr.bf16.gmra.mxu0 %v7389
  %v7809 = vpop.f32.mrf.mxu0
  %v7810 = vadd.f32 %v7385, %v7809
  %v7811 = vpop.f32.mrf.mxu0
  %v7812 = vadd.f32 %v7386, %v7811
  %v7813 = vpop.f32.mrf.mxu0
  %v7814 = vpop.f32.mrf.mxu0
  %7815 = vdwg.mxu0
  %7816 = vmatprep.subr.bf16.mxu0 %v7678
  %7817 = vmatpush1.bf16.msra.mxu0 %v7677
  %7818 = vmatprep.subr.bf16.mxu0 %v7674
  %7819 = vmatpush1.bf16.msra.mxu0 %v7673
  %7820 = vmatprep.subr.bf16.mxu0 %v7670
  %7821 = vmatpush1.bf16.msra.mxu0 %v7669
  %7822 = vmatprep.subr.bf16.mxu0 %v7666
  %7823 = vmatpush1.bf16.msra.mxu0 %v7665
  %7824 = vmatprep.subr.bf16.mxu0 %v7662
  %7825 = vmatpush1.bf16.msra.mxu0 %v7661
  %7826 = vmatprep.subr.bf16.mxu0 %v7658
  %7827 = vmatpush1.bf16.msra.mxu0 %v7657
  %7828 = vmatprep.subr.bf16.mxu0 %v7654
  %7829 = vmatpush1.bf16.msra.mxu0 %v7653
  %7830 = vmatprep.subr.bf16.mxu0 %v7650
  %7831 = vmatpush1.bf16.msra.mxu0 %v7649
  %7832 = vmatprep.subr.bf16.mxu0 %v7710
  %7833 = vmatpush2.bf16.msra.mxu0 %v7709
  %7834 = vmatprep.subr.bf16.mxu0 %v7706
  %7835 = vmatpush2.bf16.msra.mxu0 %v7705
  %7836 = vmatprep.subr.bf16.mxu0 %v7702
  %7837 = vmatpush2.bf16.msra.mxu0 %v7701
  %7838 = vmatprep.subr.bf16.mxu0 %v7698
  %7839 = vmatpush2.bf16.msra.mxu0 %v7697
  %7840 = vmatprep.subr.bf16.mxu0 %v7694
  %7841 = vmatpush2.bf16.msra.mxu0 %v7693
  %7842 = vmatprep.subr.bf16.mxu0 %v7690
  %7843 = vmatpush2.bf16.msra.mxu0 %v7689
  %7844 = vmatprep.subr.bf16.mxu0 %v7686
  %7845 = vmatpush2.bf16.msra.mxu0 %v7685
  %7846 = vmatprep.subr.bf16.mxu0 %v7682
  %7847 = vmatpush2.bf16.msra.mxu0 %v7681
  %7848 = vmatprep.mubr.bf16.mxu0 %v7390
  %7849 = vmatmul.mubr.bf16.gmra.mxu0 %v7389
  %v7850 = vpop.f32.mrf.mxu0
  %v7851 = vadd.f32 %v7387, %v7850
  %v7852 = vpop.f32.mrf.mxu0
  %v7853 = vadd.f32 %v7388, %v7852
  %v7854 = vpop.f32.mrf.mxu0
  %v7855 = vpop.f32.mrf.mxu0
  %7856 = vdwg.mxu0
  %v7857 = vxor.u32 %v7810, 2147483648
  %v7858 = vmul.f32 %v7857, 1.442695
  %v7859 = vpow.pop %v7858
  %v7860 = vadd.f32 %v7859, 1.0
  %v7861 = vrcp.pop %v7860
  %v7862 = vmul.f32 1.0, %v7861
  %v7863 = vxor.u32 %v7812, 2147483648
  %v7864 = vmul.f32 %v7863, 1.442695
  %v7865 = vpow.pop %v7864
  %v7866 = vadd.f32 %v7865, 1.0
  %v7867 = vrcp.pop %v7866
  %v7868 = vmul.f32 1.0, %v7867
  %v7869 = vtanh.pop %v7851
  %v7870 = vxor.u32 %v7853, 2147483648
  %v7871 = vmul.f32 %v7870, 1.442695
  %v7872 = vpow.pop %v7871
  %v7873 = vadd.f32 %v7872, 1.0
  %v7874 = vrcp.pop %v7873
  %v7875 = vmul.f32 1.0, %v7874
  %v7876 = vmul.f32 %v7868, %v7367
  %v7877 = vmul.f32 %v7862, %v7869
  %v7878 = vadd.f32 %v7876, %v7877
  %v7879 = vtanh.pop %v7878
  %v7880 = vmul.f32 %v7875, %v7879
  %v7881 = vmul.f32 %v7880, %v78
  %v7882 = vmul.f32 %v7880, %v83
  %v7884 = vrot.slane %v7880, 6
  %7886 = vst [vmem:[#allocation4 + $0x10] sm:$0xc] %v7884
  %7887 = vst [vmem:[#allocation4 + $0x8] sm:$0x30] %v7884
  %v7888 = vld [vmem:[#allocation2 + $0xc0] sm:$0xff]
  %v7889 = vld [vmem:[#allocation2 + $0xc8] sm:$0xff]
  %v7890 = vld [vmem:[#allocation2 + $0xd0] sm:$0xff]
  %v7891 = vld [vmem:[#allocation2 + $0xd8] sm:$0xff]
  %v7892 = vld [vmem:[%s5] sm:$0xff]
  %v7893 = vld [vmem:[%s5 + $0x8] sm:$0xff]
  %v7894 = vld [vmem:[%s5 + $0x10] sm:$0xff]
  %v7895 = vld [vmem:[%s5 + $0x18] sm:$0xff]
  %v7896 = vadd.f32 %v7888, %v7892
  %v7897 = vadd.f32 %v7889, %v7893
  %v7898 = vadd.f32 %v7890, %v7894
  %v7899 = vadd.f32 %v7891, %v7895
  %v7900 = vpack.c.bf16 %v7881, %v7881
  %v7901 = vpack.c.bf16 %v7882, %v7882
  %v7902 = vld [vmem:[%s6] sm:$0xff]
  %v7903 = vld [vmem:[%s6 + $0x8] sm:$0xff]
  %v7904 = vld [vmem:[%s6 + $0x10] sm:$0xff]
  %v7905 = vld [vmem:[%s6 + $0x18] sm:$0xff]
  %v7906 = vld [vmem:[%s6 + $0x20] sm:$0xff]
  %v7907 = vld [vmem:[%s6 + $0x28] sm:$0xff]
  %v7908 = vld [vmem:[%s6 + $0x30] sm:$0xff]
  %v7909 = vld [vmem:[%s6 + $0x38] sm:$0xff]
  %v7910 = vld [vmem:[%s6 + $0x40] sm:$0xff]
  %v7911 = vld [vmem:[%s6 + $0x48] sm:$0xff]
  %v7912 = vld [vmem:[%s6 + $0x50] sm:$0xff]
  %v7913 = vld [vmem:[%s6 + $0x58] sm:$0xff]
  %v7914 = vld [vmem:[%s6 + $0x60] sm:$0xff]
  %v7915 = vld [vmem:[%s6 + $0x68] sm:$0xff]
  %v7916 = vld [vmem:[%s6 + $0x70] sm:$0xff]
  %v7917 = vld [vmem:[%s6 + $0x78] sm:$0xff]
  %v7918 = vld [vmem:[%s6 + $0x80] sm:$0xff]
  %v7919 = vld [vmem:[%s6 + $0x88] sm:$0xff]
  %v7920 = vld [vmem:[%s6 + $0x90] sm:$0xff]
  %v7921 = vld [vmem:[%s6 + $0x98] sm:$0xff]
  %v7922 = vld [vmem:[%s6 + $0xa0] sm:$0xff]
  %v7923 = vld [vmem:[%s6 + $0xa8] sm:$0xff]
  %v7924 = vld [vmem:[%s6 + $0xb0] sm:$0xff]
  %v7925 = vld [vmem:[%s6 + $0xb8] sm:$0xff]
  %v7926 = vld [vmem:[%s6 + $0xc0] sm:$0xff]
  %v7927 = vld [vmem:[%s6 + $0xc8] sm:$0xff]
  %v7928 = vld [vmem:[%s6 + $0xd0] sm:$0xff]
  %v7929 = vld [vmem:[%s6 + $0xd8] sm:$0xff]
  %v7930 = vld [vmem:[%s6 + $0xe0] sm:$0xff]
  %v7931 = vld [vmem:[%s6 + $0xe8] sm:$0xff]
  %v7932 = vld [vmem:[%s6 + $0xf0] sm:$0xff]
  %v7933 = vld [vmem:[%s6 + $0xf8] sm:$0xff]
  %v7934 = vld [vmem:[%s6 + $0x100] sm:$0xff]
  %v7935 = vld [vmem:[%s6 + $0x108] sm:$0xff]
  %v7936 = vld [vmem:[%s6 + $0x110] sm:$0xff]
  %v7937 = vld [vmem:[%s6 + $0x118] sm:$0xff]
  %v7938 = vld [vmem:[%s6 + $0x120] sm:$0xff]
  %v7939 = vld [vmem:[%s6 + $0x128] sm:$0xff]
  %v7940 = vld [vmem:[%s6 + $0x130] sm:$0xff]
  %v7941 = vld [vmem:[%s6 + $0x138] sm:$0xff]
  %v7942 = vld [vmem:[%s6 + $0x140] sm:$0xff]
  %v7943 = vld [vmem:[%s6 + $0x148] sm:$0xff]
  %v7944 = vld [vmem:[%s6 + $0x150] sm:$0xff]
  %v7945 = vld [vmem:[%s6 + $0x158] sm:$0xff]
  %v7946 = vld [vmem:[%s6 + $0x160] sm:$0xff]
  %v7947 = vld [vmem:[%s6 + $0x168] sm:$0xff]
  %v7948 = vld [vmem:[%s6 + $0x170] sm:$0xff]
  %v7949 = vld [vmem:[%s6 + $0x178] sm:$0xff]
  %v7950 = vld [vmem:[%s6 + $0x180] sm:$0xff]
  %v7951 = vld [vmem:[%s6 + $0x188] sm:$0xff]
  %v7952 = vld [vmem:[%s6 + $0x190] sm:$0xff]
  %v7953 = vld [vmem:[%s6 + $0x198] sm:$0xff]
  %v7954 = vld [vmem:[%s6 + $0x1a0] sm:$0xff]
  %v7955 = vld [vmem:[%s6 + $0x1a8] sm:$0xff]
  %v7956 = vld [vmem:[%s6 + $0x1b0] sm:$0xff]
  %v7957 = vld [vmem:[%s6 + $0x1b8] sm:$0xff]
  %v7958 = vld [vmem:[%s6 + $0x1c0] sm:$0xff]
  %v7959 = vld [vmem:[%s6 + $0x1c8] sm:$0xff]
  %v7960 = vld [vmem:[%s6 + $0x1d0] sm:$0xff]
  %v7961 = vld [vmem:[%s6 + $0x1d8] sm:$0xff]
  %v7962 = vld [vmem:[%s6 + $0x1e0] sm:$0xff]
  %v7963 = vld [vmem:[%s6 + $0x1e8] sm:$0xff]
  %v7964 = vld [vmem:[%s6 + $0x1f0] sm:$0xff]
  %v7965 = vld [vmem:[%s6 + $0x1f8] sm:$0xff]
  %v8030 = vunpack.c.l.b16 %v7902
  %v8031 = vunpack.c.h.b16 %v7902
  %v8032 = vunpack.c.l.b16 %v7903
  %v8033 = vunpack.c.h.b16 %v7903
  %v8034 = vunpack.c.l.b16 %v7904
  %v8035 = vunpack.c.h.b16 %v7904
  %v8036 = vunpack.c.l.b16 %v7905
  %v8037 = vunpack.c.h.b16 %v7905
  %v8038 = vunpack.c.l.b16 %v7906
  %v8039 = vunpack.c.h.b16 %v7906
  %v8040 = vunpack.c.l.b16 %v7907
  %v8041 = vunpack.c.h.b16 %v7907
  %v8042 = vunpack.c.l.b16 %v7908
  %v8043 = vunpack.c.h.b16 %v7908
  %v8044 = vunpack.c.l.b16 %v7909
  %v8045 = vunpack.c.h.b16 %v7909
  %v8046 = vunpack.c.l.b16 %v7910
  %v8047 = vunpack.c.h.b16 %v7910
  %v8048 = vunpack.c.l.b16 %v7911
  %v8049 = vunpack.c.h.b16 %v7911
  %v8050 = vunpack.c.l.b16 %v7912
  %v8051 = vunpack.c.h.b16 %v7912
  %v8052 = vunpack.c.l.b16 %v7913
  %v8053 = vunpack.c.h.b16 %v7913
  %v8054 = vunpack.c.l.b16 %v7914
  %v8055 = vunpack.c.h.b16 %v7914
  %v8056 = vunpack.c.l.b16 %v7915
  %v8057 = vunpack.c.h.b16 %v7915
  %v8058 = vunpack.c.l.b16 %v7916
  %v8059 = vunpack.c.h.b16 %v7916
  %v8060 = vunpack.c.l.b16 %v7917
  %v8061 = vunpack.c.h.b16 %v7917
  %v8062 = vunpack.c.l.b16 %v7918
  %v8063 = vunpack.c.h.b16 %v7918
  %v8064 = vunpack.c.l.b16 %v7919
  %v8065 = vunpack.c.h.b16 %v7919
  %v8066 = vunpack.c.l.b16 %v7920
  %v8067 = vunpack.c.h.b16 %v7920
  %v8068 = vunpack.c.l.b16 %v7921
  %v8069 = vunpack.c.h.b16 %v7921
  %v8070 = vunpack.c.l.b16 %v7922
  %v8071 = vunpack.c.h.b16 %v7922
  %v8072 = vunpack.c.l.b16 %v7923
  %v8073 = vunpack.c.h.b16 %v7923
  %v8074 = vunpack.c.l.b16 %v7924
  %v8075 = vunpack.c.h.b16 %v7924
  %v8076 = vunpack.c.l.b16 %v7925
  %v8077 = vunpack.c.h.b16 %v7925
  %v8078 = vunpack.c.l.b16 %v7926
  %v8079 = vunpack.c.h.b16 %v7926
  %v8080 = vunpack.c.l.b16 %v7927
  %v8081 = vunpack.c.h.b16 %v7927
  %v8082 = vunpack.c.l.b16 %v7928
  %v8083 = vunpack.c.h.b16 %v7928
  %v8084 = vunpack.c.l.b16 %v7929
  %v8085 = vunpack.c.h.b16 %v7929
  %v8086 = vunpack.c.l.b16 %v7930
  %v8087 = vunpack.c.h.b16 %v7930
  %v8088 = vunpack.c.l.b16 %v7931
  %v8089 = vunpack.c.h.b16 %v7931
  %v8090 = vunpack.c.l.b16 %v7932
  %v8091 = vunpack.c.h.b16 %v7932
  %v8092 = vunpack.c.l.b16 %v7933
  %v8093 = vunpack.c.h.b16 %v7933
  %v8094 = vunpack.c.l.b16 %v7934
  %v8095 = vunpack.c.h.b16 %v7934
  %v8096 = vunpack.c.l.b16 %v7935
  %v8097 = vunpack.c.h.b16 %v7935
  %v8098 = vunpack.c.l.b16 %v7936
  %v8099 = vunpack.c.h.b16 %v7936
  %v8100 = vunpack.c.l.b16 %v7937
  %v8101 = vunpack.c.h.b16 %v7937
  %v8102 = vunpack.c.l.b16 %v7938
  %v8103 = vunpack.c.h.b16 %v7938
  %v8104 = vunpack.c.l.b16 %v7939
  %v8105 = vunpack.c.h.b16 %v7939
  %v8106 = vunpack.c.l.b16 %v7940
  %v8107 = vunpack.c.h.b16 %v7940
  %v8108 = vunpack.c.l.b16 %v7941
  %v8109 = vunpack.c.h.b16 %v7941
  %v8110 = vunpack.c.l.b16 %v7942
  %v8111 = vunpack.c.h.b16 %v7942
  %v8112 = vunpack.c.l.b16 %v7943
  %v8113 = vunpack.c.h.b16 %v7943
  %v8114 = vunpack.c.l.b16 %v7944
  %v8115 = vunpack.c.h.b16 %v7944
  %v8116 = vunpack.c.l.b16 %v7945
  %v8117 = vunpack.c.h.b16 %v7945
  %v8118 = vunpack.c.l.b16 %v7946
  %v8119 = vunpack.c.h.b16 %v7946
  %v8120 = vunpack.c.l.b16 %v7947
  %v8121 = vunpack.c.h.b16 %v7947
  %v8122 = vunpack.c.l.b16 %v7948
  %v8123 = vunpack.c.h.b16 %v7948
  %v8124 = vunpack.c.l.b16 %v7949
  %v8125 = vunpack.c.h.b16 %v7949
  %v8126 = vunpack.c.l.b16 %v7950
  %v8127 = vunpack.c.h.b16 %v7950
  %v8128 = vunpack.c.l.b16 %v7951
  %v8129 = vunpack.c.h.b16 %v7951
  %v8130 = vunpack.c.l.b16 %v7952
  %v8131 = vunpack.c.h.b16 %v7952
  %v8132 = vunpack.c.l.b16 %v7953
  %v8133 = vunpack.c.h.b16 %v7953
  %v8134 = vunpack.c.l.b16 %v7954
  %v8135 = vunpack.c.h.b16 %v7954
  %v8136 = vunpack.c.l.b16 %v7955
  %v8137 = vunpack.c.h.b16 %v7955
  %v8138 = vunpack.c.l.b16 %v7956
  %v8139 = vunpack.c.h.b16 %v7956
  %v8140 = vunpack.c.l.b16 %v7957
  %v8141 = vunpack.c.h.b16 %v7957
  %v8142 = vunpack.c.l.b16 %v7958
  %v8143 = vunpack.c.h.b16 %v7958
  %v8144 = vunpack.c.l.b16 %v7959
  %v8145 = vunpack.c.h.b16 %v7959
  %v8146 = vunpack.c.l.b16 %v7960
  %v8147 = vunpack.c.h.b16 %v7960
  %v8148 = vunpack.c.l.b16 %v7961
  %v8149 = vunpack.c.h.b16 %v7961
  %v8150 = vunpack.c.l.b16 %v7962
  %v8151 = vunpack.c.h.b16 %v7962
  %v8152 = vunpack.c.l.b16 %v7963
  %v8153 = vunpack.c.h.b16 %v7963
  %v8154 = vunpack.c.l.b16 %v7964
  %v8155 = vunpack.c.h.b16 %v7964
  %v8156 = vunpack.c.l.b16 %v7965
  %v8157 = vunpack.c.h.b16 %v7965
  %v8158 = vpack.c.b16 %v8034, %v8030
  %v8159 = vpack.c.b16 %v8035, %v8031
  %v8160 = vpack.c.b16 %v8036, %v8032
  %v8161 = vpack.c.b16 %v8037, %v8033
  %v8162 = vpack.c.b16 %v8042, %v8038
  %v8163 = vpack.c.b16 %v8043, %v8039
  %v8164 = vpack.c.b16 %v8044, %v8040
  %v8165 = vpack.c.b16 %v8045, %v8041
  %v8166 = vpack.c.b16 %v8050, %v8046
  %v8167 = vpack.c.b16 %v8051, %v8047
  %v8168 = vpack.c.b16 %v8052, %v8048
  %v8169 = vpack.c.b16 %v8053, %v8049
  %v8170 = vpack.c.b16 %v8058, %v8054
  %v8171 = vpack.c.b16 %v8059, %v8055
  %v8172 = vpack.c.b16 %v8060, %v8056
  %v8173 = vpack.c.b16 %v8061, %v8057
  %v8174 = vpack.c.b16 %v8066, %v8062
  %v8175 = vpack.c.b16 %v8067, %v8063
  %v8176 = vpack.c.b16 %v8068, %v8064
  %v8177 = vpack.c.b16 %v8069, %v8065
  %v8178 = vpack.c.b16 %v8074, %v8070
  %v8179 = vpack.c.b16 %v8075, %v8071
  %v8180 = vpack.c.b16 %v8076, %v8072
  %v8181 = vpack.c.b16 %v8077, %v8073
  %v8182 = vpack.c.b16 %v8082, %v8078
  %v8183 = vpack.c.b16 %v8083, %v8079
  %v8184 = vpack.c.b16 %v8084, %v8080
  %v8185 = vpack.c.b16 %v8085, %v8081
  %v8186 = vpack.c.b16 %v8090, %v8086
  %v8187 = vpack.c.b16 %v8091, %v8087
  %v8188 = vpack.c.b16 %v8092, %v8088
  %v8189 = vpack.c.b16 %v8093, %v8089
  %v8190 = vpack.c.b16 %v8098, %v8094
  %v8191 = vpack.c.b16 %v8099, %v8095
  %v8192 = vpack.c.b16 %v8100, %v8096
  %v8193 = vpack.c.b16 %v8101, %v8097
  %v8194 = vpack.c.b16 %v8106, %v8102
  %v8195 = vpack.c.b16 %v8107, %v8103
  %v8196 = vpack.c.b16 %v8108, %v8104
  %v8197 = vpack.c.b16 %v8109, %v8105
  %v8198 = vpack.c.b16 %v8114, %v8110
  %v8199 = vpack.c.b16 %v8115, %v8111
  %v8200 = vpack.c.b16 %v8116, %v8112
  %v8201 = vpack.c.b16 %v8117, %v8113
  %v8202 = vpack.c.b16 %v8122, %v8118
  %v8203 = vpack.c.b16 %v8123, %v8119
  %v8204 = vpack.c.b16 %v8124, %v8120
  %v8205 = vpack.c.b16 %v8125, %v8121
  %v8206 = vpack.c.b16 %v8130, %v8126
  %v8207 = vpack.c.b16 %v8131, %v8127
  %v8208 = vpack.c.b16 %v8132, %v8128
  %v8209 = vpack.c.b16 %v8133, %v8129
  %v8210 = vpack.c.b16 %v8138, %v8134
  %v8211 = vpack.c.b16 %v8139, %v8135
  %v8212 = vpack.c.b16 %v8140, %v8136
  %v8213 = vpack.c.b16 %v8141, %v8137
  %v8214 = vpack.c.b16 %v8146, %v8142
  %v8215 = vpack.c.b16 %v8147, %v8143
  %v8216 = vpack.c.b16 %v8148, %v8144
  %v8217 = vpack.c.b16 %v8149, %v8145
  %v8218 = vpack.c.b16 %v8154, %v8150
  %v8219 = vpack.c.b16 %v8155, %v8151
  %v8220 = vpack.c.b16 %v8156, %v8152
  %v8221 = vpack.c.b16 %v8157, %v8153
  %8286 = vmatprep.subr.bf16.mxu0 %v8187
  %8287 = vmatpush1.bf16.msra.mxu0 %v8186
  %8288 = vmatprep.subr.bf16.mxu0 %v8183
  %8289 = vmatpush1.bf16.msra.mxu0 %v8182
  %8290 = vmatprep.subr.bf16.mxu0 %v8179
  %8291 = vmatpush1.bf16.msra.mxu0 %v8178
  %8292 = vmatprep.subr.bf16.mxu0 %v8175
  %8293 = vmatpush1.bf16.msra.mxu0 %v8174
  %8294 = vmatprep.subr.bf16.mxu0 %v8171
  %8295 = vmatpush1.bf16.msra.mxu0 %v8170
  %8296 = vmatprep.subr.bf16.mxu0 %v8167
  %8297 = vmatpush1.bf16.msra.mxu0 %v8166
  %8298 = vmatprep.subr.bf16.mxu0 %v8163
  %8299 = vmatpush1.bf16.msra.mxu0 %v8162
  %8300 = vmatprep.subr.bf16.mxu0 %v8159
  %8301 = vmatpush1.bf16.msra.mxu0 %v8158
  %8302 = vmatprep.subr.bf16.mxu0 %v8219
  %8303 = vmatpush2.bf16.msra.mxu0 %v8218
  %8304 = vmatprep.subr.bf16.mxu0 %v8215
  %8305 = vmatpush2.bf16.msra.mxu0 %v8214
  %8306 = vmatprep.subr.bf16.mxu0 %v8211
  %8307 = vmatpush2.bf16.msra.mxu0 %v8210
  %8308 = vmatprep.subr.bf16.mxu0 %v8207
  %8309 = vmatpush2.bf16.msra.mxu0 %v8206
  %8310 = vmatprep.subr.bf16.mxu0 %v8203
  %8311 = vmatpush2.bf16.msra.mxu0 %v8202
  %8312 = vmatprep.subr.bf16.mxu0 %v8199
  %8313 = vmatpush2.bf16.msra.mxu0 %v8198
  %8314 = vmatprep.subr.bf16.mxu0 %v8195
  %8315 = vmatpush2.bf16.msra.mxu0 %v8194
  %8316 = vmatprep.subr.bf16.mxu0 %v8191
  %8317 = vmatpush2.bf16.msra.mxu0 %v8190
  %8318 = vmatprep.mubr.bf16.mxu0 %v7901
  %8319 = vmatmul.mubr.bf16.gmra.mxu0 %v7900
  %v8320 = vpop.f32.mrf.mxu0
  %v8321 = vadd.f32 %v7896, %v8320
  %v8322 = vpop.f32.mrf.mxu0
  %v8323 = vadd.f32 %v7897, %v8322
  %v8324 = vpop.f32.mrf.mxu0
  %v8325 = vpop.f32.mrf.mxu0
  %8326 = vdwg.mxu0
  %8327 = vmatprep.subr.bf16.mxu0 %v8189
  %8328 = vmatpush1.bf16.msra.mxu0 %v8188
  %8329 = vmatprep.subr.bf16.mxu0 %v8185
  %8330 = vmatpush1.bf16.msra.mxu0 %v8184
  %8331 = vmatprep.subr.bf16.mxu0 %v8181
  %8332 = vmatpush1.bf16.msra.mxu0 %v8180
  %8333 = vmatprep.subr.bf16.mxu0 %v8177
  %8334 = vmatpush1.bf16.msra.mxu0 %v8176
  %8335 = vmatprep.subr.bf16.mxu0 %v8173
  %8336 = vmatpush1.bf16.msra.mxu0 %v8172
  %8337 = vmatprep.subr.bf16.mxu0 %v8169
  %8338 = vmatpush1.bf16.msra.mxu0 %v8168
  %8339 = vmatprep.subr.bf16.mxu0 %v8165
  %8340 = vmatpush1.bf16.msra.mxu0 %v8164
  %8341 = vmatprep.subr.bf16.mxu0 %v8161
  %8342 = vmatpush1.bf16.msra.mxu0 %v8160
  %8343 = vmatprep.subr.bf16.mxu0 %v8221
  %8344 = vmatpush2.bf16.msra.mxu0 %v8220
  %8345 = vmatprep.subr.bf16.mxu0 %v8217
  %8346 = vmatpush2.bf16.msra.mxu0 %v8216
  %8347 = vmatprep.subr.bf16.mxu0 %v8213
  %8348 = vmatpush2.bf16.msra.mxu0 %v8212
  %8349 = vmatprep.subr.bf16.mxu0 %v8209
  %8350 = vmatpush2.bf16.msra.mxu0 %v8208
  %8351 = vmatprep.subr.bf16.mxu0 %v8205
  %8352 = vmatpush2.bf16.msra.mxu0 %v8204
  %8353 = vmatprep.subr.bf16.mxu0 %v8201
  %8354 = vmatpush2.bf16.msra.mxu0 %v8200
  %8355 = vmatprep.subr.bf16.mxu0 %v8197
  %8356 = vmatpush2.bf16.msra.mxu0 %v8196
  %8357 = vmatprep.subr.bf16.mxu0 %v8193
  %8358 = vmatpush2.bf16.msra.mxu0 %v8192
  %8359 = vmatprep.mubr.bf16.mxu0 %v7901
  %8360 = vmatmul.mubr.bf16.gmra.mxu0 %v7900
  %v8361 = vpop.f32.mrf.mxu0
  %v8362 = vadd.f32 %v7898, %v8361
  %v8363 = vpop.f32.mrf.mxu0
  %v8364 = vadd.f32 %v7899, %v8363
  %v8365 = vpop.f32.mrf.mxu0
  %v8366 = vpop.f32.mrf.mxu0
  %8367 = vdwg.mxu0
  %v8368 = vxor.u32 %v8321, 2147483648
  %v8369 = vmul.f32 %v8368, 1.442695
  %v8370 = vpow.pop %v8369
  %v8371 = vadd.f32 %v8370, 1.0
  %v8372 = vrcp.pop %v8371
  %v8373 = vmul.f32 1.0, %v8372
  %v8374 = vxor.u32 %v8323, 2147483648
  %v8375 = vmul.f32 %v8374, 1.442695
  %v8376 = vpow.pop %v8375
  %v8377 = vadd.f32 %v8376, 1.0
  %v8378 = vrcp.pop %v8377
  %v8379 = vmul.f32 1.0, %v8378
  %v8380 = vtanh.pop %v8362
  %v8381 = vxor.u32 %v8364, 2147483648
  %v8382 = vmul.f32 %v8381, 1.442695
  %v8383 = vpow.pop %v8382
  %v8384 = vadd.f32 %v8383, 1.0
  %v8385 = vrcp.pop %v8384
  %v8386 = vmul.f32 1.0, %v8385
  %v8387 = vmul.f32 %v8379, %v7878
  %v8388 = vmul.f32 %v8373, %v8380
  %v8389 = vadd.f32 %v8387, %v8388
  %v8390 = vtanh.pop %v8389
  %v8391 = vmul.f32 %v8386, %v8390
  %v8392 = vmul.f32 %v8391, %v78
  %v8393 = vmul.f32 %v8391, %v83
  %v8395 = vrot.slane %v8391, 4
  %8397 = vst [vmem:[#allocation4 + $0x10] sm:$0x30] %v8395
  %8398 = vst [vmem:[#allocation4 + $0x8] sm:$0xc] %v8391
  %v8399 = vld [vmem:[#allocation2 + $0xe0] sm:$0xff]
  %v8400 = vld [vmem:[#allocation2 + $0xe8] sm:$0xff]
  %v8401 = vld [vmem:[#allocation2 + $0xf0] sm:$0xff]
  %v8402 = vld [vmem:[#allocation2 + $0xf8] sm:$0xff]
  %v8403 = vld [vmem:[%s5] sm:$0xff]
  %v8404 = vld [vmem:[%s5 + $0x8] sm:$0xff]
  %v8405 = vld [vmem:[%s5 + $0x10] sm:$0xff]
  %v8406 = vld [vmem:[%s5 + $0x18] sm:$0xff]
  %v8407 = vadd.f32 %v8399, %v8403
  %v8408 = vadd.f32 %v8400, %v8404
  %v8409 = vadd.f32 %v8401, %v8405
  %v8410 = vadd.f32 %v8402, %v8406
  %v8411 = vpack.c.bf16 %v8392, %v8392
  %v8412 = vpack.c.bf16 %v8393, %v8393
  %v8413 = vld [vmem:[%s6] sm:$0xff]
  %v8414 = vld [vmem:[%s6 + $0x8] sm:$0xff]
  %v8415 = vld [vmem:[%s6 + $0x10] sm:$0xff]
  %v8416 = vld [vmem:[%s6 + $0x18] sm:$0xff]
  %v8417 = vld [vmem:[%s6 + $0x20] sm:$0xff]
  %v8418 = vld [vmem:[%s6 + $0x28] sm:$0xff]
  %v8419 = vld [vmem:[%s6 + $0x30] sm:$0xff]
  %v8420 = vld [vmem:[%s6 + $0x38] sm:$0xff]
  %v8421 = vld [vmem:[%s6 + $0x40] sm:$0xff]
  %v8422 = vld [vmem:[%s6 + $0x48] sm:$0xff]
  %v8423 = vld [vmem:[%s6 + $0x50] sm:$0xff]
  %v8424 = vld [vmem:[%s6 + $0x58] sm:$0xff]
  %v8425 = vld [vmem:[%s6 + $0x60] sm:$0xff]
  %v8426 = vld [vmem:[%s6 + $0x68] sm:$0xff]
  %v8427 = vld [vmem:[%s6 + $0x70] sm:$0xff]
  %v8428 = vld [vmem:[%s6 + $0x78] sm:$0xff]
  %v8429 = vld [vmem:[%s6 + $0x80] sm:$0xff]
  %v8430 = vld [vmem:[%s6 + $0x88] sm:$0xff]
  %v8431 = vld [vmem:[%s6 + $0x90] sm:$0xff]
  %v8432 = vld [vmem:[%s6 + $0x98] sm:$0xff]
  %v8433 = vld [vmem:[%s6 + $0xa0] sm:$0xff]
  %v8434 = vld [vmem:[%s6 + $0xa8] sm:$0xff]
  %v8435 = vld [vmem:[%s6 + $0xb0] sm:$0xff]
  %v8436 = vld [vmem:[%s6 + $0xb8] sm:$0xff]
  %v8437 = vld [vmem:[%s6 + $0xc0] sm:$0xff]
  %v8438 = vld [vmem:[%s6 + $0xc8] sm:$0xff]
  %v8439 = vld [vmem:[%s6 + $0xd0] sm:$0xff]
  %v8440 = vld [vmem:[%s6 + $0xd8] sm:$0xff]
  %v8441 = vld [vmem:[%s6 + $0xe0] sm:$0xff]
  %v8442 = vld [vmem:[%s6 + $0xe8] sm:$0xff]
  %v8443 = vld [vmem:[%s6 + $0xf0] sm:$0xff]
  %v8444 = vld [vmem:[%s6 + $0xf8] sm:$0xff]
  %v8445 = vld [vmem:[%s6 + $0x100] sm:$0xff]
  %v8446 = vld [vmem:[%s6 + $0x108] sm:$0xff]
  %v8447 = vld [vmem:[%s6 + $0x110] sm:$0xff]
  %v8448 = vld [vmem:[%s6 + $0x118] sm:$0xff]
  %v8449 = vld [vmem:[%s6 + $0x120] sm:$0xff]
  %v8450 = vld [vmem:[%s6 + $0x128] sm:$0xff]
  %v8451 = vld [vmem:[%s6 + $0x130] sm:$0xff]
  %v8452 = vld [vmem:[%s6 + $0x138] sm:$0xff]
  %v8453 = vld [vmem:[%s6 + $0x140] sm:$0xff]
  %v8454 = vld [vmem:[%s6 + $0x148] sm:$0xff]
  %v8455 = vld [vmem:[%s6 + $0x150] sm:$0xff]
  %v8456 = vld [vmem:[%s6 + $0x158] sm:$0xff]
  %v8457 = vld [vmem:[%s6 + $0x160] sm:$0xff]
  %v8458 = vld [vmem:[%s6 + $0x168] sm:$0xff]
  %v8459 = vld [vmem:[%s6 + $0x170] sm:$0xff]
  %v8460 = vld [vmem:[%s6 + $0x178] sm:$0xff]
  %v8461 = vld [vmem:[%s6 + $0x180] sm:$0xff]
  %v8462 = vld [vmem:[%s6 + $0x188] sm:$0xff]
  %v8463 = vld [vmem:[%s6 + $0x190] sm:$0xff]
  %v8464 = vld [vmem:[%s6 + $0x198] sm:$0xff]
  %v8465 = vld [vmem:[%s6 + $0x1a0] sm:$0xff]
  %v8466 = vld [vmem:[%s6 + $0x1a8] sm:$0xff]
  %v8467 = vld [vmem:[%s6 + $0x1b0] sm:$0xff]
  %v8468 = vld [vmem:[%s6 + $0x1b8] sm:$0xff]
  %v8469 = vld [vmem:[%s6 + $0x1c0] sm:$0xff]
  %v8470 = vld [vmem:[%s6 + $0x1c8] sm:$0xff]
  %v8471 = vld [vmem:[%s6 + $0x1d0] sm:$0xff]
  %v8472 = vld [vmem:[%s6 + $0x1d8] sm:$0xff]
  %v8473 = vld [vmem:[%s6 + $0x1e0] sm:$0xff]
  %v8474 = vld [vmem:[%s6 + $0x1e8] sm:$0xff]
  %v8475 = vld [vmem:[%s6 + $0x1f0] sm:$0xff]
  %v8476 = vld [vmem:[%s6 + $0x1f8] sm:$0xff]
  %v8541 = vunpack.c.l.b16 %v8413
  %v8542 = vunpack.c.h.b16 %v8413
  %v8543 = vunpack.c.l.b16 %v8414
  %v8544 = vunpack.c.h.b16 %v8414
  %v8545 = vunpack.c.l.b16 %v8415
  %v8546 = vunpack.c.h.b16 %v8415
  %v8547 = vunpack.c.l.b16 %v8416
  %v8548 = vunpack.c.h.b16 %v8416
  %v8549 = vunpack.c.l.b16 %v8417
  %v8550 = vunpack.c.h.b16 %v8417
  %v8551 = vunpack.c.l.b16 %v8418
  %v8552 = vunpack.c.h.b16 %v8418
  %v8553 = vunpack.c.l.b16 %v8419
  %v8554 = vunpack.c.h.b16 %v8419
  %v8555 = vunpack.c.l.b16 %v8420
  %v8556 = vunpack.c.h.b16 %v8420
  %v8557 = vunpack.c.l.b16 %v8421
  %v8558 = vunpack.c.h.b16 %v8421
  %v8559 = vunpack.c.l.b16 %v8422
  %v8560 = vunpack.c.h.b16 %v8422
  %v8561 = vunpack.c.l.b16 %v8423
  %v8562 = vunpack.c.h.b16 %v8423
  %v8563 = vunpack.c.l.b16 %v8424
  %v8564 = vunpack.c.h.b16 %v8424
  %v8565 = vunpack.c.l.b16 %v8425
  %v8566 = vunpack.c.h.b16 %v8425
  %v8567 = vunpack.c.l.b16 %v8426
  %v8568 = vunpack.c.h.b16 %v8426
  %v8569 = vunpack.c.l.b16 %v8427
  %v8570 = vunpack.c.h.b16 %v8427
  %v8571 = vunpack.c.l.b16 %v8428
  %v8572 = vunpack.c.h.b16 %v8428
  %v8573 = vunpack.c.l.b16 %v8429
  %v8574 = vunpack.c.h.b16 %v8429
  %v8575 = vunpack.c.l.b16 %v8430
  %v8576 = vunpack.c.h.b16 %v8430
  %v8577 = vunpack.c.l.b16 %v8431
  %v8578 = vunpack.c.h.b16 %v8431
  %v8579 = vunpack.c.l.b16 %v8432
  %v8580 = vunpack.c.h.b16 %v8432
  %v8581 = vunpack.c.l.b16 %v8433
  %v8582 = vunpack.c.h.b16 %v8433
  %v8583 = vunpack.c.l.b16 %v8434
  %v8584 = vunpack.c.h.b16 %v8434
  %v8585 = vunpack.c.l.b16 %v8435
  %v8586 = vunpack.c.h.b16 %v8435
  %v8587 = vunpack.c.l.b16 %v8436
  %v8588 = vunpack.c.h.b16 %v8436
  %v8589 = vunpack.c.l.b16 %v8437
  %v8590 = vunpack.c.h.b16 %v8437
  %v8591 = vunpack.c.l.b16 %v8438
  %v8592 = vunpack.c.h.b16 %v8438
  %v8593 = vunpack.c.l.b16 %v8439
  %v8594 = vunpack.c.h.b16 %v8439
  %v8595 = vunpack.c.l.b16 %v8440
  %v8596 = vunpack.c.h.b16 %v8440
  %v8597 = vunpack.c.l.b16 %v8441
  %v8598 = vunpack.c.h.b16 %v8441
  %v8599 = vunpack.c.l.b16 %v8442
  %v8600 = vunpack.c.h.b16 %v8442
  %v8601 = vunpack.c.l.b16 %v8443
  %v8602 = vunpack.c.h.b16 %v8443
  %v8603 = vunpack.c.l.b16 %v8444
  %v8604 = vunpack.c.h.b16 %v8444
  %v8605 = vunpack.c.l.b16 %v8445
  %v8606 = vunpack.c.h.b16 %v8445
  %v8607 = vunpack.c.l.b16 %v8446
  %v8608 = vunpack.c.h.b16 %v8446
  %v8609 = vunpack.c.l.b16 %v8447
  %v8610 = vunpack.c.h.b16 %v8447
  %v8611 = vunpack.c.l.b16 %v8448
  %v8612 = vunpack.c.h.b16 %v8448
  %v8613 = vunpack.c.l.b16 %v8449
  %v8614 = vunpack.c.h.b16 %v8449
  %v8615 = vunpack.c.l.b16 %v8450
  %v8616 = vunpack.c.h.b16 %v8450
  %v8617 = vunpack.c.l.b16 %v8451
  %v8618 = vunpack.c.h.b16 %v8451
  %v8619 = vunpack.c.l.b16 %v8452
  %v8620 = vunpack.c.h.b16 %v8452
  %v8621 = vunpack.c.l.b16 %v8453
  %v8622 = vunpack.c.h.b16 %v8453
  %v8623 = vunpack.c.l.b16 %v8454
  %v8624 = vunpack.c.h.b16 %v8454
  %v8625 = vunpack.c.l.b16 %v8455
  %v8626 = vunpack.c.h.b16 %v8455
  %v8627 = vunpack.c.l.b16 %v8456
  %v8628 = vunpack.c.h.b16 %v8456
  %v8629 = vunpack.c.l.b16 %v8457
  %v8630 = vunpack.c.h.b16 %v8457
  %v8631 = vunpack.c.l.b16 %v8458
  %v8632 = vunpack.c.h.b16 %v8458
  %v8633 = vunpack.c.l.b16 %v8459
  %v8634 = vunpack.c.h.b16 %v8459
  %v8635 = vunpack.c.l.b16 %v8460
  %v8636 = vunpack.c.h.b16 %v8460
  %v8637 = vunpack.c.l.b16 %v8461
  %v8638 = vunpack.c.h.b16 %v8461
  %v8639 = vunpack.c.l.b16 %v8462
  %v8640 = vunpack.c.h.b16 %v8462
  %v8641 = vunpack.c.l.b16 %v8463
  %v8642 = vunpack.c.h.b16 %v8463
  %v8643 = vunpack.c.l.b16 %v8464
  %v8644 = vunpack.c.h.b16 %v8464
  %v8645 = vunpack.c.l.b16 %v8465
  %v8646 = vunpack.c.h.b16 %v8465
  %v8647 = vunpack.c.l.b16 %v8466
  %v8648 = vunpack.c.h.b16 %v8466
  %v8649 = vunpack.c.l.b16 %v8467
  %v8650 = vunpack.c.h.b16 %v8467
  %v8651 = vunpack.c.l.b16 %v8468
  %v8652 = vunpack.c.h.b16 %v8468
  %v8653 = vunpack.c.l.b16 %v8469
  %v8654 = vunpack.c.h.b16 %v8469
  %v8655 = vunpack.c.l.b16 %v8470
  %v8656 = vunpack.c.h.b16 %v8470
  %v8657 = vunpack.c.l.b16 %v8471
  %v8658 = vunpack.c.h.b16 %v8471
  %v8659 = vunpack.c.l.b16 %v8472
  %v8660 = vunpack.c.h.b16 %v8472
  %v8661 = vunpack.c.l.b16 %v8473
  %v8662 = vunpack.c.h.b16 %v8473
  %v8663 = vunpack.c.l.b16 %v8474
  %v8664 = vunpack.c.h.b16 %v8474
  %v8665 = vunpack.c.l.b16 %v8475
  %v8666 = vunpack.c.h.b16 %v8475
  %v8667 = vunpack.c.l.b16 %v8476
  %v8668 = vunpack.c.h.b16 %v8476
  %v8669 = vpack.c.b16 %v8545, %v8541
  %v8670 = vpack.c.b16 %v8546, %v8542
  %v8671 = vpack.c.b16 %v8547, %v8543
  %v8672 = vpack.c.b16 %v8548, %v8544
  %v8673 = vpack.c.b16 %v8553, %v8549
  %v8674 = vpack.c.b16 %v8554, %v8550
  %v8675 = vpack.c.b16 %v8555, %v8551
  %v8676 = vpack.c.b16 %v8556, %v8552
  %v8677 = vpack.c.b16 %v8561, %v8557
  %v8678 = vpack.c.b16 %v8562, %v8558
  %v8679 = vpack.c.b16 %v8563, %v8559
  %v8680 = vpack.c.b16 %v8564, %v8560
  %v8681 = vpack.c.b16 %v8569, %v8565
  %v8682 = vpack.c.b16 %v8570, %v8566
  %v8683 = vpack.c.b16 %v8571, %v8567
  %v8684 = vpack.c.b16 %v8572, %v8568
  %v8685 = vpack.c.b16 %v8577, %v8573
  %v8686 = vpack.c.b16 %v8578, %v8574
  %v8687 = vpack.c.b16 %v8579, %v8575
  %v8688 = vpack.c.b16 %v8580, %v8576
  %v8689 = vpack.c.b16 %v8585, %v8581
  %v8690 = vpack.c.b16 %v8586, %v8582
  %v8691 = vpack.c.b16 %v8587, %v8583
  %v8692 = vpack.c.b16 %v8588, %v8584
  %v8693 = vpack.c.b16 %v8593, %v8589
  %v8694 = vpack.c.b16 %v8594, %v8590
  %v8695 = vpack.c.b16 %v8595, %v8591
  %v8696 = vpack.c.b16 %v8596, %v8592
  %v8697 = vpack.c.b16 %v8601, %v8597
  %v8698 = vpack.c.b16 %v8602, %v8598
  %v8699 = vpack.c.b16 %v8603, %v8599
  %v8700 = vpack.c.b16 %v8604, %v8600
  %v8701 = vpack.c.b16 %v8609, %v8605
  %v8702 = vpack.c.b16 %v8610, %v8606
  %v8703 = vpack.c.b16 %v8611, %v8607
  %v8704 = vpack.c.b16 %v8612, %v8608
  %v8705 = vpack.c.b16 %v8617, %v8613
  %v8706 = vpack.c.b16 %v8618, %v8614
  %v8707 = vpack.c.b16 %v8619, %v8615
  %v8708 = vpack.c.b16 %v8620, %v8616
  %v8709 = vpack.c.b16 %v8625, %v8621
  %v8710 = vpack.c.b16 %v8626, %v8622
  %v8711 = vpack.c.b16 %v8627, %v8623
  %v8712 = vpack.c.b16 %v8628, %v8624
  %v8713 = vpack.c.b16 %v8633, %v8629
  %v8714 = vpack.c.b16 %v8634, %v8630
  %v8715 = vpack.c.b16 %v8635, %v8631
  %v8716 = vpack.c.b16 %v8636, %v8632
  %v8717 = vpack.c.b16 %v8641, %v8637
  %v8718 = vpack.c.b16 %v8642, %v8638
  %v8719 = vpack.c.b16 %v8643, %v8639
  %v8720 = vpack.c.b16 %v8644, %v8640
  %v8721 = vpack.c.b16 %v8649, %v8645
  %v8722 = vpack.c.b16 %v8650, %v8646
  %v8723 = vpack.c.b16 %v8651, %v8647
  %v8724 = vpack.c.b16 %v8652, %v8648
  %v8725 = vpack.c.b16 %v8657, %v8653
  %v8726 = vpack.c.b16 %v8658, %v8654
  %v8727 = vpack.c.b16 %v8659, %v8655
  %v8728 = vpack.c.b16 %v8660, %v8656
  %v8729 = vpack.c.b16 %v8665, %v8661
  %v8730 = vpack.c.b16 %v8666, %v8662
  %v8731 = vpack.c.b16 %v8667, %v8663
  %v8732 = vpack.c.b16 %v8668, %v8664
  %8797 = vmatprep.subr.bf16.mxu0 %v8698
  %8798 = vmatpush1.bf16.msra.mxu0 %v8697
  %8799 = vmatprep.subr.bf16.mxu0 %v8694
  %8800 = vmatpush1.bf16.msra.mxu0 %v8693
  %8801 = vmatprep.subr.bf16.mxu0 %v8690
  %8802 = vmatpush1.bf16.msra.mxu0 %v8689
  %8803 = vmatprep.subr.bf16.mxu0 %v8686
  %8804 = vmatpush1.bf16.msra.mxu0 %v8685
  %8805 = vmatprep.subr.bf16.mxu0 %v8682
  %8806 = vmatpush1.bf16.msra.mxu0 %v8681
  %8807 = vmatprep.subr.bf16.mxu0 %v8678
  %8808 = vmatpush1.bf16.msra.mxu0 %v8677
  %8809 = vmatprep.subr.bf16.mxu0 %v8674
  %8810 = vmatpush1.bf16.msra.mxu0 %v8673
  %8811 = vmatprep.subr.bf16.mxu0 %v8670
  %8812 = vmatpush1.bf16.msra.mxu0 %v8669
  %8813 = vmatprep.subr.bf16.mxu0 %v8730
  %8814 = vmatpush2.bf16.msra.mxu0 %v8729
  %8815 = vmatprep.subr.bf16.mxu0 %v8726
  %8816 = vmatpush2.bf16.msra.mxu0 %v8725
  %8817 = vmatprep.subr.bf16.mxu0 %v8722
  %8818 = vmatpush2.bf16.msra.mxu0 %v8721
  %8819 = vmatprep.subr.bf16.mxu0 %v8718
  %8820 = vmatpush2.bf16.msra.mxu0 %v8717
  %8821 = vmatprep.subr.bf16.mxu0 %v8714
  %8822 = vmatpush2.bf16.msra.mxu0 %v8713
  %8823 = vmatprep.subr.bf16.mxu0 %v8710
  %8824 = vmatpush2.bf16.msra.mxu0 %v8709
  %8825 = vmatprep.subr.bf16.mxu0 %v8706
  %8826 = vmatpush2.bf16.msra.mxu0 %v8705
  %8827 = vmatprep.subr.bf16.mxu0 %v8702
  %8828 = vmatpush2.bf16.msra.mxu0 %v8701
  %8829 = vmatprep.mubr.bf16.mxu0 %v8412
  %8830 = vmatmul.mubr.bf16.gmra.mxu0 %v8411
  %v8831 = vpop.f32.mrf.mxu0
  %v8832 = vadd.f32 %v8407, %v8831
  %v8833 = vpop.f32.mrf.mxu0
  %v8834 = vadd.f32 %v8408, %v8833
  %v8835 = vpop.f32.mrf.mxu0
  %v8836 = vpop.f32.mrf.mxu0
  %8837 = vdwg.mxu0
  %8838 = vmatprep.subr.bf16.mxu0 %v8700
  %8839 = vmatpush1.bf16.msra.mxu0 %v8699
  %8840 = vmatprep.subr.bf16.mxu0 %v8696
  %8841 = vmatpush1.bf16.msra.mxu0 %v8695
  %8842 = vmatprep.subr.bf16.mxu0 %v8692
  %8843 = vmatpush1.bf16.msra.mxu0 %v8691
  %8844 = vmatprep.subr.bf16.mxu0 %v8688
  %8845 = vmatpush1.bf16.msra.mxu0 %v8687
  %8846 = vmatprep.subr.bf16.mxu0 %v8684
  %8847 = vmatpush1.bf16.msra.mxu0 %v8683
  %8848 = vmatprep.subr.bf16.mxu0 %v8680
  %8849 = vmatpush1.bf16.msra.mxu0 %v8679
  %8850 = vmatprep.subr.bf16.mxu0 %v8676
  %8851 = vmatpush1.bf16.msra.mxu0 %v8675
  %8852 = vmatprep.subr.bf16.mxu0 %v8672
  %8853 = vmatpush1.bf16.msra.mxu0 %v8671
  %8854 = vmatprep.subr.bf16.mxu0 %v8732
  %8855 = vmatpush2.bf16.msra.mxu0 %v8731
  %8856 = vmatprep.subr.bf16.mxu0 %v8728
  %8857 = vmatpush2.bf16.msra.mxu0 %v8727
  %8858 = vmatprep.subr.bf16.mxu0 %v8724
  %8859 = vmatpush2.bf16.msra.mxu0 %v8723
  %8860 = vmatprep.subr.bf16.mxu0 %v8720
  %8861 = vmatpush2.bf16.msra.mxu0 %v8719
  %8862 = vmatprep.subr.bf16.mxu0 %v8716
  %8863 = vmatpush2.bf16.msra.mxu0 %v8715
  %8864 = vmatprep.subr.bf16.mxu0 %v8712
  %8865 = vmatpush2.bf16.msra.mxu0 %v8711
  %8866 = vmatprep.subr.bf16.mxu0 %v8708
  %8867 = vmatpush2.bf16.msra.mxu0 %v8707
  %8868 = vmatprep.subr.bf16.mxu0 %v8704
  %8869 = vmatpush2.bf16.msra.mxu0 %v8703
  %8870 = vmatprep.mubr.bf16.mxu0 %v8412
  %8871 = vmatmul.mubr.bf16.gmra.mxu0 %v8411
  %v8872 = vpop.f32.mrf.mxu0
  %v8873 = vadd.f32 %v8409, %v8872
  %v8874 = vpop.f32.mrf.mxu0
  %v8875 = vadd.f32 %v8410, %v8874
  %v8876 = vpop.f32.mrf.mxu0
  %v8877 = vpop.f32.mrf.mxu0
  %8878 = vdwg.mxu0
  %v8879 = vxor.u32 %v8832, 2147483648
  %v8880 = vmul.f32 %v8879, 1.442695
  %v8881 = vpow.pop %v8880
  %v8882 = vadd.f32 %v8881, 1.0
  %v8883 = vrcp.pop %v8882
  %v8884 = vmul.f32 1.0, %v8883
  %v8885 = vxor.u32 %v8834, 2147483648
  %v8886 = vmul.f32 %v8885, 1.442695
  %v8887 = vpow.pop %v8886
  %v8888 = vadd.f32 %v8887, 1.0
  %v8889 = vrcp.pop %v8888
  %v8890 = vmul.f32 1.0, %v8889
  %v8891 = vtanh.pop %v8873
  %v8892 = vxor.u32 %v8875, 2147483648
  %v8893 = vmul.f32 %v8892, 1.442695
  %v8894 = vpow.pop %v8893
  %v8895 = vadd.f32 %v8894, 1.0
  %v8896 = vrcp.pop %v8895
  %v8897 = vmul.f32 1.0, %v8896
  %v8898 = vmul.f32 %v8890, %v8389
  %v8899 = vmul.f32 %v8884, %v8891
  %v8900 = vadd.f32 %v8898, %v8899
  %v8901 = vtanh.pop %v8900
  %v8902 = vmul.f32 %v8897, %v8901
  %v8904 = vrot.slane %v8902, 2
  %8906 = vst [vmem:[#allocation4 + $0x10] sm:$0xc0] %v8904
  %8907 = vst [vmem:[#allocation4 + $0x8] sm:$0x3] %v8904
  %8908 = vst [vmem:[%s24] sm:$0xff] %v8902
  %8909 = vst [vmem:[%s25] sm:$0xff] %v8900
  %v8910 = vld [vmem:[#allocation4] sm:$0xff]
  %v8911 = vld [vmem:[#allocation4 + $0x8] sm:$0xff]
  %v8912 = vld [vmem:[#allocation4 + $0x10] sm:$0xff]
  %v8913 = vld [vmem:[#allocation4 + $0x18] sm:$0xff]
  %v8914 = vpack.c.bf16 %v8912, %v8910
  %v8915 = vpack.c.bf16 %v8913, %v8911
  %v8916 = vld [vmem:[%s7] sm:$0xff]
  %v8917 = vld [vmem:[%s7 + $0x8] sm:$0xf]
  %v8918 = vld [vmem:[%s7 + $0xc] sm:$0xff]
  %v8919 = vld [vmem:[%s7 + $0x14] sm:$0xf]
  %v8920 = vld [vmem:[%s7 + $0x18] sm:$0xff]
  %v8921 = vld [vmem:[%s7 + $0x20] sm:$0xf]
  %v8922 = vld [vmem:[%s7 + $0x24] sm:$0xff]
  %v8923 = vld [vmem:[%s7 + $0x2c] sm:$0xf]
  %v8924 = vld [vmem:[%s7 + $0x30] sm:$0xff]
  %v8925 = vld [vmem:[%s7 + $0x38] sm:$0xf]
  %v8926 = vld [vmem:[%s7 + $0x3c] sm:$0xff]
  %v8927 = vld [vmem:[%s7 + $0x44] sm:$0xf]
  %v8928 = vld [vmem:[%s7 + $0x48] sm:$0xff]
  %v8929 = vld [vmem:[%s7 + $0x50] sm:$0xf]
  %v8930 = vld [vmem:[%s7 + $0x54] sm:$0xff]
  %v8931 = vld [vmem:[%s7 + $0x5c] sm:$0xf]
  %v8932 = vld [vmem:[%s7 + $0x60] sm:$0xff]
  %v8933 = vld [vmem:[%s7 + $0x68] sm:$0xf]
  %v8934 = vld [vmem:[%s7 + $0x6c] sm:$0xff]
  %v8935 = vld [vmem:[%s7 + $0x74] sm:$0xf]
  %v8936 = vld [vmem:[%s7 + $0x78] sm:$0xff]
  %v8937 = vld [vmem:[%s7 + $0x80] sm:$0xf]
  %v8938 = vld [vmem:[%s7 + $0x84] sm:$0xff]
  %v8939 = vld [vmem:[%s7 + $0x8c] sm:$0xf]
  %v8940 = vld [vmem:[%s7 + $0x90] sm:$0xff]
  %v8941 = vld [vmem:[%s7 + $0x98] sm:$0xf]
  %v8942 = vld [vmem:[%s7 + $0x9c] sm:$0xff]
  %v8943 = vld [vmem:[%s7 + $0xa4] sm:$0xf]
  %v8944 = vld [vmem:[%s7 + $0xa8] sm:$0xff]
  %v8945 = vld [vmem:[%s7 + $0xb0] sm:$0xf]
  %v8946 = vld [vmem:[%s7 + $0xb4] sm:$0xff]
  %v8947 = vld [vmem:[%s7 + $0xbc] sm:$0xf]
  %v8948 = vld [vmem:[%s7 + $0xc0] sm:$0xff]
  %v8949 = vld [vmem:[%s7 + $0xc8] sm:$0xf]
  %v8950 = vld [vmem:[%s7 + $0xcc] sm:$0xff]
  %v8951 = vld [vmem:[%s7 + $0xd4] sm:$0xf]
  %v8952 = vld [vmem:[%s7 + $0xd8] sm:$0xff]
  %v8953 = vld [vmem:[%s7 + $0xe0] sm:$0xf]
  %v8954 = vld [vmem:[%s7 + $0xe4] sm:$0xff]
  %v8955 = vld [vmem:[%s7 + $0xec] sm:$0xf]
  %v8956 = vld [vmem:[%s7 + $0xf0] sm:$0xff]
  %v8957 = vld [vmem:[%s7 + $0xf8] sm:$0xf]
  %v8958 = vld [vmem:[%s7 + $0xfc] sm:$0xff]
  %v8959 = vld [vmem:[%s7 + $0x104] sm:$0xf]
  %v8960 = vld [vmem:[%s7 + $0x108] sm:$0xff]
  %v8961 = vld [vmem:[%s7 + $0x110] sm:$0xf]
  %v8962 = vld [vmem:[%s7 + $0x114] sm:$0xff]
  %v8963 = vld [vmem:[%s7 + $0x11c] sm:$0xf]
  %v8964 = vld [vmem:[%s7 + $0x120] sm:$0xff]
  %v8965 = vld [vmem:[%s7 + $0x128] sm:$0xf]
  %v8966 = vld [vmem:[%s7 + $0x12c] sm:$0xff]
  %v8967 = vld [vmem:[%s7 + $0x134] sm:$0xf]
  %v8968 = vld [vmem:[%s7 + $0x138] sm:$0xff]
  %v8969 = vld [vmem:[%s7 + $0x140] sm:$0xf]
  %v8970 = vld [vmem:[%s7 + $0x144] sm:$0xff]
  %v8971 = vld [vmem:[%s7 + $0x14c] sm:$0xf]
  %v8972 = vld [vmem:[%s7 + $0x150] sm:$0xff]
  %v8973 = vld [vmem:[%s7 + $0x158] sm:$0xf]
  %v8974 = vld [vmem:[%s7 + $0x15c] sm:$0xff]
  %v8975 = vld [vmem:[%s7 + $0x164] sm:$0xf]
  %v8976 = vld [vmem:[%s7 + $0x168] sm:$0xff]
  %v8977 = vld [vmem:[%s7 + $0x170] sm:$0xf]
  %v8978 = vld [vmem:[%s7 + $0x174] sm:$0xff]
  %v8979 = vld [vmem:[%s7 + $0x17c] sm:$0xf]
  %v8980 = vld [vmem:[%s8] sm:$0x7]
  %v8982 = vlaneseq
  %v8983 = vshrl.u32 %v8982, 7
  %v8984 = vsub.s32 0, %v8983
  %v8985 = vrot.slane %v8980, %v8984
  %v8986 = vlaneseq
  %v8987 = vshrl.u32 %v8986, 7
  %v8988 = vsub.s32 1, %v8987
  %v8989 = vrot.slane %v8980, %v8988
  %v8990 = vlaneseq
  %v8991 = vshrl.u32 %v8990, 7
  %v8992 = vsub.s32 2, %v8991
  %v8993 = vrot.slane %v8980, %v8992
  %v9061 = vunpack.c.l.b16 %v8916
  %v9062 = vunpack.c.h.b16 %v8916
  %v9063 = vunpack.c.l.b16 %v8917
  %v9064 = vunpack.c.l.b16 %v8918
  %v9065 = vunpack.c.h.b16 %v8918
  %v9066 = vunpack.c.l.b16 %v8919
  %v9067 = vunpack.c.l.b16 %v8920
  %v9068 = vunpack.c.h.b16 %v8920
  %v9069 = vunpack.c.l.b16 %v8921
  %v9070 = vunpack.c.l.b16 %v8922
  %v9071 = vunpack.c.h.b16 %v8922
  %v9072 = vunpack.c.l.b16 %v8923
  %v9073 = vunpack.c.l.b16 %v8924
  %v9074 = vunpack.c.h.b16 %v8924
  %v9075 = vunpack.c.l.b16 %v8925
  %v9076 = vunpack.c.l.b16 %v8926
  %v9077 = vunpack.c.h.b16 %v8926
  %v9078 = vunpack.c.l.b16 %v8927
  %v9079 = vunpack.c.l.b16 %v8928
  %v9080 = vunpack.c.h.b16 %v8928
  %v9081 = vunpack.c.l.b16 %v8929
  %v9082 = vunpack.c.l.b16 %v8930
  %v9083 = vunpack.c.h.b16 %v8930
  %v9084 = vunpack.c.l.b16 %v8931
  %v9085 = vunpack.c.l.b16 %v8932
  %v9086 = vunpack.c.h.b16 %v8932
  %v9087 = vunpack.c.l.b16 %v8933
  %v9088 = vunpack.c.l.b16 %v8934
  %v9089 = vunpack.c.h.b16 %v8934
  %v9090 = vunpack.c.l.b16 %v8935
  %v9091 = vunpack.c.l.b16 %v8936
  %v9092 = vunpack.c.h.b16 %v8936
  %v9093 = vunpack.c.l.b16 %v8937
  %v9094 = vunpack.c.l.b16 %v8938
  %v9095 = vunpack.c.h.b16 %v8938
  %v9096 = vunpack.c.l.b16 %v8939
  %v9097 = vunpack.c.l.b16 %v8940
  %v9098 = vunpack.c.h.b16 %v8940
  %v9099 = vunpack.c.l.b16 %v8941
  %v9100 = vunpack.c.l.b16 %v8942
  %v9101 = vunpack.c.h.b16 %v8942
  %v9102 = vunpack.c.l.b16 %v8943
  %v9103 = vunpack.c.l.b16 %v8944
  %v9104 = vunpack.c.h.b16 %v8944
  %v9105 = vunpack.c.l.b16 %v8945
  %v9106 = vunpack.c.l.b16 %v8946
  %v9107 = vunpack.c.h.b16 %v8946
  %v9108 = vunpack.c.l.b16 %v8947
  %v9109 = vunpack.c.l.b16 %v8948
  %v9110 = vunpack.c.h.b16 %v8948
  %v9111 = vunpack.c.l.b16 %v8949
  %v9112 = vunpack.c.l.b16 %v8950
  %v9113 = vunpack.c.h.b16 %v8950
  %v9114 = vunpack.c.l.b16 %v8951
  %v9115 = vunpack.c.l.b16 %v8952
  %v9116 = vunpack.c.h.b16 %v8952
  %v9117 = vunpack.c.l.b16 %v8953
  %v9118 = vunpack.c.l.b16 %v8954
  %v9119 = vunpack.c.h.b16 %v8954
  %v9120 = vunpack.c.l.b16 %v8955
  %v9121 = vunpack.c.l.b16 %v8956
  %v9122 = vunpack.c.h.b16 %v8956
  %v9123 = vunpack.c.l.b16 %v8957
  %v9124 = vunpack.c.l.b16 %v8958
  %v9125 = vunpack.c.h.b16 %v8958
  %v9126 = vunpack.c.l.b16 %v8959
  %v9127 = vunpack.c.l.b16 %v8960
  %v9128 = vunpack.c.h.b16 %v8960
  %v9129 = vunpack.c.l.b16 %v8961
  %v9130 = vunpack.c.l.b16 %v8962
  %v9131 = vunpack.c.h.b16 %v8962
  %v9132 = vunpack.c.l.b16 %v8963
  %v9133 = vunpack.c.l.b16 %v8964
  %v9134 = vunpack.c.h.b16 %v8964
  %v9135 = vunpack.c.l.b16 %v8965
  %v9136 = vunpack.c.l.b16 %v8966
  %v9137 = vunpack.c.h.b16 %v8966
  %v9138 = vunpack.c.l.b16 %v8967
  %v9139 = vunpack.c.l.b16 %v8968
  %v9140 = vunpack.c.h.b16 %v8968
  %v9141 = vunpack.c.l.b16 %v8969
  %v9142 = vunpack.c.l.b16 %v8970
  %v9143 = vunpack.c.h.b16 %v8970
  %v9144 = vunpack.c.l.b16 %v8971
  %v9145 = vunpack.c.l.b16 %v8972
  %v9146 = vunpack.c.h.b16 %v8972
  %v9147 = vunpack.c.l.b16 %v8973
  %v9148 = vunpack.c.l.b16 %v8974
  %v9149 = vunpack.c.h.b16 %v8974
  %v9150 = vunpack.c.l.b16 %v8975
  %v9151 = vunpack.c.l.b16 %v8976
  %v9152 = vunpack.c.h.b16 %v8976
  %v9153 = vunpack.c.l.b16 %v8977
  %v9154 = vunpack.c.l.b16 %v8978
  %v9155 = vunpack.c.h.b16 %v8978
  %v9156 = vunpack.c.l.b16 %v8979
  %v9157 = vpack.c.b16 %v9064, %v9061
  %v9158 = vpack.c.b16 %v9065, %v9062
  %v9159 = vpack.c.b16 %v9066, %v9063
  %v9160 = vpack.c.b16 %v9070, %v9067
  %v9161 = vpack.c.b16 %v9071, %v9068
  %v9162 = vpack.c.b16 %v9072, %v9069
  %v9163 = vpack.c.b16 %v9076, %v9073
  %v9164 = vpack.c.b16 %v9077, %v9074
  %v9165 = vpack.c.b16 %v9078, %v9075
  %v9166 = vpack.c.b16 %v9082, %v9079
  %v9167 = vpack.c.b16 %v9083, %v9080
  %v9168 = vpack.c.b16 %v9084, %v9081
  %v9169 = vpack.c.b16 %v9088, %v9085
  %v9170 = vpack.c.b16 %v9089, %v9086
  %v9171 = vpack.c.b16 %v9090, %v9087
  %v9172 = vpack.c.b16 %v9094, %v9091
  %v9173 = vpack.c.b16 %v9095, %v9092
  %v9174 = vpack.c.b16 %v9096, %v9093
  %v9175 = vpack.c.b16 %v9100, %v9097
  %v9176 = vpack.c.b16 %v9101, %v9098
  %v9177 = vpack.c.b16 %v9102, %v9099
  %v9178 = vpack.c.b16 %v9106, %v9103
  %v9179 = vpack.c.b16 %v9107, %v9104
  %v9180 = vpack.c.b16 %v9108, %v9105
  %v9181 = vpack.c.b16 %v9112, %v9109
  %v9182 = vpack.c.b16 %v9113, %v9110
  %v9183 = vpack.c.b16 %v9114, %v9111
  %v9184 = vpack.c.b16 %v9118, %v9115
  %v9185 = vpack.c.b16 %v9119, %v9116
  %v9186 = vpack.c.b16 %v9120, %v9117
  %v9187 = vpack.c.b16 %v9124, %v9121
  %v9188 = vpack.c.b16 %v9125, %v9122
  %v9189 = vpack.c.b16 %v9126, %v9123
  %v9190 = vpack.c.b16 %v9130, %v9127
  %v9191 = vpack.c.b16 %v9131, %v9128
  %v9192 = vpack.c.b16 %v9132, %v9129
  %v9193 = vpack.c.b16 %v9136, %v9133
  %v9194 = vpack.c.b16 %v9137, %v9134
  %v9195 = vpack.c.b16 %v9138, %v9135
  %v9196 = vpack.c.b16 %v9142, %v9139
  %v9197 = vpack.c.b16 %v9143, %v9140
  %v9198 = vpack.c.b16 %v9144, %v9141
  %v9199 = vpack.c.b16 %v9148, %v9145
  %v9200 = vpack.c.b16 %v9149, %v9146
  %v9201 = vpack.c.b16 %v9150, %v9147
  %v9202 = vpack.c.b16 %v9154, %v9151
  %v9203 = vpack.c.b16 %v9155, %v9152
  %v9204 = vpack.c.b16 %v9156, %v9153
  %9253 = vmatprep.subr.bf16.mxu0 %v9179
  %9254 = vmatpush1.bf16.msra.mxu0 %v9178
  %9255 = vmatprep.subr.bf16.mxu0 %v9176
  %9256 = vmatpush1.bf16.msra.mxu0 %v9175
  %9257 = vmatprep.subr.bf16.mxu0 %v9173
  %9258 = vmatpush1.bf16.msra.mxu0 %v9172
  %9259 = vmatprep.subr.bf16.mxu0 %v9170
  %9260 = vmatpush1.bf16.msra.mxu0 %v9169
  %9261 = vmatprep.subr.bf16.mxu0 %v9167
  %9262 = vmatpush1.bf16.msra.mxu0 %v9166
  %9263 = vmatprep.subr.bf16.mxu0 %v9164
  %9264 = vmatpush1.bf16.msra.mxu0 %v9163
  %9265 = vmatprep.subr.bf16.mxu0 %v9161
  %9266 = vmatpush1.bf16.msra.mxu0 %v9160
  %9267 = vmatprep.subr.bf16.mxu0 %v9158
  %9268 = vmatpush1.bf16.msra.mxu0 %v9157
  %9269 = vmatprep.subr.bf16.mxu0 %v9203
  %9270 = vmatpush2.bf16.msra.mxu0 %v9202
  %9271 = vmatprep.subr.bf16.mxu0 %v9200
  %9272 = vmatpush2.bf16.msra.mxu0 %v9199
  %9273 = vmatprep.subr.bf16.mxu0 %v9197
  %9274 = vmatpush2.bf16.msra.mxu0 %v9196
  %9275 = vmatprep.subr.bf16.mxu0 %v9194
  %9276 = vmatpush2.bf16.msra.mxu0 %v9193
  %9277 = vmatprep.subr.bf16.mxu0 %v9191
  %9278 = vmatpush2.bf16.msra.mxu0 %v9190
  %9279 = vmatprep.subr.bf16.mxu0 %v9188
  %9280 = vmatpush2.bf16.msra.mxu0 %v9187
  %9281 = vmatprep.subr.bf16.mxu0 %v9185
  %9282 = vmatpush2.bf16.msra.mxu0 %v9184
  %9283 = vmatprep.subr.bf16.mxu0 %v9182
  %9284 = vmatpush2.bf16.msra.mxu0 %v9181
  %9285 = vmatprep.mubr.bf16.mxu0 %v8915
  %9286 = vmatmul.mubr.bf16.gmra.mxu0 %v8914
  %v9287 = vpop.f32.mrf.mxu0
  %v9288 = vadd.f32 %v8985, %v9287
  %v9289 = vpop.f32.mrf.mxu0
  %v9290 = vadd.f32 %v8989, %v9289
  %v9291 = vpop.f32.mrf.mxu0
  %v9292 = vadd.f32 %v8985, %v9291
  %v9293 = vpop.f32.mrf.mxu0
  %v9294 = vadd.f32 %v8989, %v9293
  %9295 = vdwg.mxu0
  %9296 = vmatprep.subr.bf16.mxu0 0
  %9297 = vmatpush1.bf16.msra.mxu0 %v9180
  %9298 = vmatprep.subr.bf16.mxu0 0
  %9299 = vmatpush1.bf16.msra.mxu0 %v9177
  %9300 = vmatprep.subr.bf16.mxu0 0
  %9301 = vmatpush1.bf16.msra.mxu0 %v9174
  %9302 = vmatprep.subr.bf16.mxu0 0
  %9303 = vmatpush1.bf16.msra.mxu0 %v9171
  %9304 = vmatprep.subr.bf16.mxu0 0
  %9305 = vmatpush1.bf16.msra.mxu0 %v9168
  %9306 = vmatprep.subr.bf16.mxu0 0
  %9307 = vmatpush1.bf16.msra.mxu0 %v9165
  %9308 = vmatprep.subr.bf16.mxu0 0
  %9309 = vmatpush1.bf16.msra.mxu0 %v9162
  %9310 = vmatprep.subr.bf16.mxu0 0
  %9311 = vmatpush1.bf16.msra.mxu0 %v9159
  %9312 = vmatprep.subr.bf16.mxu0 0
  %9313 = vmatpush2.bf16.msra.mxu0 %v9204
  %9314 = vmatprep.subr.bf16.mxu0 0
  %9315 = vmatpush2.bf16.msra.mxu0 %v9201
  %9316 = vmatprep.subr.bf16.mxu0 0
  %9317 = vmatpush2.bf16.msra.mxu0 %v9198
  %9318 = vmatprep.subr.bf16.mxu0 0
  %9319 = vmatpush2.bf16.msra.mxu0 %v9195
  %9320 = vmatprep.subr.bf16.mxu0 0
  %9321 = vmatpush2.bf16.msra.mxu0 %v9192
  %9322 = vmatprep.subr.bf16.mxu0 0
  %9323 = vmatpush2.bf16.msra.mxu0 %v9189
  %9324 = vmatprep.subr.bf16.mxu0 0
  %9325 = vmatpush2.bf16.msra.mxu0 %v9186
  %9326 = vmatprep.subr.bf16.mxu0 0
  %9327 = vmatpush2.bf16.msra.mxu0 %v9183
  %9328 = vmatprep.mubr.bf16.mxu0 %v8915
  %9329 = vmatmul.mubr.bf16.gmra.mxu0 %v8914
  %v9330 = vpop.f32.mrf.mxu0
  %v9331 = vadd.f32 %v8993, %v9330
  %v9332 = vpop.f32.mrf.mxu0
  %v9333 = vpop.f32.mrf.mxu0
  %v9334 = vadd.f32 %v8993, %v9333
  %v9335 = vpop.f32.mrf.mxu0
  %9336 = vdwg.mxu0
  %v9337 = vld [vmem:[%s9] sm:$0xff]
  %v9338 = vld [vmem:[%s9 + $0x8] sm:$0xff]
  %vm9339 = vcmask 130048
  %v9341 = vsel %vm9339, %v9337, 0
  %v9344 = vsel %vm9339, %v9338, 0
  %9346 = vmatprep.subr.mxu0 0.0
  %9347 = vmatpush1.msra.mxu0 0.0
  %9348 = vmatprep.subr.mxu0 0.0
  %9349 = vmatpush1.msra.mxu0 0.0
  %9350 = vmatprep.subr.mxu0 0.0
  %9351 = vmatpush1.msra.mxu0 0.0
  %9352 = vmatprep.subr.mxu0 0.0
  %9353 = vmatpush1.msra.mxu0 0.0
  %9354 = vmatprep.subr.mxu0 0.0
  %9355 = vmatpush1.msra.mxu0 0.0
  %9356 = vmatprep.subr.mxu0 0.0
  %9357 = vmatpush1.msra.mxu0 0.0
  %9358 = vmatprep.subr.mxu0 0.0
  %9359 = vmatpush1.msra.mxu0 0.0
  %9360 = vmatprep.subr.mxu0 0.0
  %9361 = vmatpush1.msra.mxu0 0.0
  %9362 = vmatprep.subr.mxu0 0.0
  %9363 = vmatpush1.msra.mxu0 0.0
  %9364 = vmatprep.subr.mxu0 0.0
  %9365 = vmatpush1.msra.mxu0 0.0
  %9366 = vmatprep.subr.mxu0 0.0
  %9367 = vmatpush1.msra.mxu0 0.0
  %9368 = vmatprep.subr.mxu0 0.0
  %9369 = vmatpush1.msra.mxu0 0.0
  %9370 = vmatprep.subr.mxu0 0.0
  %9371 = vmatpush1.msra.mxu0 0.0
  %9372 = vmatprep.subr.mxu0 0.0
  %9373 = vmatpush1.msra.mxu0 0.0
  %9374 = vmatprep.subr.mxu0 0.0
  %9375 = vmatpush1.msra.mxu0 %v9292
  %9376 = vmatprep.subr.mxu0 0.0
  %9377 = vmatpush1.msra.mxu0 %v9288
  %9378 = vmatprep.subr.mxu0 0.0
  %9379 = vmatpush2.msra.mxu0 0.0
  %9380 = vmatprep.subr.mxu0 0.0
  %9381 = vmatpush2.msra.mxu0 0.0
  %9382 = vmatprep.subr.mxu0 0.0
  %9383 = vmatpush2.msra.mxu0 0.0
  %9384 = vmatprep.subr.mxu0 0.0
  %9385 = vmatpush2.msra.mxu0 0.0
  %9386 = vmatprep.subr.mxu0 0.0
  %9387 = vmatpush2.msra.mxu0 0.0
  %9388 = vmatprep.subr.mxu0 0.0
  %9389 = vmatpush2.msra.mxu0 0.0
  %9390 = vmatprep.subr.mxu0 0.0
  %9391 = vmatpush2.msra.mxu0 0.0
  %9392 = vmatprep.subr.mxu0 0.0
  %9393 = vmatpush2.msra.mxu0 0.0
  %9394 = vmatprep.subr.mxu0 0.0
  %9395 = vmatpush2.msra.mxu0 0.0
  %9396 = vmatprep.subr.mxu0 0.0
  %9397 = vmatpush2.msra.mxu0 0.0
  %9398 = vmatprep.subr.mxu0 0.0
  %9399 = vmatpush2.msra.mxu0 0.0
  %9400 = vmatprep.subr.mxu0 0.0
  %9401 = vmatpush2.msra.mxu0 0.0
  %9402 = vmatprep.subr.mxu0 0.0
  %9403 = vmatpush2.msra.mxu0 0.0
  %9404 = vmatprep.subr.mxu0 0.0
  %9405 = vmatpush2.msra.mxu0 0.0
  %9406 = vmatprep.subr.mxu0 0.0
  %9407 = vmatpush2.msra.mxu0 0.0
  %9408 = vmatprep.subr.mxu0 0.0
  %9409 = vmatpush2.msra.mxu0 0.0
  %9410 = vmatprep.mubr.f32.mxu0 0.0
  %9411 = vmatmul.mubr.f32.gmra.mxu0 %v9341
  %v9412 = vpop.f32.mrf.mxu0
  %v9413 = vadd.f32 0.0, %v9412
  %v9414 = vpop.f32.mrf.mxu0
  %9415 = vmatprep.mubr.f32.mxu0 0.0
  %9416 = vmatmul.mubr.f32.gmra.mxu0 %v9344
  %v9417 = vpop.f32.mrf.mxu0
  %v9418 = vadd.f32 0.0, %v9417
  %v9419 = vpop.f32.mrf.mxu0
  %9420 = vdwg.mxu0
  %v9421 = vmul.f32 %v9290, %v9413
  %v9422 = vmul.f32 %v9294, %v9418
  %v9423 = vld [vmem:[%s10] sm:$0xff]
  %v9424 = vld [vmem:[%s10 + $0x8] sm:$0xff]
  %v9425 = vld [vmem:[%s10 + $0x10] sm:$0xff]
  %v9426 = vld [vmem:[%s10 + $0x18] sm:$0xff]
  %v9427 = vld [vmem:[%s10 + $0x20] sm:$0xff]
  %v9428 = vld [vmem:[%s10 + $0x28] sm:$0xff]
  %v9429 = vld [vmem:[%s10 + $0x30] sm:$0xff]
  %v9430 = vld [vmem:[%s10 + $0x38] sm:$0xff]
  %v9431 = vld [vmem:[%s10 + $0x40] sm:$0xff]
  %v9432 = vld [vmem:[%s10 + $0x48] sm:$0xff]
  %v9433 = vld [vmem:[%s10 + $0x50] sm:$0xff]
  %v9434 = vld [vmem:[%s10 + $0x58] sm:$0xff]
  %v9435 = vld [vmem:[%s10 + $0x60] sm:$0xff]
  %v9436 = vld [vmem:[%s10 + $0x68] sm:$0xff]
  %v9437 = vld [vmem:[%s10 + $0x70] sm:$0xff]
  %v9438 = vld [vmem:[%s10 + $0x78] sm:$0xff]
  %9439 = vmatprep.subr.mxu0 0.0
  %9440 = vmatpush1.msra.mxu0 %v9438
  %9441 = vmatprep.subr.mxu0 0.0
  %9442 = vmatpush1.msra.mxu0 %v9437
  %9443 = vmatprep.subr.mxu0 0.0
  %9444 = vmatpush1.msra.mxu0 %v9436
  %9445 = vmatprep.subr.mxu0 0.0
  %9446 = vmatpush1.msra.mxu0 %v9435
  %9447 = vmatprep.subr.mxu0 0.0
  %9448 = vmatpush1.msra.mxu0 %v9434
  %9449 = vmatprep.subr.mxu0 0.0
  %9450 = vmatpush1.msra.mxu0 %v9433
  %9451 = vmatprep.subr.mxu0 0.0
  %9452 = vmatpush1.msra.mxu0 %v9432
  %9453 = vmatprep.subr.mxu0 0.0
  %9454 = vmatpush1.msra.mxu0 %v9431
  %9455 = vmatprep.subr.mxu0 0.0
  %9456 = vmatpush1.msra.mxu0 %v9430
  %9457 = vmatprep.subr.mxu0 0.0
  %9458 = vmatpush1.msra.mxu0 %v9429
  %9459 = vmatprep.subr.mxu0 0.0
  %9460 = vmatpush1.msra.mxu0 %v9428
  %9461 = vmatprep.subr.mxu0 0.0
  %9462 = vmatpush1.msra.mxu0 %v9427
  %9463 = vmatprep.subr.mxu0 0.0
  %9464 = vmatpush1.msra.mxu0 %v9426
  %9465 = vmatprep.subr.mxu0 0.0
  %9466 = vmatpush1.msra.mxu0 %v9425
  %9467 = vmatprep.subr.mxu0 0.0
  %9468 = vmatpush1.msra.mxu0 %v9424
  %9469 = vmatprep.subr.mxu0 0.0
  %9470 = vmatpush1.msra.mxu0 %v9423
  %9471 = vmatprep.subr.mxu0 0.0
  %9472 = vmatpush2.msra.mxu0 0.0
  %9473 = vmatprep.subr.mxu0 0.0
  %9474 = vmatpush2.msra.mxu0 0.0
  %9475 = vmatprep.subr.mxu0 0.0
  %9476 = vmatpush2.msra.mxu0 0.0
  %9477 = vmatprep.subr.mxu0 0.0
  %9478 = vmatpush2.msra.mxu0 0.0
  %9479 = vmatprep.subr.mxu0 0.0
  %9480 = vmatpush2.msra.mxu0 0.0
  %9481 = vmatprep.subr.mxu0 0.0
  %9482 = vmatpush2.msra.mxu0 0.0
  %9483 = vmatprep.subr.mxu0 0.0
  %9484 = vmatpush2.msra.mxu0 0.0
  %9485 = vmatprep.subr.mxu0 0.0
  %9486 = vmatpush2.msra.mxu0 0.0
  %9487 = vmatprep.subr.mxu0 0.0
  %9488 = vmatpush2.msra.mxu0 0.0
  %9489 = vmatprep.subr.mxu0 0.0
  %9490 = vmatpush2.msra.mxu0 0.0
  %9491 = vmatprep.subr.mxu0 0.0
  %9492 = vmatpush2.msra.mxu0 0.0
  %9493 = vmatprep.subr.mxu0 0.0
  %9494 = vmatpush2.msra.mxu0 0.0
  %9495 = vmatprep.subr.mxu0 0.0
  %9496 = vmatpush2.msra.mxu0 0.0
  %9497 = vmatprep.subr.mxu0 0.0
  %9498 = vmatpush2.msra.mxu0 0.0
  %9499 = vmatprep.subr.mxu0 0.0
  %9500 = vmatpush2.msra.mxu0 0.0
  %9501 = vmatprep.subr.mxu0 0.0
  %9502 = vmatpush2.msra.mxu0 0.0
  %9503 = vmatprep.mubr.f32.mxu0 0.0
  %9504 = vmatmul.mubr.f32.gmra.mxu0 %v9421
  %v9505 = vpop.f32.mrf.mxu0
  %v9506 = vadd.f32 0.0, %v9505
  %v9507 = vpop.f32.mrf.mxu0
  %9508 = vmatprep.mubr.f32.mxu0 0.0
  %9509 = vmatmul.mubr.f32.gmra.mxu0 %v9422
  %v9510 = vpop.f32.mrf.mxu0
  %v9511 = vadd.f32 0.0, %v9510
  %v9512 = vpop.f32.mrf.mxu0
  %9513 = vdwg.mxu0
  %v9514 = vmax.f32 %v9506, %v9511
  %v9515 = vrot.slane %v9514, 4
  %v9516 = vmax.f32 %v9514, %v9515
  %v9517 = vrot.slane %v9516, 2
  %v9518 = vmax.f32 %v9516, %v9517
  %v9519 = vrot.slane %v9518, 1
  %v9520 = vmax.f32 %v9518, %v9519
  %v9521 = vsub.f32 %v9506, %v9520
  %v9522 = vsub.f32 %v9511, %v9520
  %v9523 = vmul.f32 %v9521, 1.442695
  %v9524 = vpow.pop %v9523
  %v9525 = vmul.f32 %v9522, 1.442695
  %v9526 = vpow.pop %v9525
  %v9527 = vld [vmem:[%s11] sm:$0xff]
  %v9528 = vld [vmem:[%s11 + $0x8] sm:$0xff]
  %v9529 = vld [vmem:[%s11 + $0x10] sm:$0xff]
  %v9530 = vld [vmem:[%s11 + $0x18] sm:$0xff]
  %v9531 = vld [vmem:[%s11 + $0x20] sm:$0xff]
  %v9532 = vld [vmem:[%s11 + $0x28] sm:$0xff]
  %v9533 = vld [vmem:[%s11 + $0x30] sm:$0xff]
  %v9534 = vld [vmem:[%s11 + $0x38] sm:$0xff]
  %v9535 = vld [vmem:[%s11 + $0x40] sm:$0xff]
  %v9536 = vld [vmem:[%s11 + $0x48] sm:$0xff]
  %v9537 = vld [vmem:[%s11 + $0x50] sm:$0xff]
  %v9538 = vld [vmem:[%s11 + $0x58] sm:$0xff]
  %v9539 = vld [vmem:[%s11 + $0x60] sm:$0xff]
  %v9540 = vld [vmem:[%s11 + $0x68] sm:$0xff]
  %v9541 = vld [vmem:[%s11 + $0x70] sm:$0xff]
  %v9542 = vld [vmem:[%s11 + $0x78] sm:$0xff]
  %9543 = vmatprep.subr.mxu0 0.0
  %9544 = vmatpush1.msra.mxu0 %v9542
  %9545 = vmatprep.subr.mxu0 0.0
  %9546 = vmatpush1.msra.mxu0 %v9541
  %9547 = vmatprep.subr.mxu0 0.0
  %9548 = vmatpush1.msra.mxu0 %v9540
  %9549 = vmatprep.subr.mxu0 0.0
  %9550 = vmatpush1.msra.mxu0 %v9539
  %9551 = vmatprep.subr.mxu0 0.0
  %9552 = vmatpush1.msra.mxu0 %v9538
  %9553 = vmatprep.subr.mxu0 0.0
  %9554 = vmatpush1.msra.mxu0 %v9537
  %9555 = vmatprep.subr.mxu0 0.0
  %9556 = vmatpush1.msra.mxu0 %v9536
  %9557 = vmatprep.subr.mxu0 0.0
  %9558 = vmatpush1.msra.mxu0 %v9535
  %9559 = vmatprep.subr.mxu0 0.0
  %9560 = vmatpush1.msra.mxu0 %v9534
  %9561 = vmatprep.subr.mxu0 0.0
  %9562 = vmatpush1.msra.mxu0 %v9533
  %9563 = vmatprep.subr.mxu0 0.0
  %9564 = vmatpush1.msra.mxu0 %v9532
  %9565 = vmatprep.subr.mxu0 0.0
  %9566 = vmatpush1.msra.mxu0 %v9531
  %9567 = vmatprep.subr.mxu0 0.0
  %9568 = vmatpush1.msra.mxu0 %v9530
  %9569 = vmatprep.subr.mxu0 0.0
  %9570 = vmatpush1.msra.mxu0 %v9529
  %9571 = vmatprep.subr.mxu0 0.0
  %9572 = vmatpush1.msra.mxu0 %v9528
  %9573 = vmatprep.subr.mxu0 0.0
  %9574 = vmatpush1.msra.mxu0 %v9527
  %9575 = vmatprep.subr.mxu0 0.0
  %9576 = vmatpush2.msra.mxu0 0.0
  %9577 = vmatprep.subr.mxu0 0.0
  %9578 = vmatpush2.msra.mxu0 0.0
  %9579 = vmatprep.subr.mxu0 0.0
  %9580 = vmatpush2.msra.mxu0 0.0
  %9581 = vmatprep.subr.mxu0 0.0
  %9582 = vmatpush2.msra.mxu0 0.0
  %9583 = vmatprep.subr.mxu0 0.0
  %9584 = vmatpush2.msra.mxu0 0.0
  %9585 = vmatprep.subr.mxu0 0.0
  %9586 = vmatpush2.msra.mxu0 0.0
  %9587 = vmatprep.subr.mxu0 0.0
  %9588 = vmatpush2.msra.mxu0 0.0
  %9589 = vmatprep.subr.mxu0 0.0
  %9590 = vmatpush2.msra.mxu0 0.0
  %9591 = vmatprep.subr.mxu0 0.0
  %9592 = vmatpush2.msra.mxu0 0.0
  %9593 = vmatprep.subr.mxu0 0.0
  %9594 = vmatpush2.msra.mxu0 0.0
  %9595 = vmatprep.subr.mxu0 0.0
  %9596 = vmatpush2.msra.mxu0 0.0
  %9597 = vmatprep.subr.mxu0 0.0
  %9598 = vmatpush2.msra.mxu0 0.0
  %9599 = vmatprep.subr.mxu0 0.0
  %9600 = vmatpush2.msra.mxu0 0.0
  %9601 = vmatprep.subr.mxu0 0.0
  %9602 = vmatpush2.msra.mxu0 0.0
  %9603 = vmatprep.subr.mxu0 0.0
  %9604 = vmatpush2.msra.mxu0 0.0
  %9605 = vmatprep.subr.mxu0 0.0
  %9606 = vmatpush2.msra.mxu0 0.0
  %9607 = vmatprep.mubr.f32.mxu0 0.0
  %9608 = vmatmul.mubr.f32.gmra.mxu0 %v9524
  %v9609 = vpop.f32.mrf.mxu0
  %v9610 = vadd.f32 0.0, %v9609
  %v9611 = vpop.f32.mrf.mxu0
  %9612 = vmatprep.mubr.f32.mxu0 0.0
  %9613 = vmatmul.mubr.f32.gmra.mxu0 %v9526
  %v9614 = vpop.f32.mrf.mxu0
  %v9615 = vadd.f32 0.0, %v9614
  %v9616 = vpop.f32.mrf.mxu0
  %9617 = vdwg.mxu0
  %v9618 = vmul.f32 %v9610, %v9331
  %v9619 = vmul.f32 %v9615, %v9334
  %v9620 = vld [vmem:[%s12] sm:$0xff]
  %v9622 = vsel %vm9339, %v9620, 0
  %9624 = vmatprep.subr.mxu0 0.0
  %9625 = vmatpush1.msra.mxu0 0.0
  %9626 = vmatprep.subr.mxu0 0.0
  %9627 = vmatpush1.msra.mxu0 0.0
  %9628 = vmatprep.subr.mxu0 0.0
  %9629 = vmatpush1.msra.mxu0 0.0
  %9630 = vmatprep.subr.mxu0 0.0
  %9631 = vmatpush1.msra.mxu0 0.0
  %9632 = vmatprep.subr.mxu0 0.0
  %9633 = vmatpush1.msra.mxu0 0.0
  %9634 = vmatprep.subr.mxu0 0.0
  %9635 = vmatpush1.msra.mxu0 0.0
  %9636 = vmatprep.subr.mxu0 0.0
  %9637 = vmatpush1.msra.mxu0 0.0
  %9638 = vmatprep.subr.mxu0 0.0
  %9639 = vmatpush1.msra.mxu0 0.0
  %9640 = vmatprep.subr.mxu0 0.0
  %9641 = vmatpush1.msra.mxu0 0.0
  %9642 = vmatprep.subr.mxu0 0.0
  %9643 = vmatpush1.msra.mxu0 0.0
  %9644 = vmatprep.subr.mxu0 0.0
  %9645 = vmatpush1.msra.mxu0 0.0
  %9646 = vmatprep.subr.mxu0 0.0
  %9647 = vmatpush1.msra.mxu0 0.0
  %9648 = vmatprep.subr.mxu0 0.0
  %9649 = vmatpush1.msra.mxu0 0.0
  %9650 = vmatprep.subr.mxu0 0.0
  %9651 = vmatpush1.msra.mxu0 0.0
  %9652 = vmatprep.subr.mxu0 %v9619
  %9653 = vmatpush1.msra.mxu0 %v9526
  %9654 = vmatprep.subr.mxu0 %v9618
  %9655 = vmatpush1.msra.mxu0 %v9524
  %9656 = vmatprep.subr.mxu0 0.0
  %9657 = vmatpush2.msra.mxu0 0.0
  %9658 = vmatprep.subr.mxu0 0.0
  %9659 = vmatpush2.msra.mxu0 0.0
  %9660 = vmatprep.subr.mxu0 0.0
  %9661 = vmatpush2.msra.mxu0 0.0
  %9662 = vmatprep.subr.mxu0 0.0
  %9663 = vmatpush2.msra.mxu0 0.0
  %9664 = vmatprep.subr.mxu0 0.0
  %9665 = vmatpush2.msra.mxu0 0.0
  %9666 = vmatprep.subr.mxu0 0.0
  %9667 = vmatpush2.msra.mxu0 0.0
  %9668 = vmatprep.subr.mxu0 0.0
  %9669 = vmatpush2.msra.mxu0 0.0
  %9670 = vmatprep.subr.mxu0 0.0
  %9671 = vmatpush2.msra.mxu0 0.0
  %9672 = vmatprep.subr.mxu0 0.0
  %9673 = vmatpush2.msra.mxu0 0.0
  %9674 = vmatprep.subr.mxu0 0.0
  %9675 = vmatpush2.msra.mxu0 0.0
  %9676 = vmatprep.subr.mxu0 0.0
  %9677 = vmatpush2.msra.mxu0 0.0
  %9678 = vmatprep.subr.mxu0 0.0
  %9679 = vmatpush2.msra.mxu0 0.0
  %9680 = vmatprep.subr.mxu0 0.0
  %9681 = vmatpush2.msra.mxu0 0.0
  %9682 = vmatprep.subr.mxu0 0.0
  %9683 = vmatpush2.msra.mxu0 0.0
  %9684 = vmatprep.subr.mxu0 0.0
  %9685 = vmatpush2.msra.mxu0 0.0
  %9686 = vmatprep.subr.mxu0 0.0
  %9687 = vmatpush2.msra.mxu0 0.0
  %9688 = vmatprep.mubr.f32.mxu0 0.0
  %9689 = vmatmul.mubr.f32.gmra.mxu0 %v9622
  %v9690 = vpop.f32.mrf.mxu0
  %v9691 = vadd.f32 0.0, %v9690
  %v9692 = vpop.f32.mrf.mxu0
  %v9693 = vadd.f32 0.0, %v9692
  %9694 = vdwg.mxu0
  %9695 = vmatprep.subr.mxu0 0.0
  %9696 = vmatpush1.msra.mxu0 %v9542
  %9697 = vmatprep.subr.mxu0 0.0
  %9698 = vmatpush1.msra.mxu0 %v9541
  %9699 = vmatprep.subr.mxu0 0.0
  %9700 = vmatpush1.msra.mxu0 %v9540
  %9701 = vmatprep.subr.mxu0 0.0
  %9702 = vmatpush1.msra.mxu0 %v9539
  %9703 = vmatprep.subr.mxu0 0.0
  %9704 = vmatpush1.msra.mxu0 %v9538
  %9705 = vmatprep.subr.mxu0 0.0
  %9706 = vmatpush1.msra.mxu0 %v9537
  %9707 = vmatprep.subr.mxu0 0.0
  %9708 = vmatpush1.msra.mxu0 %v9536
  %9709 = vmatprep.subr.mxu0 0.0
  %9710 = vmatpush1.msra.mxu0 %v9535
  %9711 = vmatprep.subr.mxu0 0.0
  %9712 = vmatpush1.msra.mxu0 %v9534
  %9713 = vmatprep.subr.mxu0 0.0
  %9714 = vmatpush1.msra.mxu0 %v9533
  %9715 = vmatprep.subr.mxu0 0.0
  %9716 = vmatpush1.msra.mxu0 %v9532
  %9717 = vmatprep.subr.mxu0 0.0
  %9718 = vmatpush1.msra.mxu0 %v9531
  %9719 = vmatprep.subr.mxu0 0.0
  %9720 = vmatpush1.msra.mxu0 %v9530
  %9721 = vmatprep.subr.mxu0 0.0
  %9722 = vmatpush1.msra.mxu0 %v9529
  %9723 = vmatprep.subr.mxu0 0.0
  %9724 = vmatpush1.msra.mxu0 %v9528
  %9725 = vmatprep.subr.mxu0 0.0
  %9726 = vmatpush1.msra.mxu0 %v9527
  %9727 = vmatprep.subr.mxu0 0.0
  %9728 = vmatpush2.msra.mxu0 0.0
  %9729 = vmatprep.subr.mxu0 0.0
  %9730 = vmatpush2.msra.mxu0 0.0
  %9731 = vmatprep.subr.mxu0 0.0
  %9732 = vmatpush2.msra.mxu0 0.0
  %9733 = vmatprep.subr.mxu0 0.0
  %9734 = vmatpush2.msra.mxu0 0.0
  %9735 = vmatprep.subr.mxu0 0.0
  %9736 = vmatpush2.msra.mxu0 0.0
  %9737 = vmatprep.subr.mxu0 0.0
  %9738 = vmatpush2.msra.mxu0 0.0
  %9739 = vmatprep.subr.mxu0 0.0
  %9740 = vmatpush2.msra.mxu0 0.0
  %9741 = vmatprep.subr.mxu0 0.0
  %9742 = vmatpush2.msra.mxu0 0.0
  %9743 = vmatprep.subr.mxu0 0.0
  %9744 = vmatpush2.msra.mxu0 0.0
  %9745 = vmatprep.subr.mxu0 0.0
  %9746 = vmatpush2.msra.mxu0 0.0
  %9747 = vmatprep.subr.mxu0 0.0
  %9748 = vmatpush2.msra.mxu0 0.0
  %9749 = vmatprep.subr.mxu0 0.0
  %9750 = vmatpush2.msra.mxu0 0.0
  %9751 = vmatprep.subr.mxu0 0.0
  %9752 = vmatpush2.msra.mxu0 0.0
  %9753 = vmatprep.subr.mxu0 0.0
  %9754 = vmatpush2.msra.mxu0 0.0
  %9755 = vmatprep.subr.mxu0 0.0
  %9756 = vmatpush2.msra.mxu0 0.0
  %9757 = vmatprep.subr.mxu0 0.0
  %9758 = vmatpush2.msra.mxu0 0.0
  %9759 = vmatprep.mubr.f32.mxu0 0.0
  %9760 = vmatmul.mubr.f32.gmra.mxu0 %v9691
  %v9761 = vpop.f32.mrf.mxu0
  %v9762 = vadd.f32 0.0, %v9761
  %v9763 = vpop.f32.mrf.mxu0
  %9764 = vdwg.mxu0
  %v9765 = vmax.f32 %v9762, 1e-20
  %v9766 = vrcp.pop %v9765
  %v9767 = vmul.f32 %v9693, %v9766
  %v9768 = vpack.c.bf16 %v9767, %v9767
  %v9769 = vld [vmem:[%s13] sm:$0xf]
  %v9770 = vld [vmem:[%s13 + $0x4] sm:$0xf]
  %v9771 = vld [vmem:[%s13 + $0x8] sm:$0xf]
  %v9772 = vld [vmem:[%s13 + $0xc] sm:$0xf]
  %v9773 = vld [vmem:[%s13 + $0x10] sm:$0xf]
  %v9774 = vld [vmem:[%s13 + $0x14] sm:$0xf]
  %v9775 = vld [vmem:[%s13 + $0x18] sm:$0xf]
  %v9776 = vld [vmem:[%s13 + $0x1c] sm:$0xf]
  %v9777 = vld [vmem:[%s13 + $0x20] sm:$0xf]
  %v9778 = vld [vmem:[%s13 + $0x24] sm:$0xf]
  %v9779 = vld [vmem:[%s13 + $0x28] sm:$0xf]
  %v9780 = vld [vmem:[%s13 + $0x2c] sm:$0xf]
  %v9781 = vld [vmem:[%s13 + $0x30] sm:$0xf]
  %v9782 = vld [vmem:[%s13 + $0x34] sm:$0xf]
  %v9783 = vld [vmem:[%s13 + $0x38] sm:$0xf]
  %v9784 = vld [vmem:[%s13 + $0x3c] sm:$0xf]
  %v9785 = vld [vmem:[%s14] sm:$0x1]
  %v9787 = vlaneseq
  %v9788 = vshrl.u32 %v9787, 7
  %v9789 = vsub.s32 0, %v9788
  %v9790 = vrot.slane %v9785, %v9789
  %v9808 = vunpack.c.l.b16 %v9769
  %v9809 = vunpack.c.l.b16 %v9770
  %v9810 = vunpack.c.l.b16 %v9771
  %v9811 = vunpack.c.l.b16 %v9772
  %v9812 = vunpack.c.l.b16 %v9773
  %v9813 = vunpack.c.l.b16 %v9774
  %v9814 = vunpack.c.l.b16 %v9775
  %v9815 = vunpack.c.l.b16 %v9776
  %v9816 = vunpack.c.l.b16 %v9777
  %v9817 = vunpack.c.l.b16 %v9778
  %v9818 = vunpack.c.l.b16 %v9779
  %v9819 = vunpack.c.l.b16 %v9780
  %v9820 = vunpack.c.l.b16 %v9781
  %v9821 = vunpack.c.l.b16 %v9782
  %v9822 = vunpack.c.l.b16 %v9783
  %v9823 = vunpack.c.l.b16 %v9784
  %v9824 = vpack.c.b16 %v9809, %v9808
  %v9825 = vpack.c.b16 %v9811, %v9810
  %v9826 = vpack.c.b16 %v9813, %v9812
  %v9827 = vpack.c.b16 %v9815, %v9814
  %v9828 = vpack.c.b16 %v9817, %v9816
  %v9829 = vpack.c.b16 %v9819, %v9818
  %v9830 = vpack.c.b16 %v9821, %v9820
  %v9831 = vpack.c.b16 %v9823, %v9822
  %9840 = vmatprep.subr.bf16.mxu0 0
  %9841 = vmatpush1.bf16.msra.mxu0 %v9831
  %9842 = vmatprep.subr.bf16.mxu0 0
  %9843 = vmatpush1.bf16.msra.mxu0 %v9830
  %9844 = vmatprep.subr.bf16.mxu0 0
  %9845 = vmatpush1.bf16.msra.mxu0 %v9829
  %9846 = vmatprep.subr.bf16.mxu0 0
  %9847 = vmatpush1.bf16.msra.mxu0 %v9828
  %9848 = vmatprep.subr.bf16.mxu0 0
  %9849 = vmatpush1.bf16.msra.mxu0 %v9827
  %9850 = vmatprep.subr.bf16.mxu0 0
  %9851 = vmatpush1.bf16.msra.mxu0 %v9826
  %9852 = vmatprep.subr.bf16.mxu0 0
  %9853 = vmatpush1.bf16.msra.mxu0 %v9825
  %9854 = vmatprep.subr.bf16.mxu0 0
  %9855 = vmatpush1.bf16.msra.mxu0 %v9824
  %9856 = vmatprep.subr.bf16.mxu0 0
  %9857 = vmatpush2.bf16.msra.mxu0 0
  %9858 = vmatprep.subr.bf16.mxu0 0
  %9859 = vmatpush2.bf16.msra.mxu0 0
  %9860 = vmatprep.subr.bf16.mxu0 0
  %9861 = vmatpush2.bf16.msra.mxu0 0
  %9862 = vmatprep.subr.bf16.mxu0 0
  %9863 = vmatpush2.bf16.msra.mxu0 0
  %9864 = vmatprep.subr.bf16.mxu0 0
  %9865 = vmatpush2.bf16.msra.mxu0 0
  %9866 = vmatprep.subr.bf16.mxu0 0
  %9867 = vmatpush2.bf16.msra.mxu0 0
  %9868 = vmatprep.subr.bf16.mxu0 0
  %9869 = vmatpush2.bf16.msra.mxu0 0
  %9870 = vmatprep.subr.bf16.mxu0 0
  %9871 = vmatpush2.bf16.msra.mxu0 0
  %9872 = vmatprep.mubr.bf16.mxu0 0
  %9873 = vmatmul.mubr.bf16.gmra.mxu0 %v9768
  %v9874 = vpop.f32.mrf.mxu0
  %v9875 = vadd.f32 %v9790, %v9874
  %v9876 = vpop.f32.mrf.mxu0
  %v9877 = vpop.f32.mrf.mxu0
  %v9878 = vpop.f32.mrf.mxu0
  %9879 = vdwg.mxu0
  %v9880 = vpack.c.bf16 %v9875, %v9875
  %v9881 = vld [vmem:[%s15] sm:$0xf]
  %v9882 = vld [vmem:[%s15 + $0x4] sm:$0xf]
  %v9883 = vld [vmem:[%s15 + $0x8] sm:$0xf]
  %v9884 = vld [vmem:[%s15 + $0xc] sm:$0xf]
  %v9885 = vld [vmem:[%s15 + $0x10] sm:$0xf]
  %v9886 = vld [vmem:[%s15 + $0x14] sm:$0xf]
  %v9887 = vld [vmem:[%s15 + $0x18] sm:$0xf]
  %v9888 = vld [vmem:[%s15 + $0x1c] sm:$0xf]
  %v9889 = vld [vmem:[%s15 + $0x20] sm:$0xf]
  %v9890 = vld [vmem:[%s15 + $0x24] sm:$0xf]
  %v9891 = vld [vmem:[%s15 + $0x28] sm:$0xf]
  %v9892 = vld [vmem:[%s15 + $0x2c] sm:$0xf]
  %v9893 = vld [vmem:[%s15 + $0x30] sm:$0xf]
  %v9894 = vld [vmem:[%s15 + $0x34] sm:$0xf]
  %v9895 = vld [vmem:[%s15 + $0x38] sm:$0xf]
  %v9896 = vld [vmem:[%s15 + $0x3c] sm:$0xf]
  %v9897 = vld [vmem:[%s16] sm:$0x1]
  %v9899 = vlaneseq
  %v9900 = vshrl.u32 %v9899, 7
  %v9901 = vsub.s32 0, %v9900
  %v9902 = vrot.slane %v9897, %v9901
  %v9920 = vunpack.c.l.b16 %v9881
  %v9921 = vunpack.c.l.b16 %v9882
  %v9922 = vunpack.c.l.b16 %v9883
  %v9923 = vunpack.c.l.b16 %v9884
  %v9924 = vunpack.c.l.b16 %v9885
  %v9925 = vunpack.c.l.b16 %v9886
  %v9926 = vunpack.c.l.b16 %v9887
  %v9927 = vunpack.c.l.b16 %v9888
  %v9928 = vunpack.c.l.b16 %v9889
  %v9929 = vunpack.c.l.b16 %v9890
  %v9930 = vunpack.c.l.b16 %v9891
  %v9931 = vunpack.c.l.b16 %v9892
  %v9932 = vunpack.c.l.b16 %v9893
  %v9933 = vunpack.c.l.b16 %v9894
  %v9934 = vunpack.c.l.b16 %v9895
  %v9935 = vunpack.c.l.b16 %v9896
  %v9936 = vpack.c.b16 %v9921, %v9920
  %v9937 = vpack.c.b16 %v9923, %v9922
  %v9938 = vpack.c.b16 %v9925, %v9924
  %v9939 = vpack.c.b16 %v9927, %v9926
  %v9940 = vpack.c.b16 %v9929, %v9928
  %v9941 = vpack.c.b16 %v9931, %v9930
  %v9942 = vpack.c.b16 %v9933, %v9932
  %v9943 = vpack.c.b16 %v9935, %v9934
  %9952 = vmatprep.subr.bf16.mxu0 0
  %9953 = vmatpush1.bf16.msra.mxu0 %v9943
  %9954 = vmatprep.subr.bf16.mxu0 0
  %9955 = vmatpush1.bf16.msra.mxu0 %v9942
  %9956 = vmatprep.subr.bf16.mxu0 0
  %9957 = vmatpush1.bf16.msra.mxu0 %v9941
  %9958 = vmatprep.subr.bf16.mxu0 0
  %9959 = vmatpush1.bf16.msra.mxu0 %v9940
  %9960 = vmatprep.subr.bf16.mxu0 0
  %9961 = vmatpush1.bf16.msra.mxu0 %v9939
  %9962 = vmatprep.subr.bf16.mxu0 0
  %9963 = vmatpush1.bf16.msra.mxu0 %v9938
  %9964 = vmatprep.subr.bf16.mxu0 0
  %9965 = vmatpush1.bf16.msra.mxu0 %v9937
  %9966 = vmatprep.subr.bf16.mxu0 0
  %9967 = vmatpush1.bf16.msra.mxu0 %v9936
  %9968 = vmatprep.subr.bf16.mxu0 0
  %9969 = vmatpush2.bf16.msra.mxu0 0
  %9970 = vmatprep.subr.bf16.mxu0 0
  %9971 = vmatpush2.bf16.msra.mxu0 0
  %9972 = vmatprep.subr.bf16.mxu0 0
  %9973 = vmatpush2.bf16.msra.mxu0 0
  %9974 = vmatprep.subr.bf16.mxu0 0
  %9975 = vmatpush2.bf16.msra.mxu0 0
  %9976 = vmatprep.subr.bf16.mxu0 0
  %9977 = vmatpush2.bf16.msra.mxu0 0
  %9978 = vmatprep.subr.bf16.mxu0 0
  %9979 = vmatpush2.bf16.msra.mxu0 0
  %9980 = vmatprep.subr.bf16.mxu0 0
  %9981 = vmatpush2.bf16.msra.mxu0 0
  %9982 = vmatprep.subr.bf16.mxu0 0
  %9983 = vmatpush2.bf16.msra.mxu0 0
  %9984 = vmatprep.mubr.bf16.mxu0 0
  %9985 = vmatmul.mubr.bf16.gmra.mxu0 %v9880
  %v9986 = vpop.f32.mrf.mxu0
  %v9987 = vadd.f32 %v9902, %v9986
  %v9988 = vpop.f32.mrf.mxu0
  %v9989 = vpop.f32.mrf.mxu0
  %v9990 = vpop.f32.mrf.mxu0
  %9991 = vdwg.mxu0
  %v9992 = vmax.f32 %v9987, 0.0
  %v9993 = vpack.c.bf16 %v9992, %v9992
  %v9994 = vld [vmem:[%s17] sm:$0xf]
  %v9995 = vld [vmem:[%s17 + $0x4] sm:$0xf]
  %v9996 = vld [vmem:[%s17 + $0x8] sm:$0xf]
  %v9997 = vld [vmem:[%s17 + $0xc] sm:$0xf]
  %v9998 = vld [vmem:[%s17 + $0x10] sm:$0xf]
  %v9999 = vld [vmem:[%s17 + $0x14] sm:$0xf]
  %v10000 = vld [vmem:[%s17 + $0x18] sm:$0xf]
  %v10001 = vld [vmem:[%s17 + $0x1c] sm:$0xf]
  %v10002 = vld [vmem:[%s17 + $0x20] sm:$0xf]
  %v10003 = vld [vmem:[%s17 + $0x24] sm:$0xf]
  %v10004 = vld [vmem:[%s17 + $0x28] sm:$0xf]
  %v10005 = vld [vmem:[%s17 + $0x2c] sm:$0xf]
  %v10006 = vld [vmem:[%s17 + $0x30] sm:$0xf]
  %v10007 = vld [vmem:[%s17 + $0x34] sm:$0xf]
  %v10008 = vld [vmem:[%s17 + $0x38] sm:$0xf]
  %v10009 = vld [vmem:[%s17 + $0x3c] sm:$0xf]
  %v10010 = vld [vmem:[%s18] sm:$0x1]
  %v10012 = vlaneseq
  %v10013 = vshrl.u32 %v10012, 7
  %v10014 = vsub.s32 0, %v10013
  %v10015 = vrot.slane %v10010, %v10014
  %v10033 = vunpack.c.l.b16 %v9994
  %v10034 = vunpack.c.l.b16 %v9995
  %v10035 = vunpack.c.l.b16 %v9996
  %v10036 = vunpack.c.l.b16 %v9997
  %v10037 = vunpack.c.l.b16 %v9998
  %v10038 = vunpack.c.l.b16 %v9999
  %v10039 = vunpack.c.l.b16 %v10000
  %v10040 = vunpack.c.l.b16 %v10001
  %v10041 = vunpack.c.l.b16 %v10002
  %v10042 = vunpack.c.l.b16 %v10003
  %v10043 = vunpack.c.l.b16 %v10004
  %v10044 = vunpack.c.l.b16 %v10005
  %v10045 = vunpack.c.l.b16 %v10006
  %v10046 = vunpack.c.l.b16 %v10007
  %v10047 = vunpack.c.l.b16 %v10008
  %v10048 = vunpack.c.l.b16 %v10009
  %v10049 = vpack.c.b16 %v10034, %v10033
  %v10050 = vpack.c.b16 %v10036, %v10035
  %v10051 = vpack.c.b16 %v10038, %v10037
  %v10052 = vpack.c.b16 %v10040, %v10039
  %v10053 = vpack.c.b16 %v10042, %v10041
  %v10054 = vpack.c.b16 %v10044, %v10043
  %v10055 = vpack.c.b16 %v10046, %v10045
  %v10056 = vpack.c.b16 %v10048, %v10047
  %10065 = vmatprep.subr.bf16.mxu0 0
  %10066 = vmatpush1.bf16.msra.mxu0 %v10056
  %10067 = vmatprep.subr.bf16.mxu0 0
  %10068 = vmatpush1.bf16.msra.mxu0 %v10055
  %10069 = vmatprep.subr.bf16.mxu0 0
  %10070 = vmatpush1.bf16.msra.mxu0 %v10054
  %10071 = vmatprep.subr.bf16.mxu0 0
  %10072 = vmatpush1.bf16.msra.mxu0 %v10053
  %10073 = vmatprep.subr.bf16.mxu0 0
  %10074 = vmatpush1.bf16.msra.mxu0 %v10052
  %10075 = vmatprep.subr.bf16.mxu0 0
  %10076 = vmatpush1.bf16.msra.mxu0 %v10051
  %10077 = vmatprep.subr.bf16.mxu0 0
  %10078 = vmatpush1.bf16.msra.mxu0 %v10050
  %10079 = vmatprep.subr.bf16.mxu0 0
  %10080 = vmatpush1.bf16.msra.mxu0 %v10049
  %10081 = vmatprep.subr.bf16.mxu0 0
  %10082 = vmatpush2.bf16.msra.mxu0 0
  %10083 = vmatprep.subr.bf16.mxu0 0
  %10084 = vmatpush2.bf16.msra.mxu0 0
  %10085 = vmatprep.subr.bf16.mxu0 0
  %10086 = vmatpush2.bf16.msra.mxu0 0
  %10087 = vmatprep.subr.bf16.mxu0 0
  %10088 = vmatpush2.bf16.msra.mxu0 0
  %10089 = vmatprep.subr.bf16.mxu0 0
  %10090 = vmatpush2.bf16.msra.mxu0 0
  %10091 = vmatprep.subr.bf16.mxu0 0
  %10092 = vmatpush2.bf16.msra.mxu0 0
  %10093 = vmatprep.subr.bf16.mxu0 0
  %10094 = vmatpush2.bf16.msra.mxu0 0
  %10095 = vmatprep.subr.bf16.mxu0 0
  %10096 = vmatpush2.bf16.msra.mxu0 0
  %10097 = vmatprep.mubr.bf16.mxu0 0
  %10098 = vmatmul.mubr.bf16.gmra.mxu0 %v9993
  %v10099 = vpop.f32.mrf.mxu0
  %v10100 = vadd.f32 %v10015, %v10099
  %v10101 = vpop.f32.mrf.mxu0
  %v10102 = vpop.f32.mrf.mxu0
  %v10103 = vpop.f32.mrf.mxu0
  %10104 = vdwg.mxu0
  %v10105 = vmax.f32 %v10100, 0.0
  %v10106 = vpack.c.bf16 %v10105, %v10105
  %v10107 = vld [vmem:[%s19] sm:$0xf]
  %v10108 = vld [vmem:[%s19 + $0x4] sm:$0xf]
  %v10109 = vld [vmem:[%s19 + $0x8] sm:$0xf]
  %v10110 = vld [vmem:[%s19 + $0xc] sm:$0xf]
  %v10111 = vld [vmem:[%s19 + $0x10] sm:$0xf]
  %v10112 = vld [vmem:[%s19 + $0x14] sm:$0xf]
  %v10113 = vld [vmem:[%s19 + $0x18] sm:$0xf]
  %v10114 = vld [vmem:[%s19 + $0x1c] sm:$0xf]
  %v10115 = vld [vmem:[%s19 + $0x20] sm:$0xf]
  %v10116 = vld [vmem:[%s19 + $0x24] sm:$0xf]
  %v10117 = vld [vmem:[%s19 + $0x28] sm:$0xf]
  %v10118 = vld [vmem:[%s19 + $0x2c] sm:$0xf]
  %v10119 = vld [vmem:[%s19 + $0x30] sm:$0xf]
  %v10120 = vld [vmem:[%s19 + $0x34] sm:$0xf]
  %v10121 = vld [vmem:[%s19 + $0x38] sm:$0xf]
  %v10122 = vld [vmem:[%s19 + $0x3c] sm:$0xf]
  %v10123 = vld [vmem:[%s20] sm:$0x1]
  %v10125 = vlaneseq
  %v10126 = vshrl.u32 %v10125, 7
  %v10127 = vsub.s32 0, %v10126
  %v10128 = vrot.slane %v10123, %v10127
  %v10146 = vunpack.c.l.b16 %v10107
  %v10147 = vunpack.c.l.b16 %v10108
  %v10148 = vunpack.c.l.b16 %v10109
  %v10149 = vunpack.c.l.b16 %v10110
  %v10150 = vunpack.c.l.b16 %v10111
  %v10151 = vunpack.c.l.b16 %v10112
  %v10152 = vunpack.c.l.b16 %v10113
  %v10153 = vunpack.c.l.b16 %v10114
  %v10154 = vunpack.c.l.b16 %v10115
  %v10155 = vunpack.c.l.b16 %v10116
  %v10156 = vunpack.c.l.b16 %v10117
  %v10157 = vunpack.c.l.b16 %v10118
  %v10158 = vunpack.c.l.b16 %v10119
  %v10159 = vunpack.c.l.b16 %v10120
  %v10160 = vunpack.c.l.b16 %v10121
  %v10161 = vunpack.c.l.b16 %v10122
  %v10162 = vpack.c.b16 %v10147, %v10146
  %v10163 = vpack.c.b16 %v10149, %v10148
  %v10164 = vpack.c.b16 %v10151, %v10150
  %v10165 = vpack.c.b16 %v10153, %v10152
  %v10166 = vpack.c.b16 %v10155, %v10154
  %v10167 = vpack.c.b16 %v10157, %v10156
  %v10168 = vpack.c.b16 %v10159, %v10158
  %v10169 = vpack.c.b16 %v10161, %v10160
  %10178 = vmatprep.subr.bf16.mxu0 0
  %10179 = vmatpush1.bf16.msra.mxu0 %v10169
  %10180 = vmatprep.subr.bf16.mxu0 0
  %10181 = vmatpush1.bf16.msra.mxu0 %v10168
  %10182 = vmatprep.subr.bf16.mxu0 0
  %10183 = vmatpush1.bf16.msra.mxu0 %v10167
  %10184 = vmatprep.subr.bf16.mxu0 0
  %10185 = vmatpush1.bf16.msra.mxu0 %v10166
  %10186 = vmatprep.subr.bf16.mxu0 0
  %10187 = vmatpush1.bf16.msra.mxu0 %v10165
  %10188 = vmatprep.subr.bf16.mxu0 0
  %10189 = vmatpush1.bf16.msra.mxu0 %v10164
  %10190 = vmatprep.subr.bf16.mxu0 0
  %10191 = vmatpush1.bf16.msra.mxu0 %v10163
  %10192 = vmatprep.subr.bf16.mxu0 0
  %10193 = vmatpush1.bf16.msra.mxu0 %v10162
  %10194 = vmatprep.subr.bf16.mxu0 0
  %10195 = vmatpush2.bf16.msra.mxu0 0
  %10196 = vmatprep.subr.bf16.mxu0 0
  %10197 = vmatpush2.bf16.msra.mxu0 0
  %10198 = vmatprep.subr.bf16.mxu0 0
  %10199 = vmatpush2.bf16.msra.mxu0 0
  %10200 = vmatprep.subr.bf16.mxu0 0
  %10201 = vmatpush2.bf16.msra.mxu0 0
  %10202 = vmatprep.subr.bf16.mxu0 0
  %10203 = vmatpush2.bf16.msra.mxu0 0
  %10204 = vmatprep.subr.bf16.mxu0 0
  %10205 = vmatpush2.bf16.msra.mxu0 0
  %10206 = vmatprep.subr.bf16.mxu0 0
  %10207 = vmatpush2.bf16.msra.mxu0 0
  %10208 = vmatprep.subr.bf16.mxu0 0
  %10209 = vmatpush2.bf16.msra.mxu0 0
  %10210 = vmatprep.mubr.bf16.mxu0 0
  %10211 = vmatmul.mubr.bf16.gmra.mxu0 %v10106
  %v10212 = vpop.f32.mrf.mxu0
  %v10213 = vadd.f32 %v10128, %v10212
  %v10214 = vpop.f32.mrf.mxu0
  %v10215 = vpop.f32.mrf.mxu0
  %v10216 = vpop.f32.mrf.mxu0
  %10217 = vdwg.mxu0
  %10218 = vst [vmem:[%s21] sm:$0xff] %v10213
  // Predicated region
  $region86: #{attention_bilstm_forward.1} parent=0 // pred_check
    _
  $region87: #{attention_bilstm_forward.1} parent=0 // pred_check_branch
    %10220 = sbr.rel (0) target = $region89
  $region88: #{attention_bilstm_forward.1} parent=0 // pred_region
    _
  $region89: #{attention_bilstm_forward.1} parent=0 // pred_fallthru
    _
  // Predicated region
  $region90: #{attention_bilstm_forward.1} parent=0 // pred_check
    _
  $region91: #{attention_bilstm_forward.1} parent=0 // pred_check_branch
    %10222 = sbr.rel (0) target = $region93
  $region92: #{attention_bilstm_forward.1} parent=0 // pred_region
    _
  $region93: #{attention_bilstm_forward.1} parent=0 // pred_fallthru
    _
  // Predicated region
  $region94: #{attention_bilstm_forward.1} parent=0 // pred_check
    _
  $region95: #{attention_bilstm_forward.1} parent=0 // pred_check_branch
    %10224 = sbr.rel (0) target = $region97
  $region96: #{attention_bilstm_forward.1} parent=0 // pred_region
    _
  $region97: #{attention_bilstm_forward.1} parent=0 // pred_fallthru
    _
  // Predicated region
  $region98: #{attention_bilstm_forward.1} parent=0 // pred_check
    _
  $region99: #{attention_bilstm_forward.1} parent=0 // pred_check_branch
    %10226 = sbr.rel (0) target = $region101
  $region100: #{attention_bilstm_forward.1} parent=0 // pred_region
    _
  $region101: #{attention_bilstm_forward.1} parent=0 // pred_fallthru
    _
  // Predicated region
  $region102: #{attention_bilstm_forward.1} parent=0 // pred_check
    _
  $region103: #{attention_bilstm_forward.1} parent=0 // pred_check_branch
    %10228 = sbr.rel (0) target = $region105
  $region104: #{attention_bilstm_forward.1} parent=0 // pred_region
    _
  $region105: #{attention_bilstm_forward.1} parent=0 // pred_fallthru
    _
  // Predicated region
  $region106: #{attention_bilstm_forward.1} parent=0 // pred_check
    _
  $region107: #{attention_bilstm_forward.1} parent=0 // pred_check_branch
    %10230 = sbr.rel (0) target = $region109
  $region108: #{attention_bilstm_forward.1} parent=0 // pred_region
    _
  $region109: #{attention_bilstm_forward.1} parent=0 // pred_fallthru
    _
  // Predicated region
  $region110: #{attention_bilstm_forward.1} parent=0 // pred_check
    _
  $region111: #{attention_bilstm_forward.1} parent=0 // pred_check_branch
    %10232 = sbr.rel (0) target = $region113
  $region112: #{attention_bilstm_forward.1} parent=0 // pred_region
    _
  $region113: #{attention_bilstm_forward.1} parent=0 // pred_fallthru
    _
  // Predicated region
  $region114: #{attention_bilstm_forward.1} parent=0 // pred_check
    _
  $region115: #{attention_bilstm_forward.1} parent=0 // pred_check_branch
    %10234 = sbr.rel (0) target = $region117
  $region116: #{attention_bilstm_forward.1} parent=0 // pred_region
    _
  $region117: #{attention_bilstm_forward.1} parent=0 // pred_fallthru
    _
  // Predicated region
  $region118: #{attention_bilstm_forward.1} parent=0 // pred_check
    _
  $region119: #{attention_bilstm_forward.1} parent=0 // pred_check_branch
    %10236 = sbr.rel (0) target = $region121
  $region120: #{attention_bilstm_forward.1} parent=0 // pred_region
    _
  $region121: #{attention_bilstm_forward.1} parent=0 // pred_fallthru
    _
  // Predicated region
  $region122: #{attention_bilstm_forward.1} parent=0 // pred_check
    _
  $region123: #{attention_bilstm_forward.1} parent=0 // pred_check_branch
    %10238 = sbr.rel (0) target = $region125
  $region124: #{attention_bilstm_forward.1} parent=0 // pred_region
    _
  $region125: #{attention_bilstm_forward.1} parent=0 // pred_fallthru
    _

</llo_original>
